<compile_context>
chip_gen: v7x
topology: tpu7x:2x2x1
jax: 0.10.0
libtpu: 0.0.40
codegen_flags: <defaults>
</compile_context>

<pallas_src>
import functools
import math

import jax
import jax.numpy as jnp
from jax import lax
from jax.experimental import pallas as pl
from jax.experimental.pallas import tpu as pltpu


def _round_up(x, m):
    return ((x + m - 1) // m) * m


# ----------------------------------------------------------------------------
# Fused kernel: density descriptor + per-atom MLP (nnmod)
#   dens[a, f] = sum_n w[a, n] * fc(d[a, n]) * exp(-alpha[f] * (d[a, n] - rs[f])^2)
#   h          = tanh(dens @ W1 + (b1 + spec_bias[species[a]]))
#   out[a, :]  = (h @ W2 + b2) * (species[a] >= 0)
# ----------------------------------------------------------------------------
def fused_kernel(dist_ref, wgt_ref, spec_ref, rs_ref, alpha_ref,
                 sbias_ref, w1_ref, w2_ref, b2_ref,
                 out_ref, acc_ref, *, rc, nneigh, nspecies_pad):
    # ---- density: cosine cutoff * Gaussian radial basis, reduced over neighbors
    d_all = dist_ref[...]                                   # (TA, NN) f32
    cut = 0.5 * (jnp.cos((math.pi / rc) * d_all) + 1.0)
    cut = jnp.where(d_all < rc, cut, 0.0)
    wc = wgt_ref[...] * cut                                 # (TA, NN)

    rs = rs_ref[...]                                        # (1, Fp)
    neg_alpha = -alpha_ref[...]                             # (1, Fp)

    acc_ref[...] = jnp.zeros_like(acc_ref)                  # (TA, Fp) f32 accumulator
    # Static (compile-time) loop over neighbors: each step is a lane-dense
    # (TA, Fp) EUP exp + VPU FMA — no 3-D intermediate, bounded VMEM pressure.
    for n in range(nneigh):
        dn = lax.slice_in_dim(d_all, n, n + 1, axis=1)      # (TA, 1)
        wn = lax.slice_in_dim(wc, n, n + 1, axis=1)         # (TA, 1)
        diff = dn - rs                                      # (TA, Fp)
        acc_ref[...] += wn * jnp.exp(neg_alpha * (diff * diff))

    dens = acc_ref[...]                                     # (TA, Fp) f32

    # ---- species-dependent bias via in-kernel one-hot matmul, and atom mask
    # TODO(synk): REANN's NNMod selects a distinct MLP per element; the shared
    # MLP + per-species bias is a structural stand-in for that selection.
    spec = spec_ref[...]                                    # (TA, 1) int32
    species_iota = lax.broadcasted_iota(jnp.int32, (1, nspecies_pad), 1)
    onehot = (spec == species_iota).astype(jnp.float32)     # (TA, NSPp)
    sbias = jnp.dot(onehot, sbias_ref[...],
                    preferred_element_type=jnp.float32)     # (TA, Hp) f32 (= b1 + spec_bias)

    # ---- MLP (bf16 MXU operands, f32 accumulation, f32 tanh)
    h = jnp.tanh(jnp.dot(dens.astype(jnp.bfloat16), w1_ref[...],
                         preferred_element_type=jnp.float32)
                 + sbias)                                   # (TA, Hp) f32
    o = jnp.dot(h.astype(jnp.bfloat16), w2_ref[...],
                preferred_element_type=jnp.float32) + b2_ref[...]   # (TA, NOp)

    mask = (spec >= 0).astype(jnp.float32)                  # (TA, 1)
    out_ref[...] = o * mask                                 # lane-dense (TA, NOp) store


# ----------------------------------------------------------------------------
# Wrapper: Property.forward
# ----------------------------------------------------------------------------
def property_forward(params, cart, numatoms, species, atom_index, shifts,
                     *, maxneigh, rc, atom_tile=256):
    nbatch, maxatoms, _ = cart.shape
    natoms = nbatch * maxatoms
    F = params["rs"].shape[-1]
    H = params["w1"].shape[-1]
    NOUT = params["w2"].shape[-1]
    nspec = params["spec_bias"].shape[0]

    # lane-dense padded sizes
    Fp = _round_up(F, 128)
    Hp = _round_up(H, 128)
    NOp = _round_up(NOUT, 128)
    NSPp = _round_up(nspec, 8)

    species_flat = species.reshape(-1)                       # species.view(-1)

    # ---------------- glue: neighbor gather & pairwise distances ----------------
    i_idx = atom_index[0]                                    # (nbatch, maxatoms*maxneigh)
    j_idx = atom_index[1]
    batch_ar = jnp.arange(nbatch)[:, None]
    cart_i = cart[batch_ar, i_idx]                           # (nbatch, P, 3)
    cart_j = cart[batch_ar, j_idx]                           # (nbatch, P, 3)
    rij = cart_j + shifts - cart_i
    dist = jnp.sqrt(jnp.sum(rij * rij, axis=-1) + 1e-12)     # (nbatch, P)
    dist = dist.reshape(natoms, maxneigh).astype(jnp.float32)

    spec_j = species[batch_ar, j_idx].reshape(natoms, maxneigh)
    valid_j = spec_j >= 0
    wgt = jnp.where(valid_j,
                    params["spec_coeff"][jnp.maximum(spec_j, 0)],
                    0.0).astype(jnp.float32)                 # (natoms, maxneigh)
    # TODO(synk): real REANN neighbor lists also need an explicit pair-validity
    # mask (e.g. exclude padded i==j self pairs) folded into `wgt`.

    # ---------------- pad atoms up to a multiple of the tile ----------------
    natoms_pad = _round_up(natoms, atom_tile)
    pad = natoms_pad - natoms
    dist_p = jnp.pad(dist, ((0, pad), (0, 0)), constant_values=rc + 1.0)  # > rc -> cutoff 0
    wgt_p = jnp.pad(wgt, ((0, pad), (0, 0)))
    spec_p = jnp.pad(species_flat.astype(jnp.int32), ((0, pad),),
                     constant_values=-1).reshape(natoms_pad, 1)

    # ---------------- pad / cast parameters (tiny; done once per call) ----------------
    # zero-padded basis lanes feed zero-padded W1 rows, so they never affect the output
    rs_p = jnp.pad(params["rs"].astype(jnp.float32), ((0, 0), (0, Fp - F)))
    alpha_p = jnp.pad(params["alpha"].astype(jnp.float32), ((0, 0), (0, Fp - F)))
    # fold b1 into the per-species bias table (one add saved per tile, one input less)
    sbias_full = params["spec_bias"].astype(jnp.float32) + params["b1"].astype(jnp.float32)
    sbias_tbl = jnp.pad(sbias_full, ((0, NSPp - nspec), (0, Hp - H)))
    w1_p = jnp.pad(params["w1"], ((0, Fp - F), (0, Hp - H))).astype(jnp.bfloat16)
    w2_p = jnp.pad(params["w2"], ((0, Hp - H), (0, NOp - NOUT))).astype(jnp.bfloat16)
    b2_p = jnp.pad(params["b2"].astype(jnp.float32), ((0, 0), (0, NOp - NOUT)))

    # ---------------- fused Pallas kernel ----------------
    grid = (natoms_pad // atom_tile,)
    kernel = functools.partial(fused_kernel, rc=rc, nneigh=maxneigh,
                               nspecies_pad=NSPp)

    atom_out = pl.pallas_call(
        kernel,
        out_shape=jax.ShapeDtypeStruct((natoms_pad, NOp), jnp.float32),
        grid=grid,
        in_specs=[
            pl.BlockSpec((atom_tile, maxneigh), lambda i: (i, 0)),   # dist
            pl.BlockSpec((atom_tile, maxneigh), lambda i: (i, 0)),   # wgt
            pl.BlockSpec((atom_tile, 1), lambda i: (i, 0)),          # species ids
            pl.BlockSpec((1, Fp), lambda i: (0, 0)),                 # rs
            pl.BlockSpec((1, Fp), lambda i: (0, 0)),                 # alpha
            pl.BlockSpec((NSPp, Hp), lambda i: (0, 0)),              # spec_bias (+b1) table
            pl.BlockSpec((Fp, Hp), lambda i: (0, 0)),                # w1
            pl.BlockSpec((Hp, NOp), lambda i: (0, 0)),               # w2
            pl.BlockSpec((1, NOp), lambda i: (0, 0)),                # b2
        ],
        out_specs=pl.BlockSpec((atom_tile, NOp), lambda i: (i, 0)),
        scratch_shapes=[pltpu.VMEM((atom_tile, Fp), jnp.float32)],   # density accumulator
        compiler_params=pltpu.CompilerParams(
            dimension_semantics=("parallel",)),
    )(dist_p, wgt_p, spec_p, rs_p, alpha_p, sbias_tbl, w1_p, w2_p, b2_p)

    # strip padding, then output.view(numatoms.shape[0], -1)
    output = atom_out[:natoms, :NOUT].reshape(numatoms.shape[0], -1)
    return (output,)


# ----------------------------------------------------------------------------
# Main: deterministic synthetic setup
# ----------------------------------------------------------------------------
if __name__ == "__main__":
    key = jax.random.PRNGKey(0)
    nbatch, maxatoms, maxneigh = 2, 8, 16
    nspecies, F, H, NOUT = 3, 32, 32, 2
    rc = 4.0
    natoms = nbatch * maxatoms
    P = maxatoms * maxneigh

    keys = jax.random.split(key, 10)

    # inputs (mirroring the PyTorch forward signature)
    cart = jax.random.normal(keys[0], (nbatch, maxatoms, 3), jnp.float32) * 2.0
    numatoms = jnp.full((nbatch,), maxatoms, jnp.int32)
    species = jax.random.randint(keys[1], (nbatch, maxatoms), 0, nspecies,
                                 jnp.int32)
    center = jnp.repeat(jnp.arange(maxatoms, dtype=jnp.int32), maxneigh)
    atom_index = jnp.stack([
        jnp.broadcast_to(center, (nbatch, P)),
        jax.random.randint(keys[2], (nbatch, P), 0, maxatoms, jnp.int32),
    ], axis=0)                                                  # (2, nbatch, P)
    shifts = jax.random.normal(keys[3], (nbatch, P, 3), jnp.float32) * 0.1

    # deterministic parameters
    params = {
        "rs": jnp.linspace(0.0, rc, F, dtype=jnp.float32).reshape(1, F),
        "alpha": jnp.full((1, F), 1.0, jnp.float32),
        "spec_coeff": jax.random.normal(keys[4], (nspecies,), jnp.float32),
        "spec_bias": jax.random.normal(keys[5], (nspecies, H), jnp.float32) * 0.1,
        "w1": jax.random.normal(keys[6], (F, H), jnp.float32)
              * (1.0 / math.sqrt(F)),
        "b1": jnp.zeros((1, H), jnp.float32),
        "w2": jax.random.normal(keys[7], (H, NOUT), jnp.float32)
              * (1.0 / math.sqrt(H)),
        "b2": jnp.zeros((1, NOUT), jnp.float32),
    }

    # atom_tile=128 for this tiny demo (16 real atoms pad to one 128-row tile);
    # production sizes should use the default 256.
    fwd = jax.jit(functools.partial(property_forward,
                                    maxneigh=maxneigh, rc=rc, atom_tile=128))
    (out,) = fwd(params, cart, numatoms, species, atom_index, shifts)
    out = jax.block_until_ready(out)

    assert out.shape == (nbatch, maxatoms * NOUT), out.shape
    assert bool(jnp.all(jnp.isfinite(out)))
    print("KERNEL_OK")
</pallas_src>

<mosaic_0001>
module attributes {stable_mosaic.version = 11 : i64} {
  func.func @fused_kernel(%arg0: i32, %arg1: memref<128x16xf32, #tpu.memory_space<vmem>>, %arg2: memref<128x16xf32, #tpu.memory_space<vmem>>, %arg3: memref<128x1xi32, #tpu.memory_space<vmem>>, %arg4: memref<1x128xf32, #tpu.memory_space<vmem>>, %arg5: memref<1x128xf32, #tpu.memory_space<vmem>>, %arg6: memref<8x128xf32, #tpu.memory_space<vmem>>, %arg7: memref<128x128xbf16, #tpu.memory_space<vmem>>, %arg8: memref<128x128xbf16, #tpu.memory_space<vmem>>, %arg9: memref<1x128xf32, #tpu.memory_space<vmem>>, %arg10: memref<128x128xf32, #tpu.memory_space<vmem>>, %arg11: memref<128x128xf32, #tpu.memory_space<vmem>>) attributes {dimension_semantics = [#tpu.dimension_semantics<parallel>], iteration_bounds = array<i64: 1>, scalar_prefetch = 0 : i64, scratch_operands = 1 : i64, tpu.core_type = #tpu.core_type<tc>, window_params = [{transform_indices = @transform_0, window_bounds = array<i64: 128, 16>}, {transform_indices = @transform_1, window_bounds = array<i64: 128, 16>}, {transform_indices = @transform_2, window_bounds = array<i64: 128, 1>}, {pipeline_mode = #tpu.pipeline_mode<synchronous>, transform_indices = @transform_3, window_bounds = array<i64: 1, 128>}, {pipeline_mode = #tpu.pipeline_mode<synchronous>, transform_indices = @transform_4, window_bounds = array<i64: 1, 128>}, {pipeline_mode = #tpu.pipeline_mode<synchronous>, transform_indices = @transform_5, window_bounds = array<i64: 8, 128>}, {pipeline_mode = #tpu.pipeline_mode<synchronous>, transform_indices = @transform_6, window_bounds = array<i64: 128, 128>}, {pipeline_mode = #tpu.pipeline_mode<synchronous>, transform_indices = @transform_7, window_bounds = array<i64: 128, 128>}, {pipeline_mode = #tpu.pipeline_mode<synchronous>, transform_indices = @transform_8, window_bounds = array<i64: 1, 128>}, {transform_indices = @transform_9, window_bounds = array<i64: 128, 128>}]} {
    %c0 = arith.constant 0 : index
    %c0_0 = arith.constant 0 : index
    %0 = vector.load %arg1[%c0, %c0_0] : memref<128x16xf32, #tpu.memory_space<vmem>>, vector<128x16xf32>
    %cst = arith.constant 0.785398185 : f32
    %1 = vector.broadcast %cst : f32 to vector<128x16xf32>
    %2 = arith.mulf %1, %0 : vector<128x16xf32>
    %3 = math.cos %2 : vector<128x16xf32>
    %cst_1 = arith.constant 1.000000e+00 : f32
    %4 = vector.broadcast %cst_1 : f32 to vector<128x16xf32>
    %5 = arith.addf %3, %4 : vector<128x16xf32>
    %cst_2 = arith.constant 5.000000e-01 : f32
    %6 = vector.broadcast %cst_2 : f32 to vector<128x16xf32>
    %7 = arith.mulf %6, %5 : vector<128x16xf32>
    %cst_3 = arith.constant 4.000000e+00 : f32
    %8 = vector.broadcast %cst_3 : f32 to vector<128x16xf32>
    %9 = arith.cmpf olt, %0, %8 : vector<128x16xf32>
    %cst_4 = arith.constant 0.000000e+00 : f32
    %10 = vector.broadcast %cst_4 : f32 to vector<128x16xf32>
    %11 = arith.select %9, %7, %10 : vector<128x16xi1>, vector<128x16xf32>
    %c0_5 = arith.constant 0 : index
    %c0_6 = arith.constant 0 : index
    %12 = vector.load %arg2[%c0_5, %c0_6] : memref<128x16xf32, #tpu.memory_space<vmem>>, vector<128x16xf32>
    %13 = arith.mulf %12, %11 : vector<128x16xf32>
    %c0_7 = arith.constant 0 : index
    %c0_8 = arith.constant 0 : index
    %14 = vector.load %arg4[%c0_7, %c0_8] : memref<1x128xf32, #tpu.memory_space<vmem>>, vector<1x128xf32>
    %c0_9 = arith.constant 0 : index
    %c0_10 = arith.constant 0 : index
    %15 = vector.load %arg5[%c0_9, %c0_10] : memref<1x128xf32, #tpu.memory_space<vmem>>, vector<1x128xf32>
    %cst_11 = arith.constant 0.000000e+00 : f32
    %16 = vector.broadcast %cst_11 : f32 to vector<1x128xf32>
    %17 = arith.subf %16, %15 : vector<1x128xf32>
    %cst_12 = arith.constant 0.000000e+00 : f32
    %18 = vector.broadcast %cst_12 : f32 to vector<128x128xf32>
    %c0_13 = arith.constant 0 : index
    %c0_14 = arith.constant 0 : index
    %19 = vector.load %arg11[%c0_13, %c0_14] : memref<128x128xf32, #tpu.memory_space<vmem>>, vector<128x128xf32>
    tpu.vector_store %arg11[%c0_13, %c0_14], %18 {strides = array<i32>} : memref<128x128xf32, #tpu.memory_space<vmem>>, vector<128x128xf32>,
    %20 = vector.extract_strided_slice %0 {offsets = [0, 0], sizes = [128, 1], strides = [1, 1]} : vector<128x16xf32> to vector<128x1xf32>
    %21 = vector.extract_strided_slice %13 {offsets = [0, 0], sizes = [128, 1], strides = [1, 1]} : vector<128x16xf32> to vector<128x1xf32>
    %22 = vector.broadcast %20 : vector<128x1xf32> to vector<128x128xf32>
    %23 = vector.broadcast %14 : vector<1x128xf32> to vector<128x128xf32>
    %24 = arith.subf %22, %23 : vector<128x128xf32>
    %c0_15 = arith.constant 0 : index
    %c0_16 = arith.constant 0 : index
    %25 = vector.load %arg11[%c0_15, %c0_16] : memref<128x128xf32, #tpu.memory_space<vmem>>, vector<128x128xf32>
    %26 = arith.mulf %24, %24 : vector<128x128xf32>
    %27 = vector.broadcast %17 : vector<1x128xf32> to vector<128x128xf32>
    %28 = arith.mulf %27, %26 : vector<128x128xf32>
    %29 = math.exp %28 : vector<128x128xf32>
    %30 = vector.broadcast %21 : vector<128x1xf32> to vector<128x128xf32>
    %31 = arith.mulf %30, %29 : vector<128x128xf32>
    %32 = arith.addf %25, %31 : vector<128x128xf32>
    %c0_17 = arith.constant 0 : index
    %c0_18 = arith.constant 0 : index
    %33 = vector.load %arg11[%c0_17, %c0_18] : memref<128x128xf32, #tpu.memory_space<vmem>>, vector<128x128xf32>
    tpu.vector_store %arg11[%c0_17, %c0_18], %32 {strides = array<i32>} : memref<128x128xf32, #tpu.memory_space<vmem>>, vector<128x128xf32>,
    %34 = vector.extract_strided_slice %0 {offsets = [0, 1], sizes = [128, 1], strides = [1, 1]} : vector<128x16xf32> to vector<128x1xf32>
    %35 = vector.extract_strided_slice %13 {offsets = [0, 1], sizes = [128, 1], strides = [1, 1]} : vector<128x16xf32> to vector<128x1xf32>
    %36 = vector.broadcast %34 : vector<128x1xf32> to vector<128x128xf32>
    %37 = vector.broadcast %14 : vector<1x128xf32> to vector<128x128xf32>
    %38 = arith.subf %36, %37 : vector<128x128xf32>
    %c0_19 = arith.constant 0 : index
    %c0_20 = arith.constant 0 : index
    %39 = vector.load %arg11[%c0_19, %c0_20] : memref<128x128xf32, #tpu.memory_space<vmem>>, vector<128x128xf32>
    %40 = arith.mulf %38, %38 : vector<128x128xf32>
    %41 = vector.broadcast %17 : vector<1x128xf32> to vector<128x128xf32>
    %42 = arith.mulf %41, %40 : vector<128x128xf32>
    %43 = math.exp %42 : vector<128x128xf32>
    %44 = vector.broadcast %35 : vector<128x1xf32> to vector<128x128xf32>
    %45 = arith.mulf %44, %43 : vector<128x128xf32>
    %46 = arith.addf %39, %45 : vector<128x128xf32>
    %c0_21 = arith.constant 0 : index
    %c0_22 = arith.constant 0 : index
    %47 = vector.load %arg11[%c0_21, %c0_22] : memref<128x128xf32, #tpu.memory_space<vmem>>, vector<128x128xf32>
    tpu.vector_store %arg11[%c0_21, %c0_22], %46 {strides = array<i32>} : memref<128x128xf32, #tpu.memory_space<vmem>>, vector<128x128xf32>,
    %48 = vector.extract_strided_slice %0 {offsets = [0, 2], sizes = [128, 1], strides = [1, 1]} : vector<128x16xf32> to vector<128x1xf32>
    %49 = vector.extract_strided_slice %13 {offsets = [0, 2], sizes = [128, 1], strides = [1, 1]} : vector<128x16xf32> to vector<128x1xf32>
    %50 = vector.broadcast %48 : vector<128x1xf32> to vector<128x128xf32>
    %51 = vector.broadcast %14 : vector<1x128xf32> to vector<128x128xf32>
    %52 = arith.subf %50, %51 : vector<128x128xf32>
    %c0_23 = arith.constant 0 : index
    %c0_24 = arith.constant 0 : index
    %53 = vector.load %arg11[%c0_23, %c0_24] : memref<128x128xf32, #tpu.memory_space<vmem>>, vector<128x128xf32>
    %54 = arith.mulf %52, %52 : vector<128x128xf32>
    %55 = vector.broadcast %17 : vector<1x128xf32> to vector<128x128xf32>
    %56 = arith.mulf %55, %54 : vector<128x128xf32>
    %57 = math.exp %56 : vector<128x128xf32>
    %58 = vector.broadcast %49 : vector<128x1xf32> to vector<128x128xf32>
    %59 = arith.mulf %58, %57 : vector<128x128xf32>
    %60 = arith.addf %53, %59 : vector<128x128xf32>
    %c0_25 = arith.constant 0 : index
    %c0_26 = arith.constant 0 : index
    %61 = vector.load %arg11[%c0_25, %c0_26] : memref<128x128xf32, #tpu.memory_space<vmem>>, vector<128x128xf32>
    tpu.vector_store %arg11[%c0_25, %c0_26], %60 {strides = array<i32>} : memref<128x128xf32, #tpu.memory_space<vmem>>, vector<128x128xf32>,
    %62 = vector.extract_strided_slice %0 {offsets = [0, 3], sizes = [128, 1], strides = [1, 1]} : vector<128x16xf32> to vector<128x1xf32>
    %63 = vector.extract_strided_slice %13 {offsets = [0, 3], sizes = [128, 1], strides = [1, 1]} : vector<128x16xf32> to vector<128x1xf32>
    %64 = vector.broadcast %62 : vector<128x1xf32> to vector<128x128xf32>
    %65 = vector.broadcast %14 : vector<1x128xf32> to vector<128x128xf32>
    %66 = arith.subf %64, %65 : vector<128x128xf32>
    %c0_27 = arith.constant 0 : index
    %c0_28 = arith.constant 0 : index
    %67 = vector.load %arg11[%c0_27, %c0_28] : memref<128x128xf32, #tpu.memory_space<vmem>>, vector<128x128xf32>
    %68 = arith.mulf %66, %66 : vector<128x128xf32>
    %69 = vector.broadcast %17 : vector<1x128xf32> to vector<128x128xf32>
    %70 = arith.mulf %69, %68 : vector<128x128xf32>
    %71 = math.exp %70 : vector<128x128xf32>
    %72 = vector.broadcast %63 : vector<128x1xf32> to vector<128x128xf32>
    %73 = arith.mulf %72, %71 : vector<128x128xf32>
    %74 = arith.addf %67, %73 : vector<128x128xf32>
    %c0_29 = arith.constant 0 : index
    %c0_30 = arith.constant 0 : index
    %75 = vector.load %arg11[%c0_29, %c0_30] : memref<128x128xf32, #tpu.memory_space<vmem>>, vector<128x128xf32>
    tpu.vector_store %arg11[%c0_29, %c0_30], %74 {strides = array<i32>} : memref<128x128xf32, #tpu.memory_space<vmem>>, vector<128x128xf32>,
    %76 = vector.extract_strided_slice %0 {offsets = [0, 4], sizes = [128, 1], strides = [1, 1]} : vector<128x16xf32> to vector<128x1xf32>
    %77 = vector.extract_strided_slice %13 {offsets = [0, 4], sizes = [128, 1], strides = [1, 1]} : vector<128x16xf32> to vector<128x1xf32>
    %78 = vector.broadcast %76 : vector<128x1xf32> to vector<128x128xf32>
    %79 = vector.broadcast %14 : vector<1x128xf32> to vector<128x128xf32>
    %80 = arith.subf %78, %79 : vector<128x128xf32>
    %c0_31 = arith.constant 0 : index
    %c0_32 = arith.constant 0 : index
    %81 = vector.load %arg11[%c0_31, %c0_32] : memref<128x128xf32, #tpu.memory_space<vmem>>, vector<128x128xf32>
    %82 = arith.mulf %80, %80 : vector<128x128xf32>
    %83 = vector.broadcast %17 : vector<1x128xf32> to vector<128x128xf32>
    %84 = arith.mulf %83, %82 : vector<128x128xf32>
    %85 = math.exp %84 : vector<128x128xf32>
    %86 = vector.broadcast %77 : vector<128x1xf32> to vector<128x128xf32>
    %87 = arith.mulf %86, %85 : vector<128x128xf32>
    %88 = arith.addf %81, %87 : vector<128x128xf32>
    %c0_33 = arith.constant 0 : index
    %c0_34 = arith.constant 0 : index
    %89 = vector.load %arg11[%c0_33, %c0_34] : memref<128x128xf32, #tpu.memory_space<vmem>>, vector<128x128xf32>
    tpu.vector_store %arg11[%c0_33, %c0_34], %88 {strides = array<i32>} : memref<128x128xf32, #tpu.memory_space<vmem>>, vector<128x128xf32>,
    %90 = vector.extract_strided_slice %0 {offsets = [0, 5], sizes = [128, 1], strides = [1, 1]} : vector<128x16xf32> to vector<128x1xf32>
    %91 = vector.extract_strided_slice %13 {offsets = [0, 5], sizes = [128, 1], strides = [1, 1]} : vector<128x16xf32> to vector<128x1xf32>
    %92 = vector.broadcast %90 : vector<128x1xf32> to vector<128x128xf32>
    %93 = vector.broadcast %14 : vector<1x128xf32> to vector<128x128xf32>
    %94 = arith.subf %92, %93 : vector<128x128xf32>
    %c0_35 = arith.constant 0 : index
    %c0_36 = arith.constant 0 : index
    %95 = vector.load %arg11[%c0_35, %c0_36] : memref<128x128xf32, #tpu.memory_space<vmem>>, vector<128x128xf32>
    %96 = arith.mulf %94, %94 : vector<128x128xf32>
    %97 = vector.broadcast %17 : vector<1x128xf32> to vector<128x128xf32>
    %98 = arith.mulf %97, %96 : vector<128x128xf32>
    %99 = math.exp %98 : vector<128x128xf32>
    %100 = vector.broadcast %91 : vector<128x1xf32> to vector<128x128xf32>
    %101 = arith.mulf %100, %99 : vector<128x128xf32>
    %102 = arith.addf %95, %101 : vector<128x128xf32>
    %c0_37 = arith.constant 0 : index
    %c0_38 = arith.constant 0 : index
    %103 = vector.load %arg11[%c0_37, %c0_38] : memref<128x128xf32, #tpu.memory_space<vmem>>, vector<128x128xf32>
    tpu.vector_store %arg11[%c0_37, %c0_38], %102 {strides = array<i32>} : memref<128x128xf32, #tpu.memory_space<vmem>>, vector<128x128xf32>,
    %104 = vector.extract_strided_slice %0 {offsets = [0, 6], sizes = [128, 1], strides = [1, 1]} : vector<128x16xf32> to vector<128x1xf32>
    %105 = vector.extract_strided_slice %13 {offsets = [0, 6], sizes = [128, 1], strides = [1, 1]} : vector<128x16xf32> to vector<128x1xf32>
    %106 = vector.broadcast %104 : vector<128x1xf32> to vector<128x128xf32>
    %107 = vector.broadcast %14 : vector<1x128xf32> to vector<128x128xf32>
    %108 = arith.subf %106, %107 : vector<128x128xf32>
    %c0_39 = arith.constant 0 : index
    %c0_40 = arith.constant 0 : index
    %109 = vector.load %arg11[%c0_39, %c0_40] : memref<128x128xf32, #tpu.memory_space<vmem>>, vector<128x128xf32>
    %110 = arith.mulf %108, %108 : vector<128x128xf32>
    %111 = vector.broadcast %17 : vector<1x128xf32> to vector<128x128xf32>
    %112 = arith.mulf %111, %110 : vector<128x128xf32>
    %113 = math.exp %112 : vector<128x128xf32>
    %114 = vector.broadcast %105 : vector<128x1xf32> to vector<128x128xf32>
    %115 = arith.mulf %114, %113 : vector<128x128xf32>
    %116 = arith.addf %109, %115 : vector<128x128xf32>
    %c0_41 = arith.constant 0 : index
    %c0_42 = arith.constant 0 : index
    %117 = vector.load %arg11[%c0_41, %c0_42] : memref<128x128xf32, #tpu.memory_space<vmem>>, vector<128x128xf32>
    tpu.vector_store %arg11[%c0_41, %c0_42], %116 {strides = array<i32>} : memref<128x128xf32, #tpu.memory_space<vmem>>, vector<128x128xf32>,
    %118 = vector.extract_strided_slice %0 {offsets = [0, 7], sizes = [128, 1], strides = [1, 1]} : vector<128x16xf32> to vector<128x1xf32>
    %119 = vector.extract_strided_slice %13 {offsets = [0, 7], sizes = [128, 1], strides = [1, 1]} : vector<128x16xf32> to vector<128x1xf32>
    %120 = vector.broadcast %118 : vector<128x1xf32> to vector<128x128xf32>
    %121 = vector.broadcast %14 : vector<1x128xf32> to vector<128x128xf32>
    %122 = arith.subf %120, %121 : vector<128x128xf32>
    %c0_43 = arith.constant 0 : index
    %c0_44 = arith.constant 0 : index
    %123 = vector.load %arg11[%c0_43, %c0_44] : memref<128x128xf32, #tpu.memory_space<vmem>>, vector<128x128xf32>
    %124 = arith.mulf %122, %122 : vector<128x128xf32>
    %125 = vector.broadcast %17 : vector<1x128xf32> to vector<128x128xf32>
    %126 = arith.mulf %125, %124 : vector<128x128xf32>
    %127 = math.exp %126 : vector<128x128xf32>
    %128 = vector.broadcast %119 : vector<128x1xf32> to vector<128x128xf32>
    %129 = arith.mulf %128, %127 : vector<128x128xf32>
    %130 = arith.addf %123, %129 : vector<128x128xf32>
    %c0_45 = arith.constant 0 : index
    %c0_46 = arith.constant 0 : index
    %131 = vector.load %arg11[%c0_45, %c0_46] : memref<128x128xf32, #tpu.memory_space<vmem>>, vector<128x128xf32>
    tpu.vector_store %arg11[%c0_45, %c0_46], %130 {strides = array<i32>} : memref<128x128xf32, #tpu.memory_space<vmem>>, vector<128x128xf32>,
    %132 = vector.extract_strided_slice %0 {offsets = [0, 8], sizes = [128, 1], strides = [1, 1]} : vector<128x16xf32> to vector<128x1xf32>
    %133 = vector.extract_strided_slice %13 {offsets = [0, 8], sizes = [128, 1], strides = [1, 1]} : vector<128x16xf32> to vector<128x1xf32>
    %134 = vector.broadcast %132 : vector<128x1xf32> to vector<128x128xf32>
    %135 = vector.broadcast %14 : vector<1x128xf32> to vector<128x128xf32>
    %136 = arith.subf %134, %135 : vector<128x128xf32>
    %c0_47 = arith.constant 0 : index
    %c0_48 = arith.constant 0 : index
    %137 = vector.load %arg11[%c0_47, %c0_48] : memref<128x128xf32, #tpu.memory_space<vmem>>, vector<128x128xf32>
    %138 = arith.mulf %136, %136 : vector<128x128xf32>
    %139 = vector.broadcast %17 : vector<1x128xf32> to vector<128x128xf32>
    %140 = arith.mulf %139, %138 : vector<128x128xf32>
    %141 = math.exp %140 : vector<128x128xf32>
    %142 = vector.broadcast %133 : vector<128x1xf32> to vector<128x128xf32>
    %143 = arith.mulf %142, %141 : vector<128x128xf32>
    %144 = arith.addf %137, %143 : vector<128x128xf32>
    %c0_49 = arith.constant 0 : index
    %c0_50 = arith.constant 0 : index
    %145 = vector.load %arg11[%c0_49, %c0_50] : memref<128x128xf32, #tpu.memory_space<vmem>>, vector<128x128xf32>
    tpu.vector_store %arg11[%c0_49, %c0_50], %144 {strides = array<i32>} : memref<128x128xf32, #tpu.memory_space<vmem>>, vector<128x128xf32>,
    %146 = vector.extract_strided_slice %0 {offsets = [0, 9], sizes = [128, 1], strides = [1, 1]} : vector<128x16xf32> to vector<128x1xf32>
    %147 = vector.extract_strided_slice %13 {offsets = [0, 9], sizes = [128, 1], strides = [1, 1]} : vector<128x16xf32> to vector<128x1xf32>
    %148 = vector.broadcast %146 : vector<128x1xf32> to vector<128x128xf32>
    %149 = vector.broadcast %14 : vector<1x128xf32> to vector<128x128xf32>
    %150 = arith.subf %148, %149 : vector<128x128xf32>
    %c0_51 = arith.constant 0 : index
    %c0_52 = arith.constant 0 : index
    %151 = vector.load %arg11[%c0_51, %c0_52] : memref<128x128xf32, #tpu.memory_space<vmem>>, vector<128x128xf32>
    %152 = arith.mulf %150, %150 : vector<128x128xf32>
    %153 = vector.broadcast %17 : vector<1x128xf32> to vector<128x128xf32>
    %154 = arith.mulf %153, %152 : vector<128x128xf32>
    %155 = math.exp %154 : vector<128x128xf32>
    %156 = vector.broadcast %147 : vector<128x1xf32> to vector<128x128xf32>
    %157 = arith.mulf %156, %155 : vector<128x128xf32>
    %158 = arith.addf %151, %157 : vector<128x128xf32>
    %c0_53 = arith.constant 0 : index
    %c0_54 = arith.constant 0 : index
    %159 = vector.load %arg11[%c0_53, %c0_54] : memref<128x128xf32, #tpu.memory_space<vmem>>, vector<128x128xf32>
    tpu.vector_store %arg11[%c0_53, %c0_54], %158 {strides = array<i32>} : memref<128x128xf32, #tpu.memory_space<vmem>>, vector<128x128xf32>,
    %160 = vector.extract_strided_slice %0 {offsets = [0, 10], sizes = [128, 1], strides = [1, 1]} : vector<128x16xf32> to vector<128x1xf32>
    %161 = vector.extract_strided_slice %13 {offsets = [0, 10], sizes = [128, 1], strides = [1, 1]} : vector<128x16xf32> to vector<128x1xf32>
    %162 = vector.broadcast %160 : vector<128x1xf32> to vector<128x128xf32>
    %163 = vector.broadcast %14 : vector<1x128xf32> to vector<128x128xf32>
    %164 = arith.subf %162, %163 : vector<128x128xf32>
    %c0_55 = arith.constant 0 : index
    %c0_56 = arith.constant 0 : index
    %165 = vector.load %arg11[%c0_55, %c0_56] : memref<128x128xf32, #tpu.memory_space<vmem>>, vector<128x128xf32>
    %166 = arith.mulf %164, %164 : vector<128x128xf32>
    %167 = vector.broadcast %17 : vector<1x128xf32> to vector<128x128xf32>
    %168 = arith.mulf %167, %166 : vector<128x128xf32>
    %169 = math.exp %168 : vector<128x128xf32>
    %170 = vector.broadcast %161 : vector<128x1xf32> to vector<128x128xf32>
    %171 = arith.mulf %170, %169 : vector<128x128xf32>
    %172 = arith.addf %165, %171 : vector<128x128xf32>
    %c0_57 = arith.constant 0 : index
    %c0_58 = arith.constant 0 : index
    %173 = vector.load %arg11[%c0_57, %c0_58] : memref<128x128xf32, #tpu.memory_space<vmem>>, vector<128x128xf32>
    tpu.vector_store %arg11[%c0_57, %c0_58], %172 {strides = array<i32>} : memref<128x128xf32, #tpu.memory_space<vmem>>, vector<128x128xf32>,
    %174 = vector.extract_strided_slice %0 {offsets = [0, 11], sizes = [128, 1], strides = [1, 1]} : vector<128x16xf32> to vector<128x1xf32>
    %175 = vector.extract_strided_slice %13 {offsets = [0, 11], sizes = [128, 1], strides = [1, 1]} : vector<128x16xf32> to vector<128x1xf32>
    %176 = vector.broadcast %174 : vector<128x1xf32> to vector<128x128xf32>
    %177 = vector.broadcast %14 : vector<1x128xf32> to vector<128x128xf32>
    %178 = arith.subf %176, %177 : vector<128x128xf32>
    %c0_59 = arith.constant 0 : index
    %c0_60 = arith.constant 0 : index
    %179 = vector.load %arg11[%c0_59, %c0_60] : memref<128x128xf32, #tpu.memory_space<vmem>>, vector<128x128xf32>
    %180 = arith.mulf %178, %178 : vector<128x128xf32>
    %181 = vector.broadcast %17 : vector<1x128xf32> to vector<128x128xf32>
    %182 = arith.mulf %181, %180 : vector<128x128xf32>
    %183 = math.exp %182 : vector<128x128xf32>
    %184 = vector.broadcast %175 : vector<128x1xf32> to vector<128x128xf32>
    %185 = arith.mulf %184, %183 : vector<128x128xf32>
    %186 = arith.addf %179, %185 : vector<128x128xf32>
    %c0_61 = arith.constant 0 : index
    %c0_62 = arith.constant 0 : index
    %187 = vector.load %arg11[%c0_61, %c0_62] : memref<128x128xf32, #tpu.memory_space<vmem>>, vector<128x128xf32>
    tpu.vector_store %arg11[%c0_61, %c0_62], %186 {strides = array<i32>} : memref<128x128xf32, #tpu.memory_space<vmem>>, vector<128x128xf32>,
    %188 = vector.extract_strided_slice %0 {offsets = [0, 12], sizes = [128, 1], strides = [1, 1]} : vector<128x16xf32> to vector<128x1xf32>
    %189 = vector.extract_strided_slice %13 {offsets = [0, 12], sizes = [128, 1], strides = [1, 1]} : vector<128x16xf32> to vector<128x1xf32>
    %190 = vector.broadcast %188 : vector<128x1xf32> to vector<128x128xf32>
    %191 = vector.broadcast %14 : vector<1x128xf32> to vector<128x128xf32>
    %192 = arith.subf %190, %191 : vector<128x128xf32>
    %c0_63 = arith.constant 0 : index
    %c0_64 = arith.constant 0 : index
    %193 = vector.load %arg11[%c0_63, %c0_64] : memref<128x128xf32, #tpu.memory_space<vmem>>, vector<128x128xf32>
    %194 = arith.mulf %192, %192 : vector<128x128xf32>
    %195 = vector.broadcast %17 : vector<1x128xf32> to vector<128x128xf32>
    %196 = arith.mulf %195, %194 : vector<128x128xf32>
    %197 = math.exp %196 : vector<128x128xf32>
    %198 = vector.broadcast %189 : vector<128x1xf32> to vector<128x128xf32>
    %199 = arith.mulf %198, %197 : vector<128x128xf32>
    %200 = arith.addf %193, %199 : vector<128x128xf32>
    %c0_65 = arith.constant 0 : index
    %c0_66 = arith.constant 0 : index
    %201 = vector.load %arg11[%c0_65, %c0_66] : memref<128x128xf32, #tpu.memory_space<vmem>>, vector<128x128xf32>
    tpu.vector_store %arg11[%c0_65, %c0_66], %200 {strides = array<i32>} : memref<128x128xf32, #tpu.memory_space<vmem>>, vector<128x128xf32>,
    %202 = vector.extract_strided_slice %0 {offsets = [0, 13], sizes = [128, 1], strides = [1, 1]} : vector<128x16xf32> to vector<128x1xf32>
    %203 = vector.extract_strided_slice %13 {offsets = [0, 13], sizes = [128, 1], strides = [1, 1]} : vector<128x16xf32> to vector<128x1xf32>
    %204 = vector.broadcast %202 : vector<128x1xf32> to vector<128x128xf32>
    %205 = vector.broadcast %14 : vector<1x128xf32> to vector<128x128xf32>
    %206 = arith.subf %204, %205 : vector<128x128xf32>
    %c0_67 = arith.constant 0 : index
    %c0_68 = arith.constant 0 : index
    %207 = vector.load %arg11[%c0_67, %c0_68] : memref<128x128xf32, #tpu.memory_space<vmem>>, vector<128x128xf32>
    %208 = arith.mulf %206, %206 : vector<128x128xf32>
    %209 = vector.broadcast %17 : vector<1x128xf32> to vector<128x128xf32>
    %210 = arith.mulf %209, %208 : vector<128x128xf32>
    %211 = math.exp %210 : vector<128x128xf32>
    %212 = vector.broadcast %203 : vector<128x1xf32> to vector<128x128xf32>
    %213 = arith.mulf %212, %211 : vector<128x128xf32>
    %214 = arith.addf %207, %213 : vector<128x128xf32>
    %c0_69 = arith.constant 0 : index
    %c0_70 = arith.constant 0 : index
    %215 = vector.load %arg11[%c0_69, %c0_70] : memref<128x128xf32, #tpu.memory_space<vmem>>, vector<128x128xf32>
    tpu.vector_store %arg11[%c0_69, %c0_70], %214 {strides = array<i32>} : memref<128x128xf32, #tpu.memory_space<vmem>>, vector<128x128xf32>,
    %216 = vector.extract_strided_slice %0 {offsets = [0, 14], sizes = [128, 1], strides = [1, 1]} : vector<128x16xf32> to vector<128x1xf32>
    %217 = vector.extract_strided_slice %13 {offsets = [0, 14], sizes = [128, 1], strides = [1, 1]} : vector<128x16xf32> to vector<128x1xf32>
    %218 = vector.broadcast %216 : vector<128x1xf32> to vector<128x128xf32>
    %219 = vector.broadcast %14 : vector<1x128xf32> to vector<128x128xf32>
    %220 = arith.subf %218, %219 : vector<128x128xf32>
    %c0_71 = arith.constant 0 : index
    %c0_72 = arith.constant 0 : index
    %221 = vector.load %arg11[%c0_71, %c0_72] : memref<128x128xf32, #tpu.memory_space<vmem>>, vector<128x128xf32>
    %222 = arith.mulf %220, %220 : vector<128x128xf32>
    %223 = vector.broadcast %17 : vector<1x128xf32> to vector<128x128xf32>
    %224 = arith.mulf %223, %222 : vector<128x128xf32>
    %225 = math.exp %224 : vector<128x128xf32>
    %226 = vector.broadcast %217 : vector<128x1xf32> to vector<128x128xf32>
    %227 = arith.mulf %226, %225 : vector<128x128xf32>
    %228 = arith.addf %221, %227 : vector<128x128xf32>
    %c0_73 = arith.constant 0 : index
    %c0_74 = arith.constant 0 : index
    %229 = vector.load %arg11[%c0_73, %c0_74] : memref<128x128xf32, #tpu.memory_space<vmem>>, vector<128x128xf32>
    tpu.vector_store %arg11[%c0_73, %c0_74], %228 {strides = array<i32>} : memref<128x128xf32, #tpu.memory_space<vmem>>, vector<128x128xf32>,
    %230 = vector.extract_strided_slice %0 {offsets = [0, 15], sizes = [128, 1], strides = [1, 1]} : vector<128x16xf32> to vector<128x1xf32>
    %231 = vector.extract_strided_slice %13 {offsets = [0, 15], sizes = [128, 1], strides = [1, 1]} : vector<128x16xf32> to vector<128x1xf32>
    %232 = vector.broadcast %230 : vector<128x1xf32> to vector<128x128xf32>
    %233 = vector.broadcast %14 : vector<1x128xf32> to vector<128x128xf32>
    %234 = arith.subf %232, %233 : vector<128x128xf32>
    %c0_75 = arith.constant 0 : index
    %c0_76 = arith.constant 0 : index
    %235 = vector.load %arg11[%c0_75, %c0_76] : memref<128x128xf32, #tpu.memory_space<vmem>>, vector<128x128xf32>
    %236 = arith.mulf %234, %234 : vector<128x128xf32>
    %237 = vector.broadcast %17 : vector<1x128xf32> to vector<128x128xf32>
    %238 = arith.mulf %237, %236 : vector<128x128xf32>
    %239 = math.exp %238 : vector<128x128xf32>
    %240 = vector.broadcast %231 : vector<128x1xf32> to vector<128x128xf32>
    %241 = arith.mulf %240, %239 : vector<128x128xf32>
    %242 = arith.addf %235, %241 : vector<128x128xf32>
    %c0_77 = arith.constant 0 : index
    %c0_78 = arith.constant 0 : index
    %243 = vector.load %arg11[%c0_77, %c0_78] : memref<128x128xf32, #tpu.memory_space<vmem>>, vector<128x128xf32>
    tpu.vector_store %arg11[%c0_77, %c0_78], %242 {strides = array<i32>} : memref<128x128xf32, #tpu.memory_space<vmem>>, vector<128x128xf32>,
    %c0_79 = arith.constant 0 : index
    %c0_80 = arith.constant 0 : index
    %244 = vector.load %arg11[%c0_79, %c0_80] : memref<128x128xf32, #tpu.memory_space<vmem>>, vector<128x128xf32>
    %c0_81 = arith.constant 0 : index
    %c0_82 = arith.constant 0 : index
    %245 = vector.load %arg3[%c0_81, %c0_82] : memref<128x1xi32, #tpu.memory_space<vmem>>, vector<128x1xi32>
    %246 = tpu.iota {dimensions = array<i32: 1>} : vector<1x8xi32>
    %247 = vector.broadcast %245 : vector<128x1xi32> to vector<128x8xi32>
    %248 = vector.broadcast %246 : vector<1x8xi32> to vector<128x8xi32>
    %249 = arith.cmpi eq, %247, %248 : vector<128x8xi32>
    %250 = arith.extui %249 : vector<128x8xi1> to vector<128x8xi32>
    %251 = arith.sitofp %250 : vector<128x8xi32> to vector<128x8xf32>
    %c0_83 = arith.constant 0 : index
    %c0_84 = arith.constant 0 : index
    %252 = vector.load %arg6[%c0_83, %c0_84] : memref<8x128xf32, #tpu.memory_space<vmem>>, vector<8x128xf32>
    %cst_85 = arith.constant dense<0.000000e+00> : vector<128x128xf32>
    %253 = tpu.matmul %251, %252, %cst_85 {dimension_numbers = #tpu.dot_dimension_numbers<[1], [0], [0], [1], [0, 0, 1, 1], [], []>} : vector<128x8xf32>, vector<8x128xf32>, vector<128x128xf32> -> vector<128x128xf32>
    %254 = arith.truncf %244 : vector<128x128xf32> to vector<128x128xbf16>
    %c0_86 = arith.constant 0 : index
    %c0_87 = arith.constant 0 : index
    %255 = vector.load %arg7[%c0_86, %c0_87] : memref<128x128xbf16, #tpu.memory_space<vmem>>, vector<128x128xbf16>
    %cst_88 = arith.constant dense<0.000000e+00> : vector<128x128xf32>
    %256 = tpu.matmul %254, %255, %cst_88 {dimension_numbers = #tpu.dot_dimension_numbers<[1], [0], [0], [1], [0, 0, 1, 1], [], []>} : vector<128x128xbf16>, vector<128x128xbf16>, vector<128x128xf32> -> vector<128x128xf32>
    %257 = arith.addf %256, %253 : vector<128x128xf32>
    %258 = math.tanh %257 : vector<128x128xf32>
    %259 = arith.truncf %258 : vector<128x128xf32> to vector<128x128xbf16>
    %c0_89 = arith.constant 0 : index
    %c0_90 = arith.constant 0 : index
    %260 = vector.load %arg8[%c0_89, %c0_90] : memref<128x128xbf16, #tpu.memory_space<vmem>>, vector<128x128xbf16>
    %cst_91 = arith.constant dense<0.000000e+00> : vector<128x128xf32>
    %261 = tpu.matmul %259, %260, %cst_91 {dimension_numbers = #tpu.dot_dimension_numbers<[1], [0], [0], [1], [0, 0, 1, 1], [], []>} : vector<128x128xbf16>, vector<128x128xbf16>, vector<128x128xf32> -> vector<128x128xf32>
    %c0_92 = arith.constant 0 : index
    %c0_93 = arith.constant 0 : index
    %262 = vector.load %arg9[%c0_92, %c0_93] : memref<1x128xf32, #tpu.memory_space<vmem>>, vector<1x128xf32>
    %263 = vector.broadcast %262 : vector<1x128xf32> to vector<128x128xf32>
    %264 = arith.addf %261, %263 : vector<128x128xf32>
    %c0_i32 = arith.constant 0 : i32
    %265 = vector.broadcast %c0_i32 : i32 to vector<128x1xi32>
    %266 = arith.cmpi sge, %245, %265 : vector<128x1xi32>
    %267 = arith.extui %266 : vector<128x1xi1> to vector<128x1xi32>
    %268 = arith.sitofp %267 : vector<128x1xi32> to vector<128x1xf32>
    %269 = vector.broadcast %268 : vector<128x1xf32> to vector<128x128xf32>
    %270 = arith.mulf %264, %269 : vector<128x128xf32>
    %c0_94 = arith.constant 0 : index
    %c0_95 = arith.constant 0 : index
    %271 = vector.load %arg10[%c0_94, %c0_95] : memref<128x128xf32, #tpu.memory_space<vmem>>, vector<128x128xf32>
    tpu.vector_store %arg10[%c0_94, %c0_95], %270 {strides = array<i32>} : memref<128x128xf32, #tpu.memory_space<vmem>>, vector<128x128xf32>,
    return
  }
  func.func @transform_0(%arg0: i32) -> (i32, i32) {
    %c0_i32 = arith.constant 0 : i32
    %c0_i32_0 = arith.constant 0 : i32
    return %arg0, %c0_i32 : i32, i32
  }
  func.func @transform_1(%arg0: i32) -> (i32, i32) {
    %c0_i32 = arith.constant 0 : i32
    %c0_i32_0 = arith.constant 0 : i32
    return %arg0, %c0_i32 : i32, i32
  }
  func.func @transform_2(%arg0: i32) -> (i32, i32) {
    %c0_i32 = arith.constant 0 : i32
    %c0_i32_0 = arith.constant 0 : i32
    return %arg0, %c0_i32 : i32, i32
  }
  func.func @transform_3(%arg0: i32) -> (i32, i32) {
    %c0_i32 = arith.constant 0 : i32
    %c0_i32_0 = arith.constant 0 : i32
    %c0_i32_1 = arith.constant 0 : i32
    return %c0_i32, %c0_i32_0 : i32, i32
  }
  func.func @transform_4(%arg0: i32) -> (i32, i32) {
    %c0_i32 = arith.constant 0 : i32
    %c0_i32_0 = arith.constant 0 : i32
    %c0_i32_1 = arith.constant 0 : i32
    return %c0_i32, %c0_i32_0 : i32, i32
  }
  func.func @transform_5(%arg0: i32) -> (i32, i32) {
    %c0_i32 = arith.constant 0 : i32
    %c0_i32_0 = arith.constant 0 : i32
    %c0_i32_1 = arith.constant 0 : i32
    return %c0_i32, %c0_i32_0 : i32, i32
  }
  func.func @transform_6(%arg0: i32) -> (i32, i32) {
    %c0_i32 = arith.constant 0 : i32
    %c0_i32_0 = arith.constant 0 : i32
    %c0_i32_1 = arith.constant 0 : i32
    return %c0_i32, %c0_i32_0 : i32, i32
  }
  func.func @transform_7(%arg0: i32) -> (i32, i32) {
    %c0_i32 = arith.constant 0 : i32
    %c0_i32_0 = arith.constant 0 : i32
    %c0_i32_1 = arith.constant 0 : i32
    return %c0_i32, %c0_i32_0 : i32, i32
  }
  func.func @transform_8(%arg0: i32) -> (i32, i32) {
    %c0_i32 = arith.constant 0 : i32
    %c0_i32_0 = arith.constant 0 : i32
    %c0_i32_1 = arith.constant 0 : i32
    return %c0_i32, %c0_i32_0 : i32, i32
  }
  func.func @transform_9(%arg0: i32) -> (i32, i32) {
    %c0_i32 = arith.constant 0 : i32
    %c0_i32_0 = arith.constant 0 : i32
    return %arg0, %c0_i32 : i32, i32
  }
}

</mosaic_0001>

<llo_original>
// kernel: property_forward.1
$region0: #{property_forward.1}
  #allocation0 [shape = 'u32[]', space=smem, size = 0x4, offset = 0x4, fixed_abs, tag = 'smem constant byte address 0x4 - core index']
  #allocation1 [shape = 'u32[144,128]{1,0:T(1,128)}', space=vmem, size = 0x12000, scoped, tag = 'internal scratch']
  #allocation2 [shape = 'f32[128,128]{1,0:T(8,128)}', space=vmem, size = 0x10000, scoped, tag = 'scratch operand']
  %s0 = inlined_call_operand.vmem [shape: f32[128,16], index: 0, kind: input, shape index: {}]
  %s1 = inlined_call_operand.vmem [shape: f32[128,16], index: 1, kind: input, shape index: {}]
  %s2 = inlined_call_operand.vmem [shape: s32[128,1], index: 2, kind: input, shape index: {}]
  %s3 = inlined_call_operand.vmem [shape: f32[1,128], index: 3, kind: input, shape index: {}]
  %s4 = inlined_call_operand.vmem [shape: f32[1,128], index: 4, kind: input, shape index: {}]
  %s5 = inlined_call_operand.vmem [shape: f32[8,128], index: 5, kind: input, shape index: {}]
  %s6 = inlined_call_operand.vmem [shape: bf16[128,128], index: 6, kind: input, shape index: {}]
  %s7 = inlined_call_operand.vmem [shape: bf16[128,128], index: 7, kind: input, shape index: {}]
  %s8 = inlined_call_operand.vmem [shape: f32[1,128], index: 8, kind: input, shape index: {}]
  %s9 = inlined_call_operand.vmem [shape: f32[128,128], index: 9, kind: output, shape index: {}]
  %s10 = sld [smem:[#allocation0]]
  $region46: #{property_forward.1} parent=0
    _
  %s12 = ssub.s32 1, %s10
  %s13 = scalar_select 0, %s12, %s10
  // Predicated region
  $region2: #{property_forward.1} parent=0 // pred_check
    _
  $region3: #{property_forward.1} parent=0 // pred_check_branch
    %15 = sbr.rel (0) target = $region5
  $region4: #{property_forward.1} parent=0 // pred_region
    _
  $region5: #{property_forward.1} parent=0 // pred_fallthru
    _
  // Predicated region
  $region6: #{property_forward.1} parent=0 // pred_check
    _
  $region7: #{property_forward.1} parent=0 // pred_check_branch
    %17 = sbr.rel (0) target = $region9
  $region8: #{property_forward.1} parent=0 // pred_region
    _
  $region9: #{property_forward.1} parent=0 // pred_fallthru
    _
  // Predicated region
  $region10: #{property_forward.1} parent=0 // pred_check
    _
  $region11: #{property_forward.1} parent=0 // pred_check_branch
    %19 = sbr.rel (0) target = $region13
  $region12: #{property_forward.1} parent=0 // pred_region
    _
  $region13: #{property_forward.1} parent=0 // pred_fallthru
    _
  // Predicated region
  $region14: #{property_forward.1} parent=0 // pred_check
    _
  $region15: #{property_forward.1} parent=0 // pred_check_branch
    %21 = sbr.rel (0) target = $region17
  $region16: #{property_forward.1} parent=0 // pred_region
    _
  $region17: #{property_forward.1} parent=0 // pred_fallthru
    _
  // Predicated region
  $region18: #{property_forward.1} parent=0 // pred_check
    _
  $region19: #{property_forward.1} parent=0 // pred_check_branch
    %23 = sbr.rel (0) target = $region21
  $region20: #{property_forward.1} parent=0 // pred_region
    _
  $region21: #{property_forward.1} parent=0 // pred_fallthru
    _
  // Predicated region
  $region22: #{property_forward.1} parent=0 // pred_check
    _
  $region23: #{property_forward.1} parent=0 // pred_check_branch
    %25 = sbr.rel (0) target = $region25
  $region24: #{property_forward.1} parent=0 // pred_region
    _
  $region25: #{property_forward.1} parent=0 // pred_fallthru
    _
  // Predicated region
  $region26: #{property_forward.1} parent=0 // pred_check
    _
  $region27: #{property_forward.1} parent=0 // pred_check_branch
    %27 = sbr.rel (0) target = $region29
  $region28: #{property_forward.1} parent=0 // pred_region
    _
  $region29: #{property_forward.1} parent=0 // pred_fallthru
    _
  // Predicated region
  $region30: #{property_forward.1} parent=0 // pred_check
    _
  $region31: #{property_forward.1} parent=0 // pred_check_branch
    %29 = sbr.rel (0) target = $region33
  $region32: #{property_forward.1} parent=0 // pred_region
    _
  $region33: #{property_forward.1} parent=0 // pred_fallthru
    _
  // Predicated region
  $region34: #{property_forward.1} parent=0 // pred_check
    _
  $region35: #{property_forward.1} parent=0 // pred_check_branch
    %31 = sbr.rel (0) target = $region37
  $region36: #{property_forward.1} parent=0 // pred_region
    _
  $region37: #{property_forward.1} parent=0 // pred_fallthru
    _
  %v33 = vld [vmem:[%s0] sm:$0xff]
  %v34 = vld [vmem:[%s0 + $0x8] sm:$0xff]
  %v35 = vld [vmem:[%s0 + $0x10] sm:$0xff]
  %v36 = vld [vmem:[%s0 + $0x18] sm:$0xff]
  %v37 = vld [vmem:[%s0 + $0x20] sm:$0xff]
  %v38 = vld [vmem:[%s0 + $0x28] sm:$0xff]
  %v39 = vld [vmem:[%s0 + $0x30] sm:$0xff]
  %v40 = vld [vmem:[%s0 + $0x38] sm:$0xff]
  %v41 = vld [vmem:[%s0 + $0x40] sm:$0xff]
  %v42 = vld [vmem:[%s0 + $0x48] sm:$0xff]
  %v43 = vld [vmem:[%s0 + $0x50] sm:$0xff]
  %v44 = vld [vmem:[%s0 + $0x58] sm:$0xff]
  %v45 = vld [vmem:[%s0 + $0x60] sm:$0xff]
  %v46 = vld [vmem:[%s0 + $0x68] sm:$0xff]
  %v47 = vld [vmem:[%s0 + $0x70] sm:$0xff]
  %v48 = vld [vmem:[%s0 + $0x78] sm:$0xff]
  %v49 = vmul.f32 %v33, 0.7853982
  %v50 = vmul.f32 %v34, 0.7853982
  %v51 = vmul.f32 %v35, 0.7853982
  %v52 = vmul.f32 %v36, 0.7853982
  %v53 = vmul.f32 %v37, 0.7853982
  %v54 = vmul.f32 %v38, 0.7853982
  %v55 = vmul.f32 %v39, 0.7853982
  %v56 = vmul.f32 %v40, 0.7853982
  %v57 = vmul.f32 %v41, 0.7853982
  %v58 = vmul.f32 %v42, 0.7853982
  %v59 = vmul.f32 %v43, 0.7853982
  %v60 = vmul.f32 %v44, 0.7853982
  %v61 = vmul.f32 %v45, 0.7853982
  %v62 = vmul.f32 %v46, 0.7853982
  %v63 = vmul.f32 %v47, 0.7853982
  %v64 = vmul.f32 %v48, 0.7853982
  %v65 = vand.u32 2147483647, %v49
  %vm66 = vcmp.le.f32.partialorder %v65, 0.7853982
  %vm67 = vcmp.lt.s32.totalorder %v49, 0
  %v68 = vand.u32 %v49, 2139095040
  %v69 = vshrl.u32 %v68, 23
  %v70 = vsub.s32 %v69, 127
  %v71 = vand.u32 2147483647, %v49
  %v72 = vand.u32 %v71, 8388607
  %v73 = vor.u32 %v72, 8388608
  %v74 = vsub.s32 0, %v73
  %v75 = vadd.s32 %v70, 1
  %vm76 = vcmp.gt.s32.totalorder %v75, 0
  %v77 = vsel %vm76, %v75, 0
  %v78 = vshrl.u32 %v77, 5
  %v79 = vand.u32 %v77, 31
  %v80 = vsub.s32 32, %v79
  %v81 = vshrl.u32 683565275, %v80
  %v82 = vshll.u32 683565275, %v79
  %v83 = vshrl.u32 2475754826, %v80
  %v84 = vor.u32 %v82, %v83
  %v85 = vshll.u32 2475754826, %v79
  %v86 = vshrl.u32 2131351028, %v80
  %v87 = vor.u32 %v85, %v86
  %v88 = vshll.u32 2131351028, %v79
  %v89 = vshrl.u32 2102212464, %v80
  %v90 = vor.u32 %v88, %v89
  %v91 = vshll.u32 2102212464, %v79
  %v92 = vshrl.u32 920167782, %v80
  %v93 = vor.u32 %v91, %v92
  %v94 = vshll.u32 920167782, %v79
  %v95 = vshrl.u32 1326507024, %v80
  %v96 = vor.u32 %v94, %v95
  %vm97 = vcmp.lt.s32.totalorder %v78, 1
  %vm98 = vcmp.lt.s32.totalorder %v78, 2
  %vm99 = vcmp.lt.s32.totalorder %v78, 3
  %vm100 = vcmp.lt.s32.totalorder %v78, 4
  %v101 = vsel %vm97, %v81, %v84
  %v102 = vsel %vm100, %v90, 2102212464
  %v103 = vsel %vm99, %v87, %v102
  %v104 = vsel %vm98, %v101, %v103
  %v105 = vsel %vm97, %v84, %v87
  %v106 = vsel %vm100, %v93, 920167782
  %v107 = vsel %vm99, %v90, %v106
  %v108 = vsel %vm98, %v105, %v107
  %v109 = vsel %vm97, %v87, %v90
  %v110 = vsel %vm100, %v96, 1326507024
  %v111 = vsel %vm99, %v93, %v110
  %v112 = vsel %vm98, %v109, %v111
  %v113 = vshll.u32 %v73, 8
  %v114 = vmul.u32.u64.compose %v113, %v112
  %v115 = vextract.low.u32 %v114
  %v116 = vextract.high.u32 %v114
  %v117 = vmul.u32.u64.compose %v113, %v108
  %v118 = vextract.low.u32 %v117
  %v119 = vextract.high.u32 %v117
  %v120 = vmul.u32 %v113, %v104
  %v121 = vadd.s32 %v116, %v118
  %vm122 = vc.u32 %v116, %v118
  %v123 = vadd.s32 %v119, 1
  %v124 = vsel %vm122, %v123, %v119
  %v125 = vadd.s32 %v120, %v124
  %v126 = vadd.s32 %v125, 536870912
  %v127 = vshrl.u32 %v126, 30
  %v128 = vshll.u32 %v127, 30
  %v129 = vsub.s32 %v125, %v128
  %vm130 = vcmp.lt.s32.totalorder %v129, 0
  %v131 = vsub.s32 0, %v129
  %v132 = vsel %vm130, %v131, %v129
  %v133 = vclz %v132
  %v134 = vsub.s32 %v133, 2
  %vm135 = vcmp.gt.s32.totalorder 0, %v134
  %v136 = vsel %vm135, 0, %v134
  %v137 = vsub.s32 32, %v136
  %v138 = vshll.u32 %v129, %v136
  %v139 = vshrl.u32 %v121, %v137
  %v140 = vor.u32 %v138, %v139
  %v141 = vsub.s32 4294967266, %v136
  %v142 = vadd.s32 %v141, 127
  %v143 = vshll.u32 %v142, 23
  %v144 = vor.u32 4788187, %v143
  %v145 = vand.u32 2147483647, %v144
  %v147 = vcvt.s32.f32 %v140
  %v148 = vmul.f32 %v147, %v145
  %v149 = vxor.u32 %v148, 2147483648
  %v150 = vsel %vm67, %v149, %v148
  %v151 = vsub.s32 4, %v127
  %v152 = vsel %vm67, %v151, %v127
  %v153 = vsel %vm66, %v49, %v150
  %v154 = vsel %vm66, 0, %v152
  %v155 = vcosq.f32.pop %v153
  %v156 = vsinq.f32.pop %v153
  %vm157 = vweird.f32 %v49
  %v158 = vand.u32 %v154, 3
  %vm159 = vcmp.lt.s32.totalorder %v158, 2
  %vm160 = vcmp.eq.s32.totalorder %v158, 0
  %v161 = vxor.u32 %v156, 2147483648
  %v162 = vsel %vm160, %v155, %v161
  %vm163 = vcmp.eq.s32.totalorder %v158, 2
  %v164 = vxor.u32 %v155, 2147483648
  %v165 = vsel %vm163, %v164, %v156
  %v166 = vsel %vm159, %v162, %v165
  %v167 = vsel %vm157, nan, %v166
  %v168 = vand.u32 2147483647, %v50
  %vm169 = vcmp.le.f32.partialorder %v168, 0.7853982
  %vm170 = vcmp.lt.s32.totalorder %v50, 0
  %v171 = vand.u32 %v50, 2139095040
  %v172 = vshrl.u32 %v171, 23
  %v173 = vsub.s32 %v172, 127
  %v174 = vand.u32 2147483647, %v50
  %v175 = vand.u32 %v174, 8388607
  %v176 = vor.u32 %v175, 8388608
  %v177 = vsub.s32 0, %v176
  %v178 = vadd.s32 %v173, 1
  %vm179 = vcmp.gt.s32.totalorder %v178, 0
  %v180 = vsel %vm179, %v178, 0
  %v181 = vshrl.u32 %v180, 5
  %v182 = vand.u32 %v180, 31
  %v183 = vsub.s32 32, %v182
  %v184 = vshrl.u32 683565275, %v183
  %v185 = vshll.u32 683565275, %v182
  %v186 = vshrl.u32 2475754826, %v183
  %v187 = vor.u32 %v185, %v186
  %v188 = vshll.u32 2475754826, %v182
  %v189 = vshrl.u32 2131351028, %v183
  %v190 = vor.u32 %v188, %v189
  %v191 = vshll.u32 2131351028, %v182
  %v192 = vshrl.u32 2102212464, %v183
  %v193 = vor.u32 %v191, %v192
  %v194 = vshll.u32 2102212464, %v182
  %v195 = vshrl.u32 920167782, %v183
  %v196 = vor.u32 %v194, %v195
  %v197 = vshll.u32 920167782, %v182
  %v198 = vshrl.u32 1326507024, %v183
  %v199 = vor.u32 %v197, %v198
  %vm200 = vcmp.lt.s32.totalorder %v181, 1
  %vm201 = vcmp.lt.s32.totalorder %v181, 2
  %vm202 = vcmp.lt.s32.totalorder %v181, 3
  %vm203 = vcmp.lt.s32.totalorder %v181, 4
  %v204 = vsel %vm200, %v184, %v187
  %v205 = vsel %vm203, %v193, 2102212464
  %v206 = vsel %vm202, %v190, %v205
  %v207 = vsel %vm201, %v204, %v206
  %v208 = vsel %vm200, %v187, %v190
  %v209 = vsel %vm203, %v196, 920167782
  %v210 = vsel %vm202, %v193, %v209
  %v211 = vsel %vm201, %v208, %v210
  %v212 = vsel %vm200, %v190, %v193
  %v213 = vsel %vm203, %v199, 1326507024
  %v214 = vsel %vm202, %v196, %v213
  %v215 = vsel %vm201, %v212, %v214
  %v216 = vshll.u32 %v176, 8
  %v217 = vmul.u32.u64.compose %v216, %v215
  %v218 = vextract.low.u32 %v217
  %v219 = vextract.high.u32 %v217
  %v220 = vmul.u32.u64.compose %v216, %v211
  %v221 = vextract.low.u32 %v220
  %v222 = vextract.high.u32 %v220
  %v223 = vmul.u32 %v216, %v207
  %v224 = vadd.s32 %v219, %v221
  %vm225 = vc.u32 %v219, %v221
  %v226 = vadd.s32 %v222, 1
  %v227 = vsel %vm225, %v226, %v222
  %v228 = vadd.s32 %v223, %v227
  %v229 = vadd.s32 %v228, 536870912
  %v230 = vshrl.u32 %v229, 30
  %v231 = vshll.u32 %v230, 30
  %v232 = vsub.s32 %v228, %v231
  %vm233 = vcmp.lt.s32.totalorder %v232, 0
  %v234 = vsub.s32 0, %v232
  %v235 = vsel %vm233, %v234, %v232
  %v236 = vclz %v235
  %v237 = vsub.s32 %v236, 2
  %vm238 = vcmp.gt.s32.totalorder 0, %v237
  %v239 = vsel %vm238, 0, %v237
  %v240 = vsub.s32 32, %v239
  %v241 = vshll.u32 %v232, %v239
  %v242 = vshrl.u32 %v224, %v240
  %v243 = vor.u32 %v241, %v242
  %v244 = vsub.s32 4294967266, %v239
  %v245 = vadd.s32 %v244, 127
  %v246 = vshll.u32 %v245, 23
  %v247 = vor.u32 4788187, %v246
  %v248 = vand.u32 2147483647, %v247
  %v250 = vcvt.s32.f32 %v243
  %v251 = vmul.f32 %v250, %v248
  %v252 = vxor.u32 %v251, 2147483648
  %v253 = vsel %vm170, %v252, %v251
  %v254 = vsub.s32 4, %v230
  %v255 = vsel %vm170, %v254, %v230
  %v256 = vsel %vm169, %v50, %v253
  %v257 = vsel %vm169, 0, %v255
  %v258 = vcosq.f32.pop %v256
  %v259 = vsinq.f32.pop %v256
  %vm260 = vweird.f32 %v50
  %v261 = vand.u32 %v257, 3
  %vm262 = vcmp.lt.s32.totalorder %v261, 2
  %vm263 = vcmp.eq.s32.totalorder %v261, 0
  %v264 = vxor.u32 %v259, 2147483648
  %v265 = vsel %vm263, %v258, %v264
  %vm266 = vcmp.eq.s32.totalorder %v261, 2
  %v267 = vxor.u32 %v258, 2147483648
  %v268 = vsel %vm266, %v267, %v259
  %v269 = vsel %vm262, %v265, %v268
  %v270 = vsel %vm260, nan, %v269
  %v271 = vand.u32 2147483647, %v51
  %vm272 = vcmp.le.f32.partialorder %v271, 0.7853982
  %vm273 = vcmp.lt.s32.totalorder %v51, 0
  %v274 = vand.u32 %v51, 2139095040
  %v275 = vshrl.u32 %v274, 23
  %v276 = vsub.s32 %v275, 127
  %v277 = vand.u32 2147483647, %v51
  %v278 = vand.u32 %v277, 8388607
  %v279 = vor.u32 %v278, 8388608
  %v280 = vsub.s32 0, %v279
  %v281 = vadd.s32 %v276, 1
  %vm282 = vcmp.gt.s32.totalorder %v281, 0
  %v283 = vsel %vm282, %v281, 0
  %v284 = vshrl.u32 %v283, 5
  %v285 = vand.u32 %v283, 31
  %v286 = vsub.s32 32, %v285
  %v287 = vshrl.u32 683565275, %v286
  %v288 = vshll.u32 683565275, %v285
  %v289 = vshrl.u32 2475754826, %v286
  %v290 = vor.u32 %v288, %v289
  %v291 = vshll.u32 2475754826, %v285
  %v292 = vshrl.u32 2131351028, %v286
  %v293 = vor.u32 %v291, %v292
  %v294 = vshll.u32 2131351028, %v285
  %v295 = vshrl.u32 2102212464, %v286
  %v296 = vor.u32 %v294, %v295
  %v297 = vshll.u32 2102212464, %v285
  %v298 = vshrl.u32 920167782, %v286
  %v299 = vor.u32 %v297, %v298
  %v300 = vshll.u32 920167782, %v285
  %v301 = vshrl.u32 1326507024, %v286
  %v302 = vor.u32 %v300, %v301
  %vm303 = vcmp.lt.s32.totalorder %v284, 1
  %vm304 = vcmp.lt.s32.totalorder %v284, 2
  %vm305 = vcmp.lt.s32.totalorder %v284, 3
  %vm306 = vcmp.lt.s32.totalorder %v284, 4
  %v307 = vsel %vm303, %v287, %v290
  %v308 = vsel %vm306, %v296, 2102212464
  %v309 = vsel %vm305, %v293, %v308
  %v310 = vsel %vm304, %v307, %v309
  %v311 = vsel %vm303, %v290, %v293
  %v312 = vsel %vm306, %v299, 920167782
  %v313 = vsel %vm305, %v296, %v312
  %v314 = vsel %vm304, %v311, %v313
  %v315 = vsel %vm303, %v293, %v296
  %v316 = vsel %vm306, %v302, 1326507024
  %v317 = vsel %vm305, %v299, %v316
  %v318 = vsel %vm304, %v315, %v317
  %v319 = vshll.u32 %v279, 8
  %v320 = vmul.u32.u64.compose %v319, %v318
  %v321 = vextract.low.u32 %v320
  %v322 = vextract.high.u32 %v320
  %v323 = vmul.u32.u64.compose %v319, %v314
  %v324 = vextract.low.u32 %v323
  %v325 = vextract.high.u32 %v323
  %v326 = vmul.u32 %v319, %v310
  %v327 = vadd.s32 %v322, %v324
  %vm328 = vc.u32 %v322, %v324
  %v329 = vadd.s32 %v325, 1
  %v330 = vsel %vm328, %v329, %v325
  %v331 = vadd.s32 %v326, %v330
  %v332 = vadd.s32 %v331, 536870912
  %v333 = vshrl.u32 %v332, 30
  %v334 = vshll.u32 %v333, 30
  %v335 = vsub.s32 %v331, %v334
  %vm336 = vcmp.lt.s32.totalorder %v335, 0
  %v337 = vsub.s32 0, %v335
  %v338 = vsel %vm336, %v337, %v335
  %v339 = vclz %v338
  %v340 = vsub.s32 %v339, 2
  %vm341 = vcmp.gt.s32.totalorder 0, %v340
  %v342 = vsel %vm341, 0, %v340
  %v343 = vsub.s32 32, %v342
  %v344 = vshll.u32 %v335, %v342
  %v345 = vshrl.u32 %v327, %v343
  %v346 = vor.u32 %v344, %v345
  %v347 = vsub.s32 4294967266, %v342
  %v348 = vadd.s32 %v347, 127
  %v349 = vshll.u32 %v348, 23
  %v350 = vor.u32 4788187, %v349
  %v351 = vand.u32 2147483647, %v350
  %v353 = vcvt.s32.f32 %v346
  %v354 = vmul.f32 %v353, %v351
  %v355 = vxor.u32 %v354, 2147483648
  %v356 = vsel %vm273, %v355, %v354
  %v357 = vsub.s32 4, %v333
  %v358 = vsel %vm273, %v357, %v333
  %v359 = vsel %vm272, %v51, %v356
  %v360 = vsel %vm272, 0, %v358
  %v361 = vcosq.f32.pop %v359
  %v362 = vsinq.f32.pop %v359
  %vm363 = vweird.f32 %v51
  %v364 = vand.u32 %v360, 3
  %vm365 = vcmp.lt.s32.totalorder %v364, 2
  %vm366 = vcmp.eq.s32.totalorder %v364, 0
  %v367 = vxor.u32 %v362, 2147483648
  %v368 = vsel %vm366, %v361, %v367
  %vm369 = vcmp.eq.s32.totalorder %v364, 2
  %v370 = vxor.u32 %v361, 2147483648
  %v371 = vsel %vm369, %v370, %v362
  %v372 = vsel %vm365, %v368, %v371
  %v373 = vsel %vm363, nan, %v372
  %v374 = vand.u32 2147483647, %v52
  %vm375 = vcmp.le.f32.partialorder %v374, 0.7853982
  %vm376 = vcmp.lt.s32.totalorder %v52, 0
  %v377 = vand.u32 %v52, 2139095040
  %v378 = vshrl.u32 %v377, 23
  %v379 = vsub.s32 %v378, 127
  %v380 = vand.u32 2147483647, %v52
  %v381 = vand.u32 %v380, 8388607
  %v382 = vor.u32 %v381, 8388608
  %v383 = vsub.s32 0, %v382
  %v384 = vadd.s32 %v379, 1
  %vm385 = vcmp.gt.s32.totalorder %v384, 0
  %v386 = vsel %vm385, %v384, 0
  %v387 = vshrl.u32 %v386, 5
  %v388 = vand.u32 %v386, 31
  %v389 = vsub.s32 32, %v388
  %v390 = vshrl.u32 683565275, %v389
  %v391 = vshll.u32 683565275, %v388
  %v392 = vshrl.u32 2475754826, %v389
  %v393 = vor.u32 %v391, %v392
  %v394 = vshll.u32 2475754826, %v388
  %v395 = vshrl.u32 2131351028, %v389
  %v396 = vor.u32 %v394, %v395
  %v397 = vshll.u32 2131351028, %v388
  %v398 = vshrl.u32 2102212464, %v389
  %v399 = vor.u32 %v397, %v398
  %v400 = vshll.u32 2102212464, %v388
  %v401 = vshrl.u32 920167782, %v389
  %v402 = vor.u32 %v400, %v401
  %v403 = vshll.u32 920167782, %v388
  %v404 = vshrl.u32 1326507024, %v389
  %v405 = vor.u32 %v403, %v404
  %vm406 = vcmp.lt.s32.totalorder %v387, 1
  %vm407 = vcmp.lt.s32.totalorder %v387, 2
  %vm408 = vcmp.lt.s32.totalorder %v387, 3
  %vm409 = vcmp.lt.s32.totalorder %v387, 4
  %v410 = vsel %vm406, %v390, %v393
  %v411 = vsel %vm409, %v399, 2102212464
  %v412 = vsel %vm408, %v396, %v411
  %v413 = vsel %vm407, %v410, %v412
  %v414 = vsel %vm406, %v393, %v396
  %v415 = vsel %vm409, %v402, 920167782
  %v416 = vsel %vm408, %v399, %v415
  %v417 = vsel %vm407, %v414, %v416
  %v418 = vsel %vm406, %v396, %v399
  %v419 = vsel %vm409, %v405, 1326507024
  %v420 = vsel %vm408, %v402, %v419
  %v421 = vsel %vm407, %v418, %v420
  %v422 = vshll.u32 %v382, 8
  %v423 = vmul.u32.u64.compose %v422, %v421
  %v424 = vextract.low.u32 %v423
  %v425 = vextract.high.u32 %v423
  %v426 = vmul.u32.u64.compose %v422, %v417
  %v427 = vextract.low.u32 %v426
  %v428 = vextract.high.u32 %v426
  %v429 = vmul.u32 %v422, %v413
  %v430 = vadd.s32 %v425, %v427
  %vm431 = vc.u32 %v425, %v427
  %v432 = vadd.s32 %v428, 1
  %v433 = vsel %vm431, %v432, %v428
  %v434 = vadd.s32 %v429, %v433
  %v435 = vadd.s32 %v434, 536870912
  %v436 = vshrl.u32 %v435, 30
  %v437 = vshll.u32 %v436, 30
  %v438 = vsub.s32 %v434, %v437
  %vm439 = vcmp.lt.s32.totalorder %v438, 0
  %v440 = vsub.s32 0, %v438
  %v441 = vsel %vm439, %v440, %v438
  %v442 = vclz %v441
  %v443 = vsub.s32 %v442, 2
  %vm444 = vcmp.gt.s32.totalorder 0, %v443
  %v445 = vsel %vm444, 0, %v443
  %v446 = vsub.s32 32, %v445
  %v447 = vshll.u32 %v438, %v445
  %v448 = vshrl.u32 %v430, %v446
  %v449 = vor.u32 %v447, %v448
  %v450 = vsub.s32 4294967266, %v445
  %v451 = vadd.s32 %v450, 127
  %v452 = vshll.u32 %v451, 23
  %v453 = vor.u32 4788187, %v452
  %v454 = vand.u32 2147483647, %v453
  %v456 = vcvt.s32.f32 %v449
  %v457 = vmul.f32 %v456, %v454
  %v458 = vxor.u32 %v457, 2147483648
  %v459 = vsel %vm376, %v458, %v457
  %v460 = vsub.s32 4, %v436
  %v461 = vsel %vm376, %v460, %v436
  %v462 = vsel %vm375, %v52, %v459
  %v463 = vsel %vm375, 0, %v461
  %v464 = vcosq.f32.pop %v462
  %v465 = vsinq.f32.pop %v462
  %vm466 = vweird.f32 %v52
  %v467 = vand.u32 %v463, 3
  %vm468 = vcmp.lt.s32.totalorder %v467, 2
  %vm469 = vcmp.eq.s32.totalorder %v467, 0
  %v470 = vxor.u32 %v465, 2147483648
  %v471 = vsel %vm469, %v464, %v470
  %vm472 = vcmp.eq.s32.totalorder %v467, 2
  %v473 = vxor.u32 %v464, 2147483648
  %v474 = vsel %vm472, %v473, %v465
  %v475 = vsel %vm468, %v471, %v474
  %v476 = vsel %vm466, nan, %v475
  %v477 = vand.u32 2147483647, %v53
  %vm478 = vcmp.le.f32.partialorder %v477, 0.7853982
  %vm479 = vcmp.lt.s32.totalorder %v53, 0
  %v480 = vand.u32 %v53, 2139095040
  %v481 = vshrl.u32 %v480, 23
  %v482 = vsub.s32 %v481, 127
  %v483 = vand.u32 2147483647, %v53
  %v484 = vand.u32 %v483, 8388607
  %v485 = vor.u32 %v484, 8388608
  %v486 = vsub.s32 0, %v485
  %v487 = vadd.s32 %v482, 1
  %vm488 = vcmp.gt.s32.totalorder %v487, 0
  %v489 = vsel %vm488, %v487, 0
  %v490 = vshrl.u32 %v489, 5
  %v491 = vand.u32 %v489, 31
  %v492 = vsub.s32 32, %v491
  %v493 = vshrl.u32 683565275, %v492
  %v494 = vshll.u32 683565275, %v491
  %v495 = vshrl.u32 2475754826, %v492
  %v496 = vor.u32 %v494, %v495
  %v497 = vshll.u32 2475754826, %v491
  %v498 = vshrl.u32 2131351028, %v492
  %v499 = vor.u32 %v497, %v498
  %v500 = vshll.u32 2131351028, %v491
  %v501 = vshrl.u32 2102212464, %v492
  %v502 = vor.u32 %v500, %v501
  %v503 = vshll.u32 2102212464, %v491
  %v504 = vshrl.u32 920167782, %v492
  %v505 = vor.u32 %v503, %v504
  %v506 = vshll.u32 920167782, %v491
  %v507 = vshrl.u32 1326507024, %v492
  %v508 = vor.u32 %v506, %v507
  %vm509 = vcmp.lt.s32.totalorder %v490, 1
  %vm510 = vcmp.lt.s32.totalorder %v490, 2
  %vm511 = vcmp.lt.s32.totalorder %v490, 3
  %vm512 = vcmp.lt.s32.totalorder %v490, 4
  %v513 = vsel %vm509, %v493, %v496
  %v514 = vsel %vm512, %v502, 2102212464
  %v515 = vsel %vm511, %v499, %v514
  %v516 = vsel %vm510, %v513, %v515
  %v517 = vsel %vm509, %v496, %v499
  %v518 = vsel %vm512, %v505, 920167782
  %v519 = vsel %vm511, %v502, %v518
  %v520 = vsel %vm510, %v517, %v519
  %v521 = vsel %vm509, %v499, %v502
  %v522 = vsel %vm512, %v508, 1326507024
  %v523 = vsel %vm511, %v505, %v522
  %v524 = vsel %vm510, %v521, %v523
  %v525 = vshll.u32 %v485, 8
  %v526 = vmul.u32.u64.compose %v525, %v524
  %v527 = vextract.low.u32 %v526
  %v528 = vextract.high.u32 %v526
  %v529 = vmul.u32.u64.compose %v525, %v520
  %v530 = vextract.low.u32 %v529
  %v531 = vextract.high.u32 %v529
  %v532 = vmul.u32 %v525, %v516
  %v533 = vadd.s32 %v528, %v530
  %vm534 = vc.u32 %v528, %v530
  %v535 = vadd.s32 %v531, 1
  %v536 = vsel %vm534, %v535, %v531
  %v537 = vadd.s32 %v532, %v536
  %v538 = vadd.s32 %v537, 536870912
  %v539 = vshrl.u32 %v538, 30
  %v540 = vshll.u32 %v539, 30
  %v541 = vsub.s32 %v537, %v540
  %vm542 = vcmp.lt.s32.totalorder %v541, 0
  %v543 = vsub.s32 0, %v541
  %v544 = vsel %vm542, %v543, %v541
  %v545 = vclz %v544
  %v546 = vsub.s32 %v545, 2
  %vm547 = vcmp.gt.s32.totalorder 0, %v546
  %v548 = vsel %vm547, 0, %v546
  %v549 = vsub.s32 32, %v548
  %v550 = vshll.u32 %v541, %v548
  %v551 = vshrl.u32 %v533, %v549
  %v552 = vor.u32 %v550, %v551
  %v553 = vsub.s32 4294967266, %v548
  %v554 = vadd.s32 %v553, 127
  %v555 = vshll.u32 %v554, 23
  %v556 = vor.u32 4788187, %v555
  %v557 = vand.u32 2147483647, %v556
  %v559 = vcvt.s32.f32 %v552
  %v560 = vmul.f32 %v559, %v557
  %v561 = vxor.u32 %v560, 2147483648
  %v562 = vsel %vm479, %v561, %v560
  %v563 = vsub.s32 4, %v539
  %v564 = vsel %vm479, %v563, %v539
  %v565 = vsel %vm478, %v53, %v562
  %v566 = vsel %vm478, 0, %v564
  %v567 = vcosq.f32.pop %v565
  %v568 = vsinq.f32.pop %v565
  %vm569 = vweird.f32 %v53
  %v570 = vand.u32 %v566, 3
  %vm571 = vcmp.lt.s32.totalorder %v570, 2
  %vm572 = vcmp.eq.s32.totalorder %v570, 0
  %v573 = vxor.u32 %v568, 2147483648
  %v574 = vsel %vm572, %v567, %v573
  %vm575 = vcmp.eq.s32.totalorder %v570, 2
  %v576 = vxor.u32 %v567, 2147483648
  %v577 = vsel %vm575, %v576, %v568
  %v578 = vsel %vm571, %v574, %v577
  %v579 = vsel %vm569, nan, %v578
  %v580 = vand.u32 2147483647, %v54
  %vm581 = vcmp.le.f32.partialorder %v580, 0.7853982
  %vm582 = vcmp.lt.s32.totalorder %v54, 0
  %v583 = vand.u32 %v54, 2139095040
  %v584 = vshrl.u32 %v583, 23
  %v585 = vsub.s32 %v584, 127
  %v586 = vand.u32 2147483647, %v54
  %v587 = vand.u32 %v586, 8388607
  %v588 = vor.u32 %v587, 8388608
  %v589 = vsub.s32 0, %v588
  %v590 = vadd.s32 %v585, 1
  %vm591 = vcmp.gt.s32.totalorder %v590, 0
  %v592 = vsel %vm591, %v590, 0
  %v593 = vshrl.u32 %v592, 5
  %v594 = vand.u32 %v592, 31
  %v595 = vsub.s32 32, %v594
  %v596 = vshrl.u32 683565275, %v595
  %v597 = vshll.u32 683565275, %v594
  %v598 = vshrl.u32 2475754826, %v595
  %v599 = vor.u32 %v597, %v598
  %v600 = vshll.u32 2475754826, %v594
  %v601 = vshrl.u32 2131351028, %v595
  %v602 = vor.u32 %v600, %v601
  %v603 = vshll.u32 2131351028, %v594
  %v604 = vshrl.u32 2102212464, %v595
  %v605 = vor.u32 %v603, %v604
  %v606 = vshll.u32 2102212464, %v594
  %v607 = vshrl.u32 920167782, %v595
  %v608 = vor.u32 %v606, %v607
  %v609 = vshll.u32 920167782, %v594
  %v610 = vshrl.u32 1326507024, %v595
  %v611 = vor.u32 %v609, %v610
  %vm612 = vcmp.lt.s32.totalorder %v593, 1
  %vm613 = vcmp.lt.s32.totalorder %v593, 2
  %vm614 = vcmp.lt.s32.totalorder %v593, 3
  %vm615 = vcmp.lt.s32.totalorder %v593, 4
  %v616 = vsel %vm612, %v596, %v599
  %v617 = vsel %vm615, %v605, 2102212464
  %v618 = vsel %vm614, %v602, %v617
  %v619 = vsel %vm613, %v616, %v618
  %v620 = vsel %vm612, %v599, %v602
  %v621 = vsel %vm615, %v608, 920167782
  %v622 = vsel %vm614, %v605, %v621
  %v623 = vsel %vm613, %v620, %v622
  %v624 = vsel %vm612, %v602, %v605
  %v625 = vsel %vm615, %v611, 1326507024
  %v626 = vsel %vm614, %v608, %v625
  %v627 = vsel %vm613, %v624, %v626
  %v628 = vshll.u32 %v588, 8
  %v629 = vmul.u32.u64.compose %v628, %v627
  %v630 = vextract.low.u32 %v629
  %v631 = vextract.high.u32 %v629
  %v632 = vmul.u32.u64.compose %v628, %v623
  %v633 = vextract.low.u32 %v632
  %v634 = vextract.high.u32 %v632
  %v635 = vmul.u32 %v628, %v619
  %v636 = vadd.s32 %v631, %v633
  %vm637 = vc.u32 %v631, %v633
  %v638 = vadd.s32 %v634, 1
  %v639 = vsel %vm637, %v638, %v634
  %v640 = vadd.s32 %v635, %v639
  %v641 = vadd.s32 %v640, 536870912
  %v642 = vshrl.u32 %v641, 30
  %v643 = vshll.u32 %v642, 30
  %v644 = vsub.s32 %v640, %v643
  %vm645 = vcmp.lt.s32.totalorder %v644, 0
  %v646 = vsub.s32 0, %v644
  %v647 = vsel %vm645, %v646, %v644
  %v648 = vclz %v647
  %v649 = vsub.s32 %v648, 2
  %vm650 = vcmp.gt.s32.totalorder 0, %v649
  %v651 = vsel %vm650, 0, %v649
  %v652 = vsub.s32 32, %v651
  %v653 = vshll.u32 %v644, %v651
  %v654 = vshrl.u32 %v636, %v652
  %v655 = vor.u32 %v653, %v654
  %v656 = vsub.s32 4294967266, %v651
  %v657 = vadd.s32 %v656, 127
  %v658 = vshll.u32 %v657, 23
  %v659 = vor.u32 4788187, %v658
  %v660 = vand.u32 2147483647, %v659
  %v662 = vcvt.s32.f32 %v655
  %v663 = vmul.f32 %v662, %v660
  %v664 = vxor.u32 %v663, 2147483648
  %v665 = vsel %vm582, %v664, %v663
  %v666 = vsub.s32 4, %v642
  %v667 = vsel %vm582, %v666, %v642
  %v668 = vsel %vm581, %v54, %v665
  %v669 = vsel %vm581, 0, %v667
  %v670 = vcosq.f32.pop %v668
  %v671 = vsinq.f32.pop %v668
  %vm672 = vweird.f32 %v54
  %v673 = vand.u32 %v669, 3
  %vm674 = vcmp.lt.s32.totalorder %v673, 2
  %vm675 = vcmp.eq.s32.totalorder %v673, 0
  %v676 = vxor.u32 %v671, 2147483648
  %v677 = vsel %vm675, %v670, %v676
  %vm678 = vcmp.eq.s32.totalorder %v673, 2
  %v679 = vxor.u32 %v670, 2147483648
  %v680 = vsel %vm678, %v679, %v671
  %v681 = vsel %vm674, %v677, %v680
  %v682 = vsel %vm672, nan, %v681
  %v683 = vand.u32 2147483647, %v55
  %vm684 = vcmp.le.f32.partialorder %v683, 0.7853982
  %vm685 = vcmp.lt.s32.totalorder %v55, 0
  %v686 = vand.u32 %v55, 2139095040
  %v687 = vshrl.u32 %v686, 23
  %v688 = vsub.s32 %v687, 127
  %v689 = vand.u32 2147483647, %v55
  %v690 = vand.u32 %v689, 8388607
  %v691 = vor.u32 %v690, 8388608
  %v692 = vsub.s32 0, %v691
  %v693 = vadd.s32 %v688, 1
  %vm694 = vcmp.gt.s32.totalorder %v693, 0
  %v695 = vsel %vm694, %v693, 0
  %v696 = vshrl.u32 %v695, 5
  %v697 = vand.u32 %v695, 31
  %v698 = vsub.s32 32, %v697
  %v699 = vshrl.u32 683565275, %v698
  %v700 = vshll.u32 683565275, %v697
  %v701 = vshrl.u32 2475754826, %v698
  %v702 = vor.u32 %v700, %v701
  %v703 = vshll.u32 2475754826, %v697
  %v704 = vshrl.u32 2131351028, %v698
  %v705 = vor.u32 %v703, %v704
  %v706 = vshll.u32 2131351028, %v697
  %v707 = vshrl.u32 2102212464, %v698
  %v708 = vor.u32 %v706, %v707
  %v709 = vshll.u32 2102212464, %v697
  %v710 = vshrl.u32 920167782, %v698
  %v711 = vor.u32 %v709, %v710
  %v712 = vshll.u32 920167782, %v697
  %v713 = vshrl.u32 1326507024, %v698
  %v714 = vor.u32 %v712, %v713
  %vm715 = vcmp.lt.s32.totalorder %v696, 1
  %vm716 = vcmp.lt.s32.totalorder %v696, 2
  %vm717 = vcmp.lt.s32.totalorder %v696, 3
  %vm718 = vcmp.lt.s32.totalorder %v696, 4
  %v719 = vsel %vm715, %v699, %v702
  %v720 = vsel %vm718, %v708, 2102212464
  %v721 = vsel %vm717, %v705, %v720
  %v722 = vsel %vm716, %v719, %v721
  %v723 = vsel %vm715, %v702, %v705
  %v724 = vsel %vm718, %v711, 920167782
  %v725 = vsel %vm717, %v708, %v724
  %v726 = vsel %vm716, %v723, %v725
  %v727 = vsel %vm715, %v705, %v708
  %v728 = vsel %vm718, %v714, 1326507024
  %v729 = vsel %vm717, %v711, %v728
  %v730 = vsel %vm716, %v727, %v729
  %v731 = vshll.u32 %v691, 8
  %v732 = vmul.u32.u64.compose %v731, %v730
  %v733 = vextract.low.u32 %v732
  %v734 = vextract.high.u32 %v732
  %v735 = vmul.u32.u64.compose %v731, %v726
  %v736 = vextract.low.u32 %v735
  %v737 = vextract.high.u32 %v735
  %v738 = vmul.u32 %v731, %v722
  %v739 = vadd.s32 %v734, %v736
  %vm740 = vc.u32 %v734, %v736
  %v741 = vadd.s32 %v737, 1
  %v742 = vsel %vm740, %v741, %v737
  %v743 = vadd.s32 %v738, %v742
  %v744 = vadd.s32 %v743, 536870912
  %v745 = vshrl.u32 %v744, 30
  %v746 = vshll.u32 %v745, 30
  %v747 = vsub.s32 %v743, %v746
  %vm748 = vcmp.lt.s32.totalorder %v747, 0
  %v749 = vsub.s32 0, %v747
  %v750 = vsel %vm748, %v749, %v747
  %v751 = vclz %v750
  %v752 = vsub.s32 %v751, 2
  %vm753 = vcmp.gt.s32.totalorder 0, %v752
  %v754 = vsel %vm753, 0, %v752
  %v755 = vsub.s32 32, %v754
  %v756 = vshll.u32 %v747, %v754
  %v757 = vshrl.u32 %v739, %v755
  %v758 = vor.u32 %v756, %v757
  %v759 = vsub.s32 4294967266, %v754
  %v760 = vadd.s32 %v759, 127
  %v761 = vshll.u32 %v760, 23
  %v762 = vor.u32 4788187, %v761
  %v763 = vand.u32 2147483647, %v762
  %v765 = vcvt.s32.f32 %v758
  %v766 = vmul.f32 %v765, %v763
  %v767 = vxor.u32 %v766, 2147483648
  %v768 = vsel %vm685, %v767, %v766
  %v769 = vsub.s32 4, %v745
  %v770 = vsel %vm685, %v769, %v745
  %v771 = vsel %vm684, %v55, %v768
  %v772 = vsel %vm684, 0, %v770
  %v773 = vcosq.f32.pop %v771
  %v774 = vsinq.f32.pop %v771
  %vm775 = vweird.f32 %v55
  %v776 = vand.u32 %v772, 3
  %vm777 = vcmp.lt.s32.totalorder %v776, 2
  %vm778 = vcmp.eq.s32.totalorder %v776, 0
  %v779 = vxor.u32 %v774, 2147483648
  %v780 = vsel %vm778, %v773, %v779
  %vm781 = vcmp.eq.s32.totalorder %v776, 2
  %v782 = vxor.u32 %v773, 2147483648
  %v783 = vsel %vm781, %v782, %v774
  %v784 = vsel %vm777, %v780, %v783
  %v785 = vsel %vm775, nan, %v784
  %v786 = vand.u32 2147483647, %v56
  %vm787 = vcmp.le.f32.partialorder %v786, 0.7853982
  %vm788 = vcmp.lt.s32.totalorder %v56, 0
  %v789 = vand.u32 %v56, 2139095040
  %v790 = vshrl.u32 %v789, 23
  %v791 = vsub.s32 %v790, 127
  %v792 = vand.u32 2147483647, %v56
  %v793 = vand.u32 %v792, 8388607
  %v794 = vor.u32 %v793, 8388608
  %v795 = vsub.s32 0, %v794
  %v796 = vadd.s32 %v791, 1
  %vm797 = vcmp.gt.s32.totalorder %v796, 0
  %v798 = vsel %vm797, %v796, 0
  %v799 = vshrl.u32 %v798, 5
  %v800 = vand.u32 %v798, 31
  %v801 = vsub.s32 32, %v800
  %v802 = vshrl.u32 683565275, %v801
  %v803 = vshll.u32 683565275, %v800
  %v804 = vshrl.u32 2475754826, %v801
  %v805 = vor.u32 %v803, %v804
  %v806 = vshll.u32 2475754826, %v800
  %v807 = vshrl.u32 2131351028, %v801
  %v808 = vor.u32 %v806, %v807
  %v809 = vshll.u32 2131351028, %v800
  %v810 = vshrl.u32 2102212464, %v801
  %v811 = vor.u32 %v809, %v810
  %v812 = vshll.u32 2102212464, %v800
  %v813 = vshrl.u32 920167782, %v801
  %v814 = vor.u32 %v812, %v813
  %v815 = vshll.u32 920167782, %v800
  %v816 = vshrl.u32 1326507024, %v801
  %v817 = vor.u32 %v815, %v816
  %vm818 = vcmp.lt.s32.totalorder %v799, 1
  %vm819 = vcmp.lt.s32.totalorder %v799, 2
  %vm820 = vcmp.lt.s32.totalorder %v799, 3
  %vm821 = vcmp.lt.s32.totalorder %v799, 4
  %v822 = vsel %vm818, %v802, %v805
  %v823 = vsel %vm821, %v811, 2102212464
  %v824 = vsel %vm820, %v808, %v823
  %v825 = vsel %vm819, %v822, %v824
  %v826 = vsel %vm818, %v805, %v808
  %v827 = vsel %vm821, %v814, 920167782
  %v828 = vsel %vm820, %v811, %v827
  %v829 = vsel %vm819, %v826, %v828
  %v830 = vsel %vm818, %v808, %v811
  %v831 = vsel %vm821, %v817, 1326507024
  %v832 = vsel %vm820, %v814, %v831
  %v833 = vsel %vm819, %v830, %v832
  %v834 = vshll.u32 %v794, 8
  %v835 = vmul.u32.u64.compose %v834, %v833
  %v836 = vextract.low.u32 %v835
  %v837 = vextract.high.u32 %v835
  %v838 = vmul.u32.u64.compose %v834, %v829
  %v839 = vextract.low.u32 %v838
  %v840 = vextract.high.u32 %v838
  %v841 = vmul.u32 %v834, %v825
  %v842 = vadd.s32 %v837, %v839
  %vm843 = vc.u32 %v837, %v839
  %v844 = vadd.s32 %v840, 1
  %v845 = vsel %vm843, %v844, %v840
  %v846 = vadd.s32 %v841, %v845
  %v847 = vadd.s32 %v846, 536870912
  %v848 = vshrl.u32 %v847, 30
  %v849 = vshll.u32 %v848, 30
  %v850 = vsub.s32 %v846, %v849
  %vm851 = vcmp.lt.s32.totalorder %v850, 0
  %v852 = vsub.s32 0, %v850
  %v853 = vsel %vm851, %v852, %v850
  %v854 = vclz %v853
  %v855 = vsub.s32 %v854, 2
  %vm856 = vcmp.gt.s32.totalorder 0, %v855
  %v857 = vsel %vm856, 0, %v855
  %v858 = vsub.s32 32, %v857
  %v859 = vshll.u32 %v850, %v857
  %v860 = vshrl.u32 %v842, %v858
  %v861 = vor.u32 %v859, %v860
  %v862 = vsub.s32 4294967266, %v857
  %v863 = vadd.s32 %v862, 127
  %v864 = vshll.u32 %v863, 23
  %v865 = vor.u32 4788187, %v864
  %v866 = vand.u32 2147483647, %v865
  %v868 = vcvt.s32.f32 %v861
  %v869 = vmul.f32 %v868, %v866
  %v870 = vxor.u32 %v869, 2147483648
  %v871 = vsel %vm788, %v870, %v869
  %v872 = vsub.s32 4, %v848
  %v873 = vsel %vm788, %v872, %v848
  %v874 = vsel %vm787, %v56, %v871
  %v875 = vsel %vm787, 0, %v873
  %v876 = vcosq.f32.pop %v874
  %v877 = vsinq.f32.pop %v874
  %vm878 = vweird.f32 %v56
  %v879 = vand.u32 %v875, 3
  %vm880 = vcmp.lt.s32.totalorder %v879, 2
  %vm881 = vcmp.eq.s32.totalorder %v879, 0
  %v882 = vxor.u32 %v877, 2147483648
  %v883 = vsel %vm881, %v876, %v882
  %vm884 = vcmp.eq.s32.totalorder %v879, 2
  %v885 = vxor.u32 %v876, 2147483648
  %v886 = vsel %vm884, %v885, %v877
  %v887 = vsel %vm880, %v883, %v886
  %v888 = vsel %vm878, nan, %v887
  %v889 = vand.u32 2147483647, %v57
  %vm890 = vcmp.le.f32.partialorder %v889, 0.7853982
  %vm891 = vcmp.lt.s32.totalorder %v57, 0
  %v892 = vand.u32 %v57, 2139095040
  %v893 = vshrl.u32 %v892, 23
  %v894 = vsub.s32 %v893, 127
  %v895 = vand.u32 2147483647, %v57
  %v896 = vand.u32 %v895, 8388607
  %v897 = vor.u32 %v896, 8388608
  %v898 = vsub.s32 0, %v897
  %v899 = vadd.s32 %v894, 1
  %vm900 = vcmp.gt.s32.totalorder %v899, 0
  %v901 = vsel %vm900, %v899, 0
  %v902 = vshrl.u32 %v901, 5
  %v903 = vand.u32 %v901, 31
  %v904 = vsub.s32 32, %v903
  %v905 = vshrl.u32 683565275, %v904
  %v906 = vshll.u32 683565275, %v903
  %v907 = vshrl.u32 2475754826, %v904
  %v908 = vor.u32 %v906, %v907
  %v909 = vshll.u32 2475754826, %v903
  %v910 = vshrl.u32 2131351028, %v904
  %v911 = vor.u32 %v909, %v910
  %v912 = vshll.u32 2131351028, %v903
  %v913 = vshrl.u32 2102212464, %v904
  %v914 = vor.u32 %v912, %v913
  %v915 = vshll.u32 2102212464, %v903
  %v916 = vshrl.u32 920167782, %v904
  %v917 = vor.u32 %v915, %v916
  %v918 = vshll.u32 920167782, %v903
  %v919 = vshrl.u32 1326507024, %v904
  %v920 = vor.u32 %v918, %v919
  %vm921 = vcmp.lt.s32.totalorder %v902, 1
  %vm922 = vcmp.lt.s32.totalorder %v902, 2
  %vm923 = vcmp.lt.s32.totalorder %v902, 3
  %vm924 = vcmp.lt.s32.totalorder %v902, 4
  %v925 = vsel %vm921, %v905, %v908
  %v926 = vsel %vm924, %v914, 2102212464
  %v927 = vsel %vm923, %v911, %v926
  %v928 = vsel %vm922, %v925, %v927
  %v929 = vsel %vm921, %v908, %v911
  %v930 = vsel %vm924, %v917, 920167782
  %v931 = vsel %vm923, %v914, %v930
  %v932 = vsel %vm922, %v929, %v931
  %v933 = vsel %vm921, %v911, %v914
  %v934 = vsel %vm924, %v920, 1326507024
  %v935 = vsel %vm923, %v917, %v934
  %v936 = vsel %vm922, %v933, %v935
  %v937 = vshll.u32 %v897, 8
  %v938 = vmul.u32.u64.compose %v937, %v936
  %v939 = vextract.low.u32 %v938
  %v940 = vextract.high.u32 %v938
  %v941 = vmul.u32.u64.compose %v937, %v932
  %v942 = vextract.low.u32 %v941
  %v943 = vextract.high.u32 %v941
  %v944 = vmul.u32 %v937, %v928
  %v945 = vadd.s32 %v940, %v942
  %vm946 = vc.u32 %v940, %v942
  %v947 = vadd.s32 %v943, 1
  %v948 = vsel %vm946, %v947, %v943
  %v949 = vadd.s32 %v944, %v948
  %v950 = vadd.s32 %v949, 536870912
  %v951 = vshrl.u32 %v950, 30
  %v952 = vshll.u32 %v951, 30
  %v953 = vsub.s32 %v949, %v952
  %vm954 = vcmp.lt.s32.totalorder %v953, 0
  %v955 = vsub.s32 0, %v953
  %v956 = vsel %vm954, %v955, %v953
  %v957 = vclz %v956
  %v958 = vsub.s32 %v957, 2
  %vm959 = vcmp.gt.s32.totalorder 0, %v958
  %v960 = vsel %vm959, 0, %v958
  %v961 = vsub.s32 32, %v960
  %v962 = vshll.u32 %v953, %v960
  %v963 = vshrl.u32 %v945, %v961
  %v964 = vor.u32 %v962, %v963
  %v965 = vsub.s32 4294967266, %v960
  %v966 = vadd.s32 %v965, 127
  %v967 = vshll.u32 %v966, 23
  %v968 = vor.u32 4788187, %v967
  %v969 = vand.u32 2147483647, %v968
  %v971 = vcvt.s32.f32 %v964
  %v972 = vmul.f32 %v971, %v969
  %v973 = vxor.u32 %v972, 2147483648
  %v974 = vsel %vm891, %v973, %v972
  %v975 = vsub.s32 4, %v951
  %v976 = vsel %vm891, %v975, %v951
  %v977 = vsel %vm890, %v57, %v974
  %v978 = vsel %vm890, 0, %v976
  %v979 = vcosq.f32.pop %v977
  %v980 = vsinq.f32.pop %v977
  %vm981 = vweird.f32 %v57
  %v982 = vand.u32 %v978, 3
  %vm983 = vcmp.lt.s32.totalorder %v982, 2
  %vm984 = vcmp.eq.s32.totalorder %v982, 0
  %v985 = vxor.u32 %v980, 2147483648
  %v986 = vsel %vm984, %v979, %v985
  %vm987 = vcmp.eq.s32.totalorder %v982, 2
  %v988 = vxor.u32 %v979, 2147483648
  %v989 = vsel %vm987, %v988, %v980
  %v990 = vsel %vm983, %v986, %v989
  %v991 = vsel %vm981, nan, %v990
  %v992 = vand.u32 2147483647, %v58
  %vm993 = vcmp.le.f32.partialorder %v992, 0.7853982
  %vm994 = vcmp.lt.s32.totalorder %v58, 0
  %v995 = vand.u32 %v58, 2139095040
  %v996 = vshrl.u32 %v995, 23
  %v997 = vsub.s32 %v996, 127
  %v998 = vand.u32 2147483647, %v58
  %v999 = vand.u32 %v998, 8388607
  %v1000 = vor.u32 %v999, 8388608
  %v1001 = vsub.s32 0, %v1000
  %v1002 = vadd.s32 %v997, 1
  %vm1003 = vcmp.gt.s32.totalorder %v1002, 0
  %v1004 = vsel %vm1003, %v1002, 0
  %v1005 = vshrl.u32 %v1004, 5
  %v1006 = vand.u32 %v1004, 31
  %v1007 = vsub.s32 32, %v1006
  %v1008 = vshrl.u32 683565275, %v1007
  %v1009 = vshll.u32 683565275, %v1006
  %v1010 = vshrl.u32 2475754826, %v1007
  %v1011 = vor.u32 %v1009, %v1010
  %v1012 = vshll.u32 2475754826, %v1006
  %v1013 = vshrl.u32 2131351028, %v1007
  %v1014 = vor.u32 %v1012, %v1013
  %v1015 = vshll.u32 2131351028, %v1006
  %v1016 = vshrl.u32 2102212464, %v1007
  %v1017 = vor.u32 %v1015, %v1016
  %v1018 = vshll.u32 2102212464, %v1006
  %v1019 = vshrl.u32 920167782, %v1007
  %v1020 = vor.u32 %v1018, %v1019
  %v1021 = vshll.u32 920167782, %v1006
  %v1022 = vshrl.u32 1326507024, %v1007
  %v1023 = vor.u32 %v1021, %v1022
  %vm1024 = vcmp.lt.s32.totalorder %v1005, 1
  %vm1025 = vcmp.lt.s32.totalorder %v1005, 2
  %vm1026 = vcmp.lt.s32.totalorder %v1005, 3
  %vm1027 = vcmp.lt.s32.totalorder %v1005, 4
  %v1028 = vsel %vm1024, %v1008, %v1011
  %v1029 = vsel %vm1027, %v1017, 2102212464
  %v1030 = vsel %vm1026, %v1014, %v1029
  %v1031 = vsel %vm1025, %v1028, %v1030
  %v1032 = vsel %vm1024, %v1011, %v1014
  %v1033 = vsel %vm1027, %v1020, 920167782
  %v1034 = vsel %vm1026, %v1017, %v1033
  %v1035 = vsel %vm1025, %v1032, %v1034
  %v1036 = vsel %vm1024, %v1014, %v1017
  %v1037 = vsel %vm1027, %v1023, 1326507024
  %v1038 = vsel %vm1026, %v1020, %v1037
  %v1039 = vsel %vm1025, %v1036, %v1038
  %v1040 = vshll.u32 %v1000, 8
  %v1041 = vmul.u32.u64.compose %v1040, %v1039
  %v1042 = vextract.low.u32 %v1041
  %v1043 = vextract.high.u32 %v1041
  %v1044 = vmul.u32.u64.compose %v1040, %v1035
  %v1045 = vextract.low.u32 %v1044
  %v1046 = vextract.high.u32 %v1044
  %v1047 = vmul.u32 %v1040, %v1031
  %v1048 = vadd.s32 %v1043, %v1045
  %vm1049 = vc.u32 %v1043, %v1045
  %v1050 = vadd.s32 %v1046, 1
  %v1051 = vsel %vm1049, %v1050, %v1046
  %v1052 = vadd.s32 %v1047, %v1051
  %v1053 = vadd.s32 %v1052, 536870912
  %v1054 = vshrl.u32 %v1053, 30
  %v1055 = vshll.u32 %v1054, 30
  %v1056 = vsub.s32 %v1052, %v1055
  %vm1057 = vcmp.lt.s32.totalorder %v1056, 0
  %v1058 = vsub.s32 0, %v1056
  %v1059 = vsel %vm1057, %v1058, %v1056
  %v1060 = vclz %v1059
  %v1061 = vsub.s32 %v1060, 2
  %vm1062 = vcmp.gt.s32.totalorder 0, %v1061
  %v1063 = vsel %vm1062, 0, %v1061
  %v1064 = vsub.s32 32, %v1063
  %v1065 = vshll.u32 %v1056, %v1063
  %v1066 = vshrl.u32 %v1048, %v1064
  %v1067 = vor.u32 %v1065, %v1066
  %v1068 = vsub.s32 4294967266, %v1063
  %v1069 = vadd.s32 %v1068, 127
  %v1070 = vshll.u32 %v1069, 23
  %v1071 = vor.u32 4788187, %v1070
  %v1072 = vand.u32 2147483647, %v1071
  %v1074 = vcvt.s32.f32 %v1067
  %v1075 = vmul.f32 %v1074, %v1072
  %v1076 = vxor.u32 %v1075, 2147483648
  %v1077 = vsel %vm994, %v1076, %v1075
  %v1078 = vsub.s32 4, %v1054
  %v1079 = vsel %vm994, %v1078, %v1054
  %v1080 = vsel %vm993, %v58, %v1077
  %v1081 = vsel %vm993, 0, %v1079
  %v1082 = vcosq.f32.pop %v1080
  %v1083 = vsinq.f32.pop %v1080
  %vm1084 = vweird.f32 %v58
  %v1085 = vand.u32 %v1081, 3
  %vm1086 = vcmp.lt.s32.totalorder %v1085, 2
  %vm1087 = vcmp.eq.s32.totalorder %v1085, 0
  %v1088 = vxor.u32 %v1083, 2147483648
  %v1089 = vsel %vm1087, %v1082, %v1088
  %vm1090 = vcmp.eq.s32.totalorder %v1085, 2
  %v1091 = vxor.u32 %v1082, 2147483648
  %v1092 = vsel %vm1090, %v1091, %v1083
  %v1093 = vsel %vm1086, %v1089, %v1092
  %v1094 = vsel %vm1084, nan, %v1093
  %v1095 = vand.u32 2147483647, %v59
  %vm1096 = vcmp.le.f32.partialorder %v1095, 0.7853982
  %vm1097 = vcmp.lt.s32.totalorder %v59, 0
  %v1098 = vand.u32 %v59, 2139095040
  %v1099 = vshrl.u32 %v1098, 23
  %v1100 = vsub.s32 %v1099, 127
  %v1101 = vand.u32 2147483647, %v59
  %v1102 = vand.u32 %v1101, 8388607
  %v1103 = vor.u32 %v1102, 8388608
  %v1104 = vsub.s32 0, %v1103
  %v1105 = vadd.s32 %v1100, 1
  %vm1106 = vcmp.gt.s32.totalorder %v1105, 0
  %v1107 = vsel %vm1106, %v1105, 0
  %v1108 = vshrl.u32 %v1107, 5
  %v1109 = vand.u32 %v1107, 31
  %v1110 = vsub.s32 32, %v1109
  %v1111 = vshrl.u32 683565275, %v1110
  %v1112 = vshll.u32 683565275, %v1109
  %v1113 = vshrl.u32 2475754826, %v1110
  %v1114 = vor.u32 %v1112, %v1113
  %v1115 = vshll.u32 2475754826, %v1109
  %v1116 = vshrl.u32 2131351028, %v1110
  %v1117 = vor.u32 %v1115, %v1116
  %v1118 = vshll.u32 2131351028, %v1109
  %v1119 = vshrl.u32 2102212464, %v1110
  %v1120 = vor.u32 %v1118, %v1119
  %v1121 = vshll.u32 2102212464, %v1109
  %v1122 = vshrl.u32 920167782, %v1110
  %v1123 = vor.u32 %v1121, %v1122
  %v1124 = vshll.u32 920167782, %v1109
  %v1125 = vshrl.u32 1326507024, %v1110
  %v1126 = vor.u32 %v1124, %v1125
  %vm1127 = vcmp.lt.s32.totalorder %v1108, 1
  %vm1128 = vcmp.lt.s32.totalorder %v1108, 2
  %vm1129 = vcmp.lt.s32.totalorder %v1108, 3
  %vm1130 = vcmp.lt.s32.totalorder %v1108, 4
  %v1131 = vsel %vm1127, %v1111, %v1114
  %v1132 = vsel %vm1130, %v1120, 2102212464
  %v1133 = vsel %vm1129, %v1117, %v1132
  %v1134 = vsel %vm1128, %v1131, %v1133
  %v1135 = vsel %vm1127, %v1114, %v1117
  %v1136 = vsel %vm1130, %v1123, 920167782
  %v1137 = vsel %vm1129, %v1120, %v1136
  %v1138 = vsel %vm1128, %v1135, %v1137
  %v1139 = vsel %vm1127, %v1117, %v1120
  %v1140 = vsel %vm1130, %v1126, 1326507024
  %v1141 = vsel %vm1129, %v1123, %v1140
  %v1142 = vsel %vm1128, %v1139, %v1141
  %v1143 = vshll.u32 %v1103, 8
  %v1144 = vmul.u32.u64.compose %v1143, %v1142
  %v1145 = vextract.low.u32 %v1144
  %v1146 = vextract.high.u32 %v1144
  %v1147 = vmul.u32.u64.compose %v1143, %v1138
  %v1148 = vextract.low.u32 %v1147
  %v1149 = vextract.high.u32 %v1147
  %v1150 = vmul.u32 %v1143, %v1134
  %v1151 = vadd.s32 %v1146, %v1148
  %vm1152 = vc.u32 %v1146, %v1148
  %v1153 = vadd.s32 %v1149, 1
  %v1154 = vsel %vm1152, %v1153, %v1149
  %v1155 = vadd.s32 %v1150, %v1154
  %v1156 = vadd.s32 %v1155, 536870912
  %v1157 = vshrl.u32 %v1156, 30
  %v1158 = vshll.u32 %v1157, 30
  %v1159 = vsub.s32 %v1155, %v1158
  %vm1160 = vcmp.lt.s32.totalorder %v1159, 0
  %v1161 = vsub.s32 0, %v1159
  %v1162 = vsel %vm1160, %v1161, %v1159
  %v1163 = vclz %v1162
  %v1164 = vsub.s32 %v1163, 2
  %vm1165 = vcmp.gt.s32.totalorder 0, %v1164
  %v1166 = vsel %vm1165, 0, %v1164
  %v1167 = vsub.s32 32, %v1166
  %v1168 = vshll.u32 %v1159, %v1166
  %v1169 = vshrl.u32 %v1151, %v1167
  %v1170 = vor.u32 %v1168, %v1169
  %v1171 = vsub.s32 4294967266, %v1166
  %v1172 = vadd.s32 %v1171, 127
  %v1173 = vshll.u32 %v1172, 23
  %v1174 = vor.u32 4788187, %v1173
  %v1175 = vand.u32 2147483647, %v1174
  %v1177 = vcvt.s32.f32 %v1170
  %v1178 = vmul.f32 %v1177, %v1175
  %v1179 = vxor.u32 %v1178, 2147483648
  %v1180 = vsel %vm1097, %v1179, %v1178
  %v1181 = vsub.s32 4, %v1157
  %v1182 = vsel %vm1097, %v1181, %v1157
  %v1183 = vsel %vm1096, %v59, %v1180
  %v1184 = vsel %vm1096, 0, %v1182
  %v1185 = vcosq.f32.pop %v1183
  %v1186 = vsinq.f32.pop %v1183
  %vm1187 = vweird.f32 %v59
  %v1188 = vand.u32 %v1184, 3
  %vm1189 = vcmp.lt.s32.totalorder %v1188, 2
  %vm1190 = vcmp.eq.s32.totalorder %v1188, 0
  %v1191 = vxor.u32 %v1186, 2147483648
  %v1192 = vsel %vm1190, %v1185, %v1191
  %vm1193 = vcmp.eq.s32.totalorder %v1188, 2
  %v1194 = vxor.u32 %v1185, 2147483648
  %v1195 = vsel %vm1193, %v1194, %v1186
  %v1196 = vsel %vm1189, %v1192, %v1195
  %v1197 = vsel %vm1187, nan, %v1196
  %v1198 = vand.u32 2147483647, %v60
  %vm1199 = vcmp.le.f32.partialorder %v1198, 0.7853982
  %vm1200 = vcmp.lt.s32.totalorder %v60, 0
  %v1201 = vand.u32 %v60, 2139095040
  %v1202 = vshrl.u32 %v1201, 23
  %v1203 = vsub.s32 %v1202, 127
  %v1204 = vand.u32 2147483647, %v60
  %v1205 = vand.u32 %v1204, 8388607
  %v1206 = vor.u32 %v1205, 8388608
  %v1207 = vsub.s32 0, %v1206
  %v1208 = vadd.s32 %v1203, 1
  %vm1209 = vcmp.gt.s32.totalorder %v1208, 0
  %v1210 = vsel %vm1209, %v1208, 0
  %v1211 = vshrl.u32 %v1210, 5
  %v1212 = vand.u32 %v1210, 31
  %v1213 = vsub.s32 32, %v1212
  %v1214 = vshrl.u32 683565275, %v1213
  %v1215 = vshll.u32 683565275, %v1212
  %v1216 = vshrl.u32 2475754826, %v1213
  %v1217 = vor.u32 %v1215, %v1216
  %v1218 = vshll.u32 2475754826, %v1212
  %v1219 = vshrl.u32 2131351028, %v1213
  %v1220 = vor.u32 %v1218, %v1219
  %v1221 = vshll.u32 2131351028, %v1212
  %v1222 = vshrl.u32 2102212464, %v1213
  %v1223 = vor.u32 %v1221, %v1222
  %v1224 = vshll.u32 2102212464, %v1212
  %v1225 = vshrl.u32 920167782, %v1213
  %v1226 = vor.u32 %v1224, %v1225
  %v1227 = vshll.u32 920167782, %v1212
  %v1228 = vshrl.u32 1326507024, %v1213
  %v1229 = vor.u32 %v1227, %v1228
  %vm1230 = vcmp.lt.s32.totalorder %v1211, 1
  %vm1231 = vcmp.lt.s32.totalorder %v1211, 2
  %vm1232 = vcmp.lt.s32.totalorder %v1211, 3
  %vm1233 = vcmp.lt.s32.totalorder %v1211, 4
  %v1234 = vsel %vm1230, %v1214, %v1217
  %v1235 = vsel %vm1233, %v1223, 2102212464
  %v1236 = vsel %vm1232, %v1220, %v1235
  %v1237 = vsel %vm1231, %v1234, %v1236
  %v1238 = vsel %vm1230, %v1217, %v1220
  %v1239 = vsel %vm1233, %v1226, 920167782
  %v1240 = vsel %vm1232, %v1223, %v1239
  %v1241 = vsel %vm1231, %v1238, %v1240
  %v1242 = vsel %vm1230, %v1220, %v1223
  %v1243 = vsel %vm1233, %v1229, 1326507024
  %v1244 = vsel %vm1232, %v1226, %v1243
  %v1245 = vsel %vm1231, %v1242, %v1244
  %v1246 = vshll.u32 %v1206, 8
  %v1247 = vmul.u32.u64.compose %v1246, %v1245
  %v1248 = vextract.low.u32 %v1247
  %v1249 = vextract.high.u32 %v1247
  %v1250 = vmul.u32.u64.compose %v1246, %v1241
  %v1251 = vextract.low.u32 %v1250
  %v1252 = vextract.high.u32 %v1250
  %v1253 = vmul.u32 %v1246, %v1237
  %v1254 = vadd.s32 %v1249, %v1251
  %vm1255 = vc.u32 %v1249, %v1251
  %v1256 = vadd.s32 %v1252, 1
  %v1257 = vsel %vm1255, %v1256, %v1252
  %v1258 = vadd.s32 %v1253, %v1257
  %v1259 = vadd.s32 %v1258, 536870912
  %v1260 = vshrl.u32 %v1259, 30
  %v1261 = vshll.u32 %v1260, 30
  %v1262 = vsub.s32 %v1258, %v1261
  %vm1263 = vcmp.lt.s32.totalorder %v1262, 0
  %v1264 = vsub.s32 0, %v1262
  %v1265 = vsel %vm1263, %v1264, %v1262
  %v1266 = vclz %v1265
  %v1267 = vsub.s32 %v1266, 2
  %vm1268 = vcmp.gt.s32.totalorder 0, %v1267
  %v1269 = vsel %vm1268, 0, %v1267
  %v1270 = vsub.s32 32, %v1269
  %v1271 = vshll.u32 %v1262, %v1269
  %v1272 = vshrl.u32 %v1254, %v1270
  %v1273 = vor.u32 %v1271, %v1272
  %v1274 = vsub.s32 4294967266, %v1269
  %v1275 = vadd.s32 %v1274, 127
  %v1276 = vshll.u32 %v1275, 23
  %v1277 = vor.u32 4788187, %v1276
  %v1278 = vand.u32 2147483647, %v1277
  %v1280 = vcvt.s32.f32 %v1273
  %v1281 = vmul.f32 %v1280, %v1278
  %v1282 = vxor.u32 %v1281, 2147483648
  %v1283 = vsel %vm1200, %v1282, %v1281
  %v1284 = vsub.s32 4, %v1260
  %v1285 = vsel %vm1200, %v1284, %v1260
  %v1286 = vsel %vm1199, %v60, %v1283
  %v1287 = vsel %vm1199, 0, %v1285
  %v1288 = vcosq.f32.pop %v1286
  %v1289 = vsinq.f32.pop %v1286
  %vm1290 = vweird.f32 %v60
  %v1291 = vand.u32 %v1287, 3
  %vm1292 = vcmp.lt.s32.totalorder %v1291, 2
  %vm1293 = vcmp.eq.s32.totalorder %v1291, 0
  %v1294 = vxor.u32 %v1289, 2147483648
  %v1295 = vsel %vm1293, %v1288, %v1294
  %vm1296 = vcmp.eq.s32.totalorder %v1291, 2
  %v1297 = vxor.u32 %v1288, 2147483648
  %v1298 = vsel %vm1296, %v1297, %v1289
  %v1299 = vsel %vm1292, %v1295, %v1298
  %v1300 = vsel %vm1290, nan, %v1299
  %v1301 = vand.u32 2147483647, %v61
  %vm1302 = vcmp.le.f32.partialorder %v1301, 0.7853982
  %vm1303 = vcmp.lt.s32.totalorder %v61, 0
  %v1304 = vand.u32 %v61, 2139095040
  %v1305 = vshrl.u32 %v1304, 23
  %v1306 = vsub.s32 %v1305, 127
  %v1307 = vand.u32 2147483647, %v61
  %v1308 = vand.u32 %v1307, 8388607
  %v1309 = vor.u32 %v1308, 8388608
  %v1310 = vsub.s32 0, %v1309
  %v1311 = vadd.s32 %v1306, 1
  %vm1312 = vcmp.gt.s32.totalorder %v1311, 0
  %v1313 = vsel %vm1312, %v1311, 0
  %v1314 = vshrl.u32 %v1313, 5
  %v1315 = vand.u32 %v1313, 31
  %v1316 = vsub.s32 32, %v1315
  %v1317 = vshrl.u32 683565275, %v1316
  %v1318 = vshll.u32 683565275, %v1315
  %v1319 = vshrl.u32 2475754826, %v1316
  %v1320 = vor.u32 %v1318, %v1319
  %v1321 = vshll.u32 2475754826, %v1315
  %v1322 = vshrl.u32 2131351028, %v1316
  %v1323 = vor.u32 %v1321, %v1322
  %v1324 = vshll.u32 2131351028, %v1315
  %v1325 = vshrl.u32 2102212464, %v1316
  %v1326 = vor.u32 %v1324, %v1325
  %v1327 = vshll.u32 2102212464, %v1315
  %v1328 = vshrl.u32 920167782, %v1316
  %v1329 = vor.u32 %v1327, %v1328
  %v1330 = vshll.u32 920167782, %v1315
  %v1331 = vshrl.u32 1326507024, %v1316
  %v1332 = vor.u32 %v1330, %v1331
  %vm1333 = vcmp.lt.s32.totalorder %v1314, 1
  %vm1334 = vcmp.lt.s32.totalorder %v1314, 2
  %vm1335 = vcmp.lt.s32.totalorder %v1314, 3
  %vm1336 = vcmp.lt.s32.totalorder %v1314, 4
  %v1337 = vsel %vm1333, %v1317, %v1320
  %v1338 = vsel %vm1336, %v1326, 2102212464
  %v1339 = vsel %vm1335, %v1323, %v1338
  %v1340 = vsel %vm1334, %v1337, %v1339
  %v1341 = vsel %vm1333, %v1320, %v1323
  %v1342 = vsel %vm1336, %v1329, 920167782
  %v1343 = vsel %vm1335, %v1326, %v1342
  %v1344 = vsel %vm1334, %v1341, %v1343
  %v1345 = vsel %vm1333, %v1323, %v1326
  %v1346 = vsel %vm1336, %v1332, 1326507024
  %v1347 = vsel %vm1335, %v1329, %v1346
  %v1348 = vsel %vm1334, %v1345, %v1347
  %v1349 = vshll.u32 %v1309, 8
  %v1350 = vmul.u32.u64.compose %v1349, %v1348
  %v1351 = vextract.low.u32 %v1350
  %v1352 = vextract.high.u32 %v1350
  %v1353 = vmul.u32.u64.compose %v1349, %v1344
  %v1354 = vextract.low.u32 %v1353
  %v1355 = vextract.high.u32 %v1353
  %v1356 = vmul.u32 %v1349, %v1340
  %v1357 = vadd.s32 %v1352, %v1354
  %vm1358 = vc.u32 %v1352, %v1354
  %v1359 = vadd.s32 %v1355, 1
  %v1360 = vsel %vm1358, %v1359, %v1355
  %v1361 = vadd.s32 %v1356, %v1360
  %v1362 = vadd.s32 %v1361, 536870912
  %v1363 = vshrl.u32 %v1362, 30
  %v1364 = vshll.u32 %v1363, 30
  %v1365 = vsub.s32 %v1361, %v1364
  %vm1366 = vcmp.lt.s32.totalorder %v1365, 0
  %v1367 = vsub.s32 0, %v1365
  %v1368 = vsel %vm1366, %v1367, %v1365
  %v1369 = vclz %v1368
  %v1370 = vsub.s32 %v1369, 2
  %vm1371 = vcmp.gt.s32.totalorder 0, %v1370
  %v1372 = vsel %vm1371, 0, %v1370
  %v1373 = vsub.s32 32, %v1372
  %v1374 = vshll.u32 %v1365, %v1372
  %v1375 = vshrl.u32 %v1357, %v1373
  %v1376 = vor.u32 %v1374, %v1375
  %v1377 = vsub.s32 4294967266, %v1372
  %v1378 = vadd.s32 %v1377, 127
  %v1379 = vshll.u32 %v1378, 23
  %v1380 = vor.u32 4788187, %v1379
  %v1381 = vand.u32 2147483647, %v1380
  %v1383 = vcvt.s32.f32 %v1376
  %v1384 = vmul.f32 %v1383, %v1381
  %v1385 = vxor.u32 %v1384, 2147483648
  %v1386 = vsel %vm1303, %v1385, %v1384
  %v1387 = vsub.s32 4, %v1363
  %v1388 = vsel %vm1303, %v1387, %v1363
  %v1389 = vsel %vm1302, %v61, %v1386
  %v1390 = vsel %vm1302, 0, %v1388
  %v1391 = vcosq.f32.pop %v1389
  %v1392 = vsinq.f32.pop %v1389
  %vm1393 = vweird.f32 %v61
  %v1394 = vand.u32 %v1390, 3
  %vm1395 = vcmp.lt.s32.totalorder %v1394, 2
  %vm1396 = vcmp.eq.s32.totalorder %v1394, 0
  %v1397 = vxor.u32 %v1392, 2147483648
  %v1398 = vsel %vm1396, %v1391, %v1397
  %vm1399 = vcmp.eq.s32.totalorder %v1394, 2
  %v1400 = vxor.u32 %v1391, 2147483648
  %v1401 = vsel %vm1399, %v1400, %v1392
  %v1402 = vsel %vm1395, %v1398, %v1401
  %v1403 = vsel %vm1393, nan, %v1402
  %v1404 = vand.u32 2147483647, %v62
  %vm1405 = vcmp.le.f32.partialorder %v1404, 0.7853982
  %vm1406 = vcmp.lt.s32.totalorder %v62, 0
  %v1407 = vand.u32 %v62, 2139095040
  %v1408 = vshrl.u32 %v1407, 23
  %v1409 = vsub.s32 %v1408, 127
  %v1410 = vand.u32 2147483647, %v62
  %v1411 = vand.u32 %v1410, 8388607
  %v1412 = vor.u32 %v1411, 8388608
  %v1413 = vsub.s32 0, %v1412
  %v1414 = vadd.s32 %v1409, 1
  %vm1415 = vcmp.gt.s32.totalorder %v1414, 0
  %v1416 = vsel %vm1415, %v1414, 0
  %v1417 = vshrl.u32 %v1416, 5
  %v1418 = vand.u32 %v1416, 31
  %v1419 = vsub.s32 32, %v1418
  %v1420 = vshrl.u32 683565275, %v1419
  %v1421 = vshll.u32 683565275, %v1418
  %v1422 = vshrl.u32 2475754826, %v1419
  %v1423 = vor.u32 %v1421, %v1422
  %v1424 = vshll.u32 2475754826, %v1418
  %v1425 = vshrl.u32 2131351028, %v1419
  %v1426 = vor.u32 %v1424, %v1425
  %v1427 = vshll.u32 2131351028, %v1418
  %v1428 = vshrl.u32 2102212464, %v1419
  %v1429 = vor.u32 %v1427, %v1428
  %v1430 = vshll.u32 2102212464, %v1418
  %v1431 = vshrl.u32 920167782, %v1419
  %v1432 = vor.u32 %v1430, %v1431
  %v1433 = vshll.u32 920167782, %v1418
  %v1434 = vshrl.u32 1326507024, %v1419
  %v1435 = vor.u32 %v1433, %v1434
  %vm1436 = vcmp.lt.s32.totalorder %v1417, 1
  %vm1437 = vcmp.lt.s32.totalorder %v1417, 2
  %vm1438 = vcmp.lt.s32.totalorder %v1417, 3
  %vm1439 = vcmp.lt.s32.totalorder %v1417, 4
  %v1440 = vsel %vm1436, %v1420, %v1423
  %v1441 = vsel %vm1439, %v1429, 2102212464
  %v1442 = vsel %vm1438, %v1426, %v1441
  %v1443 = vsel %vm1437, %v1440, %v1442
  %v1444 = vsel %vm1436, %v1423, %v1426
  %v1445 = vsel %vm1439, %v1432, 920167782
  %v1446 = vsel %vm1438, %v1429, %v1445
  %v1447 = vsel %vm1437, %v1444, %v1446
  %v1448 = vsel %vm1436, %v1426, %v1429
  %v1449 = vsel %vm1439, %v1435, 1326507024
  %v1450 = vsel %vm1438, %v1432, %v1449
  %v1451 = vsel %vm1437, %v1448, %v1450
  %v1452 = vshll.u32 %v1412, 8
  %v1453 = vmul.u32.u64.compose %v1452, %v1451
  %v1454 = vextract.low.u32 %v1453
  %v1455 = vextract.high.u32 %v1453
  %v1456 = vmul.u32.u64.compose %v1452, %v1447
  %v1457 = vextract.low.u32 %v1456
  %v1458 = vextract.high.u32 %v1456
  %v1459 = vmul.u32 %v1452, %v1443
  %v1460 = vadd.s32 %v1455, %v1457
  %vm1461 = vc.u32 %v1455, %v1457
  %v1462 = vadd.s32 %v1458, 1
  %v1463 = vsel %vm1461, %v1462, %v1458
  %v1464 = vadd.s32 %v1459, %v1463
  %v1465 = vadd.s32 %v1464, 536870912
  %v1466 = vshrl.u32 %v1465, 30
  %v1467 = vshll.u32 %v1466, 30
  %v1468 = vsub.s32 %v1464, %v1467
  %vm1469 = vcmp.lt.s32.totalorder %v1468, 0
  %v1470 = vsub.s32 0, %v1468
  %v1471 = vsel %vm1469, %v1470, %v1468
  %v1472 = vclz %v1471
  %v1473 = vsub.s32 %v1472, 2
  %vm1474 = vcmp.gt.s32.totalorder 0, %v1473
  %v1475 = vsel %vm1474, 0, %v1473
  %v1476 = vsub.s32 32, %v1475
  %v1477 = vshll.u32 %v1468, %v1475
  %v1478 = vshrl.u32 %v1460, %v1476
  %v1479 = vor.u32 %v1477, %v1478
  %v1480 = vsub.s32 4294967266, %v1475
  %v1481 = vadd.s32 %v1480, 127
  %v1482 = vshll.u32 %v1481, 23
  %v1483 = vor.u32 4788187, %v1482
  %v1484 = vand.u32 2147483647, %v1483
  %v1486 = vcvt.s32.f32 %v1479
  %v1487 = vmul.f32 %v1486, %v1484
  %v1488 = vxor.u32 %v1487, 2147483648
  %v1489 = vsel %vm1406, %v1488, %v1487
  %v1490 = vsub.s32 4, %v1466
  %v1491 = vsel %vm1406, %v1490, %v1466
  %v1492 = vsel %vm1405, %v62, %v1489
  %v1493 = vsel %vm1405, 0, %v1491
  %v1494 = vcosq.f32.pop %v1492
  %v1495 = vsinq.f32.pop %v1492
  %vm1496 = vweird.f32 %v62
  %v1497 = vand.u32 %v1493, 3
  %vm1498 = vcmp.lt.s32.totalorder %v1497, 2
  %vm1499 = vcmp.eq.s32.totalorder %v1497, 0
  %v1500 = vxor.u32 %v1495, 2147483648
  %v1501 = vsel %vm1499, %v1494, %v1500
  %vm1502 = vcmp.eq.s32.totalorder %v1497, 2
  %v1503 = vxor.u32 %v1494, 2147483648
  %v1504 = vsel %vm1502, %v1503, %v1495
  %v1505 = vsel %vm1498, %v1501, %v1504
  %v1506 = vsel %vm1496, nan, %v1505
  %v1507 = vand.u32 2147483647, %v63
  %vm1508 = vcmp.le.f32.partialorder %v1507, 0.7853982
  %vm1509 = vcmp.lt.s32.totalorder %v63, 0
  %v1510 = vand.u32 %v63, 2139095040
  %v1511 = vshrl.u32 %v1510, 23
  %v1512 = vsub.s32 %v1511, 127
  %v1513 = vand.u32 2147483647, %v63
  %v1514 = vand.u32 %v1513, 8388607
  %v1515 = vor.u32 %v1514, 8388608
  %v1516 = vsub.s32 0, %v1515
  %v1517 = vadd.s32 %v1512, 1
  %vm1518 = vcmp.gt.s32.totalorder %v1517, 0
  %v1519 = vsel %vm1518, %v1517, 0
  %v1520 = vshrl.u32 %v1519, 5
  %v1521 = vand.u32 %v1519, 31
  %v1522 = vsub.s32 32, %v1521
  %v1523 = vshrl.u32 683565275, %v1522
  %v1524 = vshll.u32 683565275, %v1521
  %v1525 = vshrl.u32 2475754826, %v1522
  %v1526 = vor.u32 %v1524, %v1525
  %v1527 = vshll.u32 2475754826, %v1521
  %v1528 = vshrl.u32 2131351028, %v1522
  %v1529 = vor.u32 %v1527, %v1528
  %v1530 = vshll.u32 2131351028, %v1521
  %v1531 = vshrl.u32 2102212464, %v1522
  %v1532 = vor.u32 %v1530, %v1531
  %v1533 = vshll.u32 2102212464, %v1521
  %v1534 = vshrl.u32 920167782, %v1522
  %v1535 = vor.u32 %v1533, %v1534
  %v1536 = vshll.u32 920167782, %v1521
  %v1537 = vshrl.u32 1326507024, %v1522
  %v1538 = vor.u32 %v1536, %v1537
  %vm1539 = vcmp.lt.s32.totalorder %v1520, 1
  %vm1540 = vcmp.lt.s32.totalorder %v1520, 2
  %vm1541 = vcmp.lt.s32.totalorder %v1520, 3
  %vm1542 = vcmp.lt.s32.totalorder %v1520, 4
  %v1543 = vsel %vm1539, %v1523, %v1526
  %v1544 = vsel %vm1542, %v1532, 2102212464
  %v1545 = vsel %vm1541, %v1529, %v1544
  %v1546 = vsel %vm1540, %v1543, %v1545
  %v1547 = vsel %vm1539, %v1526, %v1529
  %v1548 = vsel %vm1542, %v1535, 920167782
  %v1549 = vsel %vm1541, %v1532, %v1548
  %v1550 = vsel %vm1540, %v1547, %v1549
  %v1551 = vsel %vm1539, %v1529, %v1532
  %v1552 = vsel %vm1542, %v1538, 1326507024
  %v1553 = vsel %vm1541, %v1535, %v1552
  %v1554 = vsel %vm1540, %v1551, %v1553
  %v1555 = vshll.u32 %v1515, 8
  %v1556 = vmul.u32.u64.compose %v1555, %v1554
  %v1557 = vextract.low.u32 %v1556
  %v1558 = vextract.high.u32 %v1556
  %v1559 = vmul.u32.u64.compose %v1555, %v1550
  %v1560 = vextract.low.u32 %v1559
  %v1561 = vextract.high.u32 %v1559
  %v1562 = vmul.u32 %v1555, %v1546
  %v1563 = vadd.s32 %v1558, %v1560
  %vm1564 = vc.u32 %v1558, %v1560
  %v1565 = vadd.s32 %v1561, 1
  %v1566 = vsel %vm1564, %v1565, %v1561
  %v1567 = vadd.s32 %v1562, %v1566
  %v1568 = vadd.s32 %v1567, 536870912
  %v1569 = vshrl.u32 %v1568, 30
  %v1570 = vshll.u32 %v1569, 30
  %v1571 = vsub.s32 %v1567, %v1570
  %vm1572 = vcmp.lt.s32.totalorder %v1571, 0
  %v1573 = vsub.s32 0, %v1571
  %v1574 = vsel %vm1572, %v1573, %v1571
  %v1575 = vclz %v1574
  %v1576 = vsub.s32 %v1575, 2
  %vm1577 = vcmp.gt.s32.totalorder 0, %v1576
  %v1578 = vsel %vm1577, 0, %v1576
  %v1579 = vsub.s32 32, %v1578
  %v1580 = vshll.u32 %v1571, %v1578
  %v1581 = vshrl.u32 %v1563, %v1579
  %v1582 = vor.u32 %v1580, %v1581
  %v1583 = vsub.s32 4294967266, %v1578
  %v1584 = vadd.s32 %v1583, 127
  %v1585 = vshll.u32 %v1584, 23
  %v1586 = vor.u32 4788187, %v1585
  %v1587 = vand.u32 2147483647, %v1586
  %v1589 = vcvt.s32.f32 %v1582
  %v1590 = vmul.f32 %v1589, %v1587
  %v1591 = vxor.u32 %v1590, 2147483648
  %v1592 = vsel %vm1509, %v1591, %v1590
  %v1593 = vsub.s32 4, %v1569
  %v1594 = vsel %vm1509, %v1593, %v1569
  %v1595 = vsel %vm1508, %v63, %v1592
  %v1596 = vsel %vm1508, 0, %v1594
  %v1597 = vcosq.f32.pop %v1595
  %v1598 = vsinq.f32.pop %v1595
  %vm1599 = vweird.f32 %v63
  %v1600 = vand.u32 %v1596, 3
  %vm1601 = vcmp.lt.s32.totalorder %v1600, 2
  %vm1602 = vcmp.eq.s32.totalorder %v1600, 0
  %v1603 = vxor.u32 %v1598, 2147483648
  %v1604 = vsel %vm1602, %v1597, %v1603
  %vm1605 = vcmp.eq.s32.totalorder %v1600, 2
  %v1606 = vxor.u32 %v1597, 2147483648
  %v1607 = vsel %vm1605, %v1606, %v1598
  %v1608 = vsel %vm1601, %v1604, %v1607
  %v1609 = vsel %vm1599, nan, %v1608
  %v1610 = vand.u32 2147483647, %v64
  %vm1611 = vcmp.le.f32.partialorder %v1610, 0.7853982
  %vm1612 = vcmp.lt.s32.totalorder %v64, 0
  %v1613 = vand.u32 %v64, 2139095040
  %v1614 = vshrl.u32 %v1613, 23
  %v1615 = vsub.s32 %v1614, 127
  %v1616 = vand.u32 2147483647, %v64
  %v1617 = vand.u32 %v1616, 8388607
  %v1618 = vor.u32 %v1617, 8388608
  %v1619 = vsub.s32 0, %v1618
  %v1620 = vadd.s32 %v1615, 1
  %vm1621 = vcmp.gt.s32.totalorder %v1620, 0
  %v1622 = vsel %vm1621, %v1620, 0
  %v1623 = vshrl.u32 %v1622, 5
  %v1624 = vand.u32 %v1622, 31
  %v1625 = vsub.s32 32, %v1624
  %v1626 = vshrl.u32 683565275, %v1625
  %v1627 = vshll.u32 683565275, %v1624
  %v1628 = vshrl.u32 2475754826, %v1625
  %v1629 = vor.u32 %v1627, %v1628
  %v1630 = vshll.u32 2475754826, %v1624
  %v1631 = vshrl.u32 2131351028, %v1625
  %v1632 = vor.u32 %v1630, %v1631
  %v1633 = vshll.u32 2131351028, %v1624
  %v1634 = vshrl.u32 2102212464, %v1625
  %v1635 = vor.u32 %v1633, %v1634
  %v1636 = vshll.u32 2102212464, %v1624
  %v1637 = vshrl.u32 920167782, %v1625
  %v1638 = vor.u32 %v1636, %v1637
  %v1639 = vshll.u32 920167782, %v1624
  %v1640 = vshrl.u32 1326507024, %v1625
  %v1641 = vor.u32 %v1639, %v1640
  %vm1642 = vcmp.lt.s32.totalorder %v1623, 1
  %vm1643 = vcmp.lt.s32.totalorder %v1623, 2
  %vm1644 = vcmp.lt.s32.totalorder %v1623, 3
  %vm1645 = vcmp.lt.s32.totalorder %v1623, 4
  %v1646 = vsel %vm1642, %v1626, %v1629
  %v1647 = vsel %vm1645, %v1635, 2102212464
  %v1648 = vsel %vm1644, %v1632, %v1647
  %v1649 = vsel %vm1643, %v1646, %v1648
  %v1650 = vsel %vm1642, %v1629, %v1632
  %v1651 = vsel %vm1645, %v1638, 920167782
  %v1652 = vsel %vm1644, %v1635, %v1651
  %v1653 = vsel %vm1643, %v1650, %v1652
  %v1654 = vsel %vm1642, %v1632, %v1635
  %v1655 = vsel %vm1645, %v1641, 1326507024
  %v1656 = vsel %vm1644, %v1638, %v1655
  %v1657 = vsel %vm1643, %v1654, %v1656
  %v1658 = vshll.u32 %v1618, 8
  %v1659 = vmul.u32.u64.compose %v1658, %v1657
  %v1660 = vextract.low.u32 %v1659
  %v1661 = vextract.high.u32 %v1659
  %v1662 = vmul.u32.u64.compose %v1658, %v1653
  %v1663 = vextract.low.u32 %v1662
  %v1664 = vextract.high.u32 %v1662
  %v1665 = vmul.u32 %v1658, %v1649
  %v1666 = vadd.s32 %v1661, %v1663
  %vm1667 = vc.u32 %v1661, %v1663
  %v1668 = vadd.s32 %v1664, 1
  %v1669 = vsel %vm1667, %v1668, %v1664
  %v1670 = vadd.s32 %v1665, %v1669
  %v1671 = vadd.s32 %v1670, 536870912
  %v1672 = vshrl.u32 %v1671, 30
  %v1673 = vshll.u32 %v1672, 30
  %v1674 = vsub.s32 %v1670, %v1673
  %vm1675 = vcmp.lt.s32.totalorder %v1674, 0
  %v1676 = vsub.s32 0, %v1674
  %v1677 = vsel %vm1675, %v1676, %v1674
  %v1678 = vclz %v1677
  %v1679 = vsub.s32 %v1678, 2
  %vm1680 = vcmp.gt.s32.totalorder 0, %v1679
  %v1681 = vsel %vm1680, 0, %v1679
  %v1682 = vsub.s32 32, %v1681
  %v1683 = vshll.u32 %v1674, %v1681
  %v1684 = vshrl.u32 %v1666, %v1682
  %v1685 = vor.u32 %v1683, %v1684
  %v1686 = vsub.s32 4294967266, %v1681
  %v1687 = vadd.s32 %v1686, 127
  %v1688 = vshll.u32 %v1687, 23
  %v1689 = vor.u32 4788187, %v1688
  %v1690 = vand.u32 2147483647, %v1689
  %v1692 = vcvt.s32.f32 %v1685
  %v1693 = vmul.f32 %v1692, %v1690
  %v1694 = vxor.u32 %v1693, 2147483648
  %v1695 = vsel %vm1612, %v1694, %v1693
  %v1696 = vsub.s32 4, %v1672
  %v1697 = vsel %vm1612, %v1696, %v1672
  %v1698 = vsel %vm1611, %v64, %v1695
  %v1699 = vsel %vm1611, 0, %v1697
  %v1700 = vcosq.f32.pop %v1698
  %v1701 = vsinq.f32.pop %v1698
  %vm1702 = vweird.f32 %v64
  %v1703 = vand.u32 %v1699, 3
  %vm1704 = vcmp.lt.s32.totalorder %v1703, 2
  %vm1705 = vcmp.eq.s32.totalorder %v1703, 0
  %v1706 = vxor.u32 %v1701, 2147483648
  %v1707 = vsel %vm1705, %v1700, %v1706
  %vm1708 = vcmp.eq.s32.totalorder %v1703, 2
  %v1709 = vxor.u32 %v1700, 2147483648
  %v1710 = vsel %vm1708, %v1709, %v1701
  %v1711 = vsel %vm1704, %v1707, %v1710
  %v1712 = vsel %vm1702, nan, %v1711
  %v1713 = vadd.f32 %v167, 1.0
  %v1714 = vadd.f32 %v270, 1.0
  %v1715 = vadd.f32 %v373, 1.0
  %v1716 = vadd.f32 %v476, 1.0
  %v1717 = vadd.f32 %v579, 1.0
  %v1718 = vadd.f32 %v682, 1.0
  %v1719 = vadd.f32 %v785, 1.0
  %v1720 = vadd.f32 %v888, 1.0
  %v1721 = vadd.f32 %v991, 1.0
  %v1722 = vadd.f32 %v1094, 1.0
  %v1723 = vadd.f32 %v1197, 1.0
  %v1724 = vadd.f32 %v1300, 1.0
  %v1725 = vadd.f32 %v1403, 1.0
  %v1726 = vadd.f32 %v1506, 1.0
  %v1727 = vadd.f32 %v1609, 1.0
  %v1728 = vadd.f32 %v1712, 1.0
  %v1729 = vmul.f32 %v1713, 0.5
  %v1730 = vmul.f32 %v1714, 0.5
  %v1731 = vmul.f32 %v1715, 0.5
  %v1732 = vmul.f32 %v1716, 0.5
  %v1733 = vmul.f32 %v1717, 0.5
  %v1734 = vmul.f32 %v1718, 0.5
  %v1735 = vmul.f32 %v1719, 0.5
  %v1736 = vmul.f32 %v1720, 0.5
  %v1737 = vmul.f32 %v1721, 0.5
  %v1738 = vmul.f32 %v1722, 0.5
  %v1739 = vmul.f32 %v1723, 0.5
  %v1740 = vmul.f32 %v1724, 0.5
  %v1741 = vmul.f32 %v1725, 0.5
  %v1742 = vmul.f32 %v1726, 0.5
  %v1743 = vmul.f32 %v1727, 0.5
  %v1744 = vmul.f32 %v1728, 0.5
  %vm1745 = vcmp.lt.f32.partialorder %v33, 4.0
  %vm1746 = vcmp.lt.f32.partialorder %v34, 4.0
  %vm1747 = vcmp.lt.f32.partialorder %v35, 4.0
  %vm1748 = vcmp.lt.f32.partialorder %v36, 4.0
  %vm1749 = vcmp.lt.f32.partialorder %v37, 4.0
  %vm1750 = vcmp.lt.f32.partialorder %v38, 4.0
  %vm1751 = vcmp.lt.f32.partialorder %v39, 4.0
  %vm1752 = vcmp.lt.f32.partialorder %v40, 4.0
  %vm1753 = vcmp.lt.f32.partialorder %v41, 4.0
  %vm1754 = vcmp.lt.f32.partialorder %v42, 4.0
  %vm1755 = vcmp.lt.f32.partialorder %v43, 4.0
  %vm1756 = vcmp.lt.f32.partialorder %v44, 4.0
  %vm1757 = vcmp.lt.f32.partialorder %v45, 4.0
  %vm1758 = vcmp.lt.f32.partialorder %v46, 4.0
  %vm1759 = vcmp.lt.f32.partialorder %v47, 4.0
  %vm1760 = vcmp.lt.f32.partialorder %v48, 4.0
  %v1761 = vsel %vm1745, %v1729, 0.0
  %v1762 = vsel %vm1746, %v1730, 0.0
  %v1763 = vsel %vm1747, %v1731, 0.0
  %v1764 = vsel %vm1748, %v1732, 0.0
  %v1765 = vsel %vm1749, %v1733, 0.0
  %v1766 = vsel %vm1750, %v1734, 0.0
  %v1767 = vsel %vm1751, %v1735, 0.0
  %v1768 = vsel %vm1752, %v1736, 0.0
  %v1769 = vsel %vm1753, %v1737, 0.0
  %v1770 = vsel %vm1754, %v1738, 0.0
  %v1771 = vsel %vm1755, %v1739, 0.0
  %v1772 = vsel %vm1756, %v1740, 0.0
  %v1773 = vsel %vm1757, %v1741, 0.0
  %v1774 = vsel %vm1758, %v1742, 0.0
  %v1775 = vsel %vm1759, %v1743, 0.0
  %v1776 = vsel %vm1760, %v1744, 0.0
  %v1777 = vld [vmem:[%s1] sm:$0xff]
  %v1778 = vld [vmem:[%s1 + $0x8] sm:$0xff]
  %v1779 = vld [vmem:[%s1 + $0x10] sm:$0xff]
  %v1780 = vld [vmem:[%s1 + $0x18] sm:$0xff]
  %v1781 = vld [vmem:[%s1 + $0x20] sm:$0xff]
  %v1782 = vld [vmem:[%s1 + $0x28] sm:$0xff]
  %v1783 = vld [vmem:[%s1 + $0x30] sm:$0xff]
  %v1784 = vld [vmem:[%s1 + $0x38] sm:$0xff]
  %v1785 = vld [vmem:[%s1 + $0x40] sm:$0xff]
  %v1786 = vld [vmem:[%s1 + $0x48] sm:$0xff]
  %v1787 = vld [vmem:[%s1 + $0x50] sm:$0xff]
  %v1788 = vld [vmem:[%s1 + $0x58] sm:$0xff]
  %v1789 = vld [vmem:[%s1 + $0x60] sm:$0xff]
  %v1790 = vld [vmem:[%s1 + $0x68] sm:$0xff]
  %v1791 = vld [vmem:[%s1 + $0x70] sm:$0xff]
  %v1792 = vld [vmem:[%s1 + $0x78] sm:$0xff]
  %v1793 = vmul.f32 %v1777, %v1761
  %v1794 = vmul.f32 %v1778, %v1762
  %v1795 = vmul.f32 %v1779, %v1763
  %v1796 = vmul.f32 %v1780, %v1764
  %v1797 = vmul.f32 %v1781, %v1765
  %v1798 = vmul.f32 %v1782, %v1766
  %v1799 = vmul.f32 %v1783, %v1767
  %v1800 = vmul.f32 %v1784, %v1768
  %v1801 = vmul.f32 %v1785, %v1769
  %v1802 = vmul.f32 %v1786, %v1770
  %v1803 = vmul.f32 %v1787, %v1771
  %v1804 = vmul.f32 %v1788, %v1772
  %v1805 = vmul.f32 %v1789, %v1773
  %v1806 = vmul.f32 %v1790, %v1774
  %v1807 = vmul.f32 %v1791, %v1775
  %v1808 = vmul.f32 %v1792, %v1776
  %v1809 = vld [vmem:[%s3] sm:$0x1]
  %v1810 = vld [vmem:[%s4] sm:$0x1]
  %v1811 = vsub.f32 0.0, %v1810
  %1812 = vst [vmem:[#allocation2] sm:$0xff] 0.0
  %1813 = vst [vmem:[#allocation2 + $0x8] sm:$0xff] 0.0
  %1814 = vst [vmem:[#allocation2 + $0x10] sm:$0xff] 0.0
  %1815 = vst [vmem:[#allocation2 + $0x18] sm:$0xff] 0.0
  %1816 = vst [vmem:[#allocation2 + $0x20] sm:$0xff] 0.0
  %1817 = vst [vmem:[#allocation2 + $0x28] sm:$0xff] 0.0
  %1818 = vst [vmem:[#allocation2 + $0x30] sm:$0xff] 0.0
  %1819 = vst [vmem:[#allocation2 + $0x38] sm:$0xff] 0.0
  %1820 = vst [vmem:[#allocation2 + $0x40] sm:$0xff] 0.0
  %1821 = vst [vmem:[#allocation2 + $0x48] sm:$0xff] 0.0
  %1822 = vst [vmem:[#allocation2 + $0x50] sm:$0xff] 0.0
  %1823 = vst [vmem:[#allocation2 + $0x58] sm:$0xff] 0.0
  %1824 = vst [vmem:[#allocation2 + $0x60] sm:$0xff] 0.0
  %1825 = vst [vmem:[#allocation2 + $0x68] sm:$0xff] 0.0
  %1826 = vst [vmem:[#allocation2 + $0x70] sm:$0xff] 0.0
  %1827 = vst [vmem:[#allocation2 + $0x78] sm:$0xff] 0.0
  %1829 = vset.pattern.permute.xlu0 0
  %1830 = vperm.xlu0 %1829, %v33
  %v1831 = vpop.permute.xlu0 %1830
  %1834 = vset.pattern.permute.xlu0 0
  %1835 = vperm.xlu0 %1834, %v34
  %v1836 = vpop.permute.xlu0 %1835
  %1839 = vset.pattern.permute.xlu0 0
  %1840 = vperm.xlu0 %1839, %v35
  %v1841 = vpop.permute.xlu0 %1840
  %1844 = vset.pattern.permute.xlu0 0
  %1845 = vperm.xlu0 %1844, %v36
  %v1846 = vpop.permute.xlu0 %1845
  %1849 = vset.pattern.permute.xlu0 0
  %1850 = vperm.xlu0 %1849, %v37
  %v1851 = vpop.permute.xlu0 %1850
  %1854 = vset.pattern.permute.xlu0 0
  %1855 = vperm.xlu0 %1854, %v38
  %v1856 = vpop.permute.xlu0 %1855
  %1859 = vset.pattern.permute.xlu0 0
  %1860 = vperm.xlu0 %1859, %v39
  %v1861 = vpop.permute.xlu0 %1860
  %1864 = vset.pattern.permute.xlu0 0
  %1865 = vperm.xlu0 %1864, %v40
  %v1866 = vpop.permute.xlu0 %1865
  %1869 = vset.pattern.permute.xlu0 0
  %1870 = vperm.xlu0 %1869, %v41
  %v1871 = vpop.permute.xlu0 %1870
  %1874 = vset.pattern.permute.xlu0 0
  %1875 = vperm.xlu0 %1874, %v42
  %v1876 = vpop.permute.xlu0 %1875
  %1879 = vset.pattern.permute.xlu0 0
  %1880 = vperm.xlu0 %1879, %v43
  %v1881 = vpop.permute.xlu0 %1880
  %1884 = vset.pattern.permute.xlu0 0
  %1885 = vperm.xlu0 %1884, %v44
  %v1886 = vpop.permute.xlu0 %1885
  %1889 = vset.pattern.permute.xlu0 0
  %1890 = vperm.xlu0 %1889, %v45
  %v1891 = vpop.permute.xlu0 %1890
  %1894 = vset.pattern.permute.xlu0 0
  %1895 = vperm.xlu0 %1894, %v46
  %v1896 = vpop.permute.xlu0 %1895
  %1899 = vset.pattern.permute.xlu0 0
  %1900 = vperm.xlu0 %1899, %v47
  %v1901 = vpop.permute.xlu0 %1900
  %1904 = vset.pattern.permute.xlu0 0
  %1905 = vperm.xlu0 %1904, %v48
  %v1906 = vpop.permute.xlu0 %1905
  %v1909 = vlaneseq
  %v1910 = vshrl.u32 %v1909, 7
  %v1911 = vsub.s32 0, %v1910
  %v1912 = vrot.slane %v1809, %v1911
  %v1914 = vsub.f32 %v1831, %v1912
  %v1915 = vsub.f32 %v1836, %v1912
  %v1916 = vsub.f32 %v1841, %v1912
  %v1917 = vsub.f32 %v1846, %v1912
  %v1918 = vsub.f32 %v1851, %v1912
  %v1919 = vsub.f32 %v1856, %v1912
  %v1920 = vsub.f32 %v1861, %v1912
  %v1921 = vsub.f32 %v1866, %v1912
  %v1922 = vsub.f32 %v1871, %v1912
  %v1923 = vsub.f32 %v1876, %v1912
  %v1924 = vsub.f32 %v1881, %v1912
  %v1925 = vsub.f32 %v1886, %v1912
  %v1926 = vsub.f32 %v1891, %v1912
  %v1927 = vsub.f32 %v1896, %v1912
  %v1928 = vsub.f32 %v1901, %v1912
  %v1929 = vsub.f32 %v1906, %v1912
  %v1930 = vld [vmem:[#allocation2] sm:$0xff]
  %v1931 = vld [vmem:[#allocation2 + $0x8] sm:$0xff]
  %v1932 = vld [vmem:[#allocation2 + $0x10] sm:$0xff]
  %v1933 = vld [vmem:[#allocation2 + $0x18] sm:$0xff]
  %v1934 = vld [vmem:[#allocation2 + $0x20] sm:$0xff]
  %v1935 = vld [vmem:[#allocation2 + $0x28] sm:$0xff]
  %v1936 = vld [vmem:[#allocation2 + $0x30] sm:$0xff]
  %v1937 = vld [vmem:[#allocation2 + $0x38] sm:$0xff]
  %v1938 = vld [vmem:[#allocation2 + $0x40] sm:$0xff]
  %v1939 = vld [vmem:[#allocation2 + $0x48] sm:$0xff]
  %v1940 = vld [vmem:[#allocation2 + $0x50] sm:$0xff]
  %v1941 = vld [vmem:[#allocation2 + $0x58] sm:$0xff]
  %v1942 = vld [vmem:[#allocation2 + $0x60] sm:$0xff]
  %v1943 = vld [vmem:[#allocation2 + $0x68] sm:$0xff]
  %v1944 = vld [vmem:[#allocation2 + $0x70] sm:$0xff]
  %v1945 = vld [vmem:[#allocation2 + $0x78] sm:$0xff]
  %v1946 = vmul.f32 %v1914, %v1914
  %v1947 = vmul.f32 %v1915, %v1915
  %v1948 = vmul.f32 %v1916, %v1916
  %v1949 = vmul.f32 %v1917, %v1917
  %v1950 = vmul.f32 %v1918, %v1918
  %v1951 = vmul.f32 %v1919, %v1919
  %v1952 = vmul.f32 %v1920, %v1920
  %v1953 = vmul.f32 %v1921, %v1921
  %v1954 = vmul.f32 %v1922, %v1922
  %v1955 = vmul.f32 %v1923, %v1923
  %v1956 = vmul.f32 %v1924, %v1924
  %v1957 = vmul.f32 %v1925, %v1925
  %v1958 = vmul.f32 %v1926, %v1926
  %v1959 = vmul.f32 %v1927, %v1927
  %v1960 = vmul.f32 %v1928, %v1928
  %v1961 = vmul.f32 %v1929, %v1929
  %v1963 = vlaneseq
  %v1964 = vshrl.u32 %v1963, 7
  %v1965 = vsub.s32 0, %v1964
  %v1966 = vrot.slane %v1811, %v1965
  %v1968 = vmul.f32 %v1966, %v1946
  %v1969 = vmul.f32 %v1966, %v1947
  %v1970 = vmul.f32 %v1966, %v1948
  %v1971 = vmul.f32 %v1966, %v1949
  %v1972 = vmul.f32 %v1966, %v1950
  %v1973 = vmul.f32 %v1966, %v1951
  %v1974 = vmul.f32 %v1966, %v1952
  %v1975 = vmul.f32 %v1966, %v1953
  %v1976 = vmul.f32 %v1966, %v1954
  %v1977 = vmul.f32 %v1966, %v1955
  %v1978 = vmul.f32 %v1966, %v1956
  %v1979 = vmul.f32 %v1966, %v1957
  %v1980 = vmul.f32 %v1966, %v1958
  %v1981 = vmul.f32 %v1966, %v1959
  %v1982 = vmul.f32 %v1966, %v1960
  %v1983 = vmul.f32 %v1966, %v1961
  %v1984 = vmul.f32 %v1968, 1.442695
  %v1985 = vpow.pop %v1984
  %v1986 = vmul.f32 %v1969, 1.442695
  %v1987 = vpow.pop %v1986
  %v1988 = vmul.f32 %v1970, 1.442695
  %v1989 = vpow.pop %v1988
  %v1990 = vmul.f32 %v1971, 1.442695
  %v1991 = vpow.pop %v1990
  %v1992 = vmul.f32 %v1972, 1.442695
  %v1993 = vpow.pop %v1992
  %v1994 = vmul.f32 %v1973, 1.442695
  %v1995 = vpow.pop %v1994
  %v1996 = vmul.f32 %v1974, 1.442695
  %v1997 = vpow.pop %v1996
  %v1998 = vmul.f32 %v1975, 1.442695
  %v1999 = vpow.pop %v1998
  %v2000 = vmul.f32 %v1976, 1.442695
  %v2001 = vpow.pop %v2000
  %v2002 = vmul.f32 %v1977, 1.442695
  %v2003 = vpow.pop %v2002
  %v2004 = vmul.f32 %v1978, 1.442695
  %v2005 = vpow.pop %v2004
  %v2006 = vmul.f32 %v1979, 1.442695
  %v2007 = vpow.pop %v2006
  %v2008 = vmul.f32 %v1980, 1.442695
  %v2009 = vpow.pop %v2008
  %v2010 = vmul.f32 %v1981, 1.442695
  %v2011 = vpow.pop %v2010
  %v2012 = vmul.f32 %v1982, 1.442695
  %v2013 = vpow.pop %v2012
  %v2014 = vmul.f32 %v1983, 1.442695
  %v2015 = vpow.pop %v2014
  %2017 = vset.pattern.permute.xlu0 0
  %2018 = vperm.xlu0 %2017, %v1793
  %v2019 = vpop.permute.xlu0 %2018
  %2022 = vset.pattern.permute.xlu0 0
  %2023 = vperm.xlu0 %2022, %v1794
  %v2024 = vpop.permute.xlu0 %2023
  %2027 = vset.pattern.permute.xlu0 0
  %2028 = vperm.xlu0 %2027, %v1795
  %v2029 = vpop.permute.xlu0 %2028
  %2032 = vset.pattern.permute.xlu0 0
  %2033 = vperm.xlu0 %2032, %v1796
  %v2034 = vpop.permute.xlu0 %2033
  %2037 = vset.pattern.permute.xlu0 0
  %2038 = vperm.xlu0 %2037, %v1797
  %v2039 = vpop.permute.xlu0 %2038
  %2042 = vset.pattern.permute.xlu0 0
  %2043 = vperm.xlu0 %2042, %v1798
  %v2044 = vpop.permute.xlu0 %2043
  %2047 = vset.pattern.permute.xlu0 0
  %2048 = vperm.xlu0 %2047, %v1799
  %v2049 = vpop.permute.xlu0 %2048
  %2052 = vset.pattern.permute.xlu0 0
  %2053 = vperm.xlu0 %2052, %v1800
  %v2054 = vpop.permute.xlu0 %2053
  %2057 = vset.pattern.permute.xlu0 0
  %2058 = vperm.xlu0 %2057, %v1801
  %v2059 = vpop.permute.xlu0 %2058
  %2062 = vset.pattern.permute.xlu0 0
  %2063 = vperm.xlu0 %2062, %v1802
  %v2064 = vpop.permute.xlu0 %2063
  %2067 = vset.pattern.permute.xlu0 0
  %2068 = vperm.xlu0 %2067, %v1803
  %v2069 = vpop.permute.xlu0 %2068
  %2072 = vset.pattern.permute.xlu0 0
  %2073 = vperm.xlu0 %2072, %v1804
  %v2074 = vpop.permute.xlu0 %2073
  %2077 = vset.pattern.permute.xlu0 0
  %2078 = vperm.xlu0 %2077, %v1805
  %v2079 = vpop.permute.xlu0 %2078
  %2082 = vset.pattern.permute.xlu0 0
  %2083 = vperm.xlu0 %2082, %v1806
  %v2084 = vpop.permute.xlu0 %2083
  %2087 = vset.pattern.permute.xlu0 0
  %2088 = vperm.xlu0 %2087, %v1807
  %v2089 = vpop.permute.xlu0 %2088
  %2092 = vset.pattern.permute.xlu0 0
  %2093 = vperm.xlu0 %2092, %v1808
  %v2094 = vpop.permute.xlu0 %2093
  %v2096 = vmul.f32 %v2019, %v1985
  %v2097 = vmul.f32 %v2024, %v1987
  %v2098 = vmul.f32 %v2029, %v1989
  %v2099 = vmul.f32 %v2034, %v1991
  %v2100 = vmul.f32 %v2039, %v1993
  %v2101 = vmul.f32 %v2044, %v1995
  %v2102 = vmul.f32 %v2049, %v1997
  %v2103 = vmul.f32 %v2054, %v1999
  %v2104 = vmul.f32 %v2059, %v2001
  %v2105 = vmul.f32 %v2064, %v2003
  %v2106 = vmul.f32 %v2069, %v2005
  %v2107 = vmul.f32 %v2074, %v2007
  %v2108 = vmul.f32 %v2079, %v2009
  %v2109 = vmul.f32 %v2084, %v2011
  %v2110 = vmul.f32 %v2089, %v2013
  %v2111 = vmul.f32 %v2094, %v2015
  %v2112 = vadd.f32 %v1930, %v2096
  %v2113 = vadd.f32 %v1931, %v2097
  %v2114 = vadd.f32 %v1932, %v2098
  %v2115 = vadd.f32 %v1933, %v2099
  %v2116 = vadd.f32 %v1934, %v2100
  %v2117 = vadd.f32 %v1935, %v2101
  %v2118 = vadd.f32 %v1936, %v2102
  %v2119 = vadd.f32 %v1937, %v2103
  %v2120 = vadd.f32 %v1938, %v2104
  %v2121 = vadd.f32 %v1939, %v2105
  %v2122 = vadd.f32 %v1940, %v2106
  %v2123 = vadd.f32 %v1941, %v2107
  %v2124 = vadd.f32 %v1942, %v2108
  %v2125 = vadd.f32 %v1943, %v2109
  %v2126 = vadd.f32 %v1944, %v2110
  %v2127 = vadd.f32 %v1945, %v2111
  %2128 = vst [vmem:[#allocation2] sm:$0xff] %v2112
  %2129 = vst [vmem:[#allocation2 + $0x8] sm:$0xff] %v2113
  %2130 = vst [vmem:[#allocation2 + $0x10] sm:$0xff] %v2114
  %2131 = vst [vmem:[#allocation2 + $0x18] sm:$0xff] %v2115
  %2132 = vst [vmem:[#allocation2 + $0x20] sm:$0xff] %v2116
  %2133 = vst [vmem:[#allocation2 + $0x28] sm:$0xff] %v2117
  %2134 = vst [vmem:[#allocation2 + $0x30] sm:$0xff] %v2118
  %2135 = vst [vmem:[#allocation2 + $0x38] sm:$0xff] %v2119
  %2136 = vst [vmem:[#allocation2 + $0x40] sm:$0xff] %v2120
  %2137 = vst [vmem:[#allocation2 + $0x48] sm:$0xff] %v2121
  %2138 = vst [vmem:[#allocation2 + $0x50] sm:$0xff] %v2122
  %2139 = vst [vmem:[#allocation2 + $0x58] sm:$0xff] %v2123
  %2140 = vst [vmem:[#allocation2 + $0x60] sm:$0xff] %v2124
  %2141 = vst [vmem:[#allocation2 + $0x68] sm:$0xff] %v2125
  %2142 = vst [vmem:[#allocation2 + $0x70] sm:$0xff] %v2126
  %2143 = vst [vmem:[#allocation2 + $0x78] sm:$0xff] %v2127
  %2144 = vset.pattern.permute.xlu0 1
  %2145 = vperm.xlu0 %2144, %v33
  %v2146 = vpop.permute.xlu0 %2145
  %2148 = vset.pattern.permute.xlu0 1
  %2149 = vperm.xlu0 %2148, %v34
  %v2150 = vpop.permute.xlu0 %2149
  %2152 = vset.pattern.permute.xlu0 1
  %2153 = vperm.xlu0 %2152, %v35
  %v2154 = vpop.permute.xlu0 %2153
  %2156 = vset.pattern.permute.xlu0 1
  %2157 = vperm.xlu0 %2156, %v36
  %v2158 = vpop.permute.xlu0 %2157
  %2160 = vset.pattern.permute.xlu0 1
  %2161 = vperm.xlu0 %2160, %v37
  %v2162 = vpop.permute.xlu0 %2161
  %2164 = vset.pattern.permute.xlu0 1
  %2165 = vperm.xlu0 %2164, %v38
  %v2166 = vpop.permute.xlu0 %2165
  %2168 = vset.pattern.permute.xlu0 1
  %2169 = vperm.xlu0 %2168, %v39
  %v2170 = vpop.permute.xlu0 %2169
  %2172 = vset.pattern.permute.xlu0 1
  %2173 = vperm.xlu0 %2172, %v40
  %v2174 = vpop.permute.xlu0 %2173
  %2176 = vset.pattern.permute.xlu0 1
  %2177 = vperm.xlu0 %2176, %v41
  %v2178 = vpop.permute.xlu0 %2177
  %2180 = vset.pattern.permute.xlu0 1
  %2181 = vperm.xlu0 %2180, %v42
  %v2182 = vpop.permute.xlu0 %2181
  %2184 = vset.pattern.permute.xlu0 1
  %2185 = vperm.xlu0 %2184, %v43
  %v2186 = vpop.permute.xlu0 %2185
  %2188 = vset.pattern.permute.xlu0 1
  %2189 = vperm.xlu0 %2188, %v44
  %v2190 = vpop.permute.xlu0 %2189
  %2192 = vset.pattern.permute.xlu0 1
  %2193 = vperm.xlu0 %2192, %v45
  %v2194 = vpop.permute.xlu0 %2193
  %2196 = vset.pattern.permute.xlu0 1
  %2197 = vperm.xlu0 %2196, %v46
  %v2198 = vpop.permute.xlu0 %2197
  %2200 = vset.pattern.permute.xlu0 1
  %2201 = vperm.xlu0 %2200, %v47
  %v2202 = vpop.permute.xlu0 %2201
  %2204 = vset.pattern.permute.xlu0 1
  %2205 = vperm.xlu0 %2204, %v48
  %v2206 = vpop.permute.xlu0 %2205
  %v2208 = vsub.f32 %v2146, %v1912
  %v2209 = vsub.f32 %v2150, %v1912
  %v2210 = vsub.f32 %v2154, %v1912
  %v2211 = vsub.f32 %v2158, %v1912
  %v2212 = vsub.f32 %v2162, %v1912
  %v2213 = vsub.f32 %v2166, %v1912
  %v2214 = vsub.f32 %v2170, %v1912
  %v2215 = vsub.f32 %v2174, %v1912
  %v2216 = vsub.f32 %v2178, %v1912
  %v2217 = vsub.f32 %v2182, %v1912
  %v2218 = vsub.f32 %v2186, %v1912
  %v2219 = vsub.f32 %v2190, %v1912
  %v2220 = vsub.f32 %v2194, %v1912
  %v2221 = vsub.f32 %v2198, %v1912
  %v2222 = vsub.f32 %v2202, %v1912
  %v2223 = vsub.f32 %v2206, %v1912
  %v2224 = vld [vmem:[#allocation2] sm:$0xff]
  %v2225 = vld [vmem:[#allocation2 + $0x8] sm:$0xff]
  %v2226 = vld [vmem:[#allocation2 + $0x10] sm:$0xff]
  %v2227 = vld [vmem:[#allocation2 + $0x18] sm:$0xff]
  %v2228 = vld [vmem:[#allocation2 + $0x20] sm:$0xff]
  %v2229 = vld [vmem:[#allocation2 + $0x28] sm:$0xff]
  %v2230 = vld [vmem:[#allocation2 + $0x30] sm:$0xff]
  %v2231 = vld [vmem:[#allocation2 + $0x38] sm:$0xff]
  %v2232 = vld [vmem:[#allocation2 + $0x40] sm:$0xff]
  %v2233 = vld [vmem:[#allocation2 + $0x48] sm:$0xff]
  %v2234 = vld [vmem:[#allocation2 + $0x50] sm:$0xff]
  %v2235 = vld [vmem:[#allocation2 + $0x58] sm:$0xff]
  %v2236 = vld [vmem:[#allocation2 + $0x60] sm:$0xff]
  %v2237 = vld [vmem:[#allocation2 + $0x68] sm:$0xff]
  %v2238 = vld [vmem:[#allocation2 + $0x70] sm:$0xff]
  %v2239 = vld [vmem:[#allocation2 + $0x78] sm:$0xff]
  %v2240 = vmul.f32 %v2208, %v2208
  %v2241 = vmul.f32 %v2209, %v2209
  %v2242 = vmul.f32 %v2210, %v2210
  %v2243 = vmul.f32 %v2211, %v2211
  %v2244 = vmul.f32 %v2212, %v2212
  %v2245 = vmul.f32 %v2213, %v2213
  %v2246 = vmul.f32 %v2214, %v2214
  %v2247 = vmul.f32 %v2215, %v2215
  %v2248 = vmul.f32 %v2216, %v2216
  %v2249 = vmul.f32 %v2217, %v2217
  %v2250 = vmul.f32 %v2218, %v2218
  %v2251 = vmul.f32 %v2219, %v2219
  %v2252 = vmul.f32 %v2220, %v2220
  %v2253 = vmul.f32 %v2221, %v2221
  %v2254 = vmul.f32 %v2222, %v2222
  %v2255 = vmul.f32 %v2223, %v2223
  %v2256 = vmul.f32 %v1966, %v2240
  %v2257 = vmul.f32 %v1966, %v2241
  %v2258 = vmul.f32 %v1966, %v2242
  %v2259 = vmul.f32 %v1966, %v2243
  %v2260 = vmul.f32 %v1966, %v2244
  %v2261 = vmul.f32 %v1966, %v2245
  %v2262 = vmul.f32 %v1966, %v2246
  %v2263 = vmul.f32 %v1966, %v2247
  %v2264 = vmul.f32 %v1966, %v2248
  %v2265 = vmul.f32 %v1966, %v2249
  %v2266 = vmul.f32 %v1966, %v2250
  %v2267 = vmul.f32 %v1966, %v2251
  %v2268 = vmul.f32 %v1966, %v2252
  %v2269 = vmul.f32 %v1966, %v2253
  %v2270 = vmul.f32 %v1966, %v2254
  %v2271 = vmul.f32 %v1966, %v2255
  %v2272 = vmul.f32 %v2256, 1.442695
  %v2273 = vpow.pop %v2272
  %v2274 = vmul.f32 %v2257, 1.442695
  %v2275 = vpow.pop %v2274
  %v2276 = vmul.f32 %v2258, 1.442695
  %v2277 = vpow.pop %v2276
  %v2278 = vmul.f32 %v2259, 1.442695
  %v2279 = vpow.pop %v2278
  %v2280 = vmul.f32 %v2260, 1.442695
  %v2281 = vpow.pop %v2280
  %v2282 = vmul.f32 %v2261, 1.442695
  %v2283 = vpow.pop %v2282
  %v2284 = vmul.f32 %v2262, 1.442695
  %v2285 = vpow.pop %v2284
  %v2286 = vmul.f32 %v2263, 1.442695
  %v2287 = vpow.pop %v2286
  %v2288 = vmul.f32 %v2264, 1.442695
  %v2289 = vpow.pop %v2288
  %v2290 = vmul.f32 %v2265, 1.442695
  %v2291 = vpow.pop %v2290
  %v2292 = vmul.f32 %v2266, 1.442695
  %v2293 = vpow.pop %v2292
  %v2294 = vmul.f32 %v2267, 1.442695
  %v2295 = vpow.pop %v2294
  %v2296 = vmul.f32 %v2268, 1.442695
  %v2297 = vpow.pop %v2296
  %v2298 = vmul.f32 %v2269, 1.442695
  %v2299 = vpow.pop %v2298
  %v2300 = vmul.f32 %v2270, 1.442695
  %v2301 = vpow.pop %v2300
  %v2302 = vmul.f32 %v2271, 1.442695
  %v2303 = vpow.pop %v2302
  %2304 = vset.pattern.permute.xlu0 1
  %2305 = vperm.xlu0 %2304, %v1793
  %v2306 = vpop.permute.xlu0 %2305
  %2308 = vset.pattern.permute.xlu0 1
  %2309 = vperm.xlu0 %2308, %v1794
  %v2310 = vpop.permute.xlu0 %2309
  %2312 = vset.pattern.permute.xlu0 1
  %2313 = vperm.xlu0 %2312, %v1795
  %v2314 = vpop.permute.xlu0 %2313
  %2316 = vset.pattern.permute.xlu0 1
  %2317 = vperm.xlu0 %2316, %v1796
  %v2318 = vpop.permute.xlu0 %2317
  %2320 = vset.pattern.permute.xlu0 1
  %2321 = vperm.xlu0 %2320, %v1797
  %v2322 = vpop.permute.xlu0 %2321
  %2324 = vset.pattern.permute.xlu0 1
  %2325 = vperm.xlu0 %2324, %v1798
  %v2326 = vpop.permute.xlu0 %2325
  %2328 = vset.pattern.permute.xlu0 1
  %2329 = vperm.xlu0 %2328, %v1799
  %v2330 = vpop.permute.xlu0 %2329
  %2332 = vset.pattern.permute.xlu0 1
  %2333 = vperm.xlu0 %2332, %v1800
  %v2334 = vpop.permute.xlu0 %2333
  %2336 = vset.pattern.permute.xlu0 1
  %2337 = vperm.xlu0 %2336, %v1801
  %v2338 = vpop.permute.xlu0 %2337
  %2340 = vset.pattern.permute.xlu0 1
  %2341 = vperm.xlu0 %2340, %v1802
  %v2342 = vpop.permute.xlu0 %2341
  %2344 = vset.pattern.permute.xlu0 1
  %2345 = vperm.xlu0 %2344, %v1803
  %v2346 = vpop.permute.xlu0 %2345
  %2348 = vset.pattern.permute.xlu0 1
  %2349 = vperm.xlu0 %2348, %v1804
  %v2350 = vpop.permute.xlu0 %2349
  %2352 = vset.pattern.permute.xlu0 1
  %2353 = vperm.xlu0 %2352, %v1805
  %v2354 = vpop.permute.xlu0 %2353
  %2356 = vset.pattern.permute.xlu0 1
  %2357 = vperm.xlu0 %2356, %v1806
  %v2358 = vpop.permute.xlu0 %2357
  %2360 = vset.pattern.permute.xlu0 1
  %2361 = vperm.xlu0 %2360, %v1807
  %v2362 = vpop.permute.xlu0 %2361
  %2364 = vset.pattern.permute.xlu0 1
  %2365 = vperm.xlu0 %2364, %v1808
  %v2366 = vpop.permute.xlu0 %2365
  %v2368 = vmul.f32 %v2306, %v2273
  %v2369 = vmul.f32 %v2310, %v2275
  %v2370 = vmul.f32 %v2314, %v2277
  %v2371 = vmul.f32 %v2318, %v2279
  %v2372 = vmul.f32 %v2322, %v2281
  %v2373 = vmul.f32 %v2326, %v2283
  %v2374 = vmul.f32 %v2330, %v2285
  %v2375 = vmul.f32 %v2334, %v2287
  %v2376 = vmul.f32 %v2338, %v2289
  %v2377 = vmul.f32 %v2342, %v2291
  %v2378 = vmul.f32 %v2346, %v2293
  %v2379 = vmul.f32 %v2350, %v2295
  %v2380 = vmul.f32 %v2354, %v2297
  %v2381 = vmul.f32 %v2358, %v2299
  %v2382 = vmul.f32 %v2362, %v2301
  %v2383 = vmul.f32 %v2366, %v2303
  %v2384 = vadd.f32 %v2224, %v2368
  %v2385 = vadd.f32 %v2225, %v2369
  %v2386 = vadd.f32 %v2226, %v2370
  %v2387 = vadd.f32 %v2227, %v2371
  %v2388 = vadd.f32 %v2228, %v2372
  %v2389 = vadd.f32 %v2229, %v2373
  %v2390 = vadd.f32 %v2230, %v2374
  %v2391 = vadd.f32 %v2231, %v2375
  %v2392 = vadd.f32 %v2232, %v2376
  %v2393 = vadd.f32 %v2233, %v2377
  %v2394 = vadd.f32 %v2234, %v2378
  %v2395 = vadd.f32 %v2235, %v2379
  %v2396 = vadd.f32 %v2236, %v2380
  %v2397 = vadd.f32 %v2237, %v2381
  %v2398 = vadd.f32 %v2238, %v2382
  %v2399 = vadd.f32 %v2239, %v2383
  %2400 = vst [vmem:[#allocation2] sm:$0xff] %v2384
  %2401 = vst [vmem:[#allocation2 + $0x8] sm:$0xff] %v2385
  %2402 = vst [vmem:[#allocation2 + $0x10] sm:$0xff] %v2386
  %2403 = vst [vmem:[#allocation2 + $0x18] sm:$0xff] %v2387
  %2404 = vst [vmem:[#allocation2 + $0x20] sm:$0xff] %v2388
  %2405 = vst [vmem:[#allocation2 + $0x28] sm:$0xff] %v2389
  %2406 = vst [vmem:[#allocation2 + $0x30] sm:$0xff] %v2390
  %2407 = vst [vmem:[#allocation2 + $0x38] sm:$0xff] %v2391
  %2408 = vst [vmem:[#allocation2 + $0x40] sm:$0xff] %v2392
  %2409 = vst [vmem:[#allocation2 + $0x48] sm:$0xff] %v2393
  %2410 = vst [vmem:[#allocation2 + $0x50] sm:$0xff] %v2394
  %2411 = vst [vmem:[#allocation2 + $0x58] sm:$0xff] %v2395
  %2412 = vst [vmem:[#allocation2 + $0x60] sm:$0xff] %v2396
  %2413 = vst [vmem:[#allocation2 + $0x68] sm:$0xff] %v2397
  %2414 = vst [vmem:[#allocation2 + $0x70] sm:$0xff] %v2398
  %2415 = vst [vmem:[#allocation2 + $0x78] sm:$0xff] %v2399
  %2416 = vset.pattern.permute.xlu0 2
  %2417 = vperm.xlu0 %2416, %v33
  %v2418 = vpop.permute.xlu0 %2417
  %2420 = vset.pattern.permute.xlu0 2
  %2421 = vperm.xlu0 %2420, %v34
  %v2422 = vpop.permute.xlu0 %2421
  %2424 = vset.pattern.permute.xlu0 2
  %2425 = vperm.xlu0 %2424, %v35
  %v2426 = vpop.permute.xlu0 %2425
  %2428 = vset.pattern.permute.xlu0 2
  %2429 = vperm.xlu0 %2428, %v36
  %v2430 = vpop.permute.xlu0 %2429
  %2432 = vset.pattern.permute.xlu0 2
  %2433 = vperm.xlu0 %2432, %v37
  %v2434 = vpop.permute.xlu0 %2433
  %2436 = vset.pattern.permute.xlu0 2
  %2437 = vperm.xlu0 %2436, %v38
  %v2438 = vpop.permute.xlu0 %2437
  %2440 = vset.pattern.permute.xlu0 2
  %2441 = vperm.xlu0 %2440, %v39
  %v2442 = vpop.permute.xlu0 %2441
  %2444 = vset.pattern.permute.xlu0 2
  %2445 = vperm.xlu0 %2444, %v40
  %v2446 = vpop.permute.xlu0 %2445
  %2448 = vset.pattern.permute.xlu0 2
  %2449 = vperm.xlu0 %2448, %v41
  %v2450 = vpop.permute.xlu0 %2449
  %2452 = vset.pattern.permute.xlu0 2
  %2453 = vperm.xlu0 %2452, %v42
  %v2454 = vpop.permute.xlu0 %2453
  %2456 = vset.pattern.permute.xlu0 2
  %2457 = vperm.xlu0 %2456, %v43
  %v2458 = vpop.permute.xlu0 %2457
  %2460 = vset.pattern.permute.xlu0 2
  %2461 = vperm.xlu0 %2460, %v44
  %v2462 = vpop.permute.xlu0 %2461
  %2464 = vset.pattern.permute.xlu0 2
  %2465 = vperm.xlu0 %2464, %v45
  %v2466 = vpop.permute.xlu0 %2465
  %2468 = vset.pattern.permute.xlu0 2
  %2469 = vperm.xlu0 %2468, %v46
  %v2470 = vpop.permute.xlu0 %2469
  %2472 = vset.pattern.permute.xlu0 2
  %2473 = vperm.xlu0 %2472, %v47
  %v2474 = vpop.permute.xlu0 %2473
  %2476 = vset.pattern.permute.xlu0 2
  %2477 = vperm.xlu0 %2476, %v48
  %v2478 = vpop.permute.xlu0 %2477
  %v2480 = vsub.f32 %v2418, %v1912
  %v2481 = vsub.f32 %v2422, %v1912
  %v2482 = vsub.f32 %v2426, %v1912
  %v2483 = vsub.f32 %v2430, %v1912
  %v2484 = vsub.f32 %v2434, %v1912
  %v2485 = vsub.f32 %v2438, %v1912
  %v2486 = vsub.f32 %v2442, %v1912
  %v2487 = vsub.f32 %v2446, %v1912
  %v2488 = vsub.f32 %v2450, %v1912
  %v2489 = vsub.f32 %v2454, %v1912
  %v2490 = vsub.f32 %v2458, %v1912
  %v2491 = vsub.f32 %v2462, %v1912
  %v2492 = vsub.f32 %v2466, %v1912
  %v2493 = vsub.f32 %v2470, %v1912
  %v2494 = vsub.f32 %v2474, %v1912
  %v2495 = vsub.f32 %v2478, %v1912
  %v2496 = vld [vmem:[#allocation2] sm:$0xff]
  %v2497 = vld [vmem:[#allocation2 + $0x8] sm:$0xff]
  %v2498 = vld [vmem:[#allocation2 + $0x10] sm:$0xff]
  %v2499 = vld [vmem:[#allocation2 + $0x18] sm:$0xff]
  %v2500 = vld [vmem:[#allocation2 + $0x20] sm:$0xff]
  %v2501 = vld [vmem:[#allocation2 + $0x28] sm:$0xff]
  %v2502 = vld [vmem:[#allocation2 + $0x30] sm:$0xff]
  %v2503 = vld [vmem:[#allocation2 + $0x38] sm:$0xff]
  %v2504 = vld [vmem:[#allocation2 + $0x40] sm:$0xff]
  %v2505 = vld [vmem:[#allocation2 + $0x48] sm:$0xff]
  %v2506 = vld [vmem:[#allocation2 + $0x50] sm:$0xff]
  %v2507 = vld [vmem:[#allocation2 + $0x58] sm:$0xff]
  %v2508 = vld [vmem:[#allocation2 + $0x60] sm:$0xff]
  %v2509 = vld [vmem:[#allocation2 + $0x68] sm:$0xff]
  %v2510 = vld [vmem:[#allocation2 + $0x70] sm:$0xff]
  %v2511 = vld [vmem:[#allocation2 + $0x78] sm:$0xff]
  %v2512 = vmul.f32 %v2480, %v2480
  %v2513 = vmul.f32 %v2481, %v2481
  %v2514 = vmul.f32 %v2482, %v2482
  %v2515 = vmul.f32 %v2483, %v2483
  %v2516 = vmul.f32 %v2484, %v2484
  %v2517 = vmul.f32 %v2485, %v2485
  %v2518 = vmul.f32 %v2486, %v2486
  %v2519 = vmul.f32 %v2487, %v2487
  %v2520 = vmul.f32 %v2488, %v2488
  %v2521 = vmul.f32 %v2489, %v2489
  %v2522 = vmul.f32 %v2490, %v2490
  %v2523 = vmul.f32 %v2491, %v2491
  %v2524 = vmul.f32 %v2492, %v2492
  %v2525 = vmul.f32 %v2493, %v2493
  %v2526 = vmul.f32 %v2494, %v2494
  %v2527 = vmul.f32 %v2495, %v2495
  %v2528 = vmul.f32 %v1966, %v2512
  %v2529 = vmul.f32 %v1966, %v2513
  %v2530 = vmul.f32 %v1966, %v2514
  %v2531 = vmul.f32 %v1966, %v2515
  %v2532 = vmul.f32 %v1966, %v2516
  %v2533 = vmul.f32 %v1966, %v2517
  %v2534 = vmul.f32 %v1966, %v2518
  %v2535 = vmul.f32 %v1966, %v2519
  %v2536 = vmul.f32 %v1966, %v2520
  %v2537 = vmul.f32 %v1966, %v2521
  %v2538 = vmul.f32 %v1966, %v2522
  %v2539 = vmul.f32 %v1966, %v2523
  %v2540 = vmul.f32 %v1966, %v2524
  %v2541 = vmul.f32 %v1966, %v2525
  %v2542 = vmul.f32 %v1966, %v2526
  %v2543 = vmul.f32 %v1966, %v2527
  %v2544 = vmul.f32 %v2528, 1.442695
  %v2545 = vpow.pop %v2544
  %v2546 = vmul.f32 %v2529, 1.442695
  %v2547 = vpow.pop %v2546
  %v2548 = vmul.f32 %v2530, 1.442695
  %v2549 = vpow.pop %v2548
  %v2550 = vmul.f32 %v2531, 1.442695
  %v2551 = vpow.pop %v2550
  %v2552 = vmul.f32 %v2532, 1.442695
  %v2553 = vpow.pop %v2552
  %v2554 = vmul.f32 %v2533, 1.442695
  %v2555 = vpow.pop %v2554
  %v2556 = vmul.f32 %v2534, 1.442695
  %v2557 = vpow.pop %v2556
  %v2558 = vmul.f32 %v2535, 1.442695
  %v2559 = vpow.pop %v2558
  %v2560 = vmul.f32 %v2536, 1.442695
  %v2561 = vpow.pop %v2560
  %v2562 = vmul.f32 %v2537, 1.442695
  %v2563 = vpow.pop %v2562
  %v2564 = vmul.f32 %v2538, 1.442695
  %v2565 = vpow.pop %v2564
  %v2566 = vmul.f32 %v2539, 1.442695
  %v2567 = vpow.pop %v2566
  %v2568 = vmul.f32 %v2540, 1.442695
  %v2569 = vpow.pop %v2568
  %v2570 = vmul.f32 %v2541, 1.442695
  %v2571 = vpow.pop %v2570
  %v2572 = vmul.f32 %v2542, 1.442695
  %v2573 = vpow.pop %v2572
  %v2574 = vmul.f32 %v2543, 1.442695
  %v2575 = vpow.pop %v2574
  %2576 = vset.pattern.permute.xlu0 2
  %2577 = vperm.xlu0 %2576, %v1793
  %v2578 = vpop.permute.xlu0 %2577
  %2580 = vset.pattern.permute.xlu0 2
  %2581 = vperm.xlu0 %2580, %v1794
  %v2582 = vpop.permute.xlu0 %2581
  %2584 = vset.pattern.permute.xlu0 2
  %2585 = vperm.xlu0 %2584, %v1795
  %v2586 = vpop.permute.xlu0 %2585
  %2588 = vset.pattern.permute.xlu0 2
  %2589 = vperm.xlu0 %2588, %v1796
  %v2590 = vpop.permute.xlu0 %2589
  %2592 = vset.pattern.permute.xlu0 2
  %2593 = vperm.xlu0 %2592, %v1797
  %v2594 = vpop.permute.xlu0 %2593
  %2596 = vset.pattern.permute.xlu0 2
  %2597 = vperm.xlu0 %2596, %v1798
  %v2598 = vpop.permute.xlu0 %2597
  %2600 = vset.pattern.permute.xlu0 2
  %2601 = vperm.xlu0 %2600, %v1799
  %v2602 = vpop.permute.xlu0 %2601
  %2604 = vset.pattern.permute.xlu0 2
  %2605 = vperm.xlu0 %2604, %v1800
  %v2606 = vpop.permute.xlu0 %2605
  %2608 = vset.pattern.permute.xlu0 2
  %2609 = vperm.xlu0 %2608, %v1801
  %v2610 = vpop.permute.xlu0 %2609
  %2612 = vset.pattern.permute.xlu0 2
  %2613 = vperm.xlu0 %2612, %v1802
  %v2614 = vpop.permute.xlu0 %2613
  %2616 = vset.pattern.permute.xlu0 2
  %2617 = vperm.xlu0 %2616, %v1803
  %v2618 = vpop.permute.xlu0 %2617
  %2620 = vset.pattern.permute.xlu0 2
  %2621 = vperm.xlu0 %2620, %v1804
  %v2622 = vpop.permute.xlu0 %2621
  %2624 = vset.pattern.permute.xlu0 2
  %2625 = vperm.xlu0 %2624, %v1805
  %v2626 = vpop.permute.xlu0 %2625
  %2628 = vset.pattern.permute.xlu0 2
  %2629 = vperm.xlu0 %2628, %v1806
  %v2630 = vpop.permute.xlu0 %2629
  %2632 = vset.pattern.permute.xlu0 2
  %2633 = vperm.xlu0 %2632, %v1807
  %v2634 = vpop.permute.xlu0 %2633
  %2636 = vset.pattern.permute.xlu0 2
  %2637 = vperm.xlu0 %2636, %v1808
  %v2638 = vpop.permute.xlu0 %2637
  %v2640 = vmul.f32 %v2578, %v2545
  %v2641 = vmul.f32 %v2582, %v2547
  %v2642 = vmul.f32 %v2586, %v2549
  %v2643 = vmul.f32 %v2590, %v2551
  %v2644 = vmul.f32 %v2594, %v2553
  %v2645 = vmul.f32 %v2598, %v2555
  %v2646 = vmul.f32 %v2602, %v2557
  %v2647 = vmul.f32 %v2606, %v2559
  %v2648 = vmul.f32 %v2610, %v2561
  %v2649 = vmul.f32 %v2614, %v2563
  %v2650 = vmul.f32 %v2618, %v2565
  %v2651 = vmul.f32 %v2622, %v2567
  %v2652 = vmul.f32 %v2626, %v2569
  %v2653 = vmul.f32 %v2630, %v2571
  %v2654 = vmul.f32 %v2634, %v2573
  %v2655 = vmul.f32 %v2638, %v2575
  %v2656 = vadd.f32 %v2496, %v2640
  %v2657 = vadd.f32 %v2497, %v2641
  %v2658 = vadd.f32 %v2498, %v2642
  %v2659 = vadd.f32 %v2499, %v2643
  %v2660 = vadd.f32 %v2500, %v2644
  %v2661 = vadd.f32 %v2501, %v2645
  %v2662 = vadd.f32 %v2502, %v2646
  %v2663 = vadd.f32 %v2503, %v2647
  %v2664 = vadd.f32 %v2504, %v2648
  %v2665 = vadd.f32 %v2505, %v2649
  %v2666 = vadd.f32 %v2506, %v2650
  %v2667 = vadd.f32 %v2507, %v2651
  %v2668 = vadd.f32 %v2508, %v2652
  %v2669 = vadd.f32 %v2509, %v2653
  %v2670 = vadd.f32 %v2510, %v2654
  %v2671 = vadd.f32 %v2511, %v2655
  %2672 = vst [vmem:[#allocation2] sm:$0xff] %v2656
  %2673 = vst [vmem:[#allocation2 + $0x8] sm:$0xff] %v2657
  %2674 = vst [vmem:[#allocation2 + $0x10] sm:$0xff] %v2658
  %2675 = vst [vmem:[#allocation2 + $0x18] sm:$0xff] %v2659
  %2676 = vst [vmem:[#allocation2 + $0x20] sm:$0xff] %v2660
  %2677 = vst [vmem:[#allocation2 + $0x28] sm:$0xff] %v2661
  %2678 = vst [vmem:[#allocation2 + $0x30] sm:$0xff] %v2662
  %2679 = vst [vmem:[#allocation2 + $0x38] sm:$0xff] %v2663
  %2680 = vst [vmem:[#allocation2 + $0x40] sm:$0xff] %v2664
  %2681 = vst [vmem:[#allocation2 + $0x48] sm:$0xff] %v2665
  %2682 = vst [vmem:[#allocation2 + $0x50] sm:$0xff] %v2666
  %2683 = vst [vmem:[#allocation2 + $0x58] sm:$0xff] %v2667
  %2684 = vst [vmem:[#allocation2 + $0x60] sm:$0xff] %v2668
  %2685 = vst [vmem:[#allocation2 + $0x68] sm:$0xff] %v2669
  %2686 = vst [vmem:[#allocation2 + $0x70] sm:$0xff] %v2670
  %2687 = vst [vmem:[#allocation2 + $0x78] sm:$0xff] %v2671
  %2688 = vset.pattern.permute.xlu0 3
  %2689 = vperm.xlu0 %2688, %v33
  %v2690 = vpop.permute.xlu0 %2689
  %2692 = vset.pattern.permute.xlu0 3
  %2693 = vperm.xlu0 %2692, %v34
  %v2694 = vpop.permute.xlu0 %2693
  %2696 = vset.pattern.permute.xlu0 3
  %2697 = vperm.xlu0 %2696, %v35
  %v2698 = vpop.permute.xlu0 %2697
  %2700 = vset.pattern.permute.xlu0 3
  %2701 = vperm.xlu0 %2700, %v36
  %v2702 = vpop.permute.xlu0 %2701
  %2704 = vset.pattern.permute.xlu0 3
  %2705 = vperm.xlu0 %2704, %v37
  %v2706 = vpop.permute.xlu0 %2705
  %2708 = vset.pattern.permute.xlu0 3
  %2709 = vperm.xlu0 %2708, %v38
  %v2710 = vpop.permute.xlu0 %2709
  %2712 = vset.pattern.permute.xlu0 3
  %2713 = vperm.xlu0 %2712, %v39
  %v2714 = vpop.permute.xlu0 %2713
  %2716 = vset.pattern.permute.xlu0 3
  %2717 = vperm.xlu0 %2716, %v40
  %v2718 = vpop.permute.xlu0 %2717
  %2720 = vset.pattern.permute.xlu0 3
  %2721 = vperm.xlu0 %2720, %v41
  %v2722 = vpop.permute.xlu0 %2721
  %2724 = vset.pattern.permute.xlu0 3
  %2725 = vperm.xlu0 %2724, %v42
  %v2726 = vpop.permute.xlu0 %2725
  %2728 = vset.pattern.permute.xlu0 3
  %2729 = vperm.xlu0 %2728, %v43
  %v2730 = vpop.permute.xlu0 %2729
  %2732 = vset.pattern.permute.xlu0 3
  %2733 = vperm.xlu0 %2732, %v44
  %v2734 = vpop.permute.xlu0 %2733
  %2736 = vset.pattern.permute.xlu0 3
  %2737 = vperm.xlu0 %2736, %v45
  %v2738 = vpop.permute.xlu0 %2737
  %2740 = vset.pattern.permute.xlu0 3
  %2741 = vperm.xlu0 %2740, %v46
  %v2742 = vpop.permute.xlu0 %2741
  %2744 = vset.pattern.permute.xlu0 3
  %2745 = vperm.xlu0 %2744, %v47
  %v2746 = vpop.permute.xlu0 %2745
  %2748 = vset.pattern.permute.xlu0 3
  %2749 = vperm.xlu0 %2748, %v48
  %v2750 = vpop.permute.xlu0 %2749
  %v2752 = vsub.f32 %v2690, %v1912
  %v2753 = vsub.f32 %v2694, %v1912
  %v2754 = vsub.f32 %v2698, %v1912
  %v2755 = vsub.f32 %v2702, %v1912
  %v2756 = vsub.f32 %v2706, %v1912
  %v2757 = vsub.f32 %v2710, %v1912
  %v2758 = vsub.f32 %v2714, %v1912
  %v2759 = vsub.f32 %v2718, %v1912
  %v2760 = vsub.f32 %v2722, %v1912
  %v2761 = vsub.f32 %v2726, %v1912
  %v2762 = vsub.f32 %v2730, %v1912
  %v2763 = vsub.f32 %v2734, %v1912
  %v2764 = vsub.f32 %v2738, %v1912
  %v2765 = vsub.f32 %v2742, %v1912
  %v2766 = vsub.f32 %v2746, %v1912
  %v2767 = vsub.f32 %v2750, %v1912
  %v2768 = vld [vmem:[#allocation2] sm:$0xff]
  %v2769 = vld [vmem:[#allocation2 + $0x8] sm:$0xff]
  %v2770 = vld [vmem:[#allocation2 + $0x10] sm:$0xff]
  %v2771 = vld [vmem:[#allocation2 + $0x18] sm:$0xff]
  %v2772 = vld [vmem:[#allocation2 + $0x20] sm:$0xff]
  %v2773 = vld [vmem:[#allocation2 + $0x28] sm:$0xff]
  %v2774 = vld [vmem:[#allocation2 + $0x30] sm:$0xff]
  %v2775 = vld [vmem:[#allocation2 + $0x38] sm:$0xff]
  %v2776 = vld [vmem:[#allocation2 + $0x40] sm:$0xff]
  %v2777 = vld [vmem:[#allocation2 + $0x48] sm:$0xff]
  %v2778 = vld [vmem:[#allocation2 + $0x50] sm:$0xff]
  %v2779 = vld [vmem:[#allocation2 + $0x58] sm:$0xff]
  %v2780 = vld [vmem:[#allocation2 + $0x60] sm:$0xff]
  %v2781 = vld [vmem:[#allocation2 + $0x68] sm:$0xff]
  %v2782 = vld [vmem:[#allocation2 + $0x70] sm:$0xff]
  %v2783 = vld [vmem:[#allocation2 + $0x78] sm:$0xff]
  %v2784 = vmul.f32 %v2752, %v2752
  %v2785 = vmul.f32 %v2753, %v2753
  %v2786 = vmul.f32 %v2754, %v2754
  %v2787 = vmul.f32 %v2755, %v2755
  %v2788 = vmul.f32 %v2756, %v2756
  %v2789 = vmul.f32 %v2757, %v2757
  %v2790 = vmul.f32 %v2758, %v2758
  %v2791 = vmul.f32 %v2759, %v2759
  %v2792 = vmul.f32 %v2760, %v2760
  %v2793 = vmul.f32 %v2761, %v2761
  %v2794 = vmul.f32 %v2762, %v2762
  %v2795 = vmul.f32 %v2763, %v2763
  %v2796 = vmul.f32 %v2764, %v2764
  %v2797 = vmul.f32 %v2765, %v2765
  %v2798 = vmul.f32 %v2766, %v2766
  %v2799 = vmul.f32 %v2767, %v2767
  %v2800 = vmul.f32 %v1966, %v2784
  %v2801 = vmul.f32 %v1966, %v2785
  %v2802 = vmul.f32 %v1966, %v2786
  %v2803 = vmul.f32 %v1966, %v2787
  %v2804 = vmul.f32 %v1966, %v2788
  %v2805 = vmul.f32 %v1966, %v2789
  %v2806 = vmul.f32 %v1966, %v2790
  %v2807 = vmul.f32 %v1966, %v2791
  %v2808 = vmul.f32 %v1966, %v2792
  %v2809 = vmul.f32 %v1966, %v2793
  %v2810 = vmul.f32 %v1966, %v2794
  %v2811 = vmul.f32 %v1966, %v2795
  %v2812 = vmul.f32 %v1966, %v2796
  %v2813 = vmul.f32 %v1966, %v2797
  %v2814 = vmul.f32 %v1966, %v2798
  %v2815 = vmul.f32 %v1966, %v2799
  %v2816 = vmul.f32 %v2800, 1.442695
  %v2817 = vpow.pop %v2816
  %v2818 = vmul.f32 %v2801, 1.442695
  %v2819 = vpow.pop %v2818
  %v2820 = vmul.f32 %v2802, 1.442695
  %v2821 = vpow.pop %v2820
  %v2822 = vmul.f32 %v2803, 1.442695
  %v2823 = vpow.pop %v2822
  %v2824 = vmul.f32 %v2804, 1.442695
  %v2825 = vpow.pop %v2824
  %v2826 = vmul.f32 %v2805, 1.442695
  %v2827 = vpow.pop %v2826
  %v2828 = vmul.f32 %v2806, 1.442695
  %v2829 = vpow.pop %v2828
  %v2830 = vmul.f32 %v2807, 1.442695
  %v2831 = vpow.pop %v2830
  %v2832 = vmul.f32 %v2808, 1.442695
  %v2833 = vpow.pop %v2832
  %v2834 = vmul.f32 %v2809, 1.442695
  %v2835 = vpow.pop %v2834
  %v2836 = vmul.f32 %v2810, 1.442695
  %v2837 = vpow.pop %v2836
  %v2838 = vmul.f32 %v2811, 1.442695
  %v2839 = vpow.pop %v2838
  %v2840 = vmul.f32 %v2812, 1.442695
  %v2841 = vpow.pop %v2840
  %v2842 = vmul.f32 %v2813, 1.442695
  %v2843 = vpow.pop %v2842
  %v2844 = vmul.f32 %v2814, 1.442695
  %v2845 = vpow.pop %v2844
  %v2846 = vmul.f32 %v2815, 1.442695
  %v2847 = vpow.pop %v2846
  %2848 = vset.pattern.permute.xlu0 3
  %2849 = vperm.xlu0 %2848, %v1793
  %v2850 = vpop.permute.xlu0 %2849
  %2852 = vset.pattern.permute.xlu0 3
  %2853 = vperm.xlu0 %2852, %v1794
  %v2854 = vpop.permute.xlu0 %2853
  %2856 = vset.pattern.permute.xlu0 3
  %2857 = vperm.xlu0 %2856, %v1795
  %v2858 = vpop.permute.xlu0 %2857
  %2860 = vset.pattern.permute.xlu0 3
  %2861 = vperm.xlu0 %2860, %v1796
  %v2862 = vpop.permute.xlu0 %2861
  %2864 = vset.pattern.permute.xlu0 3
  %2865 = vperm.xlu0 %2864, %v1797
  %v2866 = vpop.permute.xlu0 %2865
  %2868 = vset.pattern.permute.xlu0 3
  %2869 = vperm.xlu0 %2868, %v1798
  %v2870 = vpop.permute.xlu0 %2869
  %2872 = vset.pattern.permute.xlu0 3
  %2873 = vperm.xlu0 %2872, %v1799
  %v2874 = vpop.permute.xlu0 %2873
  %2876 = vset.pattern.permute.xlu0 3
  %2877 = vperm.xlu0 %2876, %v1800
  %v2878 = vpop.permute.xlu0 %2877
  %2880 = vset.pattern.permute.xlu0 3
  %2881 = vperm.xlu0 %2880, %v1801
  %v2882 = vpop.permute.xlu0 %2881
  %2884 = vset.pattern.permute.xlu0 3
  %2885 = vperm.xlu0 %2884, %v1802
  %v2886 = vpop.permute.xlu0 %2885
  %2888 = vset.pattern.permute.xlu0 3
  %2889 = vperm.xlu0 %2888, %v1803
  %v2890 = vpop.permute.xlu0 %2889
  %2892 = vset.pattern.permute.xlu0 3
  %2893 = vperm.xlu0 %2892, %v1804
  %v2894 = vpop.permute.xlu0 %2893
  %2896 = vset.pattern.permute.xlu0 3
  %2897 = vperm.xlu0 %2896, %v1805
  %v2898 = vpop.permute.xlu0 %2897
  %2900 = vset.pattern.permute.xlu0 3
  %2901 = vperm.xlu0 %2900, %v1806
  %v2902 = vpop.permute.xlu0 %2901
  %2904 = vset.pattern.permute.xlu0 3
  %2905 = vperm.xlu0 %2904, %v1807
  %v2906 = vpop.permute.xlu0 %2905
  %2908 = vset.pattern.permute.xlu0 3
  %2909 = vperm.xlu0 %2908, %v1808
  %v2910 = vpop.permute.xlu0 %2909
  %v2912 = vmul.f32 %v2850, %v2817
  %v2913 = vmul.f32 %v2854, %v2819
  %v2914 = vmul.f32 %v2858, %v2821
  %v2915 = vmul.f32 %v2862, %v2823
  %v2916 = vmul.f32 %v2866, %v2825
  %v2917 = vmul.f32 %v2870, %v2827
  %v2918 = vmul.f32 %v2874, %v2829
  %v2919 = vmul.f32 %v2878, %v2831
  %v2920 = vmul.f32 %v2882, %v2833
  %v2921 = vmul.f32 %v2886, %v2835
  %v2922 = vmul.f32 %v2890, %v2837
  %v2923 = vmul.f32 %v2894, %v2839
  %v2924 = vmul.f32 %v2898, %v2841
  %v2925 = vmul.f32 %v2902, %v2843
  %v2926 = vmul.f32 %v2906, %v2845
  %v2927 = vmul.f32 %v2910, %v2847
  %v2928 = vadd.f32 %v2768, %v2912
  %v2929 = vadd.f32 %v2769, %v2913
  %v2930 = vadd.f32 %v2770, %v2914
  %v2931 = vadd.f32 %v2771, %v2915
  %v2932 = vadd.f32 %v2772, %v2916
  %v2933 = vadd.f32 %v2773, %v2917
  %v2934 = vadd.f32 %v2774, %v2918
  %v2935 = vadd.f32 %v2775, %v2919
  %v2936 = vadd.f32 %v2776, %v2920
  %v2937 = vadd.f32 %v2777, %v2921
  %v2938 = vadd.f32 %v2778, %v2922
  %v2939 = vadd.f32 %v2779, %v2923
  %v2940 = vadd.f32 %v2780, %v2924
  %v2941 = vadd.f32 %v2781, %v2925
  %v2942 = vadd.f32 %v2782, %v2926
  %v2943 = vadd.f32 %v2783, %v2927
  %2944 = vst [vmem:[#allocation2] sm:$0xff] %v2928
  %2945 = vst [vmem:[#allocation2 + $0x8] sm:$0xff] %v2929
  %2946 = vst [vmem:[#allocation2 + $0x10] sm:$0xff] %v2930
  %2947 = vst [vmem:[#allocation2 + $0x18] sm:$0xff] %v2931
  %2948 = vst [vmem:[#allocation2 + $0x20] sm:$0xff] %v2932
  %2949 = vst [vmem:[#allocation2 + $0x28] sm:$0xff] %v2933
  %2950 = vst [vmem:[#allocation2 + $0x30] sm:$0xff] %v2934
  %2951 = vst [vmem:[#allocation2 + $0x38] sm:$0xff] %v2935
  %2952 = vst [vmem:[#allocation2 + $0x40] sm:$0xff] %v2936
  %2953 = vst [vmem:[#allocation2 + $0x48] sm:$0xff] %v2937
  %2954 = vst [vmem:[#allocation2 + $0x50] sm:$0xff] %v2938
  %2955 = vst [vmem:[#allocation2 + $0x58] sm:$0xff] %v2939
  %2956 = vst [vmem:[#allocation2 + $0x60] sm:$0xff] %v2940
  %2957 = vst [vmem:[#allocation2 + $0x68] sm:$0xff] %v2941
  %2958 = vst [vmem:[#allocation2 + $0x70] sm:$0xff] %v2942
  %2959 = vst [vmem:[#allocation2 + $0x78] sm:$0xff] %v2943
  %2960 = vset.pattern.permute.xlu0 4
  %2961 = vperm.xlu0 %2960, %v33
  %v2962 = vpop.permute.xlu0 %2961
  %2964 = vset.pattern.permute.xlu0 4
  %2965 = vperm.xlu0 %2964, %v34
  %v2966 = vpop.permute.xlu0 %2965
  %2968 = vset.pattern.permute.xlu0 4
  %2969 = vperm.xlu0 %2968, %v35
  %v2970 = vpop.permute.xlu0 %2969
  %2972 = vset.pattern.permute.xlu0 4
  %2973 = vperm.xlu0 %2972, %v36
  %v2974 = vpop.permute.xlu0 %2973
  %2976 = vset.pattern.permute.xlu0 4
  %2977 = vperm.xlu0 %2976, %v37
  %v2978 = vpop.permute.xlu0 %2977
  %2980 = vset.pattern.permute.xlu0 4
  %2981 = vperm.xlu0 %2980, %v38
  %v2982 = vpop.permute.xlu0 %2981
  %2984 = vset.pattern.permute.xlu0 4
  %2985 = vperm.xlu0 %2984, %v39
  %v2986 = vpop.permute.xlu0 %2985
  %2988 = vset.pattern.permute.xlu0 4
  %2989 = vperm.xlu0 %2988, %v40
  %v2990 = vpop.permute.xlu0 %2989
  %2992 = vset.pattern.permute.xlu0 4
  %2993 = vperm.xlu0 %2992, %v41
  %v2994 = vpop.permute.xlu0 %2993
  %2996 = vset.pattern.permute.xlu0 4
  %2997 = vperm.xlu0 %2996, %v42
  %v2998 = vpop.permute.xlu0 %2997
  %3000 = vset.pattern.permute.xlu0 4
  %3001 = vperm.xlu0 %3000, %v43
  %v3002 = vpop.permute.xlu0 %3001
  %3004 = vset.pattern.permute.xlu0 4
  %3005 = vperm.xlu0 %3004, %v44
  %v3006 = vpop.permute.xlu0 %3005
  %3008 = vset.pattern.permute.xlu0 4
  %3009 = vperm.xlu0 %3008, %v45
  %v3010 = vpop.permute.xlu0 %3009
  %3012 = vset.pattern.permute.xlu0 4
  %3013 = vperm.xlu0 %3012, %v46
  %v3014 = vpop.permute.xlu0 %3013
  %3016 = vset.pattern.permute.xlu0 4
  %3017 = vperm.xlu0 %3016, %v47
  %v3018 = vpop.permute.xlu0 %3017
  %3020 = vset.pattern.permute.xlu0 4
  %3021 = vperm.xlu0 %3020, %v48
  %v3022 = vpop.permute.xlu0 %3021
  %v3024 = vsub.f32 %v2962, %v1912
  %v3025 = vsub.f32 %v2966, %v1912
  %v3026 = vsub.f32 %v2970, %v1912
  %v3027 = vsub.f32 %v2974, %v1912
  %v3028 = vsub.f32 %v2978, %v1912
  %v3029 = vsub.f32 %v2982, %v1912
  %v3030 = vsub.f32 %v2986, %v1912
  %v3031 = vsub.f32 %v2990, %v1912
  %v3032 = vsub.f32 %v2994, %v1912
  %v3033 = vsub.f32 %v2998, %v1912
  %v3034 = vsub.f32 %v3002, %v1912
  %v3035 = vsub.f32 %v3006, %v1912
  %v3036 = vsub.f32 %v3010, %v1912
  %v3037 = vsub.f32 %v3014, %v1912
  %v3038 = vsub.f32 %v3018, %v1912
  %v3039 = vsub.f32 %v3022, %v1912
  %v3040 = vld [vmem:[#allocation2] sm:$0xff]
  %v3041 = vld [vmem:[#allocation2 + $0x8] sm:$0xff]
  %v3042 = vld [vmem:[#allocation2 + $0x10] sm:$0xff]
  %v3043 = vld [vmem:[#allocation2 + $0x18] sm:$0xff]
  %v3044 = vld [vmem:[#allocation2 + $0x20] sm:$0xff]
  %v3045 = vld [vmem:[#allocation2 + $0x28] sm:$0xff]
  %v3046 = vld [vmem:[#allocation2 + $0x30] sm:$0xff]
  %v3047 = vld [vmem:[#allocation2 + $0x38] sm:$0xff]
  %v3048 = vld [vmem:[#allocation2 + $0x40] sm:$0xff]
  %v3049 = vld [vmem:[#allocation2 + $0x48] sm:$0xff]
  %v3050 = vld [vmem:[#allocation2 + $0x50] sm:$0xff]
  %v3051 = vld [vmem:[#allocation2 + $0x58] sm:$0xff]
  %v3052 = vld [vmem:[#allocation2 + $0x60] sm:$0xff]
  %v3053 = vld [vmem:[#allocation2 + $0x68] sm:$0xff]
  %v3054 = vld [vmem:[#allocation2 + $0x70] sm:$0xff]
  %v3055 = vld [vmem:[#allocation2 + $0x78] sm:$0xff]
  %v3056 = vmul.f32 %v3024, %v3024
  %v3057 = vmul.f32 %v3025, %v3025
  %v3058 = vmul.f32 %v3026, %v3026
  %v3059 = vmul.f32 %v3027, %v3027
  %v3060 = vmul.f32 %v3028, %v3028
  %v3061 = vmul.f32 %v3029, %v3029
  %v3062 = vmul.f32 %v3030, %v3030
  %v3063 = vmul.f32 %v3031, %v3031
  %v3064 = vmul.f32 %v3032, %v3032
  %v3065 = vmul.f32 %v3033, %v3033
  %v3066 = vmul.f32 %v3034, %v3034
  %v3067 = vmul.f32 %v3035, %v3035
  %v3068 = vmul.f32 %v3036, %v3036
  %v3069 = vmul.f32 %v3037, %v3037
  %v3070 = vmul.f32 %v3038, %v3038
  %v3071 = vmul.f32 %v3039, %v3039
  %v3072 = vmul.f32 %v1966, %v3056
  %v3073 = vmul.f32 %v1966, %v3057
  %v3074 = vmul.f32 %v1966, %v3058
  %v3075 = vmul.f32 %v1966, %v3059
  %v3076 = vmul.f32 %v1966, %v3060
  %v3077 = vmul.f32 %v1966, %v3061
  %v3078 = vmul.f32 %v1966, %v3062
  %v3079 = vmul.f32 %v1966, %v3063
  %v3080 = vmul.f32 %v1966, %v3064
  %v3081 = vmul.f32 %v1966, %v3065
  %v3082 = vmul.f32 %v1966, %v3066
  %v3083 = vmul.f32 %v1966, %v3067
  %v3084 = vmul.f32 %v1966, %v3068
  %v3085 = vmul.f32 %v1966, %v3069
  %v3086 = vmul.f32 %v1966, %v3070
  %v3087 = vmul.f32 %v1966, %v3071
  %v3088 = vmul.f32 %v3072, 1.442695
  %v3089 = vpow.pop %v3088
  %v3090 = vmul.f32 %v3073, 1.442695
  %v3091 = vpow.pop %v3090
  %v3092 = vmul.f32 %v3074, 1.442695
  %v3093 = vpow.pop %v3092
  %v3094 = vmul.f32 %v3075, 1.442695
  %v3095 = vpow.pop %v3094
  %v3096 = vmul.f32 %v3076, 1.442695
  %v3097 = vpow.pop %v3096
  %v3098 = vmul.f32 %v3077, 1.442695
  %v3099 = vpow.pop %v3098
  %v3100 = vmul.f32 %v3078, 1.442695
  %v3101 = vpow.pop %v3100
  %v3102 = vmul.f32 %v3079, 1.442695
  %v3103 = vpow.pop %v3102
  %v3104 = vmul.f32 %v3080, 1.442695
  %v3105 = vpow.pop %v3104
  %v3106 = vmul.f32 %v3081, 1.442695
  %v3107 = vpow.pop %v3106
  %v3108 = vmul.f32 %v3082, 1.442695
  %v3109 = vpow.pop %v3108
  %v3110 = vmul.f32 %v3083, 1.442695
  %v3111 = vpow.pop %v3110
  %v3112 = vmul.f32 %v3084, 1.442695
  %v3113 = vpow.pop %v3112
  %v3114 = vmul.f32 %v3085, 1.442695
  %v3115 = vpow.pop %v3114
  %v3116 = vmul.f32 %v3086, 1.442695
  %v3117 = vpow.pop %v3116
  %v3118 = vmul.f32 %v3087, 1.442695
  %v3119 = vpow.pop %v3118
  %3120 = vset.pattern.permute.xlu0 4
  %3121 = vperm.xlu0 %3120, %v1793
  %v3122 = vpop.permute.xlu0 %3121
  %3124 = vset.pattern.permute.xlu0 4
  %3125 = vperm.xlu0 %3124, %v1794
  %v3126 = vpop.permute.xlu0 %3125
  %3128 = vset.pattern.permute.xlu0 4
  %3129 = vperm.xlu0 %3128, %v1795
  %v3130 = vpop.permute.xlu0 %3129
  %3132 = vset.pattern.permute.xlu0 4
  %3133 = vperm.xlu0 %3132, %v1796
  %v3134 = vpop.permute.xlu0 %3133
  %3136 = vset.pattern.permute.xlu0 4
  %3137 = vperm.xlu0 %3136, %v1797
  %v3138 = vpop.permute.xlu0 %3137
  %3140 = vset.pattern.permute.xlu0 4
  %3141 = vperm.xlu0 %3140, %v1798
  %v3142 = vpop.permute.xlu0 %3141
  %3144 = vset.pattern.permute.xlu0 4
  %3145 = vperm.xlu0 %3144, %v1799
  %v3146 = vpop.permute.xlu0 %3145
  %3148 = vset.pattern.permute.xlu0 4
  %3149 = vperm.xlu0 %3148, %v1800
  %v3150 = vpop.permute.xlu0 %3149
  %3152 = vset.pattern.permute.xlu0 4
  %3153 = vperm.xlu0 %3152, %v1801
  %v3154 = vpop.permute.xlu0 %3153
  %3156 = vset.pattern.permute.xlu0 4
  %3157 = vperm.xlu0 %3156, %v1802
  %v3158 = vpop.permute.xlu0 %3157
  %3160 = vset.pattern.permute.xlu0 4
  %3161 = vperm.xlu0 %3160, %v1803
  %v3162 = vpop.permute.xlu0 %3161
  %3164 = vset.pattern.permute.xlu0 4
  %3165 = vperm.xlu0 %3164, %v1804
  %v3166 = vpop.permute.xlu0 %3165
  %3168 = vset.pattern.permute.xlu0 4
  %3169 = vperm.xlu0 %3168, %v1805
  %v3170 = vpop.permute.xlu0 %3169
  %3172 = vset.pattern.permute.xlu0 4
  %3173 = vperm.xlu0 %3172, %v1806
  %v3174 = vpop.permute.xlu0 %3173
  %3176 = vset.pattern.permute.xlu0 4
  %3177 = vperm.xlu0 %3176, %v1807
  %v3178 = vpop.permute.xlu0 %3177
  %3180 = vset.pattern.permute.xlu0 4
  %3181 = vperm.xlu0 %3180, %v1808
  %v3182 = vpop.permute.xlu0 %3181
  %v3184 = vmul.f32 %v3122, %v3089
  %v3185 = vmul.f32 %v3126, %v3091
  %v3186 = vmul.f32 %v3130, %v3093
  %v3187 = vmul.f32 %v3134, %v3095
  %v3188 = vmul.f32 %v3138, %v3097
  %v3189 = vmul.f32 %v3142, %v3099
  %v3190 = vmul.f32 %v3146, %v3101
  %v3191 = vmul.f32 %v3150, %v3103
  %v3192 = vmul.f32 %v3154, %v3105
  %v3193 = vmul.f32 %v3158, %v3107
  %v3194 = vmul.f32 %v3162, %v3109
  %v3195 = vmul.f32 %v3166, %v3111
  %v3196 = vmul.f32 %v3170, %v3113
  %v3197 = vmul.f32 %v3174, %v3115
  %v3198 = vmul.f32 %v3178, %v3117
  %v3199 = vmul.f32 %v3182, %v3119
  %v3200 = vadd.f32 %v3040, %v3184
  %v3201 = vadd.f32 %v3041, %v3185
  %v3202 = vadd.f32 %v3042, %v3186
  %v3203 = vadd.f32 %v3043, %v3187
  %v3204 = vadd.f32 %v3044, %v3188
  %v3205 = vadd.f32 %v3045, %v3189
  %v3206 = vadd.f32 %v3046, %v3190
  %v3207 = vadd.f32 %v3047, %v3191
  %v3208 = vadd.f32 %v3048, %v3192
  %v3209 = vadd.f32 %v3049, %v3193
  %v3210 = vadd.f32 %v3050, %v3194
  %v3211 = vadd.f32 %v3051, %v3195
  %v3212 = vadd.f32 %v3052, %v3196
  %v3213 = vadd.f32 %v3053, %v3197
  %v3214 = vadd.f32 %v3054, %v3198
  %v3215 = vadd.f32 %v3055, %v3199
  %3216 = vst [vmem:[#allocation2] sm:$0xff] %v3200
  %3217 = vst [vmem:[#allocation2 + $0x8] sm:$0xff] %v3201
  %3218 = vst [vmem:[#allocation2 + $0x10] sm:$0xff] %v3202
  %3219 = vst [vmem:[#allocation2 + $0x18] sm:$0xff] %v3203
  %3220 = vst [vmem:[#allocation2 + $0x20] sm:$0xff] %v3204
  %3221 = vst [vmem:[#allocation2 + $0x28] sm:$0xff] %v3205
  %3222 = vst [vmem:[#allocation2 + $0x30] sm:$0xff] %v3206
  %3223 = vst [vmem:[#allocation2 + $0x38] sm:$0xff] %v3207
  %3224 = vst [vmem:[#allocation2 + $0x40] sm:$0xff] %v3208
  %3225 = vst [vmem:[#allocation2 + $0x48] sm:$0xff] %v3209
  %3226 = vst [vmem:[#allocation2 + $0x50] sm:$0xff] %v3210
  %3227 = vst [vmem:[#allocation2 + $0x58] sm:$0xff] %v3211
  %3228 = vst [vmem:[#allocation2 + $0x60] sm:$0xff] %v3212
  %3229 = vst [vmem:[#allocation2 + $0x68] sm:$0xff] %v3213
  %3230 = vst [vmem:[#allocation2 + $0x70] sm:$0xff] %v3214
  %3231 = vst [vmem:[#allocation2 + $0x78] sm:$0xff] %v3215
  %3232 = vset.pattern.permute.xlu0 5
  %3233 = vperm.xlu0 %3232, %v33
  %v3234 = vpop.permute.xlu0 %3233
  %3236 = vset.pattern.permute.xlu0 5
  %3237 = vperm.xlu0 %3236, %v34
  %v3238 = vpop.permute.xlu0 %3237
  %3240 = vset.pattern.permute.xlu0 5
  %3241 = vperm.xlu0 %3240, %v35
  %v3242 = vpop.permute.xlu0 %3241
  %3244 = vset.pattern.permute.xlu0 5
  %3245 = vperm.xlu0 %3244, %v36
  %v3246 = vpop.permute.xlu0 %3245
  %3248 = vset.pattern.permute.xlu0 5
  %3249 = vperm.xlu0 %3248, %v37
  %v3250 = vpop.permute.xlu0 %3249
  %3252 = vset.pattern.permute.xlu0 5
  %3253 = vperm.xlu0 %3252, %v38
  %v3254 = vpop.permute.xlu0 %3253
  %3256 = vset.pattern.permute.xlu0 5
  %3257 = vperm.xlu0 %3256, %v39
  %v3258 = vpop.permute.xlu0 %3257
  %3260 = vset.pattern.permute.xlu0 5
  %3261 = vperm.xlu0 %3260, %v40
  %v3262 = vpop.permute.xlu0 %3261
  %3264 = vset.pattern.permute.xlu0 5
  %3265 = vperm.xlu0 %3264, %v41
  %v3266 = vpop.permute.xlu0 %3265
  %3268 = vset.pattern.permute.xlu0 5
  %3269 = vperm.xlu0 %3268, %v42
  %v3270 = vpop.permute.xlu0 %3269
  %3272 = vset.pattern.permute.xlu0 5
  %3273 = vperm.xlu0 %3272, %v43
  %v3274 = vpop.permute.xlu0 %3273
  %3276 = vset.pattern.permute.xlu0 5
  %3277 = vperm.xlu0 %3276, %v44
  %v3278 = vpop.permute.xlu0 %3277
  %3280 = vset.pattern.permute.xlu0 5
  %3281 = vperm.xlu0 %3280, %v45
  %v3282 = vpop.permute.xlu0 %3281
  %3284 = vset.pattern.permute.xlu0 5
  %3285 = vperm.xlu0 %3284, %v46
  %v3286 = vpop.permute.xlu0 %3285
  %3288 = vset.pattern.permute.xlu0 5
  %3289 = vperm.xlu0 %3288, %v47
  %v3290 = vpop.permute.xlu0 %3289
  %3292 = vset.pattern.permute.xlu0 5
  %3293 = vperm.xlu0 %3292, %v48
  %v3294 = vpop.permute.xlu0 %3293
  %v3296 = vsub.f32 %v3234, %v1912
  %v3297 = vsub.f32 %v3238, %v1912
  %v3298 = vsub.f32 %v3242, %v1912
  %v3299 = vsub.f32 %v3246, %v1912
  %v3300 = vsub.f32 %v3250, %v1912
  %v3301 = vsub.f32 %v3254, %v1912
  %v3302 = vsub.f32 %v3258, %v1912
  %v3303 = vsub.f32 %v3262, %v1912
  %v3304 = vsub.f32 %v3266, %v1912
  %v3305 = vsub.f32 %v3270, %v1912
  %v3306 = vsub.f32 %v3274, %v1912
  %v3307 = vsub.f32 %v3278, %v1912
  %v3308 = vsub.f32 %v3282, %v1912
  %v3309 = vsub.f32 %v3286, %v1912
  %v3310 = vsub.f32 %v3290, %v1912
  %v3311 = vsub.f32 %v3294, %v1912
  %v3312 = vld [vmem:[#allocation2] sm:$0xff]
  %v3313 = vld [vmem:[#allocation2 + $0x8] sm:$0xff]
  %v3314 = vld [vmem:[#allocation2 + $0x10] sm:$0xff]
  %v3315 = vld [vmem:[#allocation2 + $0x18] sm:$0xff]
  %v3316 = vld [vmem:[#allocation2 + $0x20] sm:$0xff]
  %v3317 = vld [vmem:[#allocation2 + $0x28] sm:$0xff]
  %v3318 = vld [vmem:[#allocation2 + $0x30] sm:$0xff]
  %v3319 = vld [vmem:[#allocation2 + $0x38] sm:$0xff]
  %v3320 = vld [vmem:[#allocation2 + $0x40] sm:$0xff]
  %v3321 = vld [vmem:[#allocation2 + $0x48] sm:$0xff]
  %v3322 = vld [vmem:[#allocation2 + $0x50] sm:$0xff]
  %v3323 = vld [vmem:[#allocation2 + $0x58] sm:$0xff]
  %v3324 = vld [vmem:[#allocation2 + $0x60] sm:$0xff]
  %v3325 = vld [vmem:[#allocation2 + $0x68] sm:$0xff]
  %v3326 = vld [vmem:[#allocation2 + $0x70] sm:$0xff]
  %v3327 = vld [vmem:[#allocation2 + $0x78] sm:$0xff]
  %v3328 = vmul.f32 %v3296, %v3296
  %v3329 = vmul.f32 %v3297, %v3297
  %v3330 = vmul.f32 %v3298, %v3298
  %v3331 = vmul.f32 %v3299, %v3299
  %v3332 = vmul.f32 %v3300, %v3300
  %v3333 = vmul.f32 %v3301, %v3301
  %v3334 = vmul.f32 %v3302, %v3302
  %v3335 = vmul.f32 %v3303, %v3303
  %v3336 = vmul.f32 %v3304, %v3304
  %v3337 = vmul.f32 %v3305, %v3305
  %v3338 = vmul.f32 %v3306, %v3306
  %v3339 = vmul.f32 %v3307, %v3307
  %v3340 = vmul.f32 %v3308, %v3308
  %v3341 = vmul.f32 %v3309, %v3309
  %v3342 = vmul.f32 %v3310, %v3310
  %v3343 = vmul.f32 %v3311, %v3311
  %v3344 = vmul.f32 %v1966, %v3328
  %v3345 = vmul.f32 %v1966, %v3329
  %v3346 = vmul.f32 %v1966, %v3330
  %v3347 = vmul.f32 %v1966, %v3331
  %v3348 = vmul.f32 %v1966, %v3332
  %v3349 = vmul.f32 %v1966, %v3333
  %v3350 = vmul.f32 %v1966, %v3334
  %v3351 = vmul.f32 %v1966, %v3335
  %v3352 = vmul.f32 %v1966, %v3336
  %v3353 = vmul.f32 %v1966, %v3337
  %v3354 = vmul.f32 %v1966, %v3338
  %v3355 = vmul.f32 %v1966, %v3339
  %v3356 = vmul.f32 %v1966, %v3340
  %v3357 = vmul.f32 %v1966, %v3341
  %v3358 = vmul.f32 %v1966, %v3342
  %v3359 = vmul.f32 %v1966, %v3343
  %v3360 = vmul.f32 %v3344, 1.442695
  %v3361 = vpow.pop %v3360
  %v3362 = vmul.f32 %v3345, 1.442695
  %v3363 = vpow.pop %v3362
  %v3364 = vmul.f32 %v3346, 1.442695
  %v3365 = vpow.pop %v3364
  %v3366 = vmul.f32 %v3347, 1.442695
  %v3367 = vpow.pop %v3366
  %v3368 = vmul.f32 %v3348, 1.442695
  %v3369 = vpow.pop %v3368
  %v3370 = vmul.f32 %v3349, 1.442695
  %v3371 = vpow.pop %v3370
  %v3372 = vmul.f32 %v3350, 1.442695
  %v3373 = vpow.pop %v3372
  %v3374 = vmul.f32 %v3351, 1.442695
  %v3375 = vpow.pop %v3374
  %v3376 = vmul.f32 %v3352, 1.442695
  %v3377 = vpow.pop %v3376
  %v3378 = vmul.f32 %v3353, 1.442695
  %v3379 = vpow.pop %v3378
  %v3380 = vmul.f32 %v3354, 1.442695
  %v3381 = vpow.pop %v3380
  %v3382 = vmul.f32 %v3355, 1.442695
  %v3383 = vpow.pop %v3382
  %v3384 = vmul.f32 %v3356, 1.442695
  %v3385 = vpow.pop %v3384
  %v3386 = vmul.f32 %v3357, 1.442695
  %v3387 = vpow.pop %v3386
  %v3388 = vmul.f32 %v3358, 1.442695
  %v3389 = vpow.pop %v3388
  %v3390 = vmul.f32 %v3359, 1.442695
  %v3391 = vpow.pop %v3390
  %3392 = vset.pattern.permute.xlu0 5
  %3393 = vperm.xlu0 %3392, %v1793
  %v3394 = vpop.permute.xlu0 %3393
  %3396 = vset.pattern.permute.xlu0 5
  %3397 = vperm.xlu0 %3396, %v1794
  %v3398 = vpop.permute.xlu0 %3397
  %3400 = vset.pattern.permute.xlu0 5
  %3401 = vperm.xlu0 %3400, %v1795
  %v3402 = vpop.permute.xlu0 %3401
  %3404 = vset.pattern.permute.xlu0 5
  %3405 = vperm.xlu0 %3404, %v1796
  %v3406 = vpop.permute.xlu0 %3405
  %3408 = vset.pattern.permute.xlu0 5
  %3409 = vperm.xlu0 %3408, %v1797
  %v3410 = vpop.permute.xlu0 %3409
  %3412 = vset.pattern.permute.xlu0 5
  %3413 = vperm.xlu0 %3412, %v1798
  %v3414 = vpop.permute.xlu0 %3413
  %3416 = vset.pattern.permute.xlu0 5
  %3417 = vperm.xlu0 %3416, %v1799
  %v3418 = vpop.permute.xlu0 %3417
  %3420 = vset.pattern.permute.xlu0 5
  %3421 = vperm.xlu0 %3420, %v1800
  %v3422 = vpop.permute.xlu0 %3421
  %3424 = vset.pattern.permute.xlu0 5
  %3425 = vperm.xlu0 %3424, %v1801
  %v3426 = vpop.permute.xlu0 %3425
  %3428 = vset.pattern.permute.xlu0 5
  %3429 = vperm.xlu0 %3428, %v1802
  %v3430 = vpop.permute.xlu0 %3429
  %3432 = vset.pattern.permute.xlu0 5
  %3433 = vperm.xlu0 %3432, %v1803
  %v3434 = vpop.permute.xlu0 %3433
  %3436 = vset.pattern.permute.xlu0 5
  %3437 = vperm.xlu0 %3436, %v1804
  %v3438 = vpop.permute.xlu0 %3437
  %3440 = vset.pattern.permute.xlu0 5
  %3441 = vperm.xlu0 %3440, %v1805
  %v3442 = vpop.permute.xlu0 %3441
  %3444 = vset.pattern.permute.xlu0 5
  %3445 = vperm.xlu0 %3444, %v1806
  %v3446 = vpop.permute.xlu0 %3445
  %3448 = vset.pattern.permute.xlu0 5
  %3449 = vperm.xlu0 %3448, %v1807
  %v3450 = vpop.permute.xlu0 %3449
  %3452 = vset.pattern.permute.xlu0 5
  %3453 = vperm.xlu0 %3452, %v1808
  %v3454 = vpop.permute.xlu0 %3453
  %v3456 = vmul.f32 %v3394, %v3361
  %v3457 = vmul.f32 %v3398, %v3363
  %v3458 = vmul.f32 %v3402, %v3365
  %v3459 = vmul.f32 %v3406, %v3367
  %v3460 = vmul.f32 %v3410, %v3369
  %v3461 = vmul.f32 %v3414, %v3371
  %v3462 = vmul.f32 %v3418, %v3373
  %v3463 = vmul.f32 %v3422, %v3375
  %v3464 = vmul.f32 %v3426, %v3377
  %v3465 = vmul.f32 %v3430, %v3379
  %v3466 = vmul.f32 %v3434, %v3381
  %v3467 = vmul.f32 %v3438, %v3383
  %v3468 = vmul.f32 %v3442, %v3385
  %v3469 = vmul.f32 %v3446, %v3387
  %v3470 = vmul.f32 %v3450, %v3389
  %v3471 = vmul.f32 %v3454, %v3391
  %v3472 = vadd.f32 %v3312, %v3456
  %v3473 = vadd.f32 %v3313, %v3457
  %v3474 = vadd.f32 %v3314, %v3458
  %v3475 = vadd.f32 %v3315, %v3459
  %v3476 = vadd.f32 %v3316, %v3460
  %v3477 = vadd.f32 %v3317, %v3461
  %v3478 = vadd.f32 %v3318, %v3462
  %v3479 = vadd.f32 %v3319, %v3463
  %v3480 = vadd.f32 %v3320, %v3464
  %v3481 = vadd.f32 %v3321, %v3465
  %v3482 = vadd.f32 %v3322, %v3466
  %v3483 = vadd.f32 %v3323, %v3467
  %v3484 = vadd.f32 %v3324, %v3468
  %v3485 = vadd.f32 %v3325, %v3469
  %v3486 = vadd.f32 %v3326, %v3470
  %v3487 = vadd.f32 %v3327, %v3471
  %3488 = vst [vmem:[#allocation2] sm:$0xff] %v3472
  %3489 = vst [vmem:[#allocation2 + $0x8] sm:$0xff] %v3473
  %3490 = vst [vmem:[#allocation2 + $0x10] sm:$0xff] %v3474
  %3491 = vst [vmem:[#allocation2 + $0x18] sm:$0xff] %v3475
  %3492 = vst [vmem:[#allocation2 + $0x20] sm:$0xff] %v3476
  %3493 = vst [vmem:[#allocation2 + $0x28] sm:$0xff] %v3477
  %3494 = vst [vmem:[#allocation2 + $0x30] sm:$0xff] %v3478
  %3495 = vst [vmem:[#allocation2 + $0x38] sm:$0xff] %v3479
  %3496 = vst [vmem:[#allocation2 + $0x40] sm:$0xff] %v3480
  %3497 = vst [vmem:[#allocation2 + $0x48] sm:$0xff] %v3481
  %3498 = vst [vmem:[#allocation2 + $0x50] sm:$0xff] %v3482
  %3499 = vst [vmem:[#allocation2 + $0x58] sm:$0xff] %v3483
  %3500 = vst [vmem:[#allocation2 + $0x60] sm:$0xff] %v3484
  %3501 = vst [vmem:[#allocation2 + $0x68] sm:$0xff] %v3485
  %3502 = vst [vmem:[#allocation2 + $0x70] sm:$0xff] %v3486
  %3503 = vst [vmem:[#allocation2 + $0x78] sm:$0xff] %v3487
  %3504 = vset.pattern.permute.xlu0 6
  %3505 = vperm.xlu0 %3504, %v33
  %v3506 = vpop.permute.xlu0 %3505
  %3508 = vset.pattern.permute.xlu0 6
  %3509 = vperm.xlu0 %3508, %v34
  %v3510 = vpop.permute.xlu0 %3509
  %3512 = vset.pattern.permute.xlu0 6
  %3513 = vperm.xlu0 %3512, %v35
  %v3514 = vpop.permute.xlu0 %3513
  %3516 = vset.pattern.permute.xlu0 6
  %3517 = vperm.xlu0 %3516, %v36
  %v3518 = vpop.permute.xlu0 %3517
  %3520 = vset.pattern.permute.xlu0 6
  %3521 = vperm.xlu0 %3520, %v37
  %v3522 = vpop.permute.xlu0 %3521
  %3524 = vset.pattern.permute.xlu0 6
  %3525 = vperm.xlu0 %3524, %v38
  %v3526 = vpop.permute.xlu0 %3525
  %3528 = vset.pattern.permute.xlu0 6
  %3529 = vperm.xlu0 %3528, %v39
  %v3530 = vpop.permute.xlu0 %3529
  %3532 = vset.pattern.permute.xlu0 6
  %3533 = vperm.xlu0 %3532, %v40
  %v3534 = vpop.permute.xlu0 %3533
  %3536 = vset.pattern.permute.xlu0 6
  %3537 = vperm.xlu0 %3536, %v41
  %v3538 = vpop.permute.xlu0 %3537
  %3540 = vset.pattern.permute.xlu0 6
  %3541 = vperm.xlu0 %3540, %v42
  %v3542 = vpop.permute.xlu0 %3541
  %3544 = vset.pattern.permute.xlu0 6
  %3545 = vperm.xlu0 %3544, %v43
  %v3546 = vpop.permute.xlu0 %3545
  %3548 = vset.pattern.permute.xlu0 6
  %3549 = vperm.xlu0 %3548, %v44
  %v3550 = vpop.permute.xlu0 %3549
  %3552 = vset.pattern.permute.xlu0 6
  %3553 = vperm.xlu0 %3552, %v45
  %v3554 = vpop.permute.xlu0 %3553
  %3556 = vset.pattern.permute.xlu0 6
  %3557 = vperm.xlu0 %3556, %v46
  %v3558 = vpop.permute.xlu0 %3557
  %3560 = vset.pattern.permute.xlu0 6
  %3561 = vperm.xlu0 %3560, %v47
  %v3562 = vpop.permute.xlu0 %3561
  %3564 = vset.pattern.permute.xlu0 6
  %3565 = vperm.xlu0 %3564, %v48
  %v3566 = vpop.permute.xlu0 %3565
  %v3568 = vsub.f32 %v3506, %v1912
  %v3569 = vsub.f32 %v3510, %v1912
  %v3570 = vsub.f32 %v3514, %v1912
  %v3571 = vsub.f32 %v3518, %v1912
  %v3572 = vsub.f32 %v3522, %v1912
  %v3573 = vsub.f32 %v3526, %v1912
  %v3574 = vsub.f32 %v3530, %v1912
  %v3575 = vsub.f32 %v3534, %v1912
  %v3576 = vsub.f32 %v3538, %v1912
  %v3577 = vsub.f32 %v3542, %v1912
  %v3578 = vsub.f32 %v3546, %v1912
  %v3579 = vsub.f32 %v3550, %v1912
  %v3580 = vsub.f32 %v3554, %v1912
  %v3581 = vsub.f32 %v3558, %v1912
  %v3582 = vsub.f32 %v3562, %v1912
  %v3583 = vsub.f32 %v3566, %v1912
  %v3584 = vld [vmem:[#allocation2] sm:$0xff]
  %v3585 = vld [vmem:[#allocation2 + $0x8] sm:$0xff]
  %v3586 = vld [vmem:[#allocation2 + $0x10] sm:$0xff]
  %v3587 = vld [vmem:[#allocation2 + $0x18] sm:$0xff]
  %v3588 = vld [vmem:[#allocation2 + $0x20] sm:$0xff]
  %v3589 = vld [vmem:[#allocation2 + $0x28] sm:$0xff]
  %v3590 = vld [vmem:[#allocation2 + $0x30] sm:$0xff]
  %v3591 = vld [vmem:[#allocation2 + $0x38] sm:$0xff]
  %v3592 = vld [vmem:[#allocation2 + $0x40] sm:$0xff]
  %v3593 = vld [vmem:[#allocation2 + $0x48] sm:$0xff]
  %v3594 = vld [vmem:[#allocation2 + $0x50] sm:$0xff]
  %v3595 = vld [vmem:[#allocation2 + $0x58] sm:$0xff]
  %v3596 = vld [vmem:[#allocation2 + $0x60] sm:$0xff]
  %v3597 = vld [vmem:[#allocation2 + $0x68] sm:$0xff]
  %v3598 = vld [vmem:[#allocation2 + $0x70] sm:$0xff]
  %v3599 = vld [vmem:[#allocation2 + $0x78] sm:$0xff]
  %v3600 = vmul.f32 %v3568, %v3568
  %v3601 = vmul.f32 %v3569, %v3569
  %v3602 = vmul.f32 %v3570, %v3570
  %v3603 = vmul.f32 %v3571, %v3571
  %v3604 = vmul.f32 %v3572, %v3572
  %v3605 = vmul.f32 %v3573, %v3573
  %v3606 = vmul.f32 %v3574, %v3574
  %v3607 = vmul.f32 %v3575, %v3575
  %v3608 = vmul.f32 %v3576, %v3576
  %v3609 = vmul.f32 %v3577, %v3577
  %v3610 = vmul.f32 %v3578, %v3578
  %v3611 = vmul.f32 %v3579, %v3579
  %v3612 = vmul.f32 %v3580, %v3580
  %v3613 = vmul.f32 %v3581, %v3581
  %v3614 = vmul.f32 %v3582, %v3582
  %v3615 = vmul.f32 %v3583, %v3583
  %v3616 = vmul.f32 %v1966, %v3600
  %v3617 = vmul.f32 %v1966, %v3601
  %v3618 = vmul.f32 %v1966, %v3602
  %v3619 = vmul.f32 %v1966, %v3603
  %v3620 = vmul.f32 %v1966, %v3604
  %v3621 = vmul.f32 %v1966, %v3605
  %v3622 = vmul.f32 %v1966, %v3606
  %v3623 = vmul.f32 %v1966, %v3607
  %v3624 = vmul.f32 %v1966, %v3608
  %v3625 = vmul.f32 %v1966, %v3609
  %v3626 = vmul.f32 %v1966, %v3610
  %v3627 = vmul.f32 %v1966, %v3611
  %v3628 = vmul.f32 %v1966, %v3612
  %v3629 = vmul.f32 %v1966, %v3613
  %v3630 = vmul.f32 %v1966, %v3614
  %v3631 = vmul.f32 %v1966, %v3615
  %v3632 = vmul.f32 %v3616, 1.442695
  %v3633 = vpow.pop %v3632
  %v3634 = vmul.f32 %v3617, 1.442695
  %v3635 = vpow.pop %v3634
  %v3636 = vmul.f32 %v3618, 1.442695
  %v3637 = vpow.pop %v3636
  %v3638 = vmul.f32 %v3619, 1.442695
  %v3639 = vpow.pop %v3638
  %v3640 = vmul.f32 %v3620, 1.442695
  %v3641 = vpow.pop %v3640
  %v3642 = vmul.f32 %v3621, 1.442695
  %v3643 = vpow.pop %v3642
  %v3644 = vmul.f32 %v3622, 1.442695
  %v3645 = vpow.pop %v3644
  %v3646 = vmul.f32 %v3623, 1.442695
  %v3647 = vpow.pop %v3646
  %v3648 = vmul.f32 %v3624, 1.442695
  %v3649 = vpow.pop %v3648
  %v3650 = vmul.f32 %v3625, 1.442695
  %v3651 = vpow.pop %v3650
  %v3652 = vmul.f32 %v3626, 1.442695
  %v3653 = vpow.pop %v3652
  %v3654 = vmul.f32 %v3627, 1.442695
  %v3655 = vpow.pop %v3654
  %v3656 = vmul.f32 %v3628, 1.442695
  %v3657 = vpow.pop %v3656
  %v3658 = vmul.f32 %v3629, 1.442695
  %v3659 = vpow.pop %v3658
  %v3660 = vmul.f32 %v3630, 1.442695
  %v3661 = vpow.pop %v3660
  %v3662 = vmul.f32 %v3631, 1.442695
  %v3663 = vpow.pop %v3662
  %3664 = vset.pattern.permute.xlu0 6
  %3665 = vperm.xlu0 %3664, %v1793
  %v3666 = vpop.permute.xlu0 %3665
  %3668 = vset.pattern.permute.xlu0 6
  %3669 = vperm.xlu0 %3668, %v1794
  %v3670 = vpop.permute.xlu0 %3669
  %3672 = vset.pattern.permute.xlu0 6
  %3673 = vperm.xlu0 %3672, %v1795
  %v3674 = vpop.permute.xlu0 %3673
  %3676 = vset.pattern.permute.xlu0 6
  %3677 = vperm.xlu0 %3676, %v1796
  %v3678 = vpop.permute.xlu0 %3677
  %3680 = vset.pattern.permute.xlu0 6
  %3681 = vperm.xlu0 %3680, %v1797
  %v3682 = vpop.permute.xlu0 %3681
  %3684 = vset.pattern.permute.xlu0 6
  %3685 = vperm.xlu0 %3684, %v1798
  %v3686 = vpop.permute.xlu0 %3685
  %3688 = vset.pattern.permute.xlu0 6
  %3689 = vperm.xlu0 %3688, %v1799
  %v3690 = vpop.permute.xlu0 %3689
  %3692 = vset.pattern.permute.xlu0 6
  %3693 = vperm.xlu0 %3692, %v1800
  %v3694 = vpop.permute.xlu0 %3693
  %3696 = vset.pattern.permute.xlu0 6
  %3697 = vperm.xlu0 %3696, %v1801
  %v3698 = vpop.permute.xlu0 %3697
  %3700 = vset.pattern.permute.xlu0 6
  %3701 = vperm.xlu0 %3700, %v1802
  %v3702 = vpop.permute.xlu0 %3701
  %3704 = vset.pattern.permute.xlu0 6
  %3705 = vperm.xlu0 %3704, %v1803
  %v3706 = vpop.permute.xlu0 %3705
  %3708 = vset.pattern.permute.xlu0 6
  %3709 = vperm.xlu0 %3708, %v1804
  %v3710 = vpop.permute.xlu0 %3709
  %3712 = vset.pattern.permute.xlu0 6
  %3713 = vperm.xlu0 %3712, %v1805
  %v3714 = vpop.permute.xlu0 %3713
  %3716 = vset.pattern.permute.xlu0 6
  %3717 = vperm.xlu0 %3716, %v1806
  %v3718 = vpop.permute.xlu0 %3717
  %3720 = vset.pattern.permute.xlu0 6
  %3721 = vperm.xlu0 %3720, %v1807
  %v3722 = vpop.permute.xlu0 %3721
  %3724 = vset.pattern.permute.xlu0 6
  %3725 = vperm.xlu0 %3724, %v1808
  %v3726 = vpop.permute.xlu0 %3725
  %v3728 = vmul.f32 %v3666, %v3633
  %v3729 = vmul.f32 %v3670, %v3635
  %v3730 = vmul.f32 %v3674, %v3637
  %v3731 = vmul.f32 %v3678, %v3639
  %v3732 = vmul.f32 %v3682, %v3641
  %v3733 = vmul.f32 %v3686, %v3643
  %v3734 = vmul.f32 %v3690, %v3645
  %v3735 = vmul.f32 %v3694, %v3647
  %v3736 = vmul.f32 %v3698, %v3649
  %v3737 = vmul.f32 %v3702, %v3651
  %v3738 = vmul.f32 %v3706, %v3653
  %v3739 = vmul.f32 %v3710, %v3655
  %v3740 = vmul.f32 %v3714, %v3657
  %v3741 = vmul.f32 %v3718, %v3659
  %v3742 = vmul.f32 %v3722, %v3661
  %v3743 = vmul.f32 %v3726, %v3663
  %v3744 = vadd.f32 %v3584, %v3728
  %v3745 = vadd.f32 %v3585, %v3729
  %v3746 = vadd.f32 %v3586, %v3730
  %v3747 = vadd.f32 %v3587, %v3731
  %v3748 = vadd.f32 %v3588, %v3732
  %v3749 = vadd.f32 %v3589, %v3733
  %v3750 = vadd.f32 %v3590, %v3734
  %v3751 = vadd.f32 %v3591, %v3735
  %v3752 = vadd.f32 %v3592, %v3736
  %v3753 = vadd.f32 %v3593, %v3737
  %v3754 = vadd.f32 %v3594, %v3738
  %v3755 = vadd.f32 %v3595, %v3739
  %v3756 = vadd.f32 %v3596, %v3740
  %v3757 = vadd.f32 %v3597, %v3741
  %v3758 = vadd.f32 %v3598, %v3742
  %v3759 = vadd.f32 %v3599, %v3743
  %3760 = vst [vmem:[#allocation2] sm:$0xff] %v3744
  %3761 = vst [vmem:[#allocation2 + $0x8] sm:$0xff] %v3745
  %3762 = vst [vmem:[#allocation2 + $0x10] sm:$0xff] %v3746
  %3763 = vst [vmem:[#allocation2 + $0x18] sm:$0xff] %v3747
  %3764 = vst [vmem:[#allocation2 + $0x20] sm:$0xff] %v3748
  %3765 = vst [vmem:[#allocation2 + $0x28] sm:$0xff] %v3749
  %3766 = vst [vmem:[#allocation2 + $0x30] sm:$0xff] %v3750
  %3767 = vst [vmem:[#allocation2 + $0x38] sm:$0xff] %v3751
  %3768 = vst [vmem:[#allocation2 + $0x40] sm:$0xff] %v3752
  %3769 = vst [vmem:[#allocation2 + $0x48] sm:$0xff] %v3753
  %3770 = vst [vmem:[#allocation2 + $0x50] sm:$0xff] %v3754
  %3771 = vst [vmem:[#allocation2 + $0x58] sm:$0xff] %v3755
  %3772 = vst [vmem:[#allocation2 + $0x60] sm:$0xff] %v3756
  %3773 = vst [vmem:[#allocation2 + $0x68] sm:$0xff] %v3757
  %3774 = vst [vmem:[#allocation2 + $0x70] sm:$0xff] %v3758
  %3775 = vst [vmem:[#allocation2 + $0x78] sm:$0xff] %v3759
  %3776 = vset.pattern.permute.xlu0 7
  %3777 = vperm.xlu0 %3776, %v33
  %v3778 = vpop.permute.xlu0 %3777
  %3780 = vset.pattern.permute.xlu0 7
  %3781 = vperm.xlu0 %3780, %v34
  %v3782 = vpop.permute.xlu0 %3781
  %3784 = vset.pattern.permute.xlu0 7
  %3785 = vperm.xlu0 %3784, %v35
  %v3786 = vpop.permute.xlu0 %3785
  %3788 = vset.pattern.permute.xlu0 7
  %3789 = vperm.xlu0 %3788, %v36
  %v3790 = vpop.permute.xlu0 %3789
  %3792 = vset.pattern.permute.xlu0 7
  %3793 = vperm.xlu0 %3792, %v37
  %v3794 = vpop.permute.xlu0 %3793
  %3796 = vset.pattern.permute.xlu0 7
  %3797 = vperm.xlu0 %3796, %v38
  %v3798 = vpop.permute.xlu0 %3797
  %3800 = vset.pattern.permute.xlu0 7
  %3801 = vperm.xlu0 %3800, %v39
  %v3802 = vpop.permute.xlu0 %3801
  %3804 = vset.pattern.permute.xlu0 7
  %3805 = vperm.xlu0 %3804, %v40
  %v3806 = vpop.permute.xlu0 %3805
  %3808 = vset.pattern.permute.xlu0 7
  %3809 = vperm.xlu0 %3808, %v41
  %v3810 = vpop.permute.xlu0 %3809
  %3812 = vset.pattern.permute.xlu0 7
  %3813 = vperm.xlu0 %3812, %v42
  %v3814 = vpop.permute.xlu0 %3813
  %3816 = vset.pattern.permute.xlu0 7
  %3817 = vperm.xlu0 %3816, %v43
  %v3818 = vpop.permute.xlu0 %3817
  %3820 = vset.pattern.permute.xlu0 7
  %3821 = vperm.xlu0 %3820, %v44
  %v3822 = vpop.permute.xlu0 %3821
  %3824 = vset.pattern.permute.xlu0 7
  %3825 = vperm.xlu0 %3824, %v45
  %v3826 = vpop.permute.xlu0 %3825
  %3828 = vset.pattern.permute.xlu0 7
  %3829 = vperm.xlu0 %3828, %v46
  %v3830 = vpop.permute.xlu0 %3829
  %3832 = vset.pattern.permute.xlu0 7
  %3833 = vperm.xlu0 %3832, %v47
  %v3834 = vpop.permute.xlu0 %3833
  %3836 = vset.pattern.permute.xlu0 7
  %3837 = vperm.xlu0 %3836, %v48
  %v3838 = vpop.permute.xlu0 %3837
  %v3840 = vsub.f32 %v3778, %v1912
  %v3841 = vsub.f32 %v3782, %v1912
  %v3842 = vsub.f32 %v3786, %v1912
  %v3843 = vsub.f32 %v3790, %v1912
  %v3844 = vsub.f32 %v3794, %v1912
  %v3845 = vsub.f32 %v3798, %v1912
  %v3846 = vsub.f32 %v3802, %v1912
  %v3847 = vsub.f32 %v3806, %v1912
  %v3848 = vsub.f32 %v3810, %v1912
  %v3849 = vsub.f32 %v3814, %v1912
  %v3850 = vsub.f32 %v3818, %v1912
  %v3851 = vsub.f32 %v3822, %v1912
  %v3852 = vsub.f32 %v3826, %v1912
  %v3853 = vsub.f32 %v3830, %v1912
  %v3854 = vsub.f32 %v3834, %v1912
  %v3855 = vsub.f32 %v3838, %v1912
  %v3856 = vld [vmem:[#allocation2] sm:$0xff]
  %v3857 = vld [vmem:[#allocation2 + $0x8] sm:$0xff]
  %v3858 = vld [vmem:[#allocation2 + $0x10] sm:$0xff]
  %v3859 = vld [vmem:[#allocation2 + $0x18] sm:$0xff]
  %v3860 = vld [vmem:[#allocation2 + $0x20] sm:$0xff]
  %v3861 = vld [vmem:[#allocation2 + $0x28] sm:$0xff]
  %v3862 = vld [vmem:[#allocation2 + $0x30] sm:$0xff]
  %v3863 = vld [vmem:[#allocation2 + $0x38] sm:$0xff]
  %v3864 = vld [vmem:[#allocation2 + $0x40] sm:$0xff]
  %v3865 = vld [vmem:[#allocation2 + $0x48] sm:$0xff]
  %v3866 = vld [vmem:[#allocation2 + $0x50] sm:$0xff]
  %v3867 = vld [vmem:[#allocation2 + $0x58] sm:$0xff]
  %v3868 = vld [vmem:[#allocation2 + $0x60] sm:$0xff]
  %v3869 = vld [vmem:[#allocation2 + $0x68] sm:$0xff]
  %v3870 = vld [vmem:[#allocation2 + $0x70] sm:$0xff]
  %v3871 = vld [vmem:[#allocation2 + $0x78] sm:$0xff]
  %v3872 = vmul.f32 %v3840, %v3840
  %v3873 = vmul.f32 %v3841, %v3841
  %v3874 = vmul.f32 %v3842, %v3842
  %v3875 = vmul.f32 %v3843, %v3843
  %v3876 = vmul.f32 %v3844, %v3844
  %v3877 = vmul.f32 %v3845, %v3845
  %v3878 = vmul.f32 %v3846, %v3846
  %v3879 = vmul.f32 %v3847, %v3847
  %v3880 = vmul.f32 %v3848, %v3848
  %v3881 = vmul.f32 %v3849, %v3849
  %v3882 = vmul.f32 %v3850, %v3850
  %v3883 = vmul.f32 %v3851, %v3851
  %v3884 = vmul.f32 %v3852, %v3852
  %v3885 = vmul.f32 %v3853, %v3853
  %v3886 = vmul.f32 %v3854, %v3854
  %v3887 = vmul.f32 %v3855, %v3855
  %v3888 = vmul.f32 %v1966, %v3872
  %v3889 = vmul.f32 %v1966, %v3873
  %v3890 = vmul.f32 %v1966, %v3874
  %v3891 = vmul.f32 %v1966, %v3875
  %v3892 = vmul.f32 %v1966, %v3876
  %v3893 = vmul.f32 %v1966, %v3877
  %v3894 = vmul.f32 %v1966, %v3878
  %v3895 = vmul.f32 %v1966, %v3879
  %v3896 = vmul.f32 %v1966, %v3880
  %v3897 = vmul.f32 %v1966, %v3881
  %v3898 = vmul.f32 %v1966, %v3882
  %v3899 = vmul.f32 %v1966, %v3883
  %v3900 = vmul.f32 %v1966, %v3884
  %v3901 = vmul.f32 %v1966, %v3885
  %v3902 = vmul.f32 %v1966, %v3886
  %v3903 = vmul.f32 %v1966, %v3887
  %v3904 = vmul.f32 %v3888, 1.442695
  %v3905 = vpow.pop %v3904
  %v3906 = vmul.f32 %v3889, 1.442695
  %v3907 = vpow.pop %v3906
  %v3908 = vmul.f32 %v3890, 1.442695
  %v3909 = vpow.pop %v3908
  %v3910 = vmul.f32 %v3891, 1.442695
  %v3911 = vpow.pop %v3910
  %v3912 = vmul.f32 %v3892, 1.442695
  %v3913 = vpow.pop %v3912
  %v3914 = vmul.f32 %v3893, 1.442695
  %v3915 = vpow.pop %v3914
  %v3916 = vmul.f32 %v3894, 1.442695
  %v3917 = vpow.pop %v3916
  %v3918 = vmul.f32 %v3895, 1.442695
  %v3919 = vpow.pop %v3918
  %v3920 = vmul.f32 %v3896, 1.442695
  %v3921 = vpow.pop %v3920
  %v3922 = vmul.f32 %v3897, 1.442695
  %v3923 = vpow.pop %v3922
  %v3924 = vmul.f32 %v3898, 1.442695
  %v3925 = vpow.pop %v3924
  %v3926 = vmul.f32 %v3899, 1.442695
  %v3927 = vpow.pop %v3926
  %v3928 = vmul.f32 %v3900, 1.442695
  %v3929 = vpow.pop %v3928
  %v3930 = vmul.f32 %v3901, 1.442695
  %v3931 = vpow.pop %v3930
  %v3932 = vmul.f32 %v3902, 1.442695
  %v3933 = vpow.pop %v3932
  %v3934 = vmul.f32 %v3903, 1.442695
  %v3935 = vpow.pop %v3934
  %3936 = vset.pattern.permute.xlu0 7
  %3937 = vperm.xlu0 %3936, %v1793
  %v3938 = vpop.permute.xlu0 %3937
  %3940 = vset.pattern.permute.xlu0 7
  %3941 = vperm.xlu0 %3940, %v1794
  %v3942 = vpop.permute.xlu0 %3941
  %3944 = vset.pattern.permute.xlu0 7
  %3945 = vperm.xlu0 %3944, %v1795
  %v3946 = vpop.permute.xlu0 %3945
  %3948 = vset.pattern.permute.xlu0 7
  %3949 = vperm.xlu0 %3948, %v1796
  %v3950 = vpop.permute.xlu0 %3949
  %3952 = vset.pattern.permute.xlu0 7
  %3953 = vperm.xlu0 %3952, %v1797
  %v3954 = vpop.permute.xlu0 %3953
  %3956 = vset.pattern.permute.xlu0 7
  %3957 = vperm.xlu0 %3956, %v1798
  %v3958 = vpop.permute.xlu0 %3957
  %3960 = vset.pattern.permute.xlu0 7
  %3961 = vperm.xlu0 %3960, %v1799
  %v3962 = vpop.permute.xlu0 %3961
  %3964 = vset.pattern.permute.xlu0 7
  %3965 = vperm.xlu0 %3964, %v1800
  %v3966 = vpop.permute.xlu0 %3965
  %3968 = vset.pattern.permute.xlu0 7
  %3969 = vperm.xlu0 %3968, %v1801
  %v3970 = vpop.permute.xlu0 %3969
  %3972 = vset.pattern.permute.xlu0 7
  %3973 = vperm.xlu0 %3972, %v1802
  %v3974 = vpop.permute.xlu0 %3973
  %3976 = vset.pattern.permute.xlu0 7
  %3977 = vperm.xlu0 %3976, %v1803
  %v3978 = vpop.permute.xlu0 %3977
  %3980 = vset.pattern.permute.xlu0 7
  %3981 = vperm.xlu0 %3980, %v1804
  %v3982 = vpop.permute.xlu0 %3981
  %3984 = vset.pattern.permute.xlu0 7
  %3985 = vperm.xlu0 %3984, %v1805
  %v3986 = vpop.permute.xlu0 %3985
  %3988 = vset.pattern.permute.xlu0 7
  %3989 = vperm.xlu0 %3988, %v1806
  %v3990 = vpop.permute.xlu0 %3989
  %3992 = vset.pattern.permute.xlu0 7
  %3993 = vperm.xlu0 %3992, %v1807
  %v3994 = vpop.permute.xlu0 %3993
  %3996 = vset.pattern.permute.xlu0 7
  %3997 = vperm.xlu0 %3996, %v1808
  %v3998 = vpop.permute.xlu0 %3997
  %v4000 = vmul.f32 %v3938, %v3905
  %v4001 = vmul.f32 %v3942, %v3907
  %v4002 = vmul.f32 %v3946, %v3909
  %v4003 = vmul.f32 %v3950, %v3911
  %v4004 = vmul.f32 %v3954, %v3913
  %v4005 = vmul.f32 %v3958, %v3915
  %v4006 = vmul.f32 %v3962, %v3917
  %v4007 = vmul.f32 %v3966, %v3919
  %v4008 = vmul.f32 %v3970, %v3921
  %v4009 = vmul.f32 %v3974, %v3923
  %v4010 = vmul.f32 %v3978, %v3925
  %v4011 = vmul.f32 %v3982, %v3927
  %v4012 = vmul.f32 %v3986, %v3929
  %v4013 = vmul.f32 %v3990, %v3931
  %v4014 = vmul.f32 %v3994, %v3933
  %v4015 = vmul.f32 %v3998, %v3935
  %v4016 = vadd.f32 %v3856, %v4000
  %v4017 = vadd.f32 %v3857, %v4001
  %v4018 = vadd.f32 %v3858, %v4002
  %v4019 = vadd.f32 %v3859, %v4003
  %v4020 = vadd.f32 %v3860, %v4004
  %v4021 = vadd.f32 %v3861, %v4005
  %v4022 = vadd.f32 %v3862, %v4006
  %v4023 = vadd.f32 %v3863, %v4007
  %v4024 = vadd.f32 %v3864, %v4008
  %v4025 = vadd.f32 %v3865, %v4009
  %v4026 = vadd.f32 %v3866, %v4010
  %v4027 = vadd.f32 %v3867, %v4011
  %v4028 = vadd.f32 %v3868, %v4012
  %v4029 = vadd.f32 %v3869, %v4013
  %v4030 = vadd.f32 %v3870, %v4014
  %v4031 = vadd.f32 %v3871, %v4015
  %4032 = vst [vmem:[#allocation2] sm:$0xff] %v4016
  %4033 = vst [vmem:[#allocation2 + $0x8] sm:$0xff] %v4017
  %4034 = vst [vmem:[#allocation2 + $0x10] sm:$0xff] %v4018
  %4035 = vst [vmem:[#allocation2 + $0x18] sm:$0xff] %v4019
  %4036 = vst [vmem:[#allocation2 + $0x20] sm:$0xff] %v4020
  %4037 = vst [vmem:[#allocation2 + $0x28] sm:$0xff] %v4021
  %4038 = vst [vmem:[#allocation2 + $0x30] sm:$0xff] %v4022
  %4039 = vst [vmem:[#allocation2 + $0x38] sm:$0xff] %v4023
  %4040 = vst [vmem:[#allocation2 + $0x40] sm:$0xff] %v4024
  %4041 = vst [vmem:[#allocation2 + $0x48] sm:$0xff] %v4025
  %4042 = vst [vmem:[#allocation2 + $0x50] sm:$0xff] %v4026
  %4043 = vst [vmem:[#allocation2 + $0x58] sm:$0xff] %v4027
  %4044 = vst [vmem:[#allocation2 + $0x60] sm:$0xff] %v4028
  %4045 = vst [vmem:[#allocation2 + $0x68] sm:$0xff] %v4029
  %4046 = vst [vmem:[#allocation2 + $0x70] sm:$0xff] %v4030
  %4047 = vst [vmem:[#allocation2 + $0x78] sm:$0xff] %v4031
  %4048 = vset.pattern.permute.xlu0 8
  %4049 = vperm.xlu0 %4048, %v33
  %v4050 = vpop.permute.xlu0 %4049
  %4052 = vset.pattern.permute.xlu0 8
  %4053 = vperm.xlu0 %4052, %v34
  %v4054 = vpop.permute.xlu0 %4053
  %4056 = vset.pattern.permute.xlu0 8
  %4057 = vperm.xlu0 %4056, %v35
  %v4058 = vpop.permute.xlu0 %4057
  %4060 = vset.pattern.permute.xlu0 8
  %4061 = vperm.xlu0 %4060, %v36
  %v4062 = vpop.permute.xlu0 %4061
  %4064 = vset.pattern.permute.xlu0 8
  %4065 = vperm.xlu0 %4064, %v37
  %v4066 = vpop.permute.xlu0 %4065
  %4068 = vset.pattern.permute.xlu0 8
  %4069 = vperm.xlu0 %4068, %v38
  %v4070 = vpop.permute.xlu0 %4069
  %4072 = vset.pattern.permute.xlu0 8
  %4073 = vperm.xlu0 %4072, %v39
  %v4074 = vpop.permute.xlu0 %4073
  %4076 = vset.pattern.permute.xlu0 8
  %4077 = vperm.xlu0 %4076, %v40
  %v4078 = vpop.permute.xlu0 %4077
  %4080 = vset.pattern.permute.xlu0 8
  %4081 = vperm.xlu0 %4080, %v41
  %v4082 = vpop.permute.xlu0 %4081
  %4084 = vset.pattern.permute.xlu0 8
  %4085 = vperm.xlu0 %4084, %v42
  %v4086 = vpop.permute.xlu0 %4085
  %4088 = vset.pattern.permute.xlu0 8
  %4089 = vperm.xlu0 %4088, %v43
  %v4090 = vpop.permute.xlu0 %4089
  %4092 = vset.pattern.permute.xlu0 8
  %4093 = vperm.xlu0 %4092, %v44
  %v4094 = vpop.permute.xlu0 %4093
  %4096 = vset.pattern.permute.xlu0 8
  %4097 = vperm.xlu0 %4096, %v45
  %v4098 = vpop.permute.xlu0 %4097
  %4100 = vset.pattern.permute.xlu0 8
  %4101 = vperm.xlu0 %4100, %v46
  %v4102 = vpop.permute.xlu0 %4101
  %4104 = vset.pattern.permute.xlu0 8
  %4105 = vperm.xlu0 %4104, %v47
  %v4106 = vpop.permute.xlu0 %4105
  %4108 = vset.pattern.permute.xlu0 8
  %4109 = vperm.xlu0 %4108, %v48
  %v4110 = vpop.permute.xlu0 %4109
  %v4112 = vsub.f32 %v4050, %v1912
  %v4113 = vsub.f32 %v4054, %v1912
  %v4114 = vsub.f32 %v4058, %v1912
  %v4115 = vsub.f32 %v4062, %v1912
  %v4116 = vsub.f32 %v4066, %v1912
  %v4117 = vsub.f32 %v4070, %v1912
  %v4118 = vsub.f32 %v4074, %v1912
  %v4119 = vsub.f32 %v4078, %v1912
  %v4120 = vsub.f32 %v4082, %v1912
  %v4121 = vsub.f32 %v4086, %v1912
  %v4122 = vsub.f32 %v4090, %v1912
  %v4123 = vsub.f32 %v4094, %v1912
  %v4124 = vsub.f32 %v4098, %v1912
  %v4125 = vsub.f32 %v4102, %v1912
  %v4126 = vsub.f32 %v4106, %v1912
  %v4127 = vsub.f32 %v4110, %v1912
  %v4128 = vld [vmem:[#allocation2] sm:$0xff]
  %v4129 = vld [vmem:[#allocation2 + $0x8] sm:$0xff]
  %v4130 = vld [vmem:[#allocation2 + $0x10] sm:$0xff]
  %v4131 = vld [vmem:[#allocation2 + $0x18] sm:$0xff]
  %v4132 = vld [vmem:[#allocation2 + $0x20] sm:$0xff]
  %v4133 = vld [vmem:[#allocation2 + $0x28] sm:$0xff]
  %v4134 = vld [vmem:[#allocation2 + $0x30] sm:$0xff]
  %v4135 = vld [vmem:[#allocation2 + $0x38] sm:$0xff]
  %v4136 = vld [vmem:[#allocation2 + $0x40] sm:$0xff]
  %v4137 = vld [vmem:[#allocation2 + $0x48] sm:$0xff]
  %v4138 = vld [vmem:[#allocation2 + $0x50] sm:$0xff]
  %v4139 = vld [vmem:[#allocation2 + $0x58] sm:$0xff]
  %v4140 = vld [vmem:[#allocation2 + $0x60] sm:$0xff]
  %v4141 = vld [vmem:[#allocation2 + $0x68] sm:$0xff]
  %v4142 = vld [vmem:[#allocation2 + $0x70] sm:$0xff]
  %v4143 = vld [vmem:[#allocation2 + $0x78] sm:$0xff]
  %v4144 = vmul.f32 %v4112, %v4112
  %v4145 = vmul.f32 %v4113, %v4113
  %v4146 = vmul.f32 %v4114, %v4114
  %v4147 = vmul.f32 %v4115, %v4115
  %v4148 = vmul.f32 %v4116, %v4116
  %v4149 = vmul.f32 %v4117, %v4117
  %v4150 = vmul.f32 %v4118, %v4118
  %v4151 = vmul.f32 %v4119, %v4119
  %v4152 = vmul.f32 %v4120, %v4120
  %v4153 = vmul.f32 %v4121, %v4121
  %v4154 = vmul.f32 %v4122, %v4122
  %v4155 = vmul.f32 %v4123, %v4123
  %v4156 = vmul.f32 %v4124, %v4124
  %v4157 = vmul.f32 %v4125, %v4125
  %v4158 = vmul.f32 %v4126, %v4126
  %v4159 = vmul.f32 %v4127, %v4127
  %v4160 = vmul.f32 %v1966, %v4144
  %v4161 = vmul.f32 %v1966, %v4145
  %v4162 = vmul.f32 %v1966, %v4146
  %v4163 = vmul.f32 %v1966, %v4147
  %v4164 = vmul.f32 %v1966, %v4148
  %v4165 = vmul.f32 %v1966, %v4149
  %v4166 = vmul.f32 %v1966, %v4150
  %v4167 = vmul.f32 %v1966, %v4151
  %v4168 = vmul.f32 %v1966, %v4152
  %v4169 = vmul.f32 %v1966, %v4153
  %v4170 = vmul.f32 %v1966, %v4154
  %v4171 = vmul.f32 %v1966, %v4155
  %v4172 = vmul.f32 %v1966, %v4156
  %v4173 = vmul.f32 %v1966, %v4157
  %v4174 = vmul.f32 %v1966, %v4158
  %v4175 = vmul.f32 %v1966, %v4159
  %v4176 = vmul.f32 %v4160, 1.442695
  %v4177 = vpow.pop %v4176
  %v4178 = vmul.f32 %v4161, 1.442695
  %v4179 = vpow.pop %v4178
  %v4180 = vmul.f32 %v4162, 1.442695
  %v4181 = vpow.pop %v4180
  %v4182 = vmul.f32 %v4163, 1.442695
  %v4183 = vpow.pop %v4182
  %v4184 = vmul.f32 %v4164, 1.442695
  %v4185 = vpow.pop %v4184
  %v4186 = vmul.f32 %v4165, 1.442695
  %v4187 = vpow.pop %v4186
  %v4188 = vmul.f32 %v4166, 1.442695
  %v4189 = vpow.pop %v4188
  %v4190 = vmul.f32 %v4167, 1.442695
  %v4191 = vpow.pop %v4190
  %v4192 = vmul.f32 %v4168, 1.442695
  %v4193 = vpow.pop %v4192
  %v4194 = vmul.f32 %v4169, 1.442695
  %v4195 = vpow.pop %v4194
  %v4196 = vmul.f32 %v4170, 1.442695
  %v4197 = vpow.pop %v4196
  %v4198 = vmul.f32 %v4171, 1.442695
  %v4199 = vpow.pop %v4198
  %v4200 = vmul.f32 %v4172, 1.442695
  %v4201 = vpow.pop %v4200
  %v4202 = vmul.f32 %v4173, 1.442695
  %v4203 = vpow.pop %v4202
  %v4204 = vmul.f32 %v4174, 1.442695
  %v4205 = vpow.pop %v4204
  %v4206 = vmul.f32 %v4175, 1.442695
  %v4207 = vpow.pop %v4206
  %4208 = vset.pattern.permute.xlu0 8
  %4209 = vperm.xlu0 %4208, %v1793
  %v4210 = vpop.permute.xlu0 %4209
  %4212 = vset.pattern.permute.xlu0 8
  %4213 = vperm.xlu0 %4212, %v1794
  %v4214 = vpop.permute.xlu0 %4213
  %4216 = vset.pattern.permute.xlu0 8
  %4217 = vperm.xlu0 %4216, %v1795
  %v4218 = vpop.permute.xlu0 %4217
  %4220 = vset.pattern.permute.xlu0 8
  %4221 = vperm.xlu0 %4220, %v1796
  %v4222 = vpop.permute.xlu0 %4221
  %4224 = vset.pattern.permute.xlu0 8
  %4225 = vperm.xlu0 %4224, %v1797
  %v4226 = vpop.permute.xlu0 %4225
  %4228 = vset.pattern.permute.xlu0 8
  %4229 = vperm.xlu0 %4228, %v1798
  %v4230 = vpop.permute.xlu0 %4229
  %4232 = vset.pattern.permute.xlu0 8
  %4233 = vperm.xlu0 %4232, %v1799
  %v4234 = vpop.permute.xlu0 %4233
  %4236 = vset.pattern.permute.xlu0 8
  %4237 = vperm.xlu0 %4236, %v1800
  %v4238 = vpop.permute.xlu0 %4237
  %4240 = vset.pattern.permute.xlu0 8
  %4241 = vperm.xlu0 %4240, %v1801
  %v4242 = vpop.permute.xlu0 %4241
  %4244 = vset.pattern.permute.xlu0 8
  %4245 = vperm.xlu0 %4244, %v1802
  %v4246 = vpop.permute.xlu0 %4245
  %4248 = vset.pattern.permute.xlu0 8
  %4249 = vperm.xlu0 %4248, %v1803
  %v4250 = vpop.permute.xlu0 %4249
  %4252 = vset.pattern.permute.xlu0 8
  %4253 = vperm.xlu0 %4252, %v1804
  %v4254 = vpop.permute.xlu0 %4253
  %4256 = vset.pattern.permute.xlu0 8
  %4257 = vperm.xlu0 %4256, %v1805
  %v4258 = vpop.permute.xlu0 %4257
  %4260 = vset.pattern.permute.xlu0 8
  %4261 = vperm.xlu0 %4260, %v1806
  %v4262 = vpop.permute.xlu0 %4261
  %4264 = vset.pattern.permute.xlu0 8
  %4265 = vperm.xlu0 %4264, %v1807
  %v4266 = vpop.permute.xlu0 %4265
  %4268 = vset.pattern.permute.xlu0 8
  %4269 = vperm.xlu0 %4268, %v1808
  %v4270 = vpop.permute.xlu0 %4269
  %v4272 = vmul.f32 %v4210, %v4177
  %v4273 = vmul.f32 %v4214, %v4179
  %v4274 = vmul.f32 %v4218, %v4181
  %v4275 = vmul.f32 %v4222, %v4183
  %v4276 = vmul.f32 %v4226, %v4185
  %v4277 = vmul.f32 %v4230, %v4187
  %v4278 = vmul.f32 %v4234, %v4189
  %v4279 = vmul.f32 %v4238, %v4191
  %v4280 = vmul.f32 %v4242, %v4193
  %v4281 = vmul.f32 %v4246, %v4195
  %v4282 = vmul.f32 %v4250, %v4197
  %v4283 = vmul.f32 %v4254, %v4199
  %v4284 = vmul.f32 %v4258, %v4201
  %v4285 = vmul.f32 %v4262, %v4203
  %v4286 = vmul.f32 %v4266, %v4205
  %v4287 = vmul.f32 %v4270, %v4207
  %v4288 = vadd.f32 %v4128, %v4272
  %v4289 = vadd.f32 %v4129, %v4273
  %v4290 = vadd.f32 %v4130, %v4274
  %v4291 = vadd.f32 %v4131, %v4275
  %v4292 = vadd.f32 %v4132, %v4276
  %v4293 = vadd.f32 %v4133, %v4277
  %v4294 = vadd.f32 %v4134, %v4278
  %v4295 = vadd.f32 %v4135, %v4279
  %v4296 = vadd.f32 %v4136, %v4280
  %v4297 = vadd.f32 %v4137, %v4281
  %v4298 = vadd.f32 %v4138, %v4282
  %v4299 = vadd.f32 %v4139, %v4283
  %v4300 = vadd.f32 %v4140, %v4284
  %v4301 = vadd.f32 %v4141, %v4285
  %v4302 = vadd.f32 %v4142, %v4286
  %v4303 = vadd.f32 %v4143, %v4287
  %4304 = vst [vmem:[#allocation2] sm:$0xff] %v4288
  %4305 = vst [vmem:[#allocation2 + $0x8] sm:$0xff] %v4289
  %4306 = vst [vmem:[#allocation2 + $0x10] sm:$0xff] %v4290
  %4307 = vst [vmem:[#allocation2 + $0x18] sm:$0xff] %v4291
  %4308 = vst [vmem:[#allocation2 + $0x20] sm:$0xff] %v4292
  %4309 = vst [vmem:[#allocation2 + $0x28] sm:$0xff] %v4293
  %4310 = vst [vmem:[#allocation2 + $0x30] sm:$0xff] %v4294
  %4311 = vst [vmem:[#allocation2 + $0x38] sm:$0xff] %v4295
  %4312 = vst [vmem:[#allocation2 + $0x40] sm:$0xff] %v4296
  %4313 = vst [vmem:[#allocation2 + $0x48] sm:$0xff] %v4297
  %4314 = vst [vmem:[#allocation2 + $0x50] sm:$0xff] %v4298
  %4315 = vst [vmem:[#allocation2 + $0x58] sm:$0xff] %v4299
  %4316 = vst [vmem:[#allocation2 + $0x60] sm:$0xff] %v4300
  %4317 = vst [vmem:[#allocation2 + $0x68] sm:$0xff] %v4301
  %4318 = vst [vmem:[#allocation2 + $0x70] sm:$0xff] %v4302
  %4319 = vst [vmem:[#allocation2 + $0x78] sm:$0xff] %v4303
  %4320 = vset.pattern.permute.xlu0 9
  %4321 = vperm.xlu0 %4320, %v33
  %v4322 = vpop.permute.xlu0 %4321
  %4324 = vset.pattern.permute.xlu0 9
  %4325 = vperm.xlu0 %4324, %v34
  %v4326 = vpop.permute.xlu0 %4325
  %4328 = vset.pattern.permute.xlu0 9
  %4329 = vperm.xlu0 %4328, %v35
  %v4330 = vpop.permute.xlu0 %4329
  %4332 = vset.pattern.permute.xlu0 9
  %4333 = vperm.xlu0 %4332, %v36
  %v4334 = vpop.permute.xlu0 %4333
  %4336 = vset.pattern.permute.xlu0 9
  %4337 = vperm.xlu0 %4336, %v37
  %v4338 = vpop.permute.xlu0 %4337
  %4340 = vset.pattern.permute.xlu0 9
  %4341 = vperm.xlu0 %4340, %v38
  %v4342 = vpop.permute.xlu0 %4341
  %4344 = vset.pattern.permute.xlu0 9
  %4345 = vperm.xlu0 %4344, %v39
  %v4346 = vpop.permute.xlu0 %4345
  %4348 = vset.pattern.permute.xlu0 9
  %4349 = vperm.xlu0 %4348, %v40
  %v4350 = vpop.permute.xlu0 %4349
  %4352 = vset.pattern.permute.xlu0 9
  %4353 = vperm.xlu0 %4352, %v41
  %v4354 = vpop.permute.xlu0 %4353
  %4356 = vset.pattern.permute.xlu0 9
  %4357 = vperm.xlu0 %4356, %v42
  %v4358 = vpop.permute.xlu0 %4357
  %4360 = vset.pattern.permute.xlu0 9
  %4361 = vperm.xlu0 %4360, %v43
  %v4362 = vpop.permute.xlu0 %4361
  %4364 = vset.pattern.permute.xlu0 9
  %4365 = vperm.xlu0 %4364, %v44
  %v4366 = vpop.permute.xlu0 %4365
  %4368 = vset.pattern.permute.xlu0 9
  %4369 = vperm.xlu0 %4368, %v45
  %v4370 = vpop.permute.xlu0 %4369
  %4372 = vset.pattern.permute.xlu0 9
  %4373 = vperm.xlu0 %4372, %v46
  %v4374 = vpop.permute.xlu0 %4373
  %4376 = vset.pattern.permute.xlu0 9
  %4377 = vperm.xlu0 %4376, %v47
  %v4378 = vpop.permute.xlu0 %4377
  %4380 = vset.pattern.permute.xlu0 9
  %4381 = vperm.xlu0 %4380, %v48
  %v4382 = vpop.permute.xlu0 %4381
  %v4384 = vsub.f32 %v4322, %v1912
  %v4385 = vsub.f32 %v4326, %v1912
  %v4386 = vsub.f32 %v4330, %v1912
  %v4387 = vsub.f32 %v4334, %v1912
  %v4388 = vsub.f32 %v4338, %v1912
  %v4389 = vsub.f32 %v4342, %v1912
  %v4390 = vsub.f32 %v4346, %v1912
  %v4391 = vsub.f32 %v4350, %v1912
  %v4392 = vsub.f32 %v4354, %v1912
  %v4393 = vsub.f32 %v4358, %v1912
  %v4394 = vsub.f32 %v4362, %v1912
  %v4395 = vsub.f32 %v4366, %v1912
  %v4396 = vsub.f32 %v4370, %v1912
  %v4397 = vsub.f32 %v4374, %v1912
  %v4398 = vsub.f32 %v4378, %v1912
  %v4399 = vsub.f32 %v4382, %v1912
  %v4400 = vld [vmem:[#allocation2] sm:$0xff]
  %v4401 = vld [vmem:[#allocation2 + $0x8] sm:$0xff]
  %v4402 = vld [vmem:[#allocation2 + $0x10] sm:$0xff]
  %v4403 = vld [vmem:[#allocation2 + $0x18] sm:$0xff]
  %v4404 = vld [vmem:[#allocation2 + $0x20] sm:$0xff]
  %v4405 = vld [vmem:[#allocation2 + $0x28] sm:$0xff]
  %v4406 = vld [vmem:[#allocation2 + $0x30] sm:$0xff]
  %v4407 = vld [vmem:[#allocation2 + $0x38] sm:$0xff]
  %v4408 = vld [vmem:[#allocation2 + $0x40] sm:$0xff]
  %v4409 = vld [vmem:[#allocation2 + $0x48] sm:$0xff]
  %v4410 = vld [vmem:[#allocation2 + $0x50] sm:$0xff]
  %v4411 = vld [vmem:[#allocation2 + $0x58] sm:$0xff]
  %v4412 = vld [vmem:[#allocation2 + $0x60] sm:$0xff]
  %v4413 = vld [vmem:[#allocation2 + $0x68] sm:$0xff]
  %v4414 = vld [vmem:[#allocation2 + $0x70] sm:$0xff]
  %v4415 = vld [vmem:[#allocation2 + $0x78] sm:$0xff]
  %v4416 = vmul.f32 %v4384, %v4384
  %v4417 = vmul.f32 %v4385, %v4385
  %v4418 = vmul.f32 %v4386, %v4386
  %v4419 = vmul.f32 %v4387, %v4387
  %v4420 = vmul.f32 %v4388, %v4388
  %v4421 = vmul.f32 %v4389, %v4389
  %v4422 = vmul.f32 %v4390, %v4390
  %v4423 = vmul.f32 %v4391, %v4391
  %v4424 = vmul.f32 %v4392, %v4392
  %v4425 = vmul.f32 %v4393, %v4393
  %v4426 = vmul.f32 %v4394, %v4394
  %v4427 = vmul.f32 %v4395, %v4395
  %v4428 = vmul.f32 %v4396, %v4396
  %v4429 = vmul.f32 %v4397, %v4397
  %v4430 = vmul.f32 %v4398, %v4398
  %v4431 = vmul.f32 %v4399, %v4399
  %v4432 = vmul.f32 %v1966, %v4416
  %v4433 = vmul.f32 %v1966, %v4417
  %v4434 = vmul.f32 %v1966, %v4418
  %v4435 = vmul.f32 %v1966, %v4419
  %v4436 = vmul.f32 %v1966, %v4420
  %v4437 = vmul.f32 %v1966, %v4421
  %v4438 = vmul.f32 %v1966, %v4422
  %v4439 = vmul.f32 %v1966, %v4423
  %v4440 = vmul.f32 %v1966, %v4424
  %v4441 = vmul.f32 %v1966, %v4425
  %v4442 = vmul.f32 %v1966, %v4426
  %v4443 = vmul.f32 %v1966, %v4427
  %v4444 = vmul.f32 %v1966, %v4428
  %v4445 = vmul.f32 %v1966, %v4429
  %v4446 = vmul.f32 %v1966, %v4430
  %v4447 = vmul.f32 %v1966, %v4431
  %v4448 = vmul.f32 %v4432, 1.442695
  %v4449 = vpow.pop %v4448
  %v4450 = vmul.f32 %v4433, 1.442695
  %v4451 = vpow.pop %v4450
  %v4452 = vmul.f32 %v4434, 1.442695
  %v4453 = vpow.pop %v4452
  %v4454 = vmul.f32 %v4435, 1.442695
  %v4455 = vpow.pop %v4454
  %v4456 = vmul.f32 %v4436, 1.442695
  %v4457 = vpow.pop %v4456
  %v4458 = vmul.f32 %v4437, 1.442695
  %v4459 = vpow.pop %v4458
  %v4460 = vmul.f32 %v4438, 1.442695
  %v4461 = vpow.pop %v4460
  %v4462 = vmul.f32 %v4439, 1.442695
  %v4463 = vpow.pop %v4462
  %v4464 = vmul.f32 %v4440, 1.442695
  %v4465 = vpow.pop %v4464
  %v4466 = vmul.f32 %v4441, 1.442695
  %v4467 = vpow.pop %v4466
  %v4468 = vmul.f32 %v4442, 1.442695
  %v4469 = vpow.pop %v4468
  %v4470 = vmul.f32 %v4443, 1.442695
  %v4471 = vpow.pop %v4470
  %v4472 = vmul.f32 %v4444, 1.442695
  %v4473 = vpow.pop %v4472
  %v4474 = vmul.f32 %v4445, 1.442695
  %v4475 = vpow.pop %v4474
  %v4476 = vmul.f32 %v4446, 1.442695
  %v4477 = vpow.pop %v4476
  %v4478 = vmul.f32 %v4447, 1.442695
  %v4479 = vpow.pop %v4478
  %4480 = vset.pattern.permute.xlu0 9
  %4481 = vperm.xlu0 %4480, %v1793
  %v4482 = vpop.permute.xlu0 %4481
  %4484 = vset.pattern.permute.xlu0 9
  %4485 = vperm.xlu0 %4484, %v1794
  %v4486 = vpop.permute.xlu0 %4485
  %4488 = vset.pattern.permute.xlu0 9
  %4489 = vperm.xlu0 %4488, %v1795
  %v4490 = vpop.permute.xlu0 %4489
  %4492 = vset.pattern.permute.xlu0 9
  %4493 = vperm.xlu0 %4492, %v1796
  %v4494 = vpop.permute.xlu0 %4493
  %4496 = vset.pattern.permute.xlu0 9
  %4497 = vperm.xlu0 %4496, %v1797
  %v4498 = vpop.permute.xlu0 %4497
  %4500 = vset.pattern.permute.xlu0 9
  %4501 = vperm.xlu0 %4500, %v1798
  %v4502 = vpop.permute.xlu0 %4501
  %4504 = vset.pattern.permute.xlu0 9
  %4505 = vperm.xlu0 %4504, %v1799
  %v4506 = vpop.permute.xlu0 %4505
  %4508 = vset.pattern.permute.xlu0 9
  %4509 = vperm.xlu0 %4508, %v1800
  %v4510 = vpop.permute.xlu0 %4509
  %4512 = vset.pattern.permute.xlu0 9
  %4513 = vperm.xlu0 %4512, %v1801
  %v4514 = vpop.permute.xlu0 %4513
  %4516 = vset.pattern.permute.xlu0 9
  %4517 = vperm.xlu0 %4516, %v1802
  %v4518 = vpop.permute.xlu0 %4517
  %4520 = vset.pattern.permute.xlu0 9
  %4521 = vperm.xlu0 %4520, %v1803
  %v4522 = vpop.permute.xlu0 %4521
  %4524 = vset.pattern.permute.xlu0 9
  %4525 = vperm.xlu0 %4524, %v1804
  %v4526 = vpop.permute.xlu0 %4525
  %4528 = vset.pattern.permute.xlu0 9
  %4529 = vperm.xlu0 %4528, %v1805
  %v4530 = vpop.permute.xlu0 %4529
  %4532 = vset.pattern.permute.xlu0 9
  %4533 = vperm.xlu0 %4532, %v1806
  %v4534 = vpop.permute.xlu0 %4533
  %4536 = vset.pattern.permute.xlu0 9
  %4537 = vperm.xlu0 %4536, %v1807
  %v4538 = vpop.permute.xlu0 %4537
  %4540 = vset.pattern.permute.xlu0 9
  %4541 = vperm.xlu0 %4540, %v1808
  %v4542 = vpop.permute.xlu0 %4541
  %v4544 = vmul.f32 %v4482, %v4449
  %v4545 = vmul.f32 %v4486, %v4451
  %v4546 = vmul.f32 %v4490, %v4453
  %v4547 = vmul.f32 %v4494, %v4455
  %v4548 = vmul.f32 %v4498, %v4457
  %v4549 = vmul.f32 %v4502, %v4459
  %v4550 = vmul.f32 %v4506, %v4461
  %v4551 = vmul.f32 %v4510, %v4463
  %v4552 = vmul.f32 %v4514, %v4465
  %v4553 = vmul.f32 %v4518, %v4467
  %v4554 = vmul.f32 %v4522, %v4469
  %v4555 = vmul.f32 %v4526, %v4471
  %v4556 = vmul.f32 %v4530, %v4473
  %v4557 = vmul.f32 %v4534, %v4475
  %v4558 = vmul.f32 %v4538, %v4477
  %v4559 = vmul.f32 %v4542, %v4479
  %v4560 = vadd.f32 %v4400, %v4544
  %v4561 = vadd.f32 %v4401, %v4545
  %v4562 = vadd.f32 %v4402, %v4546
  %v4563 = vadd.f32 %v4403, %v4547
  %v4564 = vadd.f32 %v4404, %v4548
  %v4565 = vadd.f32 %v4405, %v4549
  %v4566 = vadd.f32 %v4406, %v4550
  %v4567 = vadd.f32 %v4407, %v4551
  %v4568 = vadd.f32 %v4408, %v4552
  %v4569 = vadd.f32 %v4409, %v4553
  %v4570 = vadd.f32 %v4410, %v4554
  %v4571 = vadd.f32 %v4411, %v4555
  %v4572 = vadd.f32 %v4412, %v4556
  %v4573 = vadd.f32 %v4413, %v4557
  %v4574 = vadd.f32 %v4414, %v4558
  %v4575 = vadd.f32 %v4415, %v4559
  %4576 = vst [vmem:[#allocation2] sm:$0xff] %v4560
  %4577 = vst [vmem:[#allocation2 + $0x8] sm:$0xff] %v4561
  %4578 = vst [vmem:[#allocation2 + $0x10] sm:$0xff] %v4562
  %4579 = vst [vmem:[#allocation2 + $0x18] sm:$0xff] %v4563
  %4580 = vst [vmem:[#allocation2 + $0x20] sm:$0xff] %v4564
  %4581 = vst [vmem:[#allocation2 + $0x28] sm:$0xff] %v4565
  %4582 = vst [vmem:[#allocation2 + $0x30] sm:$0xff] %v4566
  %4583 = vst [vmem:[#allocation2 + $0x38] sm:$0xff] %v4567
  %4584 = vst [vmem:[#allocation2 + $0x40] sm:$0xff] %v4568
  %4585 = vst [vmem:[#allocation2 + $0x48] sm:$0xff] %v4569
  %4586 = vst [vmem:[#allocation2 + $0x50] sm:$0xff] %v4570
  %4587 = vst [vmem:[#allocation2 + $0x58] sm:$0xff] %v4571
  %4588 = vst [vmem:[#allocation2 + $0x60] sm:$0xff] %v4572
  %4589 = vst [vmem:[#allocation2 + $0x68] sm:$0xff] %v4573
  %4590 = vst [vmem:[#allocation2 + $0x70] sm:$0xff] %v4574
  %4591 = vst [vmem:[#allocation2 + $0x78] sm:$0xff] %v4575
  %4592 = vset.pattern.permute.xlu0 10
  %4593 = vperm.xlu0 %4592, %v33
  %v4594 = vpop.permute.xlu0 %4593
  %4596 = vset.pattern.permute.xlu0 10
  %4597 = vperm.xlu0 %4596, %v34
  %v4598 = vpop.permute.xlu0 %4597
  %4600 = vset.pattern.permute.xlu0 10
  %4601 = vperm.xlu0 %4600, %v35
  %v4602 = vpop.permute.xlu0 %4601
  %4604 = vset.pattern.permute.xlu0 10
  %4605 = vperm.xlu0 %4604, %v36
  %v4606 = vpop.permute.xlu0 %4605
  %4608 = vset.pattern.permute.xlu0 10
  %4609 = vperm.xlu0 %4608, %v37
  %v4610 = vpop.permute.xlu0 %4609
  %4612 = vset.pattern.permute.xlu0 10
  %4613 = vperm.xlu0 %4612, %v38
  %v4614 = vpop.permute.xlu0 %4613
  %4616 = vset.pattern.permute.xlu0 10
  %4617 = vperm.xlu0 %4616, %v39
  %v4618 = vpop.permute.xlu0 %4617
  %4620 = vset.pattern.permute.xlu0 10
  %4621 = vperm.xlu0 %4620, %v40
  %v4622 = vpop.permute.xlu0 %4621
  %4624 = vset.pattern.permute.xlu0 10
  %4625 = vperm.xlu0 %4624, %v41
  %v4626 = vpop.permute.xlu0 %4625
  %4628 = vset.pattern.permute.xlu0 10
  %4629 = vperm.xlu0 %4628, %v42
  %v4630 = vpop.permute.xlu0 %4629
  %4632 = vset.pattern.permute.xlu0 10
  %4633 = vperm.xlu0 %4632, %v43
  %v4634 = vpop.permute.xlu0 %4633
  %4636 = vset.pattern.permute.xlu0 10
  %4637 = vperm.xlu0 %4636, %v44
  %v4638 = vpop.permute.xlu0 %4637
  %4640 = vset.pattern.permute.xlu0 10
  %4641 = vperm.xlu0 %4640, %v45
  %v4642 = vpop.permute.xlu0 %4641
  %4644 = vset.pattern.permute.xlu0 10
  %4645 = vperm.xlu0 %4644, %v46
  %v4646 = vpop.permute.xlu0 %4645
  %4648 = vset.pattern.permute.xlu0 10
  %4649 = vperm.xlu0 %4648, %v47
  %v4650 = vpop.permute.xlu0 %4649
  %4652 = vset.pattern.permute.xlu0 10
  %4653 = vperm.xlu0 %4652, %v48
  %v4654 = vpop.permute.xlu0 %4653
  %v4656 = vsub.f32 %v4594, %v1912
  %v4657 = vsub.f32 %v4598, %v1912
  %v4658 = vsub.f32 %v4602, %v1912
  %v4659 = vsub.f32 %v4606, %v1912
  %v4660 = vsub.f32 %v4610, %v1912
  %v4661 = vsub.f32 %v4614, %v1912
  %v4662 = vsub.f32 %v4618, %v1912
  %v4663 = vsub.f32 %v4622, %v1912
  %v4664 = vsub.f32 %v4626, %v1912
  %v4665 = vsub.f32 %v4630, %v1912
  %v4666 = vsub.f32 %v4634, %v1912
  %v4667 = vsub.f32 %v4638, %v1912
  %v4668 = vsub.f32 %v4642, %v1912
  %v4669 = vsub.f32 %v4646, %v1912
  %v4670 = vsub.f32 %v4650, %v1912
  %v4671 = vsub.f32 %v4654, %v1912
  %v4672 = vld [vmem:[#allocation2] sm:$0xff]
  %v4673 = vld [vmem:[#allocation2 + $0x8] sm:$0xff]
  %v4674 = vld [vmem:[#allocation2 + $0x10] sm:$0xff]
  %v4675 = vld [vmem:[#allocation2 + $0x18] sm:$0xff]
  %v4676 = vld [vmem:[#allocation2 + $0x20] sm:$0xff]
  %v4677 = vld [vmem:[#allocation2 + $0x28] sm:$0xff]
  %v4678 = vld [vmem:[#allocation2 + $0x30] sm:$0xff]
  %v4679 = vld [vmem:[#allocation2 + $0x38] sm:$0xff]
  %v4680 = vld [vmem:[#allocation2 + $0x40] sm:$0xff]
  %v4681 = vld [vmem:[#allocation2 + $0x48] sm:$0xff]
  %v4682 = vld [vmem:[#allocation2 + $0x50] sm:$0xff]
  %v4683 = vld [vmem:[#allocation2 + $0x58] sm:$0xff]
  %v4684 = vld [vmem:[#allocation2 + $0x60] sm:$0xff]
  %v4685 = vld [vmem:[#allocation2 + $0x68] sm:$0xff]
  %v4686 = vld [vmem:[#allocation2 + $0x70] sm:$0xff]
  %v4687 = vld [vmem:[#allocation2 + $0x78] sm:$0xff]
  %v4688 = vmul.f32 %v4656, %v4656
  %v4689 = vmul.f32 %v4657, %v4657
  %v4690 = vmul.f32 %v4658, %v4658
  %v4691 = vmul.f32 %v4659, %v4659
  %v4692 = vmul.f32 %v4660, %v4660
  %v4693 = vmul.f32 %v4661, %v4661
  %v4694 = vmul.f32 %v4662, %v4662
  %v4695 = vmul.f32 %v4663, %v4663
  %v4696 = vmul.f32 %v4664, %v4664
  %v4697 = vmul.f32 %v4665, %v4665
  %v4698 = vmul.f32 %v4666, %v4666
  %v4699 = vmul.f32 %v4667, %v4667
  %v4700 = vmul.f32 %v4668, %v4668
  %v4701 = vmul.f32 %v4669, %v4669
  %v4702 = vmul.f32 %v4670, %v4670
  %v4703 = vmul.f32 %v4671, %v4671
  %v4704 = vmul.f32 %v1966, %v4688
  %v4705 = vmul.f32 %v1966, %v4689
  %v4706 = vmul.f32 %v1966, %v4690
  %v4707 = vmul.f32 %v1966, %v4691
  %v4708 = vmul.f32 %v1966, %v4692
  %v4709 = vmul.f32 %v1966, %v4693
  %v4710 = vmul.f32 %v1966, %v4694
  %v4711 = vmul.f32 %v1966, %v4695
  %v4712 = vmul.f32 %v1966, %v4696
  %v4713 = vmul.f32 %v1966, %v4697
  %v4714 = vmul.f32 %v1966, %v4698
  %v4715 = vmul.f32 %v1966, %v4699
  %v4716 = vmul.f32 %v1966, %v4700
  %v4717 = vmul.f32 %v1966, %v4701
  %v4718 = vmul.f32 %v1966, %v4702
  %v4719 = vmul.f32 %v1966, %v4703
  %v4720 = vmul.f32 %v4704, 1.442695
  %v4721 = vpow.pop %v4720
  %v4722 = vmul.f32 %v4705, 1.442695
  %v4723 = vpow.pop %v4722
  %v4724 = vmul.f32 %v4706, 1.442695
  %v4725 = vpow.pop %v4724
  %v4726 = vmul.f32 %v4707, 1.442695
  %v4727 = vpow.pop %v4726
  %v4728 = vmul.f32 %v4708, 1.442695
  %v4729 = vpow.pop %v4728
  %v4730 = vmul.f32 %v4709, 1.442695
  %v4731 = vpow.pop %v4730
  %v4732 = vmul.f32 %v4710, 1.442695
  %v4733 = vpow.pop %v4732
  %v4734 = vmul.f32 %v4711, 1.442695
  %v4735 = vpow.pop %v4734
  %v4736 = vmul.f32 %v4712, 1.442695
  %v4737 = vpow.pop %v4736
  %v4738 = vmul.f32 %v4713, 1.442695
  %v4739 = vpow.pop %v4738
  %v4740 = vmul.f32 %v4714, 1.442695
  %v4741 = vpow.pop %v4740
  %v4742 = vmul.f32 %v4715, 1.442695
  %v4743 = vpow.pop %v4742
  %v4744 = vmul.f32 %v4716, 1.442695
  %v4745 = vpow.pop %v4744
  %v4746 = vmul.f32 %v4717, 1.442695
  %v4747 = vpow.pop %v4746
  %v4748 = vmul.f32 %v4718, 1.442695
  %v4749 = vpow.pop %v4748
  %v4750 = vmul.f32 %v4719, 1.442695
  %v4751 = vpow.pop %v4750
  %4752 = vset.pattern.permute.xlu0 10
  %4753 = vperm.xlu0 %4752, %v1793
  %v4754 = vpop.permute.xlu0 %4753
  %4756 = vset.pattern.permute.xlu0 10
  %4757 = vperm.xlu0 %4756, %v1794
  %v4758 = vpop.permute.xlu0 %4757
  %4760 = vset.pattern.permute.xlu0 10
  %4761 = vperm.xlu0 %4760, %v1795
  %v4762 = vpop.permute.xlu0 %4761
  %4764 = vset.pattern.permute.xlu0 10
  %4765 = vperm.xlu0 %4764, %v1796
  %v4766 = vpop.permute.xlu0 %4765
  %4768 = vset.pattern.permute.xlu0 10
  %4769 = vperm.xlu0 %4768, %v1797
  %v4770 = vpop.permute.xlu0 %4769
  %4772 = vset.pattern.permute.xlu0 10
  %4773 = vperm.xlu0 %4772, %v1798
  %v4774 = vpop.permute.xlu0 %4773
  %4776 = vset.pattern.permute.xlu0 10
  %4777 = vperm.xlu0 %4776, %v1799
  %v4778 = vpop.permute.xlu0 %4777
  %4780 = vset.pattern.permute.xlu0 10
  %4781 = vperm.xlu0 %4780, %v1800
  %v4782 = vpop.permute.xlu0 %4781
  %4784 = vset.pattern.permute.xlu0 10
  %4785 = vperm.xlu0 %4784, %v1801
  %v4786 = vpop.permute.xlu0 %4785
  %4788 = vset.pattern.permute.xlu0 10
  %4789 = vperm.xlu0 %4788, %v1802
  %v4790 = vpop.permute.xlu0 %4789
  %4792 = vset.pattern.permute.xlu0 10
  %4793 = vperm.xlu0 %4792, %v1803
  %v4794 = vpop.permute.xlu0 %4793
  %4796 = vset.pattern.permute.xlu0 10
  %4797 = vperm.xlu0 %4796, %v1804
  %v4798 = vpop.permute.xlu0 %4797
  %4800 = vset.pattern.permute.xlu0 10
  %4801 = vperm.xlu0 %4800, %v1805
  %v4802 = vpop.permute.xlu0 %4801
  %4804 = vset.pattern.permute.xlu0 10
  %4805 = vperm.xlu0 %4804, %v1806
  %v4806 = vpop.permute.xlu0 %4805
  %4808 = vset.pattern.permute.xlu0 10
  %4809 = vperm.xlu0 %4808, %v1807
  %v4810 = vpop.permute.xlu0 %4809
  %4812 = vset.pattern.permute.xlu0 10
  %4813 = vperm.xlu0 %4812, %v1808
  %v4814 = vpop.permute.xlu0 %4813
  %v4816 = vmul.f32 %v4754, %v4721
  %v4817 = vmul.f32 %v4758, %v4723
  %v4818 = vmul.f32 %v4762, %v4725
  %v4819 = vmul.f32 %v4766, %v4727
  %v4820 = vmul.f32 %v4770, %v4729
  %v4821 = vmul.f32 %v4774, %v4731
  %v4822 = vmul.f32 %v4778, %v4733
  %v4823 = vmul.f32 %v4782, %v4735
  %v4824 = vmul.f32 %v4786, %v4737
  %v4825 = vmul.f32 %v4790, %v4739
  %v4826 = vmul.f32 %v4794, %v4741
  %v4827 = vmul.f32 %v4798, %v4743
  %v4828 = vmul.f32 %v4802, %v4745
  %v4829 = vmul.f32 %v4806, %v4747
  %v4830 = vmul.f32 %v4810, %v4749
  %v4831 = vmul.f32 %v4814, %v4751
  %v4832 = vadd.f32 %v4672, %v4816
  %v4833 = vadd.f32 %v4673, %v4817
  %v4834 = vadd.f32 %v4674, %v4818
  %v4835 = vadd.f32 %v4675, %v4819
  %v4836 = vadd.f32 %v4676, %v4820
  %v4837 = vadd.f32 %v4677, %v4821
  %v4838 = vadd.f32 %v4678, %v4822
  %v4839 = vadd.f32 %v4679, %v4823
  %v4840 = vadd.f32 %v4680, %v4824
  %v4841 = vadd.f32 %v4681, %v4825
  %v4842 = vadd.f32 %v4682, %v4826
  %v4843 = vadd.f32 %v4683, %v4827
  %v4844 = vadd.f32 %v4684, %v4828
  %v4845 = vadd.f32 %v4685, %v4829
  %v4846 = vadd.f32 %v4686, %v4830
  %v4847 = vadd.f32 %v4687, %v4831
  %4848 = vst [vmem:[#allocation2] sm:$0xff] %v4832
  %4849 = vst [vmem:[#allocation2 + $0x8] sm:$0xff] %v4833
  %4850 = vst [vmem:[#allocation2 + $0x10] sm:$0xff] %v4834
  %4851 = vst [vmem:[#allocation2 + $0x18] sm:$0xff] %v4835
  %4852 = vst [vmem:[#allocation2 + $0x20] sm:$0xff] %v4836
  %4853 = vst [vmem:[#allocation2 + $0x28] sm:$0xff] %v4837
  %4854 = vst [vmem:[#allocation2 + $0x30] sm:$0xff] %v4838
  %4855 = vst [vmem:[#allocation2 + $0x38] sm:$0xff] %v4839
  %4856 = vst [vmem:[#allocation2 + $0x40] sm:$0xff] %v4840
  %4857 = vst [vmem:[#allocation2 + $0x48] sm:$0xff] %v4841
  %4858 = vst [vmem:[#allocation2 + $0x50] sm:$0xff] %v4842
  %4859 = vst [vmem:[#allocation2 + $0x58] sm:$0xff] %v4843
  %4860 = vst [vmem:[#allocation2 + $0x60] sm:$0xff] %v4844
  %4861 = vst [vmem:[#allocation2 + $0x68] sm:$0xff] %v4845
  %4862 = vst [vmem:[#allocation2 + $0x70] sm:$0xff] %v4846
  %4863 = vst [vmem:[#allocation2 + $0x78] sm:$0xff] %v4847
  %4864 = vset.pattern.permute.xlu0 11
  %4865 = vperm.xlu0 %4864, %v33
  %v4866 = vpop.permute.xlu0 %4865
  %4868 = vset.pattern.permute.xlu0 11
  %4869 = vperm.xlu0 %4868, %v34
  %v4870 = vpop.permute.xlu0 %4869
  %4872 = vset.pattern.permute.xlu0 11
  %4873 = vperm.xlu0 %4872, %v35
  %v4874 = vpop.permute.xlu0 %4873
  %4876 = vset.pattern.permute.xlu0 11
  %4877 = vperm.xlu0 %4876, %v36
  %v4878 = vpop.permute.xlu0 %4877
  %4880 = vset.pattern.permute.xlu0 11
  %4881 = vperm.xlu0 %4880, %v37
  %v4882 = vpop.permute.xlu0 %4881
  %4884 = vset.pattern.permute.xlu0 11
  %4885 = vperm.xlu0 %4884, %v38
  %v4886 = vpop.permute.xlu0 %4885
  %4888 = vset.pattern.permute.xlu0 11
  %4889 = vperm.xlu0 %4888, %v39
  %v4890 = vpop.permute.xlu0 %4889
  %4892 = vset.pattern.permute.xlu0 11
  %4893 = vperm.xlu0 %4892, %v40
  %v4894 = vpop.permute.xlu0 %4893
  %4896 = vset.pattern.permute.xlu0 11
  %4897 = vperm.xlu0 %4896, %v41
  %v4898 = vpop.permute.xlu0 %4897
  %4900 = vset.pattern.permute.xlu0 11
  %4901 = vperm.xlu0 %4900, %v42
  %v4902 = vpop.permute.xlu0 %4901
  %4904 = vset.pattern.permute.xlu0 11
  %4905 = vperm.xlu0 %4904, %v43
  %v4906 = vpop.permute.xlu0 %4905
  %4908 = vset.pattern.permute.xlu0 11
  %4909 = vperm.xlu0 %4908, %v44
  %v4910 = vpop.permute.xlu0 %4909
  %4912 = vset.pattern.permute.xlu0 11
  %4913 = vperm.xlu0 %4912, %v45
  %v4914 = vpop.permute.xlu0 %4913
  %4916 = vset.pattern.permute.xlu0 11
  %4917 = vperm.xlu0 %4916, %v46
  %v4918 = vpop.permute.xlu0 %4917
  %4920 = vset.pattern.permute.xlu0 11
  %4921 = vperm.xlu0 %4920, %v47
  %v4922 = vpop.permute.xlu0 %4921
  %4924 = vset.pattern.permute.xlu0 11
  %4925 = vperm.xlu0 %4924, %v48
  %v4926 = vpop.permute.xlu0 %4925
  %v4928 = vsub.f32 %v4866, %v1912
  %v4929 = vsub.f32 %v4870, %v1912
  %v4930 = vsub.f32 %v4874, %v1912
  %v4931 = vsub.f32 %v4878, %v1912
  %v4932 = vsub.f32 %v4882, %v1912
  %v4933 = vsub.f32 %v4886, %v1912
  %v4934 = vsub.f32 %v4890, %v1912
  %v4935 = vsub.f32 %v4894, %v1912
  %v4936 = vsub.f32 %v4898, %v1912
  %v4937 = vsub.f32 %v4902, %v1912
  %v4938 = vsub.f32 %v4906, %v1912
  %v4939 = vsub.f32 %v4910, %v1912
  %v4940 = vsub.f32 %v4914, %v1912
  %v4941 = vsub.f32 %v4918, %v1912
  %v4942 = vsub.f32 %v4922, %v1912
  %v4943 = vsub.f32 %v4926, %v1912
  %v4944 = vld [vmem:[#allocation2] sm:$0xff]
  %v4945 = vld [vmem:[#allocation2 + $0x8] sm:$0xff]
  %v4946 = vld [vmem:[#allocation2 + $0x10] sm:$0xff]
  %v4947 = vld [vmem:[#allocation2 + $0x18] sm:$0xff]
  %v4948 = vld [vmem:[#allocation2 + $0x20] sm:$0xff]
  %v4949 = vld [vmem:[#allocation2 + $0x28] sm:$0xff]
  %v4950 = vld [vmem:[#allocation2 + $0x30] sm:$0xff]
  %v4951 = vld [vmem:[#allocation2 + $0x38] sm:$0xff]
  %v4952 = vld [vmem:[#allocation2 + $0x40] sm:$0xff]
  %v4953 = vld [vmem:[#allocation2 + $0x48] sm:$0xff]
  %v4954 = vld [vmem:[#allocation2 + $0x50] sm:$0xff]
  %v4955 = vld [vmem:[#allocation2 + $0x58] sm:$0xff]
  %v4956 = vld [vmem:[#allocation2 + $0x60] sm:$0xff]
  %v4957 = vld [vmem:[#allocation2 + $0x68] sm:$0xff]
  %v4958 = vld [vmem:[#allocation2 + $0x70] sm:$0xff]
  %v4959 = vld [vmem:[#allocation2 + $0x78] sm:$0xff]
  %v4960 = vmul.f32 %v4928, %v4928
  %v4961 = vmul.f32 %v4929, %v4929
  %v4962 = vmul.f32 %v4930, %v4930
  %v4963 = vmul.f32 %v4931, %v4931
  %v4964 = vmul.f32 %v4932, %v4932
  %v4965 = vmul.f32 %v4933, %v4933
  %v4966 = vmul.f32 %v4934, %v4934
  %v4967 = vmul.f32 %v4935, %v4935
  %v4968 = vmul.f32 %v4936, %v4936
  %v4969 = vmul.f32 %v4937, %v4937
  %v4970 = vmul.f32 %v4938, %v4938
  %v4971 = vmul.f32 %v4939, %v4939
  %v4972 = vmul.f32 %v4940, %v4940
  %v4973 = vmul.f32 %v4941, %v4941
  %v4974 = vmul.f32 %v4942, %v4942
  %v4975 = vmul.f32 %v4943, %v4943
  %v4976 = vmul.f32 %v1966, %v4960
  %v4977 = vmul.f32 %v1966, %v4961
  %v4978 = vmul.f32 %v1966, %v4962
  %v4979 = vmul.f32 %v1966, %v4963
  %v4980 = vmul.f32 %v1966, %v4964
  %v4981 = vmul.f32 %v1966, %v4965
  %v4982 = vmul.f32 %v1966, %v4966
  %v4983 = vmul.f32 %v1966, %v4967
  %v4984 = vmul.f32 %v1966, %v4968
  %v4985 = vmul.f32 %v1966, %v4969
  %v4986 = vmul.f32 %v1966, %v4970
  %v4987 = vmul.f32 %v1966, %v4971
  %v4988 = vmul.f32 %v1966, %v4972
  %v4989 = vmul.f32 %v1966, %v4973
  %v4990 = vmul.f32 %v1966, %v4974
  %v4991 = vmul.f32 %v1966, %v4975
  %v4992 = vmul.f32 %v4976, 1.442695
  %v4993 = vpow.pop %v4992
  %v4994 = vmul.f32 %v4977, 1.442695
  %v4995 = vpow.pop %v4994
  %v4996 = vmul.f32 %v4978, 1.442695
  %v4997 = vpow.pop %v4996
  %v4998 = vmul.f32 %v4979, 1.442695
  %v4999 = vpow.pop %v4998
  %v5000 = vmul.f32 %v4980, 1.442695
  %v5001 = vpow.pop %v5000
  %v5002 = vmul.f32 %v4981, 1.442695
  %v5003 = vpow.pop %v5002
  %v5004 = vmul.f32 %v4982, 1.442695
  %v5005 = vpow.pop %v5004
  %v5006 = vmul.f32 %v4983, 1.442695
  %v5007 = vpow.pop %v5006
  %v5008 = vmul.f32 %v4984, 1.442695
  %v5009 = vpow.pop %v5008
  %v5010 = vmul.f32 %v4985, 1.442695
  %v5011 = vpow.pop %v5010
  %v5012 = vmul.f32 %v4986, 1.442695
  %v5013 = vpow.pop %v5012
  %v5014 = vmul.f32 %v4987, 1.442695
  %v5015 = vpow.pop %v5014
  %v5016 = vmul.f32 %v4988, 1.442695
  %v5017 = vpow.pop %v5016
  %v5018 = vmul.f32 %v4989, 1.442695
  %v5019 = vpow.pop %v5018
  %v5020 = vmul.f32 %v4990, 1.442695
  %v5021 = vpow.pop %v5020
  %v5022 = vmul.f32 %v4991, 1.442695
  %v5023 = vpow.pop %v5022
  %5024 = vset.pattern.permute.xlu0 11
  %5025 = vperm.xlu0 %5024, %v1793
  %v5026 = vpop.permute.xlu0 %5025
  %5028 = vset.pattern.permute.xlu0 11
  %5029 = vperm.xlu0 %5028, %v1794
  %v5030 = vpop.permute.xlu0 %5029
  %5032 = vset.pattern.permute.xlu0 11
  %5033 = vperm.xlu0 %5032, %v1795
  %v5034 = vpop.permute.xlu0 %5033
  %5036 = vset.pattern.permute.xlu0 11
  %5037 = vperm.xlu0 %5036, %v1796
  %v5038 = vpop.permute.xlu0 %5037
  %5040 = vset.pattern.permute.xlu0 11
  %5041 = vperm.xlu0 %5040, %v1797
  %v5042 = vpop.permute.xlu0 %5041
  %5044 = vset.pattern.permute.xlu0 11
  %5045 = vperm.xlu0 %5044, %v1798
  %v5046 = vpop.permute.xlu0 %5045
  %5048 = vset.pattern.permute.xlu0 11
  %5049 = vperm.xlu0 %5048, %v1799
  %v5050 = vpop.permute.xlu0 %5049
  %5052 = vset.pattern.permute.xlu0 11
  %5053 = vperm.xlu0 %5052, %v1800
  %v5054 = vpop.permute.xlu0 %5053
  %5056 = vset.pattern.permute.xlu0 11
  %5057 = vperm.xlu0 %5056, %v1801
  %v5058 = vpop.permute.xlu0 %5057
  %5060 = vset.pattern.permute.xlu0 11
  %5061 = vperm.xlu0 %5060, %v1802
  %v5062 = vpop.permute.xlu0 %5061
  %5064 = vset.pattern.permute.xlu0 11
  %5065 = vperm.xlu0 %5064, %v1803
  %v5066 = vpop.permute.xlu0 %5065
  %5068 = vset.pattern.permute.xlu0 11
  %5069 = vperm.xlu0 %5068, %v1804
  %v5070 = vpop.permute.xlu0 %5069
  %5072 = vset.pattern.permute.xlu0 11
  %5073 = vperm.xlu0 %5072, %v1805
  %v5074 = vpop.permute.xlu0 %5073
  %5076 = vset.pattern.permute.xlu0 11
  %5077 = vperm.xlu0 %5076, %v1806
  %v5078 = vpop.permute.xlu0 %5077
  %5080 = vset.pattern.permute.xlu0 11
  %5081 = vperm.xlu0 %5080, %v1807
  %v5082 = vpop.permute.xlu0 %5081
  %5084 = vset.pattern.permute.xlu0 11
  %5085 = vperm.xlu0 %5084, %v1808
  %v5086 = vpop.permute.xlu0 %5085
  %v5088 = vmul.f32 %v5026, %v4993
  %v5089 = vmul.f32 %v5030, %v4995
  %v5090 = vmul.f32 %v5034, %v4997
  %v5091 = vmul.f32 %v5038, %v4999
  %v5092 = vmul.f32 %v5042, %v5001
  %v5093 = vmul.f32 %v5046, %v5003
  %v5094 = vmul.f32 %v5050, %v5005
  %v5095 = vmul.f32 %v5054, %v5007
  %v5096 = vmul.f32 %v5058, %v5009
  %v5097 = vmul.f32 %v5062, %v5011
  %v5098 = vmul.f32 %v5066, %v5013
  %v5099 = vmul.f32 %v5070, %v5015
  %v5100 = vmul.f32 %v5074, %v5017
  %v5101 = vmul.f32 %v5078, %v5019
  %v5102 = vmul.f32 %v5082, %v5021
  %v5103 = vmul.f32 %v5086, %v5023
  %v5104 = vadd.f32 %v4944, %v5088
  %v5105 = vadd.f32 %v4945, %v5089
  %v5106 = vadd.f32 %v4946, %v5090
  %v5107 = vadd.f32 %v4947, %v5091
  %v5108 = vadd.f32 %v4948, %v5092
  %v5109 = vadd.f32 %v4949, %v5093
  %v5110 = vadd.f32 %v4950, %v5094
  %v5111 = vadd.f32 %v4951, %v5095
  %v5112 = vadd.f32 %v4952, %v5096
  %v5113 = vadd.f32 %v4953, %v5097
  %v5114 = vadd.f32 %v4954, %v5098
  %v5115 = vadd.f32 %v4955, %v5099
  %v5116 = vadd.f32 %v4956, %v5100
  %v5117 = vadd.f32 %v4957, %v5101
  %v5118 = vadd.f32 %v4958, %v5102
  %v5119 = vadd.f32 %v4959, %v5103
  %5120 = vst [vmem:[#allocation2] sm:$0xff] %v5104
  %5121 = vst [vmem:[#allocation2 + $0x8] sm:$0xff] %v5105
  %5122 = vst [vmem:[#allocation2 + $0x10] sm:$0xff] %v5106
  %5123 = vst [vmem:[#allocation2 + $0x18] sm:$0xff] %v5107
  %5124 = vst [vmem:[#allocation2 + $0x20] sm:$0xff] %v5108
  %5125 = vst [vmem:[#allocation2 + $0x28] sm:$0xff] %v5109
  %5126 = vst [vmem:[#allocation2 + $0x30] sm:$0xff] %v5110
  %5127 = vst [vmem:[#allocation2 + $0x38] sm:$0xff] %v5111
  %5128 = vst [vmem:[#allocation2 + $0x40] sm:$0xff] %v5112
  %5129 = vst [vmem:[#allocation2 + $0x48] sm:$0xff] %v5113
  %5130 = vst [vmem:[#allocation2 + $0x50] sm:$0xff] %v5114
  %5131 = vst [vmem:[#allocation2 + $0x58] sm:$0xff] %v5115
  %5132 = vst [vmem:[#allocation2 + $0x60] sm:$0xff] %v5116
  %5133 = vst [vmem:[#allocation2 + $0x68] sm:$0xff] %v5117
  %5134 = vst [vmem:[#allocation2 + $0x70] sm:$0xff] %v5118
  %5135 = vst [vmem:[#allocation2 + $0x78] sm:$0xff] %v5119
  %5136 = vset.pattern.permute.xlu0 12
  %5137 = vperm.xlu0 %5136, %v33
  %v5138 = vpop.permute.xlu0 %5137
  %5140 = vset.pattern.permute.xlu0 12
  %5141 = vperm.xlu0 %5140, %v34
  %v5142 = vpop.permute.xlu0 %5141
  %5144 = vset.pattern.permute.xlu0 12
  %5145 = vperm.xlu0 %5144, %v35
  %v5146 = vpop.permute.xlu0 %5145
  %5148 = vset.pattern.permute.xlu0 12
  %5149 = vperm.xlu0 %5148, %v36
  %v5150 = vpop.permute.xlu0 %5149
  %5152 = vset.pattern.permute.xlu0 12
  %5153 = vperm.xlu0 %5152, %v37
  %v5154 = vpop.permute.xlu0 %5153
  %5156 = vset.pattern.permute.xlu0 12
  %5157 = vperm.xlu0 %5156, %v38
  %v5158 = vpop.permute.xlu0 %5157
  %5160 = vset.pattern.permute.xlu0 12
  %5161 = vperm.xlu0 %5160, %v39
  %v5162 = vpop.permute.xlu0 %5161
  %5164 = vset.pattern.permute.xlu0 12
  %5165 = vperm.xlu0 %5164, %v40
  %v5166 = vpop.permute.xlu0 %5165
  %5168 = vset.pattern.permute.xlu0 12
  %5169 = vperm.xlu0 %5168, %v41
  %v5170 = vpop.permute.xlu0 %5169
  %5172 = vset.pattern.permute.xlu0 12
  %5173 = vperm.xlu0 %5172, %v42
  %v5174 = vpop.permute.xlu0 %5173
  %5176 = vset.pattern.permute.xlu0 12
  %5177 = vperm.xlu0 %5176, %v43
  %v5178 = vpop.permute.xlu0 %5177
  %5180 = vset.pattern.permute.xlu0 12
  %5181 = vperm.xlu0 %5180, %v44
  %v5182 = vpop.permute.xlu0 %5181
  %5184 = vset.pattern.permute.xlu0 12
  %5185 = vperm.xlu0 %5184, %v45
  %v5186 = vpop.permute.xlu0 %5185
  %5188 = vset.pattern.permute.xlu0 12
  %5189 = vperm.xlu0 %5188, %v46
  %v5190 = vpop.permute.xlu0 %5189
  %5192 = vset.pattern.permute.xlu0 12
  %5193 = vperm.xlu0 %5192, %v47
  %v5194 = vpop.permute.xlu0 %5193
  %5196 = vset.pattern.permute.xlu0 12
  %5197 = vperm.xlu0 %5196, %v48
  %v5198 = vpop.permute.xlu0 %5197
  %v5200 = vsub.f32 %v5138, %v1912
  %v5201 = vsub.f32 %v5142, %v1912
  %v5202 = vsub.f32 %v5146, %v1912
  %v5203 = vsub.f32 %v5150, %v1912
  %v5204 = vsub.f32 %v5154, %v1912
  %v5205 = vsub.f32 %v5158, %v1912
  %v5206 = vsub.f32 %v5162, %v1912
  %v5207 = vsub.f32 %v5166, %v1912
  %v5208 = vsub.f32 %v5170, %v1912
  %v5209 = vsub.f32 %v5174, %v1912
  %v5210 = vsub.f32 %v5178, %v1912
  %v5211 = vsub.f32 %v5182, %v1912
  %v5212 = vsub.f32 %v5186, %v1912
  %v5213 = vsub.f32 %v5190, %v1912
  %v5214 = vsub.f32 %v5194, %v1912
  %v5215 = vsub.f32 %v5198, %v1912
  %v5216 = vld [vmem:[#allocation2] sm:$0xff]
  %v5217 = vld [vmem:[#allocation2 + $0x8] sm:$0xff]
  %v5218 = vld [vmem:[#allocation2 + $0x10] sm:$0xff]
  %v5219 = vld [vmem:[#allocation2 + $0x18] sm:$0xff]
  %v5220 = vld [vmem:[#allocation2 + $0x20] sm:$0xff]
  %v5221 = vld [vmem:[#allocation2 + $0x28] sm:$0xff]
  %v5222 = vld [vmem:[#allocation2 + $0x30] sm:$0xff]
  %v5223 = vld [vmem:[#allocation2 + $0x38] sm:$0xff]
  %v5224 = vld [vmem:[#allocation2 + $0x40] sm:$0xff]
  %v5225 = vld [vmem:[#allocation2 + $0x48] sm:$0xff]
  %v5226 = vld [vmem:[#allocation2 + $0x50] sm:$0xff]
  %v5227 = vld [vmem:[#allocation2 + $0x58] sm:$0xff]
  %v5228 = vld [vmem:[#allocation2 + $0x60] sm:$0xff]
  %v5229 = vld [vmem:[#allocation2 + $0x68] sm:$0xff]
  %v5230 = vld [vmem:[#allocation2 + $0x70] sm:$0xff]
  %v5231 = vld [vmem:[#allocation2 + $0x78] sm:$0xff]
  %v5232 = vmul.f32 %v5200, %v5200
  %v5233 = vmul.f32 %v5201, %v5201
  %v5234 = vmul.f32 %v5202, %v5202
  %v5235 = vmul.f32 %v5203, %v5203
  %v5236 = vmul.f32 %v5204, %v5204
  %v5237 = vmul.f32 %v5205, %v5205
  %v5238 = vmul.f32 %v5206, %v5206
  %v5239 = vmul.f32 %v5207, %v5207
  %v5240 = vmul.f32 %v5208, %v5208
  %v5241 = vmul.f32 %v5209, %v5209
  %v5242 = vmul.f32 %v5210, %v5210
  %v5243 = vmul.f32 %v5211, %v5211
  %v5244 = vmul.f32 %v5212, %v5212
  %v5245 = vmul.f32 %v5213, %v5213
  %v5246 = vmul.f32 %v5214, %v5214
  %v5247 = vmul.f32 %v5215, %v5215
  %v5248 = vmul.f32 %v1966, %v5232
  %v5249 = vmul.f32 %v1966, %v5233
  %v5250 = vmul.f32 %v1966, %v5234
  %v5251 = vmul.f32 %v1966, %v5235
  %v5252 = vmul.f32 %v1966, %v5236
  %v5253 = vmul.f32 %v1966, %v5237
  %v5254 = vmul.f32 %v1966, %v5238
  %v5255 = vmul.f32 %v1966, %v5239
  %v5256 = vmul.f32 %v1966, %v5240
  %v5257 = vmul.f32 %v1966, %v5241
  %v5258 = vmul.f32 %v1966, %v5242
  %v5259 = vmul.f32 %v1966, %v5243
  %v5260 = vmul.f32 %v1966, %v5244
  %v5261 = vmul.f32 %v1966, %v5245
  %v5262 = vmul.f32 %v1966, %v5246
  %v5263 = vmul.f32 %v1966, %v5247
  %v5264 = vmul.f32 %v5248, 1.442695
  %v5265 = vpow.pop %v5264
  %v5266 = vmul.f32 %v5249, 1.442695
  %v5267 = vpow.pop %v5266
  %v5268 = vmul.f32 %v5250, 1.442695
  %v5269 = vpow.pop %v5268
  %v5270 = vmul.f32 %v5251, 1.442695
  %v5271 = vpow.pop %v5270
  %v5272 = vmul.f32 %v5252, 1.442695
  %v5273 = vpow.pop %v5272
  %v5274 = vmul.f32 %v5253, 1.442695
  %v5275 = vpow.pop %v5274
  %v5276 = vmul.f32 %v5254, 1.442695
  %v5277 = vpow.pop %v5276
  %v5278 = vmul.f32 %v5255, 1.442695
  %v5279 = vpow.pop %v5278
  %v5280 = vmul.f32 %v5256, 1.442695
  %v5281 = vpow.pop %v5280
  %v5282 = vmul.f32 %v5257, 1.442695
  %v5283 = vpow.pop %v5282
  %v5284 = vmul.f32 %v5258, 1.442695
  %v5285 = vpow.pop %v5284
  %v5286 = vmul.f32 %v5259, 1.442695
  %v5287 = vpow.pop %v5286
  %v5288 = vmul.f32 %v5260, 1.442695
  %v5289 = vpow.pop %v5288
  %v5290 = vmul.f32 %v5261, 1.442695
  %v5291 = vpow.pop %v5290
  %v5292 = vmul.f32 %v5262, 1.442695
  %v5293 = vpow.pop %v5292
  %v5294 = vmul.f32 %v5263, 1.442695
  %v5295 = vpow.pop %v5294
  %5296 = vset.pattern.permute.xlu0 12
  %5297 = vperm.xlu0 %5296, %v1793
  %v5298 = vpop.permute.xlu0 %5297
  %5300 = vset.pattern.permute.xlu0 12
  %5301 = vperm.xlu0 %5300, %v1794
  %v5302 = vpop.permute.xlu0 %5301
  %5304 = vset.pattern.permute.xlu0 12
  %5305 = vperm.xlu0 %5304, %v1795
  %v5306 = vpop.permute.xlu0 %5305
  %5308 = vset.pattern.permute.xlu0 12
  %5309 = vperm.xlu0 %5308, %v1796
  %v5310 = vpop.permute.xlu0 %5309
  %5312 = vset.pattern.permute.xlu0 12
  %5313 = vperm.xlu0 %5312, %v1797
  %v5314 = vpop.permute.xlu0 %5313
  %5316 = vset.pattern.permute.xlu0 12
  %5317 = vperm.xlu0 %5316, %v1798
  %v5318 = vpop.permute.xlu0 %5317
  %5320 = vset.pattern.permute.xlu0 12
  %5321 = vperm.xlu0 %5320, %v1799
  %v5322 = vpop.permute.xlu0 %5321
  %5324 = vset.pattern.permute.xlu0 12
  %5325 = vperm.xlu0 %5324, %v1800
  %v5326 = vpop.permute.xlu0 %5325
  %5328 = vset.pattern.permute.xlu0 12
  %5329 = vperm.xlu0 %5328, %v1801
  %v5330 = vpop.permute.xlu0 %5329
  %5332 = vset.pattern.permute.xlu0 12
  %5333 = vperm.xlu0 %5332, %v1802
  %v5334 = vpop.permute.xlu0 %5333
  %5336 = vset.pattern.permute.xlu0 12
  %5337 = vperm.xlu0 %5336, %v1803
  %v5338 = vpop.permute.xlu0 %5337
  %5340 = vset.pattern.permute.xlu0 12
  %5341 = vperm.xlu0 %5340, %v1804
  %v5342 = vpop.permute.xlu0 %5341
  %5344 = vset.pattern.permute.xlu0 12
  %5345 = vperm.xlu0 %5344, %v1805
  %v5346 = vpop.permute.xlu0 %5345
  %5348 = vset.pattern.permute.xlu0 12
  %5349 = vperm.xlu0 %5348, %v1806
  %v5350 = vpop.permute.xlu0 %5349
  %5352 = vset.pattern.permute.xlu0 12
  %5353 = vperm.xlu0 %5352, %v1807
  %v5354 = vpop.permute.xlu0 %5353
  %5356 = vset.pattern.permute.xlu0 12
  %5357 = vperm.xlu0 %5356, %v1808
  %v5358 = vpop.permute.xlu0 %5357
  %v5360 = vmul.f32 %v5298, %v5265
  %v5361 = vmul.f32 %v5302, %v5267
  %v5362 = vmul.f32 %v5306, %v5269
  %v5363 = vmul.f32 %v5310, %v5271
  %v5364 = vmul.f32 %v5314, %v5273
  %v5365 = vmul.f32 %v5318, %v5275
  %v5366 = vmul.f32 %v5322, %v5277
  %v5367 = vmul.f32 %v5326, %v5279
  %v5368 = vmul.f32 %v5330, %v5281
  %v5369 = vmul.f32 %v5334, %v5283
  %v5370 = vmul.f32 %v5338, %v5285
  %v5371 = vmul.f32 %v5342, %v5287
  %v5372 = vmul.f32 %v5346, %v5289
  %v5373 = vmul.f32 %v5350, %v5291
  %v5374 = vmul.f32 %v5354, %v5293
  %v5375 = vmul.f32 %v5358, %v5295
  %v5376 = vadd.f32 %v5216, %v5360
  %v5377 = vadd.f32 %v5217, %v5361
  %v5378 = vadd.f32 %v5218, %v5362
  %v5379 = vadd.f32 %v5219, %v5363
  %v5380 = vadd.f32 %v5220, %v5364
  %v5381 = vadd.f32 %v5221, %v5365
  %v5382 = vadd.f32 %v5222, %v5366
  %v5383 = vadd.f32 %v5223, %v5367
  %v5384 = vadd.f32 %v5224, %v5368
  %v5385 = vadd.f32 %v5225, %v5369
  %v5386 = vadd.f32 %v5226, %v5370
  %v5387 = vadd.f32 %v5227, %v5371
  %v5388 = vadd.f32 %v5228, %v5372
  %v5389 = vadd.f32 %v5229, %v5373
  %v5390 = vadd.f32 %v5230, %v5374
  %v5391 = vadd.f32 %v5231, %v5375
  %5392 = vst [vmem:[#allocation2] sm:$0xff] %v5376
  %5393 = vst [vmem:[#allocation2 + $0x8] sm:$0xff] %v5377
  %5394 = vst [vmem:[#allocation2 + $0x10] sm:$0xff] %v5378
  %5395 = vst [vmem:[#allocation2 + $0x18] sm:$0xff] %v5379
  %5396 = vst [vmem:[#allocation2 + $0x20] sm:$0xff] %v5380
  %5397 = vst [vmem:[#allocation2 + $0x28] sm:$0xff] %v5381
  %5398 = vst [vmem:[#allocation2 + $0x30] sm:$0xff] %v5382
  %5399 = vst [vmem:[#allocation2 + $0x38] sm:$0xff] %v5383
  %5400 = vst [vmem:[#allocation2 + $0x40] sm:$0xff] %v5384
  %5401 = vst [vmem:[#allocation2 + $0x48] sm:$0xff] %v5385
  %5402 = vst [vmem:[#allocation2 + $0x50] sm:$0xff] %v5386
  %5403 = vst [vmem:[#allocation2 + $0x58] sm:$0xff] %v5387
  %5404 = vst [vmem:[#allocation2 + $0x60] sm:$0xff] %v5388
  %5405 = vst [vmem:[#allocation2 + $0x68] sm:$0xff] %v5389
  %5406 = vst [vmem:[#allocation2 + $0x70] sm:$0xff] %v5390
  %5407 = vst [vmem:[#allocation2 + $0x78] sm:$0xff] %v5391
  %5408 = vset.pattern.permute.xlu0 13
  %5409 = vperm.xlu0 %5408, %v33
  %v5410 = vpop.permute.xlu0 %5409
  %5412 = vset.pattern.permute.xlu0 13
  %5413 = vperm.xlu0 %5412, %v34
  %v5414 = vpop.permute.xlu0 %5413
  %5416 = vset.pattern.permute.xlu0 13
  %5417 = vperm.xlu0 %5416, %v35
  %v5418 = vpop.permute.xlu0 %5417
  %5420 = vset.pattern.permute.xlu0 13
  %5421 = vperm.xlu0 %5420, %v36
  %v5422 = vpop.permute.xlu0 %5421
  %5424 = vset.pattern.permute.xlu0 13
  %5425 = vperm.xlu0 %5424, %v37
  %v5426 = vpop.permute.xlu0 %5425
  %5428 = vset.pattern.permute.xlu0 13
  %5429 = vperm.xlu0 %5428, %v38
  %v5430 = vpop.permute.xlu0 %5429
  %5432 = vset.pattern.permute.xlu0 13
  %5433 = vperm.xlu0 %5432, %v39
  %v5434 = vpop.permute.xlu0 %5433
  %5436 = vset.pattern.permute.xlu0 13
  %5437 = vperm.xlu0 %5436, %v40
  %v5438 = vpop.permute.xlu0 %5437
  %5440 = vset.pattern.permute.xlu0 13
  %5441 = vperm.xlu0 %5440, %v41
  %v5442 = vpop.permute.xlu0 %5441
  %5444 = vset.pattern.permute.xlu0 13
  %5445 = vperm.xlu0 %5444, %v42
  %v5446 = vpop.permute.xlu0 %5445
  %5448 = vset.pattern.permute.xlu0 13
  %5449 = vperm.xlu0 %5448, %v43
  %v5450 = vpop.permute.xlu0 %5449
  %5452 = vset.pattern.permute.xlu0 13
  %5453 = vperm.xlu0 %5452, %v44
  %v5454 = vpop.permute.xlu0 %5453
  %5456 = vset.pattern.permute.xlu0 13
  %5457 = vperm.xlu0 %5456, %v45
  %v5458 = vpop.permute.xlu0 %5457
  %5460 = vset.pattern.permute.xlu0 13
  %5461 = vperm.xlu0 %5460, %v46
  %v5462 = vpop.permute.xlu0 %5461
  %5464 = vset.pattern.permute.xlu0 13
  %5465 = vperm.xlu0 %5464, %v47
  %v5466 = vpop.permute.xlu0 %5465
  %5468 = vset.pattern.permute.xlu0 13
  %5469 = vperm.xlu0 %5468, %v48
  %v5470 = vpop.permute.xlu0 %5469
  %v5472 = vsub.f32 %v5410, %v1912
  %v5473 = vsub.f32 %v5414, %v1912
  %v5474 = vsub.f32 %v5418, %v1912
  %v5475 = vsub.f32 %v5422, %v1912
  %v5476 = vsub.f32 %v5426, %v1912
  %v5477 = vsub.f32 %v5430, %v1912
  %v5478 = vsub.f32 %v5434, %v1912
  %v5479 = vsub.f32 %v5438, %v1912
  %v5480 = vsub.f32 %v5442, %v1912
  %v5481 = vsub.f32 %v5446, %v1912
  %v5482 = vsub.f32 %v5450, %v1912
  %v5483 = vsub.f32 %v5454, %v1912
  %v5484 = vsub.f32 %v5458, %v1912
  %v5485 = vsub.f32 %v5462, %v1912
  %v5486 = vsub.f32 %v5466, %v1912
  %v5487 = vsub.f32 %v5470, %v1912
  %v5488 = vld [vmem:[#allocation2] sm:$0xff]
  %v5489 = vld [vmem:[#allocation2 + $0x8] sm:$0xff]
  %v5490 = vld [vmem:[#allocation2 + $0x10] sm:$0xff]
  %v5491 = vld [vmem:[#allocation2 + $0x18] sm:$0xff]
  %v5492 = vld [vmem:[#allocation2 + $0x20] sm:$0xff]
  %v5493 = vld [vmem:[#allocation2 + $0x28] sm:$0xff]
  %v5494 = vld [vmem:[#allocation2 + $0x30] sm:$0xff]
  %v5495 = vld [vmem:[#allocation2 + $0x38] sm:$0xff]
  %v5496 = vld [vmem:[#allocation2 + $0x40] sm:$0xff]
  %v5497 = vld [vmem:[#allocation2 + $0x48] sm:$0xff]
  %v5498 = vld [vmem:[#allocation2 + $0x50] sm:$0xff]
  %v5499 = vld [vmem:[#allocation2 + $0x58] sm:$0xff]
  %v5500 = vld [vmem:[#allocation2 + $0x60] sm:$0xff]
  %v5501 = vld [vmem:[#allocation2 + $0x68] sm:$0xff]
  %v5502 = vld [vmem:[#allocation2 + $0x70] sm:$0xff]
  %v5503 = vld [vmem:[#allocation2 + $0x78] sm:$0xff]
  %v5504 = vmul.f32 %v5472, %v5472
  %v5505 = vmul.f32 %v5473, %v5473
  %v5506 = vmul.f32 %v5474, %v5474
  %v5507 = vmul.f32 %v5475, %v5475
  %v5508 = vmul.f32 %v5476, %v5476
  %v5509 = vmul.f32 %v5477, %v5477
  %v5510 = vmul.f32 %v5478, %v5478
  %v5511 = vmul.f32 %v5479, %v5479
  %v5512 = vmul.f32 %v5480, %v5480
  %v5513 = vmul.f32 %v5481, %v5481
  %v5514 = vmul.f32 %v5482, %v5482
  %v5515 = vmul.f32 %v5483, %v5483
  %v5516 = vmul.f32 %v5484, %v5484
  %v5517 = vmul.f32 %v5485, %v5485
  %v5518 = vmul.f32 %v5486, %v5486
  %v5519 = vmul.f32 %v5487, %v5487
  %v5520 = vmul.f32 %v1966, %v5504
  %v5521 = vmul.f32 %v1966, %v5505
  %v5522 = vmul.f32 %v1966, %v5506
  %v5523 = vmul.f32 %v1966, %v5507
  %v5524 = vmul.f32 %v1966, %v5508
  %v5525 = vmul.f32 %v1966, %v5509
  %v5526 = vmul.f32 %v1966, %v5510
  %v5527 = vmul.f32 %v1966, %v5511
  %v5528 = vmul.f32 %v1966, %v5512
  %v5529 = vmul.f32 %v1966, %v5513
  %v5530 = vmul.f32 %v1966, %v5514
  %v5531 = vmul.f32 %v1966, %v5515
  %v5532 = vmul.f32 %v1966, %v5516
  %v5533 = vmul.f32 %v1966, %v5517
  %v5534 = vmul.f32 %v1966, %v5518
  %v5535 = vmul.f32 %v1966, %v5519
  %v5536 = vmul.f32 %v5520, 1.442695
  %v5537 = vpow.pop %v5536
  %v5538 = vmul.f32 %v5521, 1.442695
  %v5539 = vpow.pop %v5538
  %v5540 = vmul.f32 %v5522, 1.442695
  %v5541 = vpow.pop %v5540
  %v5542 = vmul.f32 %v5523, 1.442695
  %v5543 = vpow.pop %v5542
  %v5544 = vmul.f32 %v5524, 1.442695
  %v5545 = vpow.pop %v5544
  %v5546 = vmul.f32 %v5525, 1.442695
  %v5547 = vpow.pop %v5546
  %v5548 = vmul.f32 %v5526, 1.442695
  %v5549 = vpow.pop %v5548
  %v5550 = vmul.f32 %v5527, 1.442695
  %v5551 = vpow.pop %v5550
  %v5552 = vmul.f32 %v5528, 1.442695
  %v5553 = vpow.pop %v5552
  %v5554 = vmul.f32 %v5529, 1.442695
  %v5555 = vpow.pop %v5554
  %v5556 = vmul.f32 %v5530, 1.442695
  %v5557 = vpow.pop %v5556
  %v5558 = vmul.f32 %v5531, 1.442695
  %v5559 = vpow.pop %v5558
  %v5560 = vmul.f32 %v5532, 1.442695
  %v5561 = vpow.pop %v5560
  %v5562 = vmul.f32 %v5533, 1.442695
  %v5563 = vpow.pop %v5562
  %v5564 = vmul.f32 %v5534, 1.442695
  %v5565 = vpow.pop %v5564
  %v5566 = vmul.f32 %v5535, 1.442695
  %v5567 = vpow.pop %v5566
  %5568 = vset.pattern.permute.xlu0 13
  %5569 = vperm.xlu0 %5568, %v1793
  %v5570 = vpop.permute.xlu0 %5569
  %5572 = vset.pattern.permute.xlu0 13
  %5573 = vperm.xlu0 %5572, %v1794
  %v5574 = vpop.permute.xlu0 %5573
  %5576 = vset.pattern.permute.xlu0 13
  %5577 = vperm.xlu0 %5576, %v1795
  %v5578 = vpop.permute.xlu0 %5577
  %5580 = vset.pattern.permute.xlu0 13
  %5581 = vperm.xlu0 %5580, %v1796
  %v5582 = vpop.permute.xlu0 %5581
  %5584 = vset.pattern.permute.xlu0 13
  %5585 = vperm.xlu0 %5584, %v1797
  %v5586 = vpop.permute.xlu0 %5585
  %5588 = vset.pattern.permute.xlu0 13
  %5589 = vperm.xlu0 %5588, %v1798
  %v5590 = vpop.permute.xlu0 %5589
  %5592 = vset.pattern.permute.xlu0 13
  %5593 = vperm.xlu0 %5592, %v1799
  %v5594 = vpop.permute.xlu0 %5593
  %5596 = vset.pattern.permute.xlu0 13
  %5597 = vperm.xlu0 %5596, %v1800
  %v5598 = vpop.permute.xlu0 %5597
  %5600 = vset.pattern.permute.xlu0 13
  %5601 = vperm.xlu0 %5600, %v1801
  %v5602 = vpop.permute.xlu0 %5601
  %5604 = vset.pattern.permute.xlu0 13
  %5605 = vperm.xlu0 %5604, %v1802
  %v5606 = vpop.permute.xlu0 %5605
  %5608 = vset.pattern.permute.xlu0 13
  %5609 = vperm.xlu0 %5608, %v1803
  %v5610 = vpop.permute.xlu0 %5609
  %5612 = vset.pattern.permute.xlu0 13
  %5613 = vperm.xlu0 %5612, %v1804
  %v5614 = vpop.permute.xlu0 %5613
  %5616 = vset.pattern.permute.xlu0 13
  %5617 = vperm.xlu0 %5616, %v1805
  %v5618 = vpop.permute.xlu0 %5617
  %5620 = vset.pattern.permute.xlu0 13
  %5621 = vperm.xlu0 %5620, %v1806
  %v5622 = vpop.permute.xlu0 %5621
  %5624 = vset.pattern.permute.xlu0 13
  %5625 = vperm.xlu0 %5624, %v1807
  %v5626 = vpop.permute.xlu0 %5625
  %5628 = vset.pattern.permute.xlu0 13
  %5629 = vperm.xlu0 %5628, %v1808
  %v5630 = vpop.permute.xlu0 %5629
  %v5632 = vmul.f32 %v5570, %v5537
  %v5633 = vmul.f32 %v5574, %v5539
  %v5634 = vmul.f32 %v5578, %v5541
  %v5635 = vmul.f32 %v5582, %v5543
  %v5636 = vmul.f32 %v5586, %v5545
  %v5637 = vmul.f32 %v5590, %v5547
  %v5638 = vmul.f32 %v5594, %v5549
  %v5639 = vmul.f32 %v5598, %v5551
  %v5640 = vmul.f32 %v5602, %v5553
  %v5641 = vmul.f32 %v5606, %v5555
  %v5642 = vmul.f32 %v5610, %v5557
  %v5643 = vmul.f32 %v5614, %v5559
  %v5644 = vmul.f32 %v5618, %v5561
  %v5645 = vmul.f32 %v5622, %v5563
  %v5646 = vmul.f32 %v5626, %v5565
  %v5647 = vmul.f32 %v5630, %v5567
  %v5648 = vadd.f32 %v5488, %v5632
  %v5649 = vadd.f32 %v5489, %v5633
  %v5650 = vadd.f32 %v5490, %v5634
  %v5651 = vadd.f32 %v5491, %v5635
  %v5652 = vadd.f32 %v5492, %v5636
  %v5653 = vadd.f32 %v5493, %v5637
  %v5654 = vadd.f32 %v5494, %v5638
  %v5655 = vadd.f32 %v5495, %v5639
  %v5656 = vadd.f32 %v5496, %v5640
  %v5657 = vadd.f32 %v5497, %v5641
  %v5658 = vadd.f32 %v5498, %v5642
  %v5659 = vadd.f32 %v5499, %v5643
  %v5660 = vadd.f32 %v5500, %v5644
  %v5661 = vadd.f32 %v5501, %v5645
  %v5662 = vadd.f32 %v5502, %v5646
  %v5663 = vadd.f32 %v5503, %v5647
  %5664 = vst [vmem:[#allocation2] sm:$0xff] %v5648
  %5665 = vst [vmem:[#allocation2 + $0x8] sm:$0xff] %v5649
  %5666 = vst [vmem:[#allocation2 + $0x10] sm:$0xff] %v5650
  %5667 = vst [vmem:[#allocation2 + $0x18] sm:$0xff] %v5651
  %5668 = vst [vmem:[#allocation2 + $0x20] sm:$0xff] %v5652
  %5669 = vst [vmem:[#allocation2 + $0x28] sm:$0xff] %v5653
  %5670 = vst [vmem:[#allocation2 + $0x30] sm:$0xff] %v5654
  %5671 = vst [vmem:[#allocation2 + $0x38] sm:$0xff] %v5655
  %5672 = vst [vmem:[#allocation2 + $0x40] sm:$0xff] %v5656
  %5673 = vst [vmem:[#allocation2 + $0x48] sm:$0xff] %v5657
  %5674 = vst [vmem:[#allocation2 + $0x50] sm:$0xff] %v5658
  %5675 = vst [vmem:[#allocation2 + $0x58] sm:$0xff] %v5659
  %5676 = vst [vmem:[#allocation2 + $0x60] sm:$0xff] %v5660
  %5677 = vst [vmem:[#allocation2 + $0x68] sm:$0xff] %v5661
  %5678 = vst [vmem:[#allocation2 + $0x70] sm:$0xff] %v5662
  %5679 = vst [vmem:[#allocation2 + $0x78] sm:$0xff] %v5663
  %5680 = vset.pattern.permute.xlu0 14
  %5681 = vperm.xlu0 %5680, %v33
  %v5682 = vpop.permute.xlu0 %5681
  %5684 = vset.pattern.permute.xlu0 14
  %5685 = vperm.xlu0 %5684, %v34
  %v5686 = vpop.permute.xlu0 %5685
  %5688 = vset.pattern.permute.xlu0 14
  %5689 = vperm.xlu0 %5688, %v35
  %v5690 = vpop.permute.xlu0 %5689
  %5692 = vset.pattern.permute.xlu0 14
  %5693 = vperm.xlu0 %5692, %v36
  %v5694 = vpop.permute.xlu0 %5693
  %5696 = vset.pattern.permute.xlu0 14
  %5697 = vperm.xlu0 %5696, %v37
  %v5698 = vpop.permute.xlu0 %5697
  %5700 = vset.pattern.permute.xlu0 14
  %5701 = vperm.xlu0 %5700, %v38
  %v5702 = vpop.permute.xlu0 %5701
  %5704 = vset.pattern.permute.xlu0 14
  %5705 = vperm.xlu0 %5704, %v39
  %v5706 = vpop.permute.xlu0 %5705
  %5708 = vset.pattern.permute.xlu0 14
  %5709 = vperm.xlu0 %5708, %v40
  %v5710 = vpop.permute.xlu0 %5709
  %5712 = vset.pattern.permute.xlu0 14
  %5713 = vperm.xlu0 %5712, %v41
  %v5714 = vpop.permute.xlu0 %5713
  %5716 = vset.pattern.permute.xlu0 14
  %5717 = vperm.xlu0 %5716, %v42
  %v5718 = vpop.permute.xlu0 %5717
  %5720 = vset.pattern.permute.xlu0 14
  %5721 = vperm.xlu0 %5720, %v43
  %v5722 = vpop.permute.xlu0 %5721
  %5724 = vset.pattern.permute.xlu0 14
  %5725 = vperm.xlu0 %5724, %v44
  %v5726 = vpop.permute.xlu0 %5725
  %5728 = vset.pattern.permute.xlu0 14
  %5729 = vperm.xlu0 %5728, %v45
  %v5730 = vpop.permute.xlu0 %5729
  %5732 = vset.pattern.permute.xlu0 14
  %5733 = vperm.xlu0 %5732, %v46
  %v5734 = vpop.permute.xlu0 %5733
  %5736 = vset.pattern.permute.xlu0 14
  %5737 = vperm.xlu0 %5736, %v47
  %v5738 = vpop.permute.xlu0 %5737
  %5740 = vset.pattern.permute.xlu0 14
  %5741 = vperm.xlu0 %5740, %v48
  %v5742 = vpop.permute.xlu0 %5741
  %v5744 = vsub.f32 %v5682, %v1912
  %v5745 = vsub.f32 %v5686, %v1912
  %v5746 = vsub.f32 %v5690, %v1912
  %v5747 = vsub.f32 %v5694, %v1912
  %v5748 = vsub.f32 %v5698, %v1912
  %v5749 = vsub.f32 %v5702, %v1912
  %v5750 = vsub.f32 %v5706, %v1912
  %v5751 = vsub.f32 %v5710, %v1912
  %v5752 = vsub.f32 %v5714, %v1912
  %v5753 = vsub.f32 %v5718, %v1912
  %v5754 = vsub.f32 %v5722, %v1912
  %v5755 = vsub.f32 %v5726, %v1912
  %v5756 = vsub.f32 %v5730, %v1912
  %v5757 = vsub.f32 %v5734, %v1912
  %v5758 = vsub.f32 %v5738, %v1912
  %v5759 = vsub.f32 %v5742, %v1912
  %v5760 = vld [vmem:[#allocation2] sm:$0xff]
  %v5761 = vld [vmem:[#allocation2 + $0x8] sm:$0xff]
  %v5762 = vld [vmem:[#allocation2 + $0x10] sm:$0xff]
  %v5763 = vld [vmem:[#allocation2 + $0x18] sm:$0xff]
  %v5764 = vld [vmem:[#allocation2 + $0x20] sm:$0xff]
  %v5765 = vld [vmem:[#allocation2 + $0x28] sm:$0xff]
  %v5766 = vld [vmem:[#allocation2 + $0x30] sm:$0xff]
  %v5767 = vld [vmem:[#allocation2 + $0x38] sm:$0xff]
  %v5768 = vld [vmem:[#allocation2 + $0x40] sm:$0xff]
  %v5769 = vld [vmem:[#allocation2 + $0x48] sm:$0xff]
  %v5770 = vld [vmem:[#allocation2 + $0x50] sm:$0xff]
  %v5771 = vld [vmem:[#allocation2 + $0x58] sm:$0xff]
  %v5772 = vld [vmem:[#allocation2 + $0x60] sm:$0xff]
  %v5773 = vld [vmem:[#allocation2 + $0x68] sm:$0xff]
  %v5774 = vld [vmem:[#allocation2 + $0x70] sm:$0xff]
  %v5775 = vld [vmem:[#allocation2 + $0x78] sm:$0xff]
  %v5776 = vmul.f32 %v5744, %v5744
  %v5777 = vmul.f32 %v5745, %v5745
  %v5778 = vmul.f32 %v5746, %v5746
  %v5779 = vmul.f32 %v5747, %v5747
  %v5780 = vmul.f32 %v5748, %v5748
  %v5781 = vmul.f32 %v5749, %v5749
  %v5782 = vmul.f32 %v5750, %v5750
  %v5783 = vmul.f32 %v5751, %v5751
  %v5784 = vmul.f32 %v5752, %v5752
  %v5785 = vmul.f32 %v5753, %v5753
  %v5786 = vmul.f32 %v5754, %v5754
  %v5787 = vmul.f32 %v5755, %v5755
  %v5788 = vmul.f32 %v5756, %v5756
  %v5789 = vmul.f32 %v5757, %v5757
  %v5790 = vmul.f32 %v5758, %v5758
  %v5791 = vmul.f32 %v5759, %v5759
  %v5792 = vmul.f32 %v1966, %v5776
  %v5793 = vmul.f32 %v1966, %v5777
  %v5794 = vmul.f32 %v1966, %v5778
  %v5795 = vmul.f32 %v1966, %v5779
  %v5796 = vmul.f32 %v1966, %v5780
  %v5797 = vmul.f32 %v1966, %v5781
  %v5798 = vmul.f32 %v1966, %v5782
  %v5799 = vmul.f32 %v1966, %v5783
  %v5800 = vmul.f32 %v1966, %v5784
  %v5801 = vmul.f32 %v1966, %v5785
  %v5802 = vmul.f32 %v1966, %v5786
  %v5803 = vmul.f32 %v1966, %v5787
  %v5804 = vmul.f32 %v1966, %v5788
  %v5805 = vmul.f32 %v1966, %v5789
  %v5806 = vmul.f32 %v1966, %v5790
  %v5807 = vmul.f32 %v1966, %v5791
  %v5808 = vmul.f32 %v5792, 1.442695
  %v5809 = vpow.pop %v5808
  %v5810 = vmul.f32 %v5793, 1.442695
  %v5811 = vpow.pop %v5810
  %v5812 = vmul.f32 %v5794, 1.442695
  %v5813 = vpow.pop %v5812
  %v5814 = vmul.f32 %v5795, 1.442695
  %v5815 = vpow.pop %v5814
  %v5816 = vmul.f32 %v5796, 1.442695
  %v5817 = vpow.pop %v5816
  %v5818 = vmul.f32 %v5797, 1.442695
  %v5819 = vpow.pop %v5818
  %v5820 = vmul.f32 %v5798, 1.442695
  %v5821 = vpow.pop %v5820
  %v5822 = vmul.f32 %v5799, 1.442695
  %v5823 = vpow.pop %v5822
  %v5824 = vmul.f32 %v5800, 1.442695
  %v5825 = vpow.pop %v5824
  %v5826 = vmul.f32 %v5801, 1.442695
  %v5827 = vpow.pop %v5826
  %v5828 = vmul.f32 %v5802, 1.442695
  %v5829 = vpow.pop %v5828
  %v5830 = vmul.f32 %v5803, 1.442695
  %v5831 = vpow.pop %v5830
  %v5832 = vmul.f32 %v5804, 1.442695
  %v5833 = vpow.pop %v5832
  %v5834 = vmul.f32 %v5805, 1.442695
  %v5835 = vpow.pop %v5834
  %v5836 = vmul.f32 %v5806, 1.442695
  %v5837 = vpow.pop %v5836
  %v5838 = vmul.f32 %v5807, 1.442695
  %v5839 = vpow.pop %v5838
  %5840 = vset.pattern.permute.xlu0 14
  %5841 = vperm.xlu0 %5840, %v1793
  %v5842 = vpop.permute.xlu0 %5841
  %5844 = vset.pattern.permute.xlu0 14
  %5845 = vperm.xlu0 %5844, %v1794
  %v5846 = vpop.permute.xlu0 %5845
  %5848 = vset.pattern.permute.xlu0 14
  %5849 = vperm.xlu0 %5848, %v1795
  %v5850 = vpop.permute.xlu0 %5849
  %5852 = vset.pattern.permute.xlu0 14
  %5853 = vperm.xlu0 %5852, %v1796
  %v5854 = vpop.permute.xlu0 %5853
  %5856 = vset.pattern.permute.xlu0 14
  %5857 = vperm.xlu0 %5856, %v1797
  %v5858 = vpop.permute.xlu0 %5857
  %5860 = vset.pattern.permute.xlu0 14
  %5861 = vperm.xlu0 %5860, %v1798
  %v5862 = vpop.permute.xlu0 %5861
  %5864 = vset.pattern.permute.xlu0 14
  %5865 = vperm.xlu0 %5864, %v1799
  %v5866 = vpop.permute.xlu0 %5865
  %5868 = vset.pattern.permute.xlu0 14
  %5869 = vperm.xlu0 %5868, %v1800
  %v5870 = vpop.permute.xlu0 %5869
  %5872 = vset.pattern.permute.xlu0 14
  %5873 = vperm.xlu0 %5872, %v1801
  %v5874 = vpop.permute.xlu0 %5873
  %5876 = vset.pattern.permute.xlu0 14
  %5877 = vperm.xlu0 %5876, %v1802
  %v5878 = vpop.permute.xlu0 %5877
  %5880 = vset.pattern.permute.xlu0 14
  %5881 = vperm.xlu0 %5880, %v1803
  %v5882 = vpop.permute.xlu0 %5881
  %5884 = vset.pattern.permute.xlu0 14
  %5885 = vperm.xlu0 %5884, %v1804
  %v5886 = vpop.permute.xlu0 %5885
  %5888 = vset.pattern.permute.xlu0 14
  %5889 = vperm.xlu0 %5888, %v1805
  %v5890 = vpop.permute.xlu0 %5889
  %5892 = vset.pattern.permute.xlu0 14
  %5893 = vperm.xlu0 %5892, %v1806
  %v5894 = vpop.permute.xlu0 %5893
  %5896 = vset.pattern.permute.xlu0 14
  %5897 = vperm.xlu0 %5896, %v1807
  %v5898 = vpop.permute.xlu0 %5897
  %5900 = vset.pattern.permute.xlu0 14
  %5901 = vperm.xlu0 %5900, %v1808
  %v5902 = vpop.permute.xlu0 %5901
  %v5904 = vmul.f32 %v5842, %v5809
  %v5905 = vmul.f32 %v5846, %v5811
  %v5906 = vmul.f32 %v5850, %v5813
  %v5907 = vmul.f32 %v5854, %v5815
  %v5908 = vmul.f32 %v5858, %v5817
  %v5909 = vmul.f32 %v5862, %v5819
  %v5910 = vmul.f32 %v5866, %v5821
  %v5911 = vmul.f32 %v5870, %v5823
  %v5912 = vmul.f32 %v5874, %v5825
  %v5913 = vmul.f32 %v5878, %v5827
  %v5914 = vmul.f32 %v5882, %v5829
  %v5915 = vmul.f32 %v5886, %v5831
  %v5916 = vmul.f32 %v5890, %v5833
  %v5917 = vmul.f32 %v5894, %v5835
  %v5918 = vmul.f32 %v5898, %v5837
  %v5919 = vmul.f32 %v5902, %v5839
  %v5920 = vadd.f32 %v5760, %v5904
  %v5921 = vadd.f32 %v5761, %v5905
  %v5922 = vadd.f32 %v5762, %v5906
  %v5923 = vadd.f32 %v5763, %v5907
  %v5924 = vadd.f32 %v5764, %v5908
  %v5925 = vadd.f32 %v5765, %v5909
  %v5926 = vadd.f32 %v5766, %v5910
  %v5927 = vadd.f32 %v5767, %v5911
  %v5928 = vadd.f32 %v5768, %v5912
  %v5929 = vadd.f32 %v5769, %v5913
  %v5930 = vadd.f32 %v5770, %v5914
  %v5931 = vadd.f32 %v5771, %v5915
  %v5932 = vadd.f32 %v5772, %v5916
  %v5933 = vadd.f32 %v5773, %v5917
  %v5934 = vadd.f32 %v5774, %v5918
  %v5935 = vadd.f32 %v5775, %v5919
  %5936 = vst [vmem:[#allocation2] sm:$0xff] %v5920
  %5937 = vst [vmem:[#allocation2 + $0x8] sm:$0xff] %v5921
  %5938 = vst [vmem:[#allocation2 + $0x10] sm:$0xff] %v5922
  %5939 = vst [vmem:[#allocation2 + $0x18] sm:$0xff] %v5923
  %5940 = vst [vmem:[#allocation2 + $0x20] sm:$0xff] %v5924
  %5941 = vst [vmem:[#allocation2 + $0x28] sm:$0xff] %v5925
  %5942 = vst [vmem:[#allocation2 + $0x30] sm:$0xff] %v5926
  %5943 = vst [vmem:[#allocation2 + $0x38] sm:$0xff] %v5927
  %5944 = vst [vmem:[#allocation2 + $0x40] sm:$0xff] %v5928
  %5945 = vst [vmem:[#allocation2 + $0x48] sm:$0xff] %v5929
  %5946 = vst [vmem:[#allocation2 + $0x50] sm:$0xff] %v5930
  %5947 = vst [vmem:[#allocation2 + $0x58] sm:$0xff] %v5931
  %5948 = vst [vmem:[#allocation2 + $0x60] sm:$0xff] %v5932
  %5949 = vst [vmem:[#allocation2 + $0x68] sm:$0xff] %v5933
  %5950 = vst [vmem:[#allocation2 + $0x70] sm:$0xff] %v5934
  %5951 = vst [vmem:[#allocation2 + $0x78] sm:$0xff] %v5935
  %5952 = vset.pattern.permute.xlu0 15
  %5953 = vperm.xlu0 %5952, %v33
  %v5954 = vpop.permute.xlu0 %5953
  %5956 = vset.pattern.permute.xlu0 15
  %5957 = vperm.xlu0 %5956, %v34
  %v5958 = vpop.permute.xlu0 %5957
  %5960 = vset.pattern.permute.xlu0 15
  %5961 = vperm.xlu0 %5960, %v35
  %v5962 = vpop.permute.xlu0 %5961
  %5964 = vset.pattern.permute.xlu0 15
  %5965 = vperm.xlu0 %5964, %v36
  %v5966 = vpop.permute.xlu0 %5965
  %5968 = vset.pattern.permute.xlu0 15
  %5969 = vperm.xlu0 %5968, %v37
  %v5970 = vpop.permute.xlu0 %5969
  %5972 = vset.pattern.permute.xlu0 15
  %5973 = vperm.xlu0 %5972, %v38
  %v5974 = vpop.permute.xlu0 %5973
  %5976 = vset.pattern.permute.xlu0 15
  %5977 = vperm.xlu0 %5976, %v39
  %v5978 = vpop.permute.xlu0 %5977
  %5980 = vset.pattern.permute.xlu0 15
  %5981 = vperm.xlu0 %5980, %v40
  %v5982 = vpop.permute.xlu0 %5981
  %5984 = vset.pattern.permute.xlu0 15
  %5985 = vperm.xlu0 %5984, %v41
  %v5986 = vpop.permute.xlu0 %5985
  %5988 = vset.pattern.permute.xlu0 15
  %5989 = vperm.xlu0 %5988, %v42
  %v5990 = vpop.permute.xlu0 %5989
  %5992 = vset.pattern.permute.xlu0 15
  %5993 = vperm.xlu0 %5992, %v43
  %v5994 = vpop.permute.xlu0 %5993
  %5996 = vset.pattern.permute.xlu0 15
  %5997 = vperm.xlu0 %5996, %v44
  %v5998 = vpop.permute.xlu0 %5997
  %6000 = vset.pattern.permute.xlu0 15
  %6001 = vperm.xlu0 %6000, %v45
  %v6002 = vpop.permute.xlu0 %6001
  %6004 = vset.pattern.permute.xlu0 15
  %6005 = vperm.xlu0 %6004, %v46
  %v6006 = vpop.permute.xlu0 %6005
  %6008 = vset.pattern.permute.xlu0 15
  %6009 = vperm.xlu0 %6008, %v47
  %v6010 = vpop.permute.xlu0 %6009
  %6012 = vset.pattern.permute.xlu0 15
  %6013 = vperm.xlu0 %6012, %v48
  %v6014 = vpop.permute.xlu0 %6013
  %v6016 = vsub.f32 %v5954, %v1912
  %v6017 = vsub.f32 %v5958, %v1912
  %v6018 = vsub.f32 %v5962, %v1912
  %v6019 = vsub.f32 %v5966, %v1912
  %v6020 = vsub.f32 %v5970, %v1912
  %v6021 = vsub.f32 %v5974, %v1912
  %v6022 = vsub.f32 %v5978, %v1912
  %v6023 = vsub.f32 %v5982, %v1912
  %v6024 = vsub.f32 %v5986, %v1912
  %v6025 = vsub.f32 %v5990, %v1912
  %v6026 = vsub.f32 %v5994, %v1912
  %v6027 = vsub.f32 %v5998, %v1912
  %v6028 = vsub.f32 %v6002, %v1912
  %v6029 = vsub.f32 %v6006, %v1912
  %v6030 = vsub.f32 %v6010, %v1912
  %v6031 = vsub.f32 %v6014, %v1912
  %v6032 = vld [vmem:[#allocation2] sm:$0xff]
  %v6033 = vld [vmem:[#allocation2 + $0x8] sm:$0xff]
  %v6034 = vld [vmem:[#allocation2 + $0x10] sm:$0xff]
  %v6035 = vld [vmem:[#allocation2 + $0x18] sm:$0xff]
  %v6036 = vld [vmem:[#allocation2 + $0x20] sm:$0xff]
  %v6037 = vld [vmem:[#allocation2 + $0x28] sm:$0xff]
  %v6038 = vld [vmem:[#allocation2 + $0x30] sm:$0xff]
  %v6039 = vld [vmem:[#allocation2 + $0x38] sm:$0xff]
  %v6040 = vld [vmem:[#allocation2 + $0x40] sm:$0xff]
  %v6041 = vld [vmem:[#allocation2 + $0x48] sm:$0xff]
  %v6042 = vld [vmem:[#allocation2 + $0x50] sm:$0xff]
  %v6043 = vld [vmem:[#allocation2 + $0x58] sm:$0xff]
  %v6044 = vld [vmem:[#allocation2 + $0x60] sm:$0xff]
  %v6045 = vld [vmem:[#allocation2 + $0x68] sm:$0xff]
  %v6046 = vld [vmem:[#allocation2 + $0x70] sm:$0xff]
  %v6047 = vld [vmem:[#allocation2 + $0x78] sm:$0xff]
  %v6048 = vmul.f32 %v6016, %v6016
  %v6049 = vmul.f32 %v6017, %v6017
  %v6050 = vmul.f32 %v6018, %v6018
  %v6051 = vmul.f32 %v6019, %v6019
  %v6052 = vmul.f32 %v6020, %v6020
  %v6053 = vmul.f32 %v6021, %v6021
  %v6054 = vmul.f32 %v6022, %v6022
  %v6055 = vmul.f32 %v6023, %v6023
  %v6056 = vmul.f32 %v6024, %v6024
  %v6057 = vmul.f32 %v6025, %v6025
  %v6058 = vmul.f32 %v6026, %v6026
  %v6059 = vmul.f32 %v6027, %v6027
  %v6060 = vmul.f32 %v6028, %v6028
  %v6061 = vmul.f32 %v6029, %v6029
  %v6062 = vmul.f32 %v6030, %v6030
  %v6063 = vmul.f32 %v6031, %v6031
  %v6064 = vmul.f32 %v1966, %v6048
  %v6065 = vmul.f32 %v1966, %v6049
  %v6066 = vmul.f32 %v1966, %v6050
  %v6067 = vmul.f32 %v1966, %v6051
  %v6068 = vmul.f32 %v1966, %v6052
  %v6069 = vmul.f32 %v1966, %v6053
  %v6070 = vmul.f32 %v1966, %v6054
  %v6071 = vmul.f32 %v1966, %v6055
  %v6072 = vmul.f32 %v1966, %v6056
  %v6073 = vmul.f32 %v1966, %v6057
  %v6074 = vmul.f32 %v1966, %v6058
  %v6075 = vmul.f32 %v1966, %v6059
  %v6076 = vmul.f32 %v1966, %v6060
  %v6077 = vmul.f32 %v1966, %v6061
  %v6078 = vmul.f32 %v1966, %v6062
  %v6079 = vmul.f32 %v1966, %v6063
  %v6080 = vmul.f32 %v6064, 1.442695
  %v6081 = vpow.pop %v6080
  %v6082 = vmul.f32 %v6065, 1.442695
  %v6083 = vpow.pop %v6082
  %v6084 = vmul.f32 %v6066, 1.442695
  %v6085 = vpow.pop %v6084
  %v6086 = vmul.f32 %v6067, 1.442695
  %v6087 = vpow.pop %v6086
  %v6088 = vmul.f32 %v6068, 1.442695
  %v6089 = vpow.pop %v6088
  %v6090 = vmul.f32 %v6069, 1.442695
  %v6091 = vpow.pop %v6090
  %v6092 = vmul.f32 %v6070, 1.442695
  %v6093 = vpow.pop %v6092
  %v6094 = vmul.f32 %v6071, 1.442695
  %v6095 = vpow.pop %v6094
  %v6096 = vmul.f32 %v6072, 1.442695
  %v6097 = vpow.pop %v6096
  %v6098 = vmul.f32 %v6073, 1.442695
  %v6099 = vpow.pop %v6098
  %v6100 = vmul.f32 %v6074, 1.442695
  %v6101 = vpow.pop %v6100
  %v6102 = vmul.f32 %v6075, 1.442695
  %v6103 = vpow.pop %v6102
  %v6104 = vmul.f32 %v6076, 1.442695
  %v6105 = vpow.pop %v6104
  %v6106 = vmul.f32 %v6077, 1.442695
  %v6107 = vpow.pop %v6106
  %v6108 = vmul.f32 %v6078, 1.442695
  %v6109 = vpow.pop %v6108
  %v6110 = vmul.f32 %v6079, 1.442695
  %v6111 = vpow.pop %v6110
  %6112 = vset.pattern.permute.xlu0 15
  %6113 = vperm.xlu0 %6112, %v1793
  %v6114 = vpop.permute.xlu0 %6113
  %6116 = vset.pattern.permute.xlu0 15
  %6117 = vperm.xlu0 %6116, %v1794
  %v6118 = vpop.permute.xlu0 %6117
  %6120 = vset.pattern.permute.xlu0 15
  %6121 = vperm.xlu0 %6120, %v1795
  %v6122 = vpop.permute.xlu0 %6121
  %6124 = vset.pattern.permute.xlu0 15
  %6125 = vperm.xlu0 %6124, %v1796
  %v6126 = vpop.permute.xlu0 %6125
  %6128 = vset.pattern.permute.xlu0 15
  %6129 = vperm.xlu0 %6128, %v1797
  %v6130 = vpop.permute.xlu0 %6129
  %6132 = vset.pattern.permute.xlu0 15
  %6133 = vperm.xlu0 %6132, %v1798
  %v6134 = vpop.permute.xlu0 %6133
  %6136 = vset.pattern.permute.xlu0 15
  %6137 = vperm.xlu0 %6136, %v1799
  %v6138 = vpop.permute.xlu0 %6137
  %6140 = vset.pattern.permute.xlu0 15
  %6141 = vperm.xlu0 %6140, %v1800
  %v6142 = vpop.permute.xlu0 %6141
  %6144 = vset.pattern.permute.xlu0 15
  %6145 = vperm.xlu0 %6144, %v1801
  %v6146 = vpop.permute.xlu0 %6145
  %6148 = vset.pattern.permute.xlu0 15
  %6149 = vperm.xlu0 %6148, %v1802
  %v6150 = vpop.permute.xlu0 %6149
  %6152 = vset.pattern.permute.xlu0 15
  %6153 = vperm.xlu0 %6152, %v1803
  %v6154 = vpop.permute.xlu0 %6153
  %6156 = vset.pattern.permute.xlu0 15
  %6157 = vperm.xlu0 %6156, %v1804
  %v6158 = vpop.permute.xlu0 %6157
  %6160 = vset.pattern.permute.xlu0 15
  %6161 = vperm.xlu0 %6160, %v1805
  %v6162 = vpop.permute.xlu0 %6161
  %6164 = vset.pattern.permute.xlu0 15
  %6165 = vperm.xlu0 %6164, %v1806
  %v6166 = vpop.permute.xlu0 %6165
  %6168 = vset.pattern.permute.xlu0 15
  %6169 = vperm.xlu0 %6168, %v1807
  %v6170 = vpop.permute.xlu0 %6169
  %6172 = vset.pattern.permute.xlu0 15
  %6173 = vperm.xlu0 %6172, %v1808
  %v6174 = vpop.permute.xlu0 %6173
  %v6176 = vmul.f32 %v6114, %v6081
  %v6177 = vmul.f32 %v6118, %v6083
  %v6178 = vmul.f32 %v6122, %v6085
  %v6179 = vmul.f32 %v6126, %v6087
  %v6180 = vmul.f32 %v6130, %v6089
  %v6181 = vmul.f32 %v6134, %v6091
  %v6182 = vmul.f32 %v6138, %v6093
  %v6183 = vmul.f32 %v6142, %v6095
  %v6184 = vmul.f32 %v6146, %v6097
  %v6185 = vmul.f32 %v6150, %v6099
  %v6186 = vmul.f32 %v6154, %v6101
  %v6187 = vmul.f32 %v6158, %v6103
  %v6188 = vmul.f32 %v6162, %v6105
  %v6189 = vmul.f32 %v6166, %v6107
  %v6190 = vmul.f32 %v6170, %v6109
  %v6191 = vmul.f32 %v6174, %v6111
  %v6192 = vadd.f32 %v6032, %v6176
  %v6193 = vadd.f32 %v6033, %v6177
  %v6194 = vadd.f32 %v6034, %v6178
  %v6195 = vadd.f32 %v6035, %v6179
  %v6196 = vadd.f32 %v6036, %v6180
  %v6197 = vadd.f32 %v6037, %v6181
  %v6198 = vadd.f32 %v6038, %v6182
  %v6199 = vadd.f32 %v6039, %v6183
  %v6200 = vadd.f32 %v6040, %v6184
  %v6201 = vadd.f32 %v6041, %v6185
  %v6202 = vadd.f32 %v6042, %v6186
  %v6203 = vadd.f32 %v6043, %v6187
  %v6204 = vadd.f32 %v6044, %v6188
  %v6205 = vadd.f32 %v6045, %v6189
  %v6206 = vadd.f32 %v6046, %v6190
  %v6207 = vadd.f32 %v6047, %v6191
  %6208 = vst [vmem:[#allocation2] sm:$0xff] %v6192
  %6209 = vst [vmem:[#allocation2 + $0x8] sm:$0xff] %v6193
  %6210 = vst [vmem:[#allocation2 + $0x10] sm:$0xff] %v6194
  %6211 = vst [vmem:[#allocation2 + $0x18] sm:$0xff] %v6195
  %6212 = vst [vmem:[#allocation2 + $0x20] sm:$0xff] %v6196
  %6213 = vst [vmem:[#allocation2 + $0x28] sm:$0xff] %v6197
  %6214 = vst [vmem:[#allocation2 + $0x30] sm:$0xff] %v6198
  %6215 = vst [vmem:[#allocation2 + $0x38] sm:$0xff] %v6199
  %6216 = vst [vmem:[#allocation2 + $0x40] sm:$0xff] %v6200
  %6217 = vst [vmem:[#allocation2 + $0x48] sm:$0xff] %v6201
  %6218 = vst [vmem:[#allocation2 + $0x50] sm:$0xff] %v6202
  %6219 = vst [vmem:[#allocation2 + $0x58] sm:$0xff] %v6203
  %6220 = vst [vmem:[#allocation2 + $0x60] sm:$0xff] %v6204
  %6221 = vst [vmem:[#allocation2 + $0x68] sm:$0xff] %v6205
  %6222 = vst [vmem:[#allocation2 + $0x70] sm:$0xff] %v6206
  %6223 = vst [vmem:[#allocation2 + $0x78] sm:$0xff] %v6207
  %v6224 = vld [vmem:[#allocation2] sm:$0xff]
  %v6225 = vld [vmem:[#allocation2 + $0x8] sm:$0xff]
  %v6226 = vld [vmem:[#allocation2 + $0x10] sm:$0xff]
  %v6227 = vld [vmem:[#allocation2 + $0x18] sm:$0xff]
  %v6228 = vld [vmem:[#allocation2 + $0x20] sm:$0xff]
  %v6229 = vld [vmem:[#allocation2 + $0x28] sm:$0xff]
  %v6230 = vld [vmem:[#allocation2 + $0x30] sm:$0xff]
  %v6231 = vld [vmem:[#allocation2 + $0x38] sm:$0xff]
  %v6232 = vld [vmem:[#allocation2 + $0x40] sm:$0xff]
  %v6233 = vld [vmem:[#allocation2 + $0x48] sm:$0xff]
  %v6234 = vld [vmem:[#allocation2 + $0x50] sm:$0xff]
  %v6235 = vld [vmem:[#allocation2 + $0x58] sm:$0xff]
  %v6236 = vld [vmem:[#allocation2 + $0x60] sm:$0xff]
  %v6237 = vld [vmem:[#allocation2 + $0x68] sm:$0xff]
  %v6238 = vld [vmem:[#allocation2 + $0x70] sm:$0xff]
  %v6239 = vld [vmem:[#allocation2 + $0x78] sm:$0xff]
  %v6240 = vld [vmem:[%s2] sm:$0xff]
  %v6241 = vld [vmem:[%s2 + $0x8] sm:$0xff]
  %v6242 = vld [vmem:[%s2 + $0x10] sm:$0xff]
  %v6243 = vld [vmem:[%s2 + $0x18] sm:$0xff]
  %v6244 = vld [vmem:[%s2 + $0x20] sm:$0xff]
  %v6245 = vld [vmem:[%s2 + $0x28] sm:$0xff]
  %v6246 = vld [vmem:[%s2 + $0x30] sm:$0xff]
  %v6247 = vld [vmem:[%s2 + $0x38] sm:$0xff]
  %v6248 = vld [vmem:[%s2 + $0x40] sm:$0xff]
  %v6249 = vld [vmem:[%s2 + $0x48] sm:$0xff]
  %v6250 = vld [vmem:[%s2 + $0x50] sm:$0xff]
  %v6251 = vld [vmem:[%s2 + $0x58] sm:$0xff]
  %v6252 = vld [vmem:[%s2 + $0x60] sm:$0xff]
  %v6253 = vld [vmem:[%s2 + $0x68] sm:$0xff]
  %v6254 = vld [vmem:[%s2 + $0x70] sm:$0xff]
  %v6255 = vld [vmem:[%s2 + $0x78] sm:$0xff]
  %v6256 = vlaneseq
  %v6257 = vand.u32 %v6256, 127
  %6258 = vset.pattern.permute.xlu0 0
  %6259 = vperm.xlu0 %6258, %v6240
  %v6260 = vpop.permute.xlu0 %6259
  %6261 = vset.pattern.permute.xlu0 0
  %6262 = vperm.xlu0 %6261, %v6241
  %v6263 = vpop.permute.xlu0 %6262
  %6264 = vset.pattern.permute.xlu0 0
  %6265 = vperm.xlu0 %6264, %v6242
  %v6266 = vpop.permute.xlu0 %6265
  %6267 = vset.pattern.permute.xlu0 0
  %6268 = vperm.xlu0 %6267, %v6243
  %v6269 = vpop.permute.xlu0 %6268
  %6270 = vset.pattern.permute.xlu0 0
  %6271 = vperm.xlu0 %6270, %v6244
  %v6272 = vpop.permute.xlu0 %6271
  %6273 = vset.pattern.permute.xlu0 0
  %6274 = vperm.xlu0 %6273, %v6245
  %v6275 = vpop.permute.xlu0 %6274
  %6276 = vset.pattern.permute.xlu0 0
  %6277 = vperm.xlu0 %6276, %v6246
  %v6278 = vpop.permute.xlu0 %6277
  %6279 = vset.pattern.permute.xlu0 0
  %6280 = vperm.xlu0 %6279, %v6247
  %v6281 = vpop.permute.xlu0 %6280
  %6282 = vset.pattern.permute.xlu0 0
  %6283 = vperm.xlu0 %6282, %v6248
  %v6284 = vpop.permute.xlu0 %6283
  %6285 = vset.pattern.permute.xlu0 0
  %6286 = vperm.xlu0 %6285, %v6249
  %v6287 = vpop.permute.xlu0 %6286
  %6288 = vset.pattern.permute.xlu0 0
  %6289 = vperm.xlu0 %6288, %v6250
  %v6290 = vpop.permute.xlu0 %6289
  %6291 = vset.pattern.permute.xlu0 0
  %6292 = vperm.xlu0 %6291, %v6251
  %v6293 = vpop.permute.xlu0 %6292
  %6294 = vset.pattern.permute.xlu0 0
  %6295 = vperm.xlu0 %6294, %v6252
  %v6296 = vpop.permute.xlu0 %6295
  %6297 = vset.pattern.permute.xlu0 0
  %6298 = vperm.xlu0 %6297, %v6253
  %v6299 = vpop.permute.xlu0 %6298
  %6300 = vset.pattern.permute.xlu0 0
  %6301 = vperm.xlu0 %6300, %v6254
  %v6302 = vpop.permute.xlu0 %6301
  %6303 = vset.pattern.permute.xlu0 0
  %6304 = vperm.xlu0 %6303, %v6255
  %v6305 = vpop.permute.xlu0 %6304
  %vm6306 = vcmp.eq.s32.totalorder %v6260, %v6257
  %vm6307 = vcmp.eq.s32.totalorder %v6263, %v6257
  %vm6308 = vcmp.eq.s32.totalorder %v6266, %v6257
  %vm6309 = vcmp.eq.s32.totalorder %v6269, %v6257
  %vm6310 = vcmp.eq.s32.totalorder %v6272, %v6257
  %vm6311 = vcmp.eq.s32.totalorder %v6275, %v6257
  %vm6312 = vcmp.eq.s32.totalorder %v6278, %v6257
  %vm6313 = vcmp.eq.s32.totalorder %v6281, %v6257
  %vm6314 = vcmp.eq.s32.totalorder %v6284, %v6257
  %vm6315 = vcmp.eq.s32.totalorder %v6287, %v6257
  %vm6316 = vcmp.eq.s32.totalorder %v6290, %v6257
  %vm6317 = vcmp.eq.s32.totalorder %v6293, %v6257
  %vm6318 = vcmp.eq.s32.totalorder %v6296, %v6257
  %vm6319 = vcmp.eq.s32.totalorder %v6299, %v6257
  %vm6320 = vcmp.eq.s32.totalorder %v6302, %v6257
  %vm6321 = vcmp.eq.s32.totalorder %v6305, %v6257
  %v6322 = vsel %vm6306, 1, 0
  %v6323 = vsel %vm6307, 1, 0
  %v6324 = vsel %vm6308, 1, 0
  %v6325 = vsel %vm6309, 1, 0
  %v6326 = vsel %vm6310, 1, 0
  %v6327 = vsel %vm6311, 1, 0
  %v6328 = vsel %vm6312, 1, 0
  %v6329 = vsel %vm6313, 1, 0
  %v6330 = vsel %vm6314, 1, 0
  %v6331 = vsel %vm6315, 1, 0
  %v6332 = vsel %vm6316, 1, 0
  %v6333 = vsel %vm6317, 1, 0
  %v6334 = vsel %vm6318, 1, 0
  %v6335 = vsel %vm6319, 1, 0
  %v6336 = vsel %vm6320, 1, 0
  %v6337 = vsel %vm6321, 1, 0
  %v6338 = vcvt.s32.f32 %v6322
  %v6339 = vcvt.s32.f32 %v6323
  %v6340 = vcvt.s32.f32 %v6324
  %v6341 = vcvt.s32.f32 %v6325
  %v6342 = vcvt.s32.f32 %v6326
  %v6343 = vcvt.s32.f32 %v6327
  %v6344 = vcvt.s32.f32 %v6328
  %v6345 = vcvt.s32.f32 %v6329
  %v6346 = vcvt.s32.f32 %v6330
  %v6347 = vcvt.s32.f32 %v6331
  %v6348 = vcvt.s32.f32 %v6332
  %v6349 = vcvt.s32.f32 %v6333
  %v6350 = vcvt.s32.f32 %v6334
  %v6351 = vcvt.s32.f32 %v6335
  %v6352 = vcvt.s32.f32 %v6336
  %v6353 = vcvt.s32.f32 %v6337
  %v6354 = vld [vmem:[%s5] sm:$0xff]
  %vm6355 = vcmask 64512
  %v6357 = vsel %vm6355, %v6338, 0
  %v6360 = vsel %vm6355, %v6339, 0
  %v6363 = vsel %vm6355, %v6340, 0
  %v6366 = vsel %vm6355, %v6341, 0
  %v6369 = vsel %vm6355, %v6342, 0
  %v6372 = vsel %vm6355, %v6343, 0
  %v6375 = vsel %vm6355, %v6344, 0
  %v6378 = vsel %vm6355, %v6345, 0
  %v6381 = vsel %vm6355, %v6346, 0
  %v6384 = vsel %vm6355, %v6347, 0
  %v6387 = vsel %vm6355, %v6348, 0
  %v6390 = vsel %vm6355, %v6349, 0
  %v6393 = vsel %vm6355, %v6350, 0
  %v6396 = vsel %vm6355, %v6351, 0
  %v6399 = vsel %vm6355, %v6352, 0
  %v6402 = vsel %vm6355, %v6353, 0
  %6404 = vmatprep.subr.mxu0 0.0
  %6405 = vmatpush1.msra.mxu0 %v6354
  %6406 = vmatprep.subr.mxu0 0.0
  %6407 = vmatpush1.msra.mxu0 0.0
  %6408 = vmatprep.subr.mxu0 0.0
  %6409 = vmatpush1.msra.mxu0 0.0
  %6410 = vmatprep.subr.mxu0 0.0
  %6411 = vmatpush1.msra.mxu0 0.0
  %6412 = vmatprep.subr.mxu0 0.0
  %6413 = vmatpush1.msra.mxu0 0.0
  %6414 = vmatprep.subr.mxu0 0.0
  %6415 = vmatpush1.msra.mxu0 0.0
  %6416 = vmatprep.subr.mxu0 0.0
  %6417 = vmatpush1.msra.mxu0 0.0
  %6418 = vmatprep.subr.mxu0 0.0
  %6419 = vmatpush1.msra.mxu0 0.0
  %6420 = vmatprep.subr.mxu0 0.0
  %6421 = vmatpush1.msra.mxu0 0.0
  %6422 = vmatprep.subr.mxu0 0.0
  %6423 = vmatpush1.msra.mxu0 0.0
  %6424 = vmatprep.subr.mxu0 0.0
  %6425 = vmatpush1.msra.mxu0 0.0
  %6426 = vmatprep.subr.mxu0 0.0
  %6427 = vmatpush1.msra.mxu0 0.0
  %6428 = vmatprep.subr.mxu0 0.0
  %6429 = vmatpush1.msra.mxu0 0.0
  %6430 = vmatprep.subr.mxu0 0.0
  %6431 = vmatpush1.msra.mxu0 0.0
  %6432 = vmatprep.subr.mxu0 0.0
  %6433 = vmatpush1.msra.mxu0 0.0
  %6434 = vmatprep.subr.mxu0 0.0
  %6435 = vmatpush1.msra.mxu0 0.0
  %6436 = vmatprep.subr.mxu0 0.0
  %6437 = vmatpush1.msra.mxu0 0.0
  %6438 = vmatprep.subr.mxu0 0.0
  %6439 = vmatpush1.msra.mxu0 0.0
  %6440 = vmatprep.subr.mxu0 0.0
  %6441 = vmatpush1.msra.mxu0 0.0
  %6442 = vmatprep.subr.mxu0 0.0
  %6443 = vmatpush1.msra.mxu0 0.0
  %6444 = vmatprep.subr.mxu0 0.0
  %6445 = vmatpush1.msra.mxu0 0.0
  %6446 = vmatprep.subr.mxu0 0.0
  %6447 = vmatpush1.msra.mxu0 0.0
  %6448 = vmatprep.subr.mxu0 0.0
  %6449 = vmatpush1.msra.mxu0 0.0
  %6450 = vmatprep.subr.mxu0 0.0
  %6451 = vmatpush1.msra.mxu0 0.0
  %6452 = vmatprep.subr.mxu0 0.0
  %6453 = vmatpush1.msra.mxu0 0.0
  %6454 = vmatprep.subr.mxu0 0.0
  %6455 = vmatpush1.msra.mxu0 0.0
  %6456 = vmatprep.subr.mxu0 0.0
  %6457 = vmatpush1.msra.mxu0 0.0
  %6458 = vmatprep.subr.mxu0 0.0
  %6459 = vmatpush1.msra.mxu0 0.0
  %6460 = vmatprep.subr.mxu0 0.0
  %6461 = vmatpush1.msra.mxu0 0.0
  %6462 = vmatprep.subr.mxu0 0.0
  %6463 = vmatpush1.msra.mxu0 0.0
  %6464 = vmatprep.subr.mxu0 0.0
  %6465 = vmatpush1.msra.mxu0 0.0
  %6466 = vmatprep.subr.mxu0 0.0
  %6467 = vmatpush1.msra.mxu0 0.0
  %6468 = vmatprep.mubr.f32.mxu0 0.0
  %6469 = vmatmul.mubr.f32.gmra.mrb[0].mxu0 %v6357
  %v6470 = vpop.f32.mrb[0].mxu0
  %v6471 = vadd.f32 0.0, %v6470
  %v6472 = vpop.f32.mrb[0].mxu0
  %6473 = vmatprep.mubr.f32.mxu0 0.0
  %6474 = vmatmul.mubr.f32.gmra.mrb[0].mxu0 %v6360
  %v6475 = vpop.f32.mrb[0].mxu0
  %v6476 = vadd.f32 0.0, %v6475
  %v6477 = vpop.f32.mrb[0].mxu0
  %6478 = vmatprep.mubr.f32.mxu0 0.0
  %6479 = vmatmul.mubr.f32.gmra.mrb[0].mxu0 %v6363
  %v6480 = vpop.f32.mrb[0].mxu0
  %v6481 = vadd.f32 0.0, %v6480
  %v6482 = vpop.f32.mrb[0].mxu0
  %6483 = vmatprep.mubr.f32.mxu0 0.0
  %6484 = vmatmul.mubr.f32.gmra.mrb[0].mxu0 %v6366
  %v6485 = vpop.f32.mrb[0].mxu0
  %v6486 = vadd.f32 0.0, %v6485
  %v6487 = vpop.f32.mrb[0].mxu0
  %6488 = vmatprep.mubr.f32.mxu0 0.0
  %6489 = vmatmul.mubr.f32.gmra.mrb[0].mxu0 %v6369
  %v6490 = vpop.f32.mrb[0].mxu0
  %v6491 = vadd.f32 0.0, %v6490
  %v6492 = vpop.f32.mrb[0].mxu0
  %6493 = vmatprep.mubr.f32.mxu0 0.0
  %6494 = vmatmul.mubr.f32.gmra.mrb[0].mxu0 %v6372
  %v6495 = vpop.f32.mrb[0].mxu0
  %v6496 = vadd.f32 0.0, %v6495
  %v6497 = vpop.f32.mrb[0].mxu0
  %6498 = vmatprep.mubr.f32.mxu0 0.0
  %6499 = vmatmul.mubr.f32.gmra.mrb[0].mxu0 %v6375
  %v6500 = vpop.f32.mrb[0].mxu0
  %v6501 = vadd.f32 0.0, %v6500
  %v6502 = vpop.f32.mrb[0].mxu0
  %6503 = vmatprep.mubr.f32.mxu0 0.0
  %6504 = vmatmul.mubr.f32.gmra.mrb[0].mxu0 %v6378
  %v6505 = vpop.f32.mrb[0].mxu0
  %v6506 = vadd.f32 0.0, %v6505
  %v6507 = vpop.f32.mrb[0].mxu0
  %6508 = vmatprep.mubr.f32.mxu0 0.0
  %6509 = vmatmul.mubr.f32.gmra.mrb[0].mxu0 %v6381
  %v6510 = vpop.f32.mrb[0].mxu0
  %v6511 = vadd.f32 0.0, %v6510
  %v6512 = vpop.f32.mrb[0].mxu0
  %6513 = vmatprep.mubr.f32.mxu0 0.0
  %6514 = vmatmul.mubr.f32.gmra.mrb[0].mxu0 %v6384
  %v6515 = vpop.f32.mrb[0].mxu0
  %v6516 = vadd.f32 0.0, %v6515
  %v6517 = vpop.f32.mrb[0].mxu0
  %6518 = vmatprep.mubr.f32.mxu0 0.0
  %6519 = vmatmul.mubr.f32.gmra.mrb[0].mxu0 %v6387
  %v6520 = vpop.f32.mrb[0].mxu0
  %v6521 = vadd.f32 0.0, %v6520
  %v6522 = vpop.f32.mrb[0].mxu0
  %6523 = vmatprep.mubr.f32.mxu0 0.0
  %6524 = vmatmul.mubr.f32.gmra.mrb[0].mxu0 %v6390
  %v6525 = vpop.f32.mrb[0].mxu0
  %v6526 = vadd.f32 0.0, %v6525
  %v6527 = vpop.f32.mrb[0].mxu0
  %6528 = vmatprep.mubr.f32.mxu0 0.0
  %6529 = vmatmul.mubr.f32.gmra.mrb[0].mxu0 %v6393
  %v6530 = vpop.f32.mrb[0].mxu0
  %v6531 = vadd.f32 0.0, %v6530
  %v6532 = vpop.f32.mrb[0].mxu0
  %6533 = vmatprep.mubr.f32.mxu0 0.0
  %6534 = vmatmul.mubr.f32.gmra.mrb[0].mxu0 %v6396
  %v6535 = vpop.f32.mrb[0].mxu0
  %v6536 = vadd.f32 0.0, %v6535
  %v6537 = vpop.f32.mrb[0].mxu0
  %6538 = vmatprep.mubr.f32.mxu0 0.0
  %6539 = vmatmul.mubr.f32.gmra.mrb[0].mxu0 %v6399
  %v6540 = vpop.f32.mrb[0].mxu0
  %v6541 = vadd.f32 0.0, %v6540
  %v6542 = vpop.f32.mrb[0].mxu0
  %6543 = vmatprep.mubr.f32.mxu0 0.0
  %6544 = vmatmul.mubr.f32.gmra.mrb[0].mxu0 %v6402
  %v6545 = vpop.f32.mrb[0].mxu0
  %v6546 = vadd.f32 0.0, %v6545
  %v6547 = vpop.f32.mrb[0].mxu0
  %6548 = vdwg.mxu0
  %v6549 = vpack.c.bf16 %v6225, %v6224
  %v6550 = vpack.c.bf16 %v6227, %v6226
  %v6551 = vpack.c.bf16 %v6229, %v6228
  %v6552 = vpack.c.bf16 %v6231, %v6230
  %v6553 = vpack.c.bf16 %v6233, %v6232
  %v6554 = vpack.c.bf16 %v6235, %v6234
  %v6555 = vpack.c.bf16 %v6237, %v6236
  %v6556 = vpack.c.bf16 %v6239, %v6238
  %v6557 = vld [vmem:[%s6] sm:$0xf]
  %v6558 = vld [vmem:[%s6 + $0x4] sm:$0xf]
  %v6559 = vld [vmem:[%s6 + $0x8] sm:$0xf]
  %v6560 = vld [vmem:[%s6 + $0xc] sm:$0xf]
  %v6561 = vld [vmem:[%s6 + $0x10] sm:$0xf]
  %v6562 = vld [vmem:[%s6 + $0x14] sm:$0xf]
  %v6563 = vld [vmem:[%s6 + $0x18] sm:$0xf]
  %v6564 = vld [vmem:[%s6 + $0x1c] sm:$0xf]
  %v6565 = vld [vmem:[%s6 + $0x20] sm:$0xf]
  %v6566 = vld [vmem:[%s6 + $0x24] sm:$0xf]
  %v6567 = vld [vmem:[%s6 + $0x28] sm:$0xf]
  %v6568 = vld [vmem:[%s6 + $0x2c] sm:$0xf]
  %v6569 = vld [vmem:[%s6 + $0x30] sm:$0xf]
  %v6570 = vld [vmem:[%s6 + $0x34] sm:$0xf]
  %v6571 = vld [vmem:[%s6 + $0x38] sm:$0xf]
  %v6572 = vld [vmem:[%s6 + $0x3c] sm:$0xf]
  %v6589 = vunpack.c.l.b16 %v6557
  %v6590 = vunpack.c.l.b16 %v6558
  %v6591 = vunpack.c.l.b16 %v6559
  %v6592 = vunpack.c.l.b16 %v6560
  %v6593 = vunpack.c.l.b16 %v6561
  %v6594 = vunpack.c.l.b16 %v6562
  %v6595 = vunpack.c.l.b16 %v6563
  %v6596 = vunpack.c.l.b16 %v6564
  %v6597 = vunpack.c.l.b16 %v6565
  %v6598 = vunpack.c.l.b16 %v6566
  %v6599 = vunpack.c.l.b16 %v6567
  %v6600 = vunpack.c.l.b16 %v6568
  %v6601 = vunpack.c.l.b16 %v6569
  %v6602 = vunpack.c.l.b16 %v6570
  %v6603 = vunpack.c.l.b16 %v6571
  %v6604 = vunpack.c.l.b16 %v6572
  %v6605 = vpack.c.b16 %v6590, %v6589
  %v6606 = vpack.c.b16 %v6592, %v6591
  %v6607 = vpack.c.b16 %v6594, %v6593
  %v6608 = vpack.c.b16 %v6596, %v6595
  %v6609 = vpack.c.b16 %v6598, %v6597
  %v6610 = vpack.c.b16 %v6600, %v6599
  %v6611 = vpack.c.b16 %v6602, %v6601
  %v6612 = vpack.c.b16 %v6604, %v6603
  %6621 = vmatprep.subr.bf16.mxu0 0
  %6622 = vmatpush1.bf16.msra.mxu0 %v6605
  %6623 = vmatprep.subr.bf16.mxu0 0
  %6624 = vmatpush1.bf16.msra.mxu0 %v6606
  %6625 = vmatprep.subr.bf16.mxu0 0
  %6626 = vmatpush1.bf16.msra.mxu0 %v6607
  %6627 = vmatprep.subr.bf16.mxu0 0
  %6628 = vmatpush1.bf16.msra.mxu0 %v6608
  %6629 = vmatprep.subr.bf16.mxu0 0
  %6630 = vmatpush1.bf16.msra.mxu0 %v6609
  %6631 = vmatprep.subr.bf16.mxu0 0
  %6632 = vmatpush1.bf16.msra.mxu0 %v6610
  %6633 = vmatprep.subr.bf16.mxu0 0
  %6634 = vmatpush1.bf16.msra.mxu0 %v6611
  %6635 = vmatprep.subr.bf16.mxu0 0
  %6636 = vmatpush1.bf16.msra.mxu0 %v6612
  %6637 = vmatprep.subr.bf16.mxu0 0
  %6638 = vmatpush1.bf16.msra.mxu0 0
  %6639 = vmatprep.subr.bf16.mxu0 0
  %6640 = vmatpush1.bf16.msra.mxu0 0
  %6641 = vmatprep.subr.bf16.mxu0 0
  %6642 = vmatpush1.bf16.msra.mxu0 0
  %6643 = vmatprep.subr.bf16.mxu0 0
  %6644 = vmatpush1.bf16.msra.mxu0 0
  %6645 = vmatprep.subr.bf16.mxu0 0
  %6646 = vmatpush1.bf16.msra.mxu0 0
  %6647 = vmatprep.subr.bf16.mxu0 0
  %6648 = vmatpush1.bf16.msra.mxu0 0
  %6649 = vmatprep.subr.bf16.mxu0 0
  %6650 = vmatpush1.bf16.msra.mxu0 0
  %6651 = vmatprep.subr.bf16.mxu0 0
  %6652 = vmatpush1.bf16.msra.mxu0 0
  %6653 = vmatprep.mubr.bf16.mxu0 0
  %6654 = vmatmul.mubr.bf16.gmra.mrb[0].mxu0 %v6549
  %v6655 = vpop.f32.mrb[0].mxu0
  %v6656 = vadd.f32 %v6471, %v6655
  %v6657 = vpop.f32.mrb[0].mxu0
  %v6658 = vpop.f32.mrb[0].mxu0
  %v6659 = vadd.f32 %v6476, %v6658
  %v6660 = vpop.f32.mrb[0].mxu0
  %6661 = vmatprep.mubr.bf16.mxu0 0
  %6662 = vmatmul.mubr.bf16.gmra.mrb[0].mxu0 %v6550
  %v6663 = vpop.f32.mrb[0].mxu0
  %v6664 = vadd.f32 %v6481, %v6663
  %v6665 = vpop.f32.mrb[0].mxu0
  %v6666 = vpop.f32.mrb[0].mxu0
  %v6667 = vadd.f32 %v6486, %v6666
  %v6668 = vpop.f32.mrb[0].mxu0
  %6669 = vmatprep.mubr.bf16.mxu0 0
  %6670 = vmatmul.mubr.bf16.gmra.mrb[0].mxu0 %v6551
  %v6671 = vpop.f32.mrb[0].mxu0
  %v6672 = vadd.f32 %v6491, %v6671
  %v6673 = vpop.f32.mrb[0].mxu0
  %v6674 = vpop.f32.mrb[0].mxu0
  %v6675 = vadd.f32 %v6496, %v6674
  %v6676 = vpop.f32.mrb[0].mxu0
  %6677 = vmatprep.mubr.bf16.mxu0 0
  %6678 = vmatmul.mubr.bf16.gmra.mrb[0].mxu0 %v6552
  %v6679 = vpop.f32.mrb[0].mxu0
  %v6680 = vadd.f32 %v6501, %v6679
  %v6681 = vpop.f32.mrb[0].mxu0
  %v6682 = vpop.f32.mrb[0].mxu0
  %v6683 = vadd.f32 %v6506, %v6682
  %v6684 = vpop.f32.mrb[0].mxu0
  %6685 = vmatprep.mubr.bf16.mxu0 0
  %6686 = vmatmul.mubr.bf16.gmra.mrb[0].mxu0 %v6553
  %v6687 = vpop.f32.mrb[0].mxu0
  %v6688 = vadd.f32 %v6511, %v6687
  %v6689 = vpop.f32.mrb[0].mxu0
  %v6690 = vpop.f32.mrb[0].mxu0
  %v6691 = vadd.f32 %v6516, %v6690
  %v6692 = vpop.f32.mrb[0].mxu0
  %6693 = vmatprep.mubr.bf16.mxu0 0
  %6694 = vmatmul.mubr.bf16.gmra.mrb[0].mxu0 %v6554
  %v6695 = vpop.f32.mrb[0].mxu0
  %v6696 = vadd.f32 %v6521, %v6695
  %v6697 = vpop.f32.mrb[0].mxu0
  %v6698 = vpop.f32.mrb[0].mxu0
  %v6699 = vadd.f32 %v6526, %v6698
  %v6700 = vpop.f32.mrb[0].mxu0
  %6701 = vmatprep.mubr.bf16.mxu0 0
  %6702 = vmatmul.mubr.bf16.gmra.mrb[0].mxu0 %v6555
  %v6703 = vpop.f32.mrb[0].mxu0
  %v6704 = vadd.f32 %v6531, %v6703
  %v6705 = vpop.f32.mrb[0].mxu0
  %v6706 = vpop.f32.mrb[0].mxu0
  %v6707 = vadd.f32 %v6536, %v6706
  %v6708 = vpop.f32.mrb[0].mxu0
  %6709 = vmatprep.mubr.bf16.mxu0 0
  %6710 = vmatmul.mubr.bf16.gmra.mrb[0].mxu0 %v6556
  %v6711 = vpop.f32.mrb[0].mxu0
  %v6712 = vadd.f32 %v6541, %v6711
  %v6713 = vpop.f32.mrb[0].mxu0
  %v6714 = vpop.f32.mrb[0].mxu0
  %v6715 = vadd.f32 %v6546, %v6714
  %v6716 = vpop.f32.mrb[0].mxu0
  %6717 = vdwg.mxu0
  %v6718 = vtanh.pop %v6656
  %v6719 = vtanh.pop %v6659
  %v6720 = vtanh.pop %v6664
  %v6721 = vtanh.pop %v6667
  %v6722 = vtanh.pop %v6672
  %v6723 = vtanh.pop %v6675
  %v6724 = vtanh.pop %v6680
  %v6725 = vtanh.pop %v6683
  %v6726 = vtanh.pop %v6688
  %v6727 = vtanh.pop %v6691
  %v6728 = vtanh.pop %v6696
  %v6729 = vtanh.pop %v6699
  %v6730 = vtanh.pop %v6704
  %v6731 = vtanh.pop %v6707
  %v6732 = vtanh.pop %v6712
  %v6733 = vtanh.pop %v6715
  %v6734 = vpack.c.bf16 %v6719, %v6718
  %v6735 = vpack.c.bf16 %v6721, %v6720
  %v6736 = vpack.c.bf16 %v6723, %v6722
  %v6737 = vpack.c.bf16 %v6725, %v6724
  %v6738 = vpack.c.bf16 %v6727, %v6726
  %v6739 = vpack.c.bf16 %v6729, %v6728
  %v6740 = vpack.c.bf16 %v6731, %v6730
  %v6741 = vpack.c.bf16 %v6733, %v6732
  %v6742 = vld [vmem:[%s7] sm:$0xf]
  %v6743 = vld [vmem:[%s7 + $0x4] sm:$0xf]
  %v6744 = vld [vmem:[%s7 + $0x8] sm:$0xf]
  %v6745 = vld [vmem:[%s7 + $0xc] sm:$0xf]
  %v6746 = vld [vmem:[%s7 + $0x10] sm:$0xf]
  %v6747 = vld [vmem:[%s7 + $0x14] sm:$0xf]
  %v6748 = vld [vmem:[%s7 + $0x18] sm:$0xf]
  %v6749 = vld [vmem:[%s7 + $0x1c] sm:$0xf]
  %v6750 = vld [vmem:[%s7 + $0x20] sm:$0xf]
  %v6751 = vld [vmem:[%s7 + $0x24] sm:$0xf]
  %v6752 = vld [vmem:[%s7 + $0x28] sm:$0xf]
  %v6753 = vld [vmem:[%s7 + $0x2c] sm:$0xf]
  %v6754 = vld [vmem:[%s7 + $0x30] sm:$0xf]
  %v6755 = vld [vmem:[%s7 + $0x34] sm:$0xf]
  %v6756 = vld [vmem:[%s7 + $0x38] sm:$0xf]
  %v6757 = vld [vmem:[%s7 + $0x3c] sm:$0xf]
  %v6758 = vld [vmem:[%s8] sm:$0x1]
  %v6760 = vlaneseq
  %v6761 = vshrl.u32 %v6760, 7
  %v6762 = vsub.s32 0, %v6761
  %v6763 = vrot.slane %v6758, %v6762
  %v6781 = vunpack.c.l.b16 %v6742
  %v6782 = vunpack.c.l.b16 %v6743
  %v6783 = vunpack.c.l.b16 %v6744
  %v6784 = vunpack.c.l.b16 %v6745
  %v6785 = vunpack.c.l.b16 %v6746
  %v6786 = vunpack.c.l.b16 %v6747
  %v6787 = vunpack.c.l.b16 %v6748
  %v6788 = vunpack.c.l.b16 %v6749
  %v6789 = vunpack.c.l.b16 %v6750
  %v6790 = vunpack.c.l.b16 %v6751
  %v6791 = vunpack.c.l.b16 %v6752
  %v6792 = vunpack.c.l.b16 %v6753
  %v6793 = vunpack.c.l.b16 %v6754
  %v6794 = vunpack.c.l.b16 %v6755
  %v6795 = vunpack.c.l.b16 %v6756
  %v6796 = vunpack.c.l.b16 %v6757
  %v6797 = vpack.c.b16 %v6782, %v6781
  %v6798 = vpack.c.b16 %v6784, %v6783
  %v6799 = vpack.c.b16 %v6786, %v6785
  %v6800 = vpack.c.b16 %v6788, %v6787
  %v6801 = vpack.c.b16 %v6790, %v6789
  %v6802 = vpack.c.b16 %v6792, %v6791
  %v6803 = vpack.c.b16 %v6794, %v6793
  %v6804 = vpack.c.b16 %v6796, %v6795
  %6813 = vmatprep.subr.bf16.mxu0 0
  %6814 = vmatpush1.bf16.msra.mxu0 %v6797
  %6815 = vmatprep.subr.bf16.mxu0 0
  %6816 = vmatpush1.bf16.msra.mxu0 %v6798
  %6817 = vmatprep.subr.bf16.mxu0 0
  %6818 = vmatpush1.bf16.msra.mxu0 %v6799
  %6819 = vmatprep.subr.bf16.mxu0 0
  %6820 = vmatpush1.bf16.msra.mxu0 %v6800
  %6821 = vmatprep.subr.bf16.mxu0 0
  %6822 = vmatpush1.bf16.msra.mxu0 %v6801
  %6823 = vmatprep.subr.bf16.mxu0 0
  %6824 = vmatpush1.bf16.msra.mxu0 %v6802
  %6825 = vmatprep.subr.bf16.mxu0 0
  %6826 = vmatpush1.bf16.msra.mxu0 %v6803
  %6827 = vmatprep.subr.bf16.mxu0 0
  %6828 = vmatpush1.bf16.msra.mxu0 %v6804
  %6829 = vmatprep.subr.bf16.mxu0 0
  %6830 = vmatpush1.bf16.msra.mxu0 0
  %6831 = vmatprep.subr.bf16.mxu0 0
  %6832 = vmatpush1.bf16.msra.mxu0 0
  %6833 = vmatprep.subr.bf16.mxu0 0
  %6834 = vmatpush1.bf16.msra.mxu0 0
  %6835 = vmatprep.subr.bf16.mxu0 0
  %6836 = vmatpush1.bf16.msra.mxu0 0
  %6837 = vmatprep.subr.bf16.mxu0 0
  %6838 = vmatpush1.bf16.msra.mxu0 0
  %6839 = vmatprep.subr.bf16.mxu0 0
  %6840 = vmatpush1.bf16.msra.mxu0 0
  %6841 = vmatprep.subr.bf16.mxu0 0
  %6842 = vmatpush1.bf16.msra.mxu0 0
  %6843 = vmatprep.subr.bf16.mxu0 0
  %6844 = vmatpush1.bf16.msra.mxu0 0
  %6845 = vmatprep.mubr.bf16.mxu0 0
  %6846 = vmatmul.mubr.bf16.gmra.mrb[0].mxu0 %v6734
  %v6847 = vpop.f32.mrb[0].mxu0
  %v6848 = vadd.f32 %v6763, %v6847
  %v6849 = vpop.f32.mrb[0].mxu0
  %v6850 = vpop.f32.mrb[0].mxu0
  %v6851 = vadd.f32 %v6763, %v6850
  %v6852 = vpop.f32.mrb[0].mxu0
  %6853 = vmatprep.mubr.bf16.mxu0 0
  %6854 = vmatmul.mubr.bf16.gmra.mrb[0].mxu0 %v6735
  %v6855 = vpop.f32.mrb[0].mxu0
  %v6856 = vadd.f32 %v6763, %v6855
  %v6857 = vpop.f32.mrb[0].mxu0
  %v6858 = vpop.f32.mrb[0].mxu0
  %v6859 = vadd.f32 %v6763, %v6858
  %v6860 = vpop.f32.mrb[0].mxu0
  %6861 = vmatprep.mubr.bf16.mxu0 0
  %6862 = vmatmul.mubr.bf16.gmra.mrb[0].mxu0 %v6736
  %v6863 = vpop.f32.mrb[0].mxu0
  %v6864 = vadd.f32 %v6763, %v6863
  %v6865 = vpop.f32.mrb[0].mxu0
  %v6866 = vpop.f32.mrb[0].mxu0
  %v6867 = vadd.f32 %v6763, %v6866
  %v6868 = vpop.f32.mrb[0].mxu0
  %6869 = vmatprep.mubr.bf16.mxu0 0
  %6870 = vmatmul.mubr.bf16.gmra.mrb[0].mxu0 %v6737
  %v6871 = vpop.f32.mrb[0].mxu0
  %v6872 = vadd.f32 %v6763, %v6871
  %v6873 = vpop.f32.mrb[0].mxu0
  %v6874 = vpop.f32.mrb[0].mxu0
  %v6875 = vadd.f32 %v6763, %v6874
  %v6876 = vpop.f32.mrb[0].mxu0
  %6877 = vmatprep.mubr.bf16.mxu0 0
  %6878 = vmatmul.mubr.bf16.gmra.mrb[0].mxu0 %v6738
  %v6879 = vpop.f32.mrb[0].mxu0
  %v6880 = vadd.f32 %v6763, %v6879
  %v6881 = vpop.f32.mrb[0].mxu0
  %v6882 = vpop.f32.mrb[0].mxu0
  %v6883 = vadd.f32 %v6763, %v6882
  %v6884 = vpop.f32.mrb[0].mxu0
  %6885 = vmatprep.mubr.bf16.mxu0 0
  %6886 = vmatmul.mubr.bf16.gmra.mrb[0].mxu0 %v6739
  %v6887 = vpop.f32.mrb[0].mxu0
  %v6888 = vadd.f32 %v6763, %v6887
  %v6889 = vpop.f32.mrb[0].mxu0
  %v6890 = vpop.f32.mrb[0].mxu0
  %v6891 = vadd.f32 %v6763, %v6890
  %v6892 = vpop.f32.mrb[0].mxu0
  %6893 = vmatprep.mubr.bf16.mxu0 0
  %6894 = vmatmul.mubr.bf16.gmra.mrb[0].mxu0 %v6740
  %v6895 = vpop.f32.mrb[0].mxu0
  %v6896 = vadd.f32 %v6763, %v6895
  %v6897 = vpop.f32.mrb[0].mxu0
  %v6898 = vpop.f32.mrb[0].mxu0
  %v6899 = vadd.f32 %v6763, %v6898
  %v6900 = vpop.f32.mrb[0].mxu0
  %6901 = vmatprep.mubr.bf16.mxu0 0
  %6902 = vmatmul.mubr.bf16.gmra.mrb[0].mxu0 %v6741
  %v6903 = vpop.f32.mrb[0].mxu0
  %v6904 = vadd.f32 %v6763, %v6903
  %v6905 = vpop.f32.mrb[0].mxu0
  %v6906 = vpop.f32.mrb[0].mxu0
  %v6907 = vadd.f32 %v6763, %v6906
  %v6908 = vpop.f32.mrb[0].mxu0
  %6909 = vdwg.mxu0
  %vm6910 = vcmp.ge.s32.totalorder %v6240, 0
  %vm6911 = vcmp.ge.s32.totalorder %v6241, 0
  %vm6912 = vcmp.ge.s32.totalorder %v6242, 0
  %vm6913 = vcmp.ge.s32.totalorder %v6243, 0
  %vm6914 = vcmp.ge.s32.totalorder %v6244, 0
  %vm6915 = vcmp.ge.s32.totalorder %v6245, 0
  %vm6916 = vcmp.ge.s32.totalorder %v6246, 0
  %vm6917 = vcmp.ge.s32.totalorder %v6247, 0
  %vm6918 = vcmp.ge.s32.totalorder %v6248, 0
  %vm6919 = vcmp.ge.s32.totalorder %v6249, 0
  %vm6920 = vcmp.ge.s32.totalorder %v6250, 0
  %vm6921 = vcmp.ge.s32.totalorder %v6251, 0
  %vm6922 = vcmp.ge.s32.totalorder %v6252, 0
  %vm6923 = vcmp.ge.s32.totalorder %v6253, 0
  %vm6924 = vcmp.ge.s32.totalorder %v6254, 0
  %vm6925 = vcmp.ge.s32.totalorder %v6255, 0
  %v6926 = vsel %vm6910, 1, 0
  %v6927 = vsel %vm6911, 1, 0
  %v6928 = vsel %vm6912, 1, 0
  %v6929 = vsel %vm6913, 1, 0
  %v6930 = vsel %vm6914, 1, 0
  %v6931 = vsel %vm6915, 1, 0
  %v6932 = vsel %vm6916, 1, 0
  %v6933 = vsel %vm6917, 1, 0
  %v6934 = vsel %vm6918, 1, 0
  %v6935 = vsel %vm6919, 1, 0
  %v6936 = vsel %vm6920, 1, 0
  %v6937 = vsel %vm6921, 1, 0
  %v6938 = vsel %vm6922, 1, 0
  %v6939 = vsel %vm6923, 1, 0
  %v6940 = vsel %vm6924, 1, 0
  %v6941 = vsel %vm6925, 1, 0
  %v6942 = vcvt.s32.f32 %v6926
  %v6943 = vcvt.s32.f32 %v6927
  %v6944 = vcvt.s32.f32 %v6928
  %v6945 = vcvt.s32.f32 %v6929
  %v6946 = vcvt.s32.f32 %v6930
  %v6947 = vcvt.s32.f32 %v6931
  %v6948 = vcvt.s32.f32 %v6932
  %v6949 = vcvt.s32.f32 %v6933
  %v6950 = vcvt.s32.f32 %v6934
  %v6951 = vcvt.s32.f32 %v6935
  %v6952 = vcvt.s32.f32 %v6936
  %v6953 = vcvt.s32.f32 %v6937
  %v6954 = vcvt.s32.f32 %v6938
  %v6955 = vcvt.s32.f32 %v6939
  %v6956 = vcvt.s32.f32 %v6940
  %v6957 = vcvt.s32.f32 %v6941
  %6959 = vset.pattern.permute.xlu0 0
  %6960 = vperm.xlu0 %6959, %v6942
  %v6961 = vpop.permute.xlu0 %6960
  %6964 = vset.pattern.permute.xlu0 0
  %6965 = vperm.xlu0 %6964, %v6943
  %v6966 = vpop.permute.xlu0 %6965
  %6969 = vset.pattern.permute.xlu0 0
  %6970 = vperm.xlu0 %6969, %v6944
  %v6971 = vpop.permute.xlu0 %6970
  %6974 = vset.pattern.permute.xlu0 0
  %6975 = vperm.xlu0 %6974, %v6945
  %v6976 = vpop.permute.xlu0 %6975
  %6979 = vset.pattern.permute.xlu0 0
  %6980 = vperm.xlu0 %6979, %v6946
  %v6981 = vpop.permute.xlu0 %6980
  %6984 = vset.pattern.permute.xlu0 0
  %6985 = vperm.xlu0 %6984, %v6947
  %v6986 = vpop.permute.xlu0 %6985
  %6989 = vset.pattern.permute.xlu0 0
  %6990 = vperm.xlu0 %6989, %v6948
  %v6991 = vpop.permute.xlu0 %6990
  %6994 = vset.pattern.permute.xlu0 0
  %6995 = vperm.xlu0 %6994, %v6949
  %v6996 = vpop.permute.xlu0 %6995
  %6999 = vset.pattern.permute.xlu0 0
  %7000 = vperm.xlu0 %6999, %v6950
  %v7001 = vpop.permute.xlu0 %7000
  %7004 = vset.pattern.permute.xlu0 0
  %7005 = vperm.xlu0 %7004, %v6951
  %v7006 = vpop.permute.xlu0 %7005
  %7009 = vset.pattern.permute.xlu0 0
  %7010 = vperm.xlu0 %7009, %v6952
  %v7011 = vpop.permute.xlu0 %7010
  %7014 = vset.pattern.permute.xlu0 0
  %7015 = vperm.xlu0 %7014, %v6953
  %v7016 = vpop.permute.xlu0 %7015
  %7019 = vset.pattern.permute.xlu0 0
  %7020 = vperm.xlu0 %7019, %v6954
  %v7021 = vpop.permute.xlu0 %7020
  %7024 = vset.pattern.permute.xlu0 0
  %7025 = vperm.xlu0 %7024, %v6955
  %v7026 = vpop.permute.xlu0 %7025
  %7029 = vset.pattern.permute.xlu0 0
  %7030 = vperm.xlu0 %7029, %v6956
  %v7031 = vpop.permute.xlu0 %7030
  %7034 = vset.pattern.permute.xlu0 0
  %7035 = vperm.xlu0 %7034, %v6957
  %v7036 = vpop.permute.xlu0 %7035
  %v7038 = vmul.f32 %v6848, %v6961
  %v7039 = vmul.f32 %v6851, %v6966
  %v7040 = vmul.f32 %v6856, %v6971
  %v7041 = vmul.f32 %v6859, %v6976
  %v7042 = vmul.f32 %v6864, %v6981
  %v7043 = vmul.f32 %v6867, %v6986
  %v7044 = vmul.f32 %v6872, %v6991
  %v7045 = vmul.f32 %v6875, %v6996
  %v7046 = vmul.f32 %v6880, %v7001
  %v7047 = vmul.f32 %v6883, %v7006
  %v7048 = vmul.f32 %v6888, %v7011
  %v7049 = vmul.f32 %v6891, %v7016
  %v7050 = vmul.f32 %v6896, %v7021
  %v7051 = vmul.f32 %v6899, %v7026
  %v7052 = vmul.f32 %v6904, %v7031
  %v7053 = vmul.f32 %v6907, %v7036
  %7054 = vst [vmem:[%s9] sm:$0xff] %v7038
  %7055 = vst [vmem:[%s9 + $0x8] sm:$0xff] %v7039
  %7056 = vst [vmem:[%s9 + $0x10] sm:$0xff] %v7040
  %7057 = vst [vmem:[%s9 + $0x18] sm:$0xff] %v7041
  %7058 = vst [vmem:[%s9 + $0x20] sm:$0xff] %v7042
  %7059 = vst [vmem:[%s9 + $0x28] sm:$0xff] %v7043
  %7060 = vst [vmem:[%s9 + $0x30] sm:$0xff] %v7044
  %7061 = vst [vmem:[%s9 + $0x38] sm:$0xff] %v7045
  %7062 = vst [vmem:[%s9 + $0x40] sm:$0xff] %v7046
  %7063 = vst [vmem:[%s9 + $0x48] sm:$0xff] %v7047
  %7064 = vst [vmem:[%s9 + $0x50] sm:$0xff] %v7048
  %7065 = vst [vmem:[%s9 + $0x58] sm:$0xff] %v7049
  %7066 = vst [vmem:[%s9 + $0x60] sm:$0xff] %v7050
  %7067 = vst [vmem:[%s9 + $0x68] sm:$0xff] %v7051
  %7068 = vst [vmem:[%s9 + $0x70] sm:$0xff] %v7052
  %7069 = vst [vmem:[%s9 + $0x78] sm:$0xff] %v7053
  // Predicated region
  $region38: #{property_forward.1} parent=0 // pred_check
    _
  $region39: #{property_forward.1} parent=0 // pred_check_branch
    %7071 = sbr.rel (0) target = $region41
  $region40: #{property_forward.1} parent=0 // pred_region
    _
  $region41: #{property_forward.1} parent=0 // pred_fallthru
    _
  // Predicated region
  $region42: #{property_forward.1} parent=0 // pred_check
    _
  $region43: #{property_forward.1} parent=0 // pred_check_branch
    %7073 = sbr.rel (0) target = $region45
  $region44: #{property_forward.1} parent=0 // pred_region
    _
  $region45: #{property_forward.1} parent=0 // pred_fallthru
    _

</llo_original>
